<compile_context>
chip_gen: v5e
topology: v5e:2x2
jax: 0.10.0
libtpu: 0.0.40
codegen_flags: <defaults>
</compile_context>

<pallas_src>
import functools
from typing import NamedTuple

import jax
import jax.numpy as jnp
from jax.experimental import pallas as pl
from jax.experimental.pallas import tpu as pltpu

NEG_SLOPE = 0.05            # RFDN/IMDN block.py: activation('lrelu', neg_slope=0.05)
_MAX_TM = 8192              # lane tile upper bound (review: v5e/v6e want big tiles)
_VMEM_LIMIT = 32 * 1024 * 1024


def _round_up(x, m):
    return ((x + m - 1) // m) * m


def _cdiv(a, b):
    return -(-a // b)


def _tile_m(m):
    """Balanced lane tiling of the spatial axis M.

    tm is a multiple of 128; tiles are balanced (no near-empty last tile) and
    the grid has >= 2 steps when there is enough work (v7x has 2 TensorCores).
    """
    mr = _round_up(max(m, 1), 128)
    nsteps = _cdiv(mr, _MAX_TM)
    if nsteps == 1 and mr >= 256:
        nsteps = 2
    tm = _round_up(_cdiv(mr, nsteps), 128)
    return tm, tm * nsteps


def _compiler_params():
    # "parallel" lets Mosaic shard the M-tile axis across v7x's two TensorCores;
    # neutral on single-core v5e/v6e.
    return pltpu.CompilerParams(dimension_semantics=("parallel",),
                                vmem_limit_bytes=_VMEM_LIMIT)


class Planar(NamedTuple):
    """Lane-dense planar activation: data is (C, Mpad) f32 with M = n*h*w."""
    data: jax.Array
    n: int
    h: int
    w: int


def to_planar(x_nhwc):
    n, h, w, c = x_nhwc.shape
    m = n * h * w
    _, mpad = _tile_m(m)
    data = x_nhwc.reshape(m, c).T.astype(jnp.float32)
    if mpad > m:
        data = jnp.pad(data, ((0, 0), (0, mpad - m)))
    return Planar(data, n, h, w)


def to_nhwc(p):
    c = p.data.shape[0]
    m = p.n * p.h * p.w
    return p.data[:, :m].T.reshape(p.n, p.h, p.w, c)


def _im2col_planar(x, kh_, kw_, stride, padding):
    """NHWC -> planar taps (K, Mpad) with K = KH*KW*Cin (tap-major, cin-minor)."""
    n, h, w, cin = x.shape
    xp = jnp.pad(x, ((0, 0), (padding, padding), (padding, padding), (0, 0)))
    ho = (h + 2 * padding - kh_) // stride + 1
    wo = (w + 2 * padding - kw_) // stride + 1
    m = n * ho * wo
    cols = []
    for kh in range(kh_):
        for kw in range(kw_):
            cols.append(xp[:, kh:kh + (ho - 1) * stride + 1:stride,
                           kw:kw + (wo - 1) * stride + 1:stride, :])
    taps = jnp.stack(cols, axis=3).reshape(m, kh_ * kw_ * cin).T
    _, mpad = _tile_m(m)
    if mpad > m:
        taps = jnp.pad(taps, ((0, 0), (0, mpad - m)))
    return Planar(taps.astype(jnp.float32), n, ho, wo)


# --------------------------------------------------------------------------
# Pallas kernels
# --------------------------------------------------------------------------
def _gemm_kernel(*refs, act, n_taps, has_extra):
    """out(Cout, TM) = act(sum_i W_i(Cout,Ki) @ taps_i(Ki,TM) + b [, extra])."""
    w_refs = refs[:n_taps]
    tap_refs = refs[n_taps:2 * n_taps]
    b_ref = refs[2 * n_taps]
    extra_ref = refs[2 * n_taps + 1] if has_extra else None
    o_ref = refs[-1]

    acc = jnp.dot(w_refs[0][...], tap_refs[0][...],
                  preferred_element_type=jnp.float32)
    for i in range(1, n_taps):
        acc = acc + jnp.dot(w_refs[i][...], tap_refs[i][...],
                            preferred_element_type=jnp.float32)
    acc = acc + b_ref[...]                      # (Cout,1) broadcasts over lanes

    if act == "residual":
        acc = acc + extra_ref[...]
    elif act == "lrelu":
        acc = jnp.where(acc >= 0, acc, NEG_SLOPE * acc)
    elif act == "relu":
        acc = jnp.maximum(acc, 0.0)
    elif act == "sigmoid_gate":                 # out = extra * sigmoid(conv)
        acc = extra_ref[...] * jax.nn.sigmoid(acc)
    # act == "none": nothing
    o_ref[...] = acc


def _dual_conv_kernel(w_ref, taps_ref, b_ref, r_ref, d_ref, *, cin, center, cout_r):
    """Fused RFDB pair on one shared 3x3 taps tile with a single stacked GEMM:
         rows [:cout_r]  -> r = lrelu(conv3x3(x) + x)   (x = center tap, f32)
         rows [cout_r:]  -> d = lrelu(conv1x1(x))       (1x1 weights in center cols)
    """
    taps = taps_ref[...]                                       # (K, TM) f32
    x_c = taps[center * cin:(center + 1) * cin, :]             # identity tap
    acc = jnp.dot(w_ref[...], taps, preferred_element_type=jnp.float32)
    acc = acc + b_ref[...]
    r = acc[:cout_r, :] + x_c
    r_ref[...] = jnp.where(r >= 0, r, NEG_SLOPE * r)
    d = acc[cout_r:, :]
    d_ref[...] = jnp.where(d >= 0, d, NEG_SLOPE * d)


# --------------------------------------------------------------------------
# GEMM / conv wrappers
# --------------------------------------------------------------------------
def _gemm(tap_planars, weights, bias, *, act="none", extra=None):
    """Planar GEMM over (possibly several, channel-concat-fused) tap inputs."""
    p0 = tap_planars[0]
    m = p0.n * p0.h * p0.w
    mpad = p0.data.shape[1]
    tm, mpad_chk = _tile_m(m)
    assert mpad == mpad_chk
    cout = weights[0].shape[0]
    n_taps = len(tap_planars)

    b_c = bias.reshape(cout, 1).astype(jnp.float32)
    inputs = ([wi.astype(jnp.float32) for wi in weights]
              + [p.data for p in tap_planars] + [b_c])
    in_specs = ([pl.BlockSpec(wi.shape, lambda i: (0, 0)) for wi in weights]
                + [pl.BlockSpec((p.data.shape[0], tm), lambda i: (0, i))
                   for p in tap_planars]
                + [pl.BlockSpec((cout, 1), lambda i: (0, 0))])
    has_extra = extra is not None
    if has_extra:
        inputs.append(extra.data)
        in_specs.append(pl.BlockSpec((cout, tm), lambda i: (0, i)))

    ktot = sum(p.data.shape[0] for p in tap_planars)
    flops = 2 * mpad * ktot * cout
    trans = mpad * cout if act == "sigmoid_gate" else 0
    bytes_accessed = 4 * (ktot * mpad + sum(int(w.size) for w in weights)
                          + cout * mpad * (2 if has_extra else 1))

    out = pl.pallas_call(
        functools.partial(_gemm_kernel, act=act, n_taps=n_taps, has_extra=has_extra),
        out_shape=jax.ShapeDtypeStruct((cout, mpad), jnp.float32),
        grid=(mpad // tm,),
        in_specs=in_specs,
        out_specs=pl.BlockSpec((cout, tm), lambda i: (0, i)),
        compiler_params=_compiler_params(),
        cost_estimate=pl.CostEstimate(flops=flops, transcendentals=trans,
                                      bytes_accessed=bytes_accessed),
    )(*inputs)
    return Planar(out, p0.n, p0.h, p0.w)


def conv1x1(taps, w, b, *, act="none", extra=None):
    """1x1 conv on planar activations. `taps` may be a list of Planar inputs,
    in which case the channel concat is fused into the GEMM (partial dots)."""
    if isinstance(taps, Planar):
        taps = [taps]
    cin_total, cout = w.shape[2], w.shape[3]
    w2 = w.reshape(cin_total, cout).T                   # (Cout, Cin_total)
    weights, off = [], 0
    for p in taps:
        ci = p.data.shape[0]
        weights.append(w2[:, off:off + ci])
        off += ci
    assert off == cin_total
    return _gemm(taps, weights, b, act=act, extra=extra)


def conv2d_nhwc(x, w, b, *, stride=1, padding=0, act="none", extra=None):
    """General conv (NHWC input, planar output) via wrapper-side im2col + GEMM."""
    kh, kw, cin, cout = w.shape
    taps = _im2col_planar(x, kh, kw, stride, padding)
    w2 = w.reshape(kh * kw * cin, cout).T
    return _gemm([taps], [w2], b, act=act, extra=extra)


def dual_conv(x, w_r, b_r, w_d, b_d):
    """Fused RFDB pair (3x3/pad=1/stride=1 + 1x1) sharing one taps tile.
    Returns planar (r, d) = (lrelu(conv3x3(x)+x), lrelu(conv1x1(x)))."""
    n, h, wd, cin = x.shape
    kh, kw, _, cout_r = w_r.shape
    assert cout_r == cin, "residual branch requires Cout == Cin"
    cout_d = w_d.shape[-1]

    taps = _im2col_planar(x, kh, kw, 1, 1)
    k = kh * kw * cin
    m = taps.n * taps.h * taps.w
    mpad = taps.data.shape[1]
    tm, _ = _tile_m(m)
    center = (kh // 2) * kw + (kw // 2)

    w_r2 = w_r.reshape(k, cout_r).T.astype(jnp.float32)
    w_d2 = jnp.zeros((cout_d, k), jnp.float32)
    w_d2 = w_d2.at[:, center * cin:(center + 1) * cin].set(
        w_d.reshape(cin, cout_d).T.astype(jnp.float32))
    w_stack = jnp.concatenate([w_r2, w_d2], axis=0)               # (Cr+Cd, K)
    b_stack = jnp.concatenate([b_r, b_d]).reshape(cout_r + cout_d, 1).astype(jnp.float32)

    flops = 2 * mpad * k * (cout_r + cout_d)
    bytes_accessed = 4 * (k * mpad + int(w_stack.size) + mpad * (cout_r + cout_d))

    r, d = pl.pallas_call(
        functools.partial(_dual_conv_kernel, cin=cin, center=center, cout_r=cout_r),
        out_shape=(jax.ShapeDtypeStruct((cout_r, mpad), jnp.float32),
                   jax.ShapeDtypeStruct((cout_d, mpad), jnp.float32)),
        grid=(mpad // tm,),
        in_specs=[
            pl.BlockSpec((cout_r + cout_d, k), lambda i: (0, 0)),
            pl.BlockSpec((k, tm), lambda i: (0, i)),
            pl.BlockSpec((cout_r + cout_d, 1), lambda i: (0, 0)),
        ],
        out_specs=(pl.BlockSpec((cout_r, tm), lambda i: (0, i)),
                   pl.BlockSpec((cout_d, tm), lambda i: (0, i))),
        compiler_params=_compiler_params(),
        cost_estimate=pl.CostEstimate(flops=flops, transcendentals=0,
                                      bytes_accessed=bytes_accessed),
    )(w_stack, taps.data, b_stack)
    return (Planar(r, taps.n, taps.h, taps.w),
            Planar(d, taps.n, taps.h, taps.w))


def max_pool2d(x, kernel_size, stride):
    # Avoid 49x im2col HBM amplification -- plain XLA reduce_window.
    return jax.lax.reduce_window(
        x, -jnp.inf, jax.lax.max,
        window_dimensions=(1, kernel_size, kernel_size, 1),
        window_strides=(1, stride, stride, 1),
        padding="VALID")


def pixel_shuffle_nhwc(x, r):
    n, h, w, c = x.shape
    c_out = c // (r * r)
    x = x.reshape(n, h, w, c_out, r, r)
    x = jnp.transpose(x, (0, 1, 4, 2, 5, 3))
    return x.reshape(n, h * r, w * r, c_out)


# --------------------------------------------------------------------------
# Deterministic parameter construction (synthetic weights)
# --------------------------------------------------------------------------
def _init_conv(key, kh, kw, cin, cout):
    kw_, kb_ = jax.random.split(key)
    fan_in = kh * kw * cin
    w = jax.random.normal(kw_, (kh, kw, cin, cout), jnp.float32) / jnp.sqrt(fan_in)
    b = jax.random.normal(kb_, (cout,), jnp.float32) * 0.01
    return {"w": w, "b": b}


def init_esa(key, nf):
    f = nf // 4
    ks = jax.random.split(key, 7)
    return {
        "conv1": _init_conv(ks[0], 1, 1, nf, f),
        "conv_f": _init_conv(ks[1], 1, 1, f, f),
        "conv_max": _init_conv(ks[2], 3, 3, f, f),
        "conv2": _init_conv(ks[3], 3, 3, f, f),
        "conv3": _init_conv(ks[4], 3, 3, f, f),
        "conv3_": _init_conv(ks[5], 3, 3, f, f),
        "conv4": _init_conv(ks[6], 1, 1, f, nf),
    }


def init_rfdb(key, nf):
    dc = nf // 2
    ks = jax.random.split(key, 9)
    return {
        "c1_d": _init_conv(ks[0], 1, 1, nf, dc),
        "c1_r": _init_conv(ks[1], 3, 3, nf, nf),
        "c2_d": _init_conv(ks[2], 1, 1, nf, dc),
        "c2_r": _init_conv(ks[3], 3, 3, nf, nf),
        "c3_d": _init_conv(ks[4], 1, 1, nf, dc),
        "c3_r": _init_conv(ks[5], 3, 3, nf, nf),
        "c4": _init_conv(ks[6], 3, 3, nf, dc),
        "c5": _init_conv(ks[7], 1, 1, 4 * dc, nf),
        "esa": init_esa(ks[8], nf),
    }


def init_rfdn(key, in_nc=3, nf=16, num_modules=4, out_nc=3, upscale=4):
    ks = jax.random.split(key, num_modules + 4)
    return {
        "fea_conv": _init_conv(ks[0], 3, 3, in_nc, nf),
        "blocks": [init_rfdb(ks[1 + i], nf) for i in range(num_modules)],
        "c": _init_conv(ks[num_modules + 1], 1, 1, nf * num_modules, nf),
        "LR_conv": _init_conv(ks[num_modules + 2], 3, 3, nf, nf),
        "up_conv": _init_conv(ks[num_modules + 3], 3, 3, nf, out_nc * upscale * upscale),
    }


# --------------------------------------------------------------------------
# Forward passes (mirror B.ESA / B.RFDB / RFDNBase.forward)
# --------------------------------------------------------------------------
def esa_forward(p, x):
    # x: Planar (nf channels)
    n, h, w = x.n, x.h, x.w
    c1_ = conv1x1(x, p["conv1"]["w"], p["conv1"]["b"])                   # planar chain
    c1 = conv2d_nhwc(to_nhwc(c1_), p["conv2"]["w"], p["conv2"]["b"],
                     stride=2, padding=0)
    v_max = max_pool2d(to_nhwc(c1), kernel_size=7, stride=3)
    v_range = conv2d_nhwc(v_max, p["conv_max"]["w"], p["conv_max"]["b"],
                          padding=1, act="relu")
    c3 = conv2d_nhwc(to_nhwc(v_range), p["conv3"]["w"], p["conv3"]["b"],
                     padding=1, act="relu")
    c3 = conv2d_nhwc(to_nhwc(c3), p["conv3_"]["w"], p["conv3_"]["b"], padding=1)
    # TODO(synk): F.interpolate(mode='bilinear', align_corners=False) approximated
    # with jax.image.resize half-pixel bilinear (plain-JAX glue).
    c3_up = jax.image.resize(to_nhwc(c3), (n, h, w, c3.data.shape[0]),
                             method="bilinear")
    # cf = conv_f(c1_); c4 = conv4(c3 + cf); m = sigmoid(c4); out = x * m  (fused)
    cf_plus_c3 = conv1x1(c1_, p["conv_f"]["w"], p["conv_f"]["b"],
                         act="residual", extra=to_planar(c3_up))
    return conv1x1(cf_plus_c3, p["conv4"]["w"], p["conv4"]["b"],
                   act="sigmoid_gate", extra=x)


def rfdb_forward(p, x):
    # x: Planar (nf channels).  Fused distilled/refine pairs: one taps tile,
    # one stacked GEMM, two outputs.
    r1, d1 = dual_conv(to_nhwc(x), p["c1_r"]["w"], p["c1_r"]["b"],
                       p["c1_d"]["w"], p["c1_d"]["b"])
    r2, d2 = dual_conv(to_nhwc(r1), p["c2_r"]["w"], p["c2_r"]["b"],
                       p["c2_d"]["w"], p["c2_d"]["b"])
    r3, d3 = dual_conv(to_nhwc(r2), p["c3_r"]["w"], p["c3_r"]["b"],
                       p["c3_d"]["w"], p["c3_d"]["b"])
    r4 = conv2d_nhwc(to_nhwc(r3), p["c4"]["w"], p["c4"]["b"], padding=1, act="lrelu")
    # concat([d1, d2, d3, r4]) + 1x1 c5: concat fused into the GEMM (partial dots).
    out = conv1x1([d1, d2, d3, r4], p["c5"]["w"], p["c5"]["b"])
    return esa_forward(p["esa"], out)


def rfdn_forward(params, x_nchw, upscale=4):
    x = jnp.transpose(x_nchw, (0, 2, 3, 1)).astype(jnp.float32)   # NCHW -> NHWC
    out_fea = conv2d_nhwc(x, params["fea_conv"]["w"], params["fea_conv"]["b"],
                          padding=1)
    feats = []
    h = out_fea
    for bp in params["blocks"]:
        h = rfdb_forward(bp, h)
        feats.append(h)
    # concat(block outputs) + 1x1 `c` (lrelu): concat fused into the GEMM.
    out_B = conv1x1(feats, params["c"]["w"], params["c"]["b"], act="lrelu")
    out_lr = conv2d_nhwc(to_nhwc(out_B), params["LR_conv"]["w"], params["LR_conv"]["b"],
                         padding=1, act="residual", extra=out_fea)
    up = conv2d_nhwc(to_nhwc(out_lr), params["up_conv"]["w"], params["up_conv"]["b"],
                     padding=1)
    output = pixel_shuffle_nhwc(to_nhwc(up), upscale)
    out_lr_nhwc = to_nhwc(out_lr)
    # back to NCHW, matching (output, out_lr) of the PyTorch module
    return (jnp.transpose(output, (0, 3, 1, 2)),
            jnp.transpose(out_lr_nhwc, (0, 3, 1, 2)))


if __name__ == "__main__":
    in_nc, nf, num_modules, out_nc, upscale = 3, 16, 4, 3, 4
    key = jax.random.PRNGKey(0)
    k_in, k_par = jax.random.split(key)

    x = jax.random.normal(k_in, (2, in_nc, 16, 16), jnp.float32)  # NCHW like PyTorch
    params = init_rfdn(k_par, in_nc=in_nc, nf=nf, num_modules=num_modules,
                       out_nc=out_nc, upscale=upscale)

    fwd = jax.jit(functools.partial(rfdn_forward, upscale=upscale))
    output, out_lr = fwd(params, x)
    jax.block_until_ready((output, out_lr))

    assert output.shape == (2, out_nc, 16 * upscale, 16 * upscale), output.shape
    assert out_lr.shape == (2, nf, 16, 16), out_lr.shape
    assert bool(jnp.all(jnp.isfinite(output))) and bool(jnp.all(jnp.isfinite(out_lr)))
    print("KERNEL_OK")
</pallas_src>

<mosaic_0001>
module attributes {stable_mosaic.version = 11 : i64} {
  func.func @_gemm_kernel(%arg0: i32, %arg1: memref<16x27xf32, #tpu.memory_space<vmem>>, %arg2: memref<27x256xf32, #tpu.memory_space<vmem>>, %arg3: memref<16x1xf32, #tpu.memory_space<vmem>>, %arg4: memref<16x256xf32, #tpu.memory_space<vmem>>) attributes {dimension_semantics = [#tpu.dimension_semantics<parallel>], iteration_bounds = array<i64: 2>, scalar_prefetch = 0 : i64, scratch_operands = 0 : i64, tpu.core_type = #tpu.core_type<tc>, window_params = [{pipeline_mode = #tpu.pipeline_mode<synchronous>, transform_indices = @transform_0, window_bounds = array<i64: 16, 27>}, {transform_indices = @transform_1, window_bounds = array<i64: 27, 256>}, {pipeline_mode = #tpu.pipeline_mode<synchronous>, transform_indices = @transform_2, window_bounds = array<i64: 16, 1>}, {transform_indices = @transform_3, window_bounds = array<i64: 16, 256>}]} {
    %c0 = arith.constant 0 : index
    %c0_0 = arith.constant 0 : index
    %0 = vector.load %arg1[%c0, %c0_0] : memref<16x27xf32, #tpu.memory_space<vmem>>, vector<16x27xf32>
    %c0_1 = arith.constant 0 : index
    %c0_2 = arith.constant 0 : index
    %1 = vector.load %arg2[%c0_1, %c0_2] : memref<27x256xf32, #tpu.memory_space<vmem>>, vector<27x256xf32>
    %cst = arith.constant dense<0.000000e+00> : vector<16x256xf32>
    %2 = tpu.matmul %0, %1, %cst {dimension_numbers = #tpu.dot_dimension_numbers<[1], [0], [0], [1], [0, 0, 1, 1], [], []>} : vector<16x27xf32>, vector<27x256xf32>, vector<16x256xf32> -> vector<16x256xf32>
    %c0_3 = arith.constant 0 : index
    %c0_4 = arith.constant 0 : index
    %3 = vector.load %arg3[%c0_3, %c0_4] : memref<16x1xf32, #tpu.memory_space<vmem>>, vector<16x1xf32>
    %4 = vector.broadcast %3 : vector<16x1xf32> to vector<16x256xf32>
    %5 = arith.addf %2, %4 : vector<16x256xf32>
    %c0_5 = arith.constant 0 : index
    %c0_6 = arith.constant 0 : index
    %6 = vector.load %arg4[%c0_5, %c0_6] : memref<16x256xf32, #tpu.memory_space<vmem>>, vector<16x256xf32>
    tpu.vector_store %arg4[%c0_5, %c0_6], %5 {strides = array<i32>} : memref<16x256xf32, #tpu.memory_space<vmem>>, vector<16x256xf32>,
    return
  }
  func.func @transform_0(%arg0: i32) -> (i32, i32) {
    %c0_i32 = arith.constant 0 : i32
    %c0_i32_0 = arith.constant 0 : i32
    %c0_i32_1 = arith.constant 0 : i32
    return %c0_i32, %c0_i32_0 : i32, i32
  }
  func.func @transform_1(%arg0: i32) -> (i32, i32) {
    %c0_i32 = arith.constant 0 : i32
    %c0_i32_0 = arith.constant 0 : i32
    return %c0_i32, %arg0 : i32, i32
  }
  func.func @transform_2(%arg0: i32) -> (i32, i32) {
    %c0_i32 = arith.constant 0 : i32
    %c0_i32_0 = arith.constant 0 : i32
    %c0_i32_1 = arith.constant 0 : i32
    return %c0_i32, %c0_i32_0 : i32, i32
  }
  func.func @transform_3(%arg0: i32) -> (i32, i32) {
    %c0_i32 = arith.constant 0 : i32
    %c0_i32_0 = arith.constant 0 : i32
    return %c0_i32, %arg0 : i32, i32
  }
}

module attributes {stable_mosaic.version = 11 : i64} {
  func.func @_gemm_kernel(%arg0: i32, %arg1: memref<8x144xf32, #tpu.memory_space<vmem>>, %arg2: memref<144x256xf32, #tpu.memory_space<vmem>>, %arg3: memref<8x1xf32, #tpu.memory_space<vmem>>, %arg4: memref<8x256xf32, #tpu.memory_space<vmem>>) attributes {dimension_semantics = [#tpu.dimension_semantics<parallel>], iteration_bounds = array<i64: 2>, scalar_prefetch = 0 : i64, scratch_operands = 0 : i64, tpu.core_type = #tpu.core_type<tc>, window_params = [{pipeline_mode = #tpu.pipeline_mode<synchronous>, transform_indices = @transform_0, window_bounds = array<i64: 8, 144>}, {transform_indices = @transform_1, window_bounds = array<i64: 144, 256>}, {pipeline_mode = #tpu.pipeline_mode<synchronous>, transform_indices = @transform_2, window_bounds = array<i64: 8, 1>}, {transform_indices = @transform_3, window_bounds = array<i64: 8, 256>}]} {
    %c0 = arith.constant 0 : index
    %c0_0 = arith.constant 0 : index
    %0 = vector.load %arg1[%c0, %c0_0] : memref<8x144xf32, #tpu.memory_space<vmem>>, vector<8x144xf32>
    %c0_1 = arith.constant 0 : index
    %c0_2 = arith.constant 0 : index
    %1 = vector.load %arg2[%c0_1, %c0_2] : memref<144x256xf32, #tpu.memory_space<vmem>>, vector<144x256xf32>
    %cst = arith.constant dense<0.000000e+00> : vector<8x256xf32>
    %2 = tpu.matmul %0, %1, %cst {dimension_numbers = #tpu.dot_dimension_numbers<[1], [0], [0], [1], [0, 0, 1, 1], [], []>} : vector<8x144xf32>, vector<144x256xf32>, vector<8x256xf32> -> vector<8x256xf32>
    %c0_3 = arith.constant 0 : index
    %c0_4 = arith.constant 0 : index
    %3 = vector.load %arg3[%c0_3, %c0_4] : memref<8x1xf32, #tpu.memory_space<vmem>>, vector<8x1xf32>
    %4 = vector.broadcast %3 : vector<8x1xf32> to vector<8x256xf32>
    %5 = arith.addf %2, %4 : vector<8x256xf32>
    %cst_5 = arith.constant 0.000000e+00 : f32
    %6 = vector.broadcast %cst_5 : f32 to vector<8x256xf32>
    %7 = arith.cmpf oge, %5, %6 : vector<8x256xf32>
    %cst_6 = arith.constant 5.000000e-02 : f32
    %8 = vector.broadcast %cst_6 : f32 to vector<8x256xf32>
    %9 = arith.mulf %8, %5 : vector<8x256xf32>
    %10 = arith.select %7, %5, %9 : vector<8x256xi1>, vector<8x256xf32>
    %c0_7 = arith.constant 0 : index
    %c0_8 = arith.constant 0 : index
    %11 = vector.load %arg4[%c0_7, %c0_8] : memref<8x256xf32, #tpu.memory_space<vmem>>, vector<8x256xf32>
    tpu.vector_store %arg4[%c0_7, %c0_8], %10 {strides = array<i32>} : memref<8x256xf32, #tpu.memory_space<vmem>>, vector<8x256xf32>,
    return
  }
  func.func @transform_0(%arg0: i32) -> (i32, i32) {
    %c0_i32 = arith.constant 0 : i32
    %c0_i32_0 = arith.constant 0 : i32
    %c0_i32_1 = arith.constant 0 : i32
    return %c0_i32, %c0_i32_0 : i32, i32
  }
  func.func @transform_1(%arg0: i32) -> (i32, i32) {
    %c0_i32 = arith.constant 0 : i32
    %c0_i32_0 = arith.constant 0 : i32
    return %c0_i32, %arg0 : i32, i32
  }
  func.func @transform_2(%arg0: i32) -> (i32, i32) {
    %c0_i32 = arith.constant 0 : i32
    %c0_i32_0 = arith.constant 0 : i32
    %c0_i32_1 = arith.constant 0 : i32
    return %c0_i32, %c0_i32_0 : i32, i32
  }
  func.func @transform_3(%arg0: i32) -> (i32, i32) {
    %c0_i32 = arith.constant 0 : i32
    %c0_i32_0 = arith.constant 0 : i32
    return %c0_i32, %arg0 : i32, i32
  }
}

module attributes {stable_mosaic.version = 11 : i64} {
  func.func @_dual_conv_kernel(%arg0: i32, %arg1: memref<24x144xf32, #tpu.memory_space<vmem>>, %arg2: memref<144x256xf32, #tpu.memory_space<vmem>>, %arg3: memref<24x1xf32, #tpu.memory_space<vmem>>, %arg4: memref<16x256xf32, #tpu.memory_space<vmem>>, %arg5: memref<8x256xf32, #tpu.memory_space<vmem>>) attributes {dimension_semantics = [#tpu.dimension_semantics<parallel>], iteration_bounds = array<i64: 2>, scalar_prefetch = 0 : i64, scratch_operands = 0 : i64, tpu.core_type = #tpu.core_type<tc>, window_params = [{pipeline_mode = #tpu.pipeline_mode<synchronous>, transform_indices = @transform_0, window_bounds = array<i64: 24, 144>}, {transform_indices = @transform_1, window_bounds = array<i64: 144, 256>}, {pipeline_mode = #tpu.pipeline_mode<synchronous>, transform_indices = @transform_2, window_bounds = array<i64: 24, 1>}, {transform_indices = @transform_3, window_bounds = array<i64: 16, 256>}, {transform_indices = @transform_4, window_bounds = array<i64: 8, 256>}]} {
    %c0 = arith.constant 0 : index
    %c0_0 = arith.constant 0 : index
    %0 = vector.load %arg2[%c0, %c0_0] : memref<144x256xf32, #tpu.memory_space<vmem>>, vector<144x256xf32>
    %1 = vector.extract_strided_slice %0 {offsets = [64, 0], sizes = [16, 256], strides = [1, 1]} : vector<144x256xf32> to vector<16x256xf32>
    %c0_1 = arith.constant 0 : index
    %c0_2 = arith.constant 0 : index
    %2 = vector.load %arg1[%c0_1, %c0_2] : memref<24x144xf32, #tpu.memory_space<vmem>>, vector<24x144xf32>
    %cst = arith.constant dense<0.000000e+00> : vector<24x256xf32>
    %3 = tpu.matmul %2, %0, %cst {dimension_numbers = #tpu.dot_dimension_numbers<[1], [0], [0], [1], [0, 0, 1, 1], [], []>} : vector<24x144xf32>, vector<144x256xf32>, vector<24x256xf32> -> vector<24x256xf32>
    %c0_3 = arith.constant 0 : index
    %c0_4 = arith.constant 0 : index
    %4 = vector.load %arg3[%c0_3, %c0_4] : memref<24x1xf32, #tpu.memory_space<vmem>>, vector<24x1xf32>
    %5 = vector.broadcast %4 : vector<24x1xf32> to vector<24x256xf32>
    %6 = arith.addf %3, %5 : vector<24x256xf32>
    %7 = vector.extract_strided_slice %6 {offsets = [0, 0], sizes = [16, 256], strides = [1, 1]} : vector<24x256xf32> to vector<16x256xf32>
    %8 = arith.addf %7, %1 : vector<16x256xf32>
    %cst_5 = arith.constant 0.000000e+00 : f32
    %9 = vector.broadcast %cst_5 : f32 to vector<16x256xf32>
    %10 = arith.cmpf oge, %8, %9 : vector<16x256xf32>
    %cst_6 = arith.constant 5.000000e-02 : f32
    %11 = vector.broadcast %cst_6 : f32 to vector<16x256xf32>
    %12 = arith.mulf %11, %8 : vector<16x256xf32>
    %13 = arith.select %10, %8, %12 : vector<16x256xi1>, vector<16x256xf32>
    %c0_7 = arith.constant 0 : index
    %c0_8 = arith.constant 0 : index
    %14 = vector.load %arg4[%c0_7, %c0_8] : memref<16x256xf32, #tpu.memory_space<vmem>>, vector<16x256xf32>
    tpu.vector_store %arg4[%c0_7, %c0_8], %13 {strides = array<i32>} : memref<16x256xf32, #tpu.memory_space<vmem>>, vector<16x256xf32>,
    %15 = vector.extract_strided_slice %6 {offsets = [16, 0], sizes = [8, 256], strides = [1, 1]} : vector<24x256xf32> to vector<8x256xf32>
    %cst_9 = arith.constant 0.000000e+00 : f32
    %16 = vector.broadcast %cst_9 : f32 to vector<8x256xf32>
    %17 = arith.cmpf oge, %15, %16 : vector<8x256xf32>
    %cst_10 = arith.constant 5.000000e-02 : f32
    %18 = vector.broadcast %cst_10 : f32 to vector<8x256xf32>
    %19 = arith.mulf %18, %15 : vector<8x256xf32>
    %20 = arith.select %17, %15, %19 : vector<8x256xi1>, vector<8x256xf32>
    %c0_11 = arith.constant 0 : index
    %c0_12 = arith.constant 0 : index
    %21 = vector.load %arg5[%c0_11, %c0_12] : memref<8x256xf32, #tpu.memory_space<vmem>>, vector<8x256xf32>
    tpu.vector_store %arg5[%c0_11, %c0_12], %20 {strides = array<i32>} : memref<8x256xf32, #tpu.memory_space<vmem>>, vector<8x256xf32>,
    return
  }
  func.func @transform_0(%arg0: i32) -> (i32, i32) {
    %c0_i32 = arith.constant 0 : i32
    %c0_i32_0 = arith.constant 0 : i32
    %c0_i32_1 = arith.constant 0 : i32
    return %c0_i32, %c0_i32_0 : i32, i32
  }
  func.func @transform_1(%arg0: i32) -> (i32, i32) {
    %c0_i32 = arith.constant 0 : i32
    %c0_i32_0 = arith.constant 0 : i32
    return %c0_i32, %arg0 : i32, i32
  }
  func.func @transform_2(%arg0: i32) -> (i32, i32) {
    %c0_i32 = arith.constant 0 : i32
    %c0_i32_0 = arith.constant 0 : i32
    %c0_i32_1 = arith.constant 0 : i32
    return %c0_i32, %c0_i32_0 : i32, i32
  }
  func.func @transform_3(%arg0: i32) -> (i32, i32) {
    %c0_i32 = arith.constant 0 : i32
    %c0_i32_0 = arith.constant 0 : i32
    return %c0_i32, %arg0 : i32, i32
  }
  func.func @transform_4(%arg0: i32) -> (i32, i32) {
    %c0_i32 = arith.constant 0 : i32
    %c0_i32_0 = arith.constant 0 : i32
    return %c0_i32, %arg0 : i32, i32
  }
}

module attributes {stable_mosaic.version = 11 : i64} {
  func.func @_gemm_kernel(%arg0: i32, %arg1: memref<16x8xf32, #tpu.memory_space<vmem>>, %arg2: memref<16x8xf32, #tpu.memory_space<vmem>>, %arg3: memref<16x8xf32, #tpu.memory_space<vmem>>, %arg4: memref<16x8xf32, #tpu.memory_space<vmem>>, %arg5: memref<8x256xf32, #tpu.memory_space<vmem>>, %arg6: memref<8x256xf32, #tpu.memory_space<vmem>>, %arg7: memref<8x256xf32, #tpu.memory_space<vmem>>, %arg8: memref<8x256xf32, #tpu.memory_space<vmem>>, %arg9: memref<16x1xf32, #tpu.memory_space<vmem>>, %arg10: memref<16x256xf32, #tpu.memory_space<vmem>>) attributes {dimension_semantics = [#tpu.dimension_semantics<parallel>], iteration_bounds = array<i64: 2>, scalar_prefetch = 0 : i64, scratch_operands = 0 : i64, tpu.core_type = #tpu.core_type<tc>, window_params = [{pipeline_mode = #tpu.pipeline_mode<synchronous>, transform_indices = @transform_0, window_bounds = array<i64: 16, 8>}, {pipeline_mode = #tpu.pipeline_mode<synchronous>, transform_indices = @transform_1, window_bounds = array<i64: 16, 8>}, {pipeline_mode = #tpu.pipeline_mode<synchronous>, transform_indices = @transform_2, window_bounds = array<i64: 16, 8>}, {pipeline_mode = #tpu.pipeline_mode<synchronous>, transform_indices = @transform_3, window_bounds = array<i64: 16, 8>}, {transform_indices = @transform_4, window_bounds = array<i64: 8, 256>}, {transform_indices = @transform_5, window_bounds = array<i64: 8, 256>}, {transform_indices = @transform_6, window_bounds = array<i64: 8, 256>}, {transform_indices = @transform_7, window_bounds = array<i64: 8, 256>}, {pipeline_mode = #tpu.pipeline_mode<synchronous>, transform_indices = @transform_8, window_bounds = array<i64: 16, 1>}, {transform_indices = @transform_9, window_bounds = array<i64: 16, 256>}]} {
    %c0 = arith.constant 0 : index
    %c0_0 = arith.constant 0 : index
    %0 = vector.load %arg1[%c0, %c0_0] : memref<16x8xf32, #tpu.memory_space<vmem>>, vector<16x8xf32>
    %c0_1 = arith.constant 0 : index
    %c0_2 = arith.constant 0 : index
    %1 = vector.load %arg5[%c0_1, %c0_2] : memref<8x256xf32, #tpu.memory_space<vmem>>, vector<8x256xf32>
    %cst = arith.constant dense<0.000000e+00> : vector<16x256xf32>
    %2 = tpu.matmul %0, %1, %cst {dimension_numbers = #tpu.dot_dimension_numbers<[1], [0], [0], [1], [0, 0, 1, 1], [], []>} : vector<16x8xf32>, vector<8x256xf32>, vector<16x256xf32> -> vector<16x256xf32>
    %c0_3 = arith.constant 0 : index
    %c0_4 = arith.constant 0 : index
    %3 = vector.load %arg2[%c0_3, %c0_4] : memref<16x8xf32, #tpu.memory_space<vmem>>, vector<16x8xf32>
    %c0_5 = arith.constant 0 : index
    %c0_6 = arith.constant 0 : index
    %4 = vector.load %arg6[%c0_5, %c0_6] : memref<8x256xf32, #tpu.memory_space<vmem>>, vector<8x256xf32>
    %cst_7 = arith.constant dense<0.000000e+00> : vector<16x256xf32>
    %5 = tpu.matmul %3, %4, %cst_7 {dimension_numbers = #tpu.dot_dimension_numbers<[1], [0], [0], [1], [0, 0, 1, 1], [], []>} : vector<16x8xf32>, vector<8x256xf32>, vector<16x256xf32> -> vector<16x256xf32>
    %6 = arith.addf %2, %5 : vector<16x256xf32>
    %c0_8 = arith.constant 0 : index
    %c0_9 = arith.constant 0 : index
    %7 = vector.load %arg3[%c0_8, %c0_9] : memref<16x8xf32, #tpu.memory_space<vmem>>, vector<16x8xf32>
    %c0_10 = arith.constant 0 : index
    %c0_11 = arith.constant 0 : index
    %8 = vector.load %arg7[%c0_10, %c0_11] : memref<8x256xf32, #tpu.memory_space<vmem>>, vector<8x256xf32>
    %cst_12 = arith.constant dense<0.000000e+00> : vector<16x256xf32>
    %9 = tpu.matmul %7, %8, %cst_12 {dimension_numbers = #tpu.dot_dimension_numbers<[1], [0], [0], [1], [0, 0, 1, 1], [], []>} : vector<16x8xf32>, vector<8x256xf32>, vector<16x256xf32> -> vector<16x256xf32>
    %10 = arith.addf %6, %9 : vector<16x256xf32>
    %c0_13 = arith.constant 0 : index
    %c0_14 = arith.constant 0 : index
    %11 = vector.load %arg4[%c0_13, %c0_14] : memref<16x8xf32, #tpu.memory_space<vmem>>, vector<16x8xf32>
    %c0_15 = arith.constant 0 : index
    %c0_16 = arith.constant 0 : index
    %12 = vector.load %arg8[%c0_15, %c0_16] : memref<8x256xf32, #tpu.memory_space<vmem>>, vector<8x256xf32>
    %cst_17 = arith.constant dense<0.000000e+00> : vector<16x256xf32>
    %13 = tpu.matmul %11, %12, %cst_17 {dimension_numbers = #tpu.dot_dimension_numbers<[1], [0], [0], [1], [0, 0, 1, 1], [], []>} : vector<16x8xf32>, vector<8x256xf32>, vector<16x256xf32> -> vector<16x256xf32>
    %14 = arith.addf %10, %13 : vector<16x256xf32>
    %c0_18 = arith.constant 0 : index
    %c0_19 = arith.constant 0 : index
    %15 = vector.load %arg9[%c0_18, %c0_19] : memref<16x1xf32, #tpu.memory_space<vmem>>, vector<16x1xf32>
    %16 = vector.broadcast %15 : vector<16x1xf32> to vector<16x256xf32>
    %17 = arith.addf %14, %16 : vector<16x256xf32>
    %c0_20 = arith.constant 0 : index
    %c0_21 = arith.constant 0 : index
    %18 = vector.load %arg10[%c0_20, %c0_21] : memref<16x256xf32, #tpu.memory_space<vmem>>, vector<16x256xf32>
    tpu.vector_store %arg10[%c0_20, %c0_21], %17 {strides = array<i32>} : memref<16x256xf32, #tpu.memory_space<vmem>>, vector<16x256xf32>,
    return
  }
  func.func @transform_0(%arg0: i32) -> (i32, i32) {
    %c0_i32 = arith.constant 0 : i32
    %c0_i32_0 = arith.constant 0 : i32
    %c0_i32_1 = arith.constant 0 : i32
    return %c0_i32, %c0_i32_0 : i32, i32
  }
  func.func @transform_1(%arg0: i32) -> (i32, i32) {
    %c0_i32 = arith.constant 0 : i32
    %c0_i32_0 = arith.constant 0 : i32
    %c0_i32_1 = arith.constant 0 : i32
    return %c0_i32, %c0_i32_0 : i32, i32
  }
  func.func @transform_2(%arg0: i32) -> (i32, i32) {
    %c0_i32 = arith.constant 0 : i32
    %c0_i32_0 = arith.constant 0 : i32
    %c0_i32_1 = arith.constant 0 : i32
    return %c0_i32, %c0_i32_0 : i32, i32
  }
  func.func @transform_3(%arg0: i32) -> (i32, i32) {
    %c0_i32 = arith.constant 0 : i32
    %c0_i32_0 = arith.constant 0 : i32
    %c0_i32_1 = arith.constant 0 : i32
    return %c0_i32, %c0_i32_0 : i32, i32
  }
  func.func @transform_4(%arg0: i32) -> (i32, i32) {
    %c0_i32 = arith.constant 0 : i32
    %c0_i32_0 = arith.constant 0 : i32
    return %c0_i32, %arg0 : i32, i32
  }
  func.func @transform_5(%arg0: i32) -> (i32, i32) {
    %c0_i32 = arith.constant 0 : i32
    %c0_i32_0 = arith.constant 0 : i32
    return %c0_i32, %arg0 : i32, i32
  }
  func.func @transform_6(%arg0: i32) -> (i32, i32) {
    %c0_i32 = arith.constant 0 : i32
    %c0_i32_0 = arith.constant 0 : i32
    return %c0_i32, %arg0 : i32, i32
  }
  func.func @transform_7(%arg0: i32) -> (i32, i32) {
    %c0_i32 = arith.constant 0 : i32
    %c0_i32_0 = arith.constant 0 : i32
    return %c0_i32, %arg0 : i32, i32
  }
  func.func @transform_8(%arg0: i32) -> (i32, i32) {
    %c0_i32 = arith.constant 0 : i32
    %c0_i32_0 = arith.constant 0 : i32
    %c0_i32_1 = arith.constant 0 : i32
    return %c0_i32, %c0_i32_0 : i32, i32
  }
  func.func @transform_9(%arg0: i32) -> (i32, i32) {
    %c0_i32 = arith.constant 0 : i32
    %c0_i32_0 = arith.constant 0 : i32
    return %c0_i32, %arg0 : i32, i32
  }
}

module attributes {stable_mosaic.version = 11 : i64} {
  func.func @_gemm_kernel(%arg0: i32, %arg1: memref<4x16xf32, #tpu.memory_space<vmem>>, %arg2: memref<16x256xf32, #tpu.memory_space<vmem>>, %arg3: memref<4x1xf32, #tpu.memory_space<vmem>>, %arg4: memref<4x256xf32, #tpu.memory_space<vmem>>) attributes {dimension_semantics = [#tpu.dimension_semantics<parallel>], iteration_bounds = array<i64: 2>, scalar_prefetch = 0 : i64, scratch_operands = 0 : i64, tpu.core_type = #tpu.core_type<tc>, window_params = [{pipeline_mode = #tpu.pipeline_mode<synchronous>, transform_indices = @transform_0, window_bounds = array<i64: 4, 16>}, {transform_indices = @transform_1, window_bounds = array<i64: 16, 256>}, {pipeline_mode = #tpu.pipeline_mode<synchronous>, transform_indices = @transform_2, window_bounds = array<i64: 4, 1>}, {transform_indices = @transform_3, window_bounds = array<i64: 4, 256>}]} {
    %c0 = arith.constant 0 : index
    %c0_0 = arith.constant 0 : index
    %0 = vector.load %arg1[%c0, %c0_0] : memref<4x16xf32, #tpu.memory_space<vmem>>, vector<4x16xf32>
    %c0_1 = arith.constant 0 : index
    %c0_2 = arith.constant 0 : index
    %1 = vector.load %arg2[%c0_1, %c0_2] : memref<16x256xf32, #tpu.memory_space<vmem>>, vector<16x256xf32>
    %cst = arith.constant dense<0.000000e+00> : vector<4x256xf32>
    %2 = tpu.matmul %0, %1, %cst {dimension_numbers = #tpu.dot_dimension_numbers<[1], [0], [0], [1], [0, 0, 1, 1], [], []>} : vector<4x16xf32>, vector<16x256xf32>, vector<4x256xf32> -> vector<4x256xf32>
    %c0_3 = arith.constant 0 : index
    %c0_4 = arith.constant 0 : index
    %3 = vector.load %arg3[%c0_3, %c0_4] : memref<4x1xf32, #tpu.memory_space<vmem>>, vector<4x1xf32>
    %4 = vector.broadcast %3 : vector<4x1xf32> to vector<4x256xf32>
    %5 = arith.addf %2, %4 : vector<4x256xf32>
    %c0_5 = arith.constant 0 : index
    %c0_6 = arith.constant 0 : index
    %6 = vector.load %arg4[%c0_5, %c0_6] : memref<4x256xf32, #tpu.memory_space<vmem>>, vector<4x256xf32>
    tpu.vector_store %arg4[%c0_5, %c0_6], %5 {strides = array<i32>} : memref<4x256xf32, #tpu.memory_space<vmem>>, vector<4x256xf32>,
    return
  }
  func.func @transform_0(%arg0: i32) -> (i32, i32) {
    %c0_i32 = arith.constant 0 : i32
    %c0_i32_0 = arith.constant 0 : i32
    %c0_i32_1 = arith.constant 0 : i32
    return %c0_i32, %c0_i32_0 : i32, i32
  }
  func.func @transform_1(%arg0: i32) -> (i32, i32) {
    %c0_i32 = arith.constant 0 : i32
    %c0_i32_0 = arith.constant 0 : i32
    return %c0_i32, %arg0 : i32, i32
  }
  func.func @transform_2(%arg0: i32) -> (i32, i32) {
    %c0_i32 = arith.constant 0 : i32
    %c0_i32_0 = arith.constant 0 : i32
    %c0_i32_1 = arith.constant 0 : i32
    return %c0_i32, %c0_i32_0 : i32, i32
  }
  func.func @transform_3(%arg0: i32) -> (i32, i32) {
    %c0_i32 = arith.constant 0 : i32
    %c0_i32_0 = arith.constant 0 : i32
    return %c0_i32, %arg0 : i32, i32
  }
}

module attributes {stable_mosaic.version = 11 : i64} {
  func.func @_gemm_kernel(%arg0: i32, %arg1: memref<4x36xf32, #tpu.memory_space<vmem>>, %arg2: memref<36x128xf32, #tpu.memory_space<vmem>>, %arg3: memref<4x1xf32, #tpu.memory_space<vmem>>, %arg4: memref<4x128xf32, #tpu.memory_space<vmem>>) attributes {dimension_semantics = [#tpu.dimension_semantics<parallel>], iteration_bounds = array<i64: 1>, scalar_prefetch = 0 : i64, scratch_operands = 0 : i64, tpu.core_type = #tpu.core_type<tc>, window_params = [{pipeline_mode = #tpu.pipeline_mode<synchronous>, transform_indices = @transform_0, window_bounds = array<i64: 4, 36>}, {transform_indices = @transform_1, window_bounds = array<i64: 36, 128>}, {pipeline_mode = #tpu.pipeline_mode<synchronous>, transform_indices = @transform_2, window_bounds = array<i64: 4, 1>}, {transform_indices = @transform_3, window_bounds = array<i64: 4, 128>}]} {
    %c0 = arith.constant 0 : index
    %c0_0 = arith.constant 0 : index
    %0 = vector.load %arg1[%c0, %c0_0] : memref<4x36xf32, #tpu.memory_space<vmem>>, vector<4x36xf32>
    %c0_1 = arith.constant 0 : index
    %c0_2 = arith.constant 0 : index
    %1 = vector.load %arg2[%c0_1, %c0_2] : memref<36x128xf32, #tpu.memory_space<vmem>>, vector<36x128xf32>
    %cst = arith.constant dense<0.000000e+00> : vector<4x128xf32>
    %2 = tpu.matmul %0, %1, %cst {dimension_numbers = #tpu.dot_dimension_numbers<[1], [0], [0], [1], [0, 0, 1, 1], [], []>} : vector<4x36xf32>, vector<36x128xf32>, vector<4x128xf32> -> vector<4x128xf32>
    %c0_3 = arith.constant 0 : index
    %c0_4 = arith.constant 0 : index
    %3 = vector.load %arg3[%c0_3, %c0_4] : memref<4x1xf32, #tpu.memory_space<vmem>>, vector<4x1xf32>
    %4 = vector.broadcast %3 : vector<4x1xf32> to vector<4x128xf32>
    %5 = arith.addf %2, %4 : vector<4x128xf32>
    %c0_5 = arith.constant 0 : index
    %c0_6 = arith.constant 0 : index
    %6 = vector.load %arg4[%c0_5, %c0_6] : memref<4x128xf32, #tpu.memory_space<vmem>>, vector<4x128xf32>
    tpu.vector_store %arg4[%c0_5, %c0_6], %5 {strides = array<i32>} : memref<4x128xf32, #tpu.memory_space<vmem>>, vector<4x128xf32>,
    return
  }
  func.func @transform_0(%arg0: i32) -> (i32, i32) {
    %c0_i32 = arith.constant 0 : i32
    %c0_i32_0 = arith.constant 0 : i32
    %c0_i32_1 = arith.constant 0 : i32
    return %c0_i32, %c0_i32_0 : i32, i32
  }
  func.func @transform_1(%arg0: i32) -> (i32, i32) {
    %c0_i32 = arith.constant 0 : i32
    %c0_i32_0 = arith.constant 0 : i32
    return %c0_i32, %arg0 : i32, i32
  }
  func.func @transform_2(%arg0: i32) -> (i32, i32) {
    %c0_i32 = arith.constant 0 : i32
    %c0_i32_0 = arith.constant 0 : i32
    %c0_i32_1 = arith.constant 0 : i32
    return %c0_i32, %c0_i32_0 : i32, i32
  }
  func.func @transform_3(%arg0: i32) -> (i32, i32) {
    %c0_i32 = arith.constant 0 : i32
    %c0_i32_0 = arith.constant 0 : i32
    return %c0_i32, %arg0 : i32, i32
  }
}

module attributes {stable_mosaic.version = 11 : i64} {
  func.func @_gemm_kernel(%arg0: i32, %arg1: memref<4x36xf32, #tpu.memory_space<vmem>>, %arg2: memref<36x128xf32, #tpu.memory_space<vmem>>, %arg3: memref<4x1xf32, #tpu.memory_space<vmem>>, %arg4: memref<4x128xf32, #tpu.memory_space<vmem>>) attributes {dimension_semantics = [#tpu.dimension_semantics<parallel>], iteration_bounds = array<i64: 1>, scalar_prefetch = 0 : i64, scratch_operands = 0 : i64, tpu.core_type = #tpu.core_type<tc>, window_params = [{pipeline_mode = #tpu.pipeline_mode<synchronous>, transform_indices = @transform_0, window_bounds = array<i64: 4, 36>}, {transform_indices = @transform_1, window_bounds = array<i64: 36, 128>}, {pipeline_mode = #tpu.pipeline_mode<synchronous>, transform_indices = @transform_2, window_bounds = array<i64: 4, 1>}, {transform_indices = @transform_3, window_bounds = array<i64: 4, 128>}]} {
    %c0 = arith.constant 0 : index
    %c0_0 = arith.constant 0 : index
    %0 = vector.load %arg1[%c0, %c0_0] : memref<4x36xf32, #tpu.memory_space<vmem>>, vector<4x36xf32>
    %c0_1 = arith.constant 0 : index
    %c0_2 = arith.constant 0 : index
    %1 = vector.load %arg2[%c0_1, %c0_2] : memref<36x128xf32, #tpu.memory_space<vmem>>, vector<36x128xf32>
    %cst = arith.constant dense<0.000000e+00> : vector<4x128xf32>
    %2 = tpu.matmul %0, %1, %cst {dimension_numbers = #tpu.dot_dimension_numbers<[1], [0], [0], [1], [0, 0, 1, 1], [], []>} : vector<4x36xf32>, vector<36x128xf32>, vector<4x128xf32> -> vector<4x128xf32>
    %c0_3 = arith.constant 0 : index
    %c0_4 = arith.constant 0 : index
    %3 = vector.load %arg3[%c0_3, %c0_4] : memref<4x1xf32, #tpu.memory_space<vmem>>, vector<4x1xf32>
    %4 = vector.broadcast %3 : vector<4x1xf32> to vector<4x128xf32>
    %5 = arith.addf %2, %4 : vector<4x128xf32>
    %cst_5 = arith.constant 0.000000e+00 : f32
    %6 = vector.broadcast %cst_5 : f32 to vector<4x128xf32>
    %7 = arith.maximumf %5, %6 : vector<4x128xf32>
    %c0_6 = arith.constant 0 : index
    %c0_7 = arith.constant 0 : index
    %8 = vector.load %arg4[%c0_6, %c0_7] : memref<4x128xf32, #tpu.memory_space<vmem>>, vector<4x128xf32>
    tpu.vector_store %arg4[%c0_6, %c0_7], %7 {strides = array<i32>} : memref<4x128xf32, #tpu.memory_space<vmem>>, vector<4x128xf32>,
    return
  }
  func.func @transform_0(%arg0: i32) -> (i32, i32) {
    %c0_i32 = arith.constant 0 : i32
    %c0_i32_0 = arith.constant 0 : i32
    %c0_i32_1 = arith.constant 0 : i32
    return %c0_i32, %c0_i32_0 : i32, i32
  }
  func.func @transform_1(%arg0: i32) -> (i32, i32) {
    %c0_i32 = arith.constant 0 : i32
    %c0_i32_0 = arith.constant 0 : i32
    return %c0_i32, %arg0 : i32, i32
  }
  func.func @transform_2(%arg0: i32) -> (i32, i32) {
    %c0_i32 = arith.constant 0 : i32
    %c0_i32_0 = arith.constant 0 : i32
    %c0_i32_1 = arith.constant 0 : i32
    return %c0_i32, %c0_i32_0 : i32, i32
  }
  func.func @transform_3(%arg0: i32) -> (i32, i32) {
    %c0_i32 = arith.constant 0 : i32
    %c0_i32_0 = arith.constant 0 : i32
    return %c0_i32, %arg0 : i32, i32
  }
}

module attributes {stable_mosaic.version = 11 : i64} {
  func.func @_gemm_kernel(%arg0: i32, %arg1: memref<4x4xf32, #tpu.memory_space<vmem>>, %arg2: memref<4x256xf32, #tpu.memory_space<vmem>>, %arg3: memref<4x1xf32, #tpu.memory_space<vmem>>, %arg4: memref<4x256xf32, #tpu.memory_space<vmem>>, %arg5: memref<4x256xf32, #tpu.memory_space<vmem>>) attributes {dimension_semantics = [#tpu.dimension_semantics<parallel>], iteration_bounds = array<i64: 2>, scalar_prefetch = 0 : i64, scratch_operands = 0 : i64, tpu.core_type = #tpu.core_type<tc>, window_params = [{pipeline_mode = #tpu.pipeline_mode<synchronous>, transform_indices = @transform_0, window_bounds = array<i64: 4, 4>}, {transform_indices = @transform_1, window_bounds = array<i64: 4, 256>}, {pipeline_mode = #tpu.pipeline_mode<synchronous>, transform_indices = @transform_2, window_bounds = array<i64: 4, 1>}, {transform_indices = @transform_3, window_bounds = array<i64: 4, 256>}, {transform_indices = @transform_4, window_bounds = array<i64: 4, 256>}]} {
    %c0 = arith.constant 0 : index
    %c0_0 = arith.constant 0 : index
    %0 = vector.load %arg1[%c0, %c0_0] : memref<4x4xf32, #tpu.memory_space<vmem>>, vector<4x4xf32>
    %c0_1 = arith.constant 0 : index
    %c0_2 = arith.constant 0 : index
    %1 = vector.load %arg2[%c0_1, %c0_2] : memref<4x256xf32, #tpu.memory_space<vmem>>, vector<4x256xf32>
    %cst = arith.constant dense<0.000000e+00> : vector<4x256xf32>
    %2 = tpu.matmul %0, %1, %cst {dimension_numbers = #tpu.dot_dimension_numbers<[1], [0], [0], [1], [0, 0, 1, 1], [], []>} : vector<4x4xf32>, vector<4x256xf32>, vector<4x256xf32> -> vector<4x256xf32>
    %c0_3 = arith.constant 0 : index
    %c0_4 = arith.constant 0 : index
    %3 = vector.load %arg3[%c0_3, %c0_4] : memref<4x1xf32, #tpu.memory_space<vmem>>, vector<4x1xf32>
    %4 = vector.broadcast %3 : vector<4x1xf32> to vector<4x256xf32>
    %5 = arith.addf %2, %4 : vector<4x256xf32>
    %c0_5 = arith.constant 0 : index
    %c0_6 = arith.constant 0 : index
    %6 = vector.load %arg4[%c0_5, %c0_6] : memref<4x256xf32, #tpu.memory_space<vmem>>, vector<4x256xf32>
    %7 = arith.addf %5, %6 : vector<4x256xf32>
    %c0_7 = arith.constant 0 : index
    %c0_8 = arith.constant 0 : index
    %8 = vector.load %arg5[%c0_7, %c0_8] : memref<4x256xf32, #tpu.memory_space<vmem>>, vector<4x256xf32>
    tpu.vector_store %arg5[%c0_7, %c0_8], %7 {strides = array<i32>} : memref<4x256xf32, #tpu.memory_space<vmem>>, vector<4x256xf32>,
    return
  }
  func.func @transform_0(%arg0: i32) -> (i32, i32) {
    %c0_i32 = arith.constant 0 : i32
    %c0_i32_0 = arith.constant 0 : i32
    %c0_i32_1 = arith.constant 0 : i32
    return %c0_i32, %c0_i32_0 : i32, i32
  }
  func.func @transform_1(%arg0: i32) -> (i32, i32) {
    %c0_i32 = arith.constant 0 : i32
    %c0_i32_0 = arith.constant 0 : i32
    return %c0_i32, %arg0 : i32, i32
  }
  func.func @transform_2(%arg0: i32) -> (i32, i32) {
    %c0_i32 = arith.constant 0 : i32
    %c0_i32_0 = arith.constant 0 : i32
    %c0_i32_1 = arith.constant 0 : i32
    return %c0_i32, %c0_i32_0 : i32, i32
  }
  func.func @transform_3(%arg0: i32) -> (i32, i32) {
    %c0_i32 = arith.constant 0 : i32
    %c0_i32_0 = arith.constant 0 : i32
    return %c0_i32, %arg0 : i32, i32
  }
  func.func @transform_4(%arg0: i32) -> (i32, i32) {
    %c0_i32 = arith.constant 0 : i32
    %c0_i32_0 = arith.constant 0 : i32
    return %c0_i32, %arg0 : i32, i32
  }
}

module attributes {stable_mosaic.version = 11 : i64} {
  func.func @_gemm_kernel(%arg0: i32, %arg1: memref<16x4xf32, #tpu.memory_space<vmem>>, %arg2: memref<4x256xf32, #tpu.memory_space<vmem>>, %arg3: memref<16x1xf32, #tpu.memory_space<vmem>>, %arg4: memref<16x256xf32, #tpu.memory_space<vmem>>, %arg5: memref<16x256xf32, #tpu.memory_space<vmem>>) attributes {dimension_semantics = [#tpu.dimension_semantics<parallel>], iteration_bounds = array<i64: 2>, scalar_prefetch = 0 : i64, scratch_operands = 0 : i64, tpu.core_type = #tpu.core_type<tc>, window_params = [{pipeline_mode = #tpu.pipeline_mode<synchronous>, transform_indices = @transform_0, window_bounds = array<i64: 16, 4>}, {transform_indices = @transform_1, window_bounds = array<i64: 4, 256>}, {pipeline_mode = #tpu.pipeline_mode<synchronous>, transform_indices = @transform_2, window_bounds = array<i64: 16, 1>}, {transform_indices = @transform_3, window_bounds = array<i64: 16, 256>}, {transform_indices = @transform_4, window_bounds = array<i64: 16, 256>}]} {
    %c0 = arith.constant 0 : index
    %c0_0 = arith.constant 0 : index
    %0 = vector.load %arg1[%c0, %c0_0] : memref<16x4xf32, #tpu.memory_space<vmem>>, vector<16x4xf32>
    %c0_1 = arith.constant 0 : index
    %c0_2 = arith.constant 0 : index
    %1 = vector.load %arg2[%c0_1, %c0_2] : memref<4x256xf32, #tpu.memory_space<vmem>>, vector<4x256xf32>
    %cst = arith.constant dense<0.000000e+00> : vector<16x256xf32>
    %2 = tpu.matmul %0, %1, %cst {dimension_numbers = #tpu.dot_dimension_numbers<[1], [0], [0], [1], [0, 0, 1, 1], [], []>} : vector<16x4xf32>, vector<4x256xf32>, vector<16x256xf32> -> vector<16x256xf32>
    %c0_3 = arith.constant 0 : index
    %c0_4 = arith.constant 0 : index
    %3 = vector.load %arg3[%c0_3, %c0_4] : memref<16x1xf32, #tpu.memory_space<vmem>>, vector<16x1xf32>
    %4 = vector.broadcast %3 : vector<16x1xf32> to vector<16x256xf32>
    %5 = arith.addf %2, %4 : vector<16x256xf32>
    %c0_5 = arith.constant 0 : index
    %c0_6 = arith.constant 0 : index
    %6 = vector.load %arg4[%c0_5, %c0_6] : memref<16x256xf32, #tpu.memory_space<vmem>>, vector<16x256xf32>
    %7 = arith.negf %5 : vector<16x256xf32>
    %8 = math.exp %7 : vector<16x256xf32>
    %cst_7 = arith.constant 1.000000e+00 : f32
    %9 = vector.broadcast %cst_7 : f32 to vector<16x256xf32>
    %10 = arith.addf %9, %8 : vector<16x256xf32>
    %11 = arith.divf %9, %10 : vector<16x256xf32>
    %12 = arith.mulf %6, %11 : vector<16x256xf32>
    %c0_8 = arith.constant 0 : index
    %c0_9 = arith.constant 0 : index
    %13 = vector.load %arg5[%c0_8, %c0_9] : memref<16x256xf32, #tpu.memory_space<vmem>>, vector<16x256xf32>
    tpu.vector_store %arg5[%c0_8, %c0_9], %12 {strides = array<i32>} : memref<16x256xf32, #tpu.memory_space<vmem>>, vector<16x256xf32>,
    return
  }
  func.func @transform_0(%arg0: i32) -> (i32, i32) {
    %c0_i32 = arith.constant 0 : i32
    %c0_i32_0 = arith.constant 0 : i32
    %c0_i32_1 = arith.constant 0 : i32
    return %c0_i32, %c0_i32_0 : i32, i32
  }
  func.func @transform_1(%arg0: i32) -> (i32, i32) {
    %c0_i32 = arith.constant 0 : i32
    %c0_i32_0 = arith.constant 0 : i32
    return %c0_i32, %arg0 : i32, i32
  }
  func.func @transform_2(%arg0: i32) -> (i32, i32) {
    %c0_i32 = arith.constant 0 : i32
    %c0_i32_0 = arith.constant 0 : i32
    %c0_i32_1 = arith.constant 0 : i32
    return %c0_i32, %c0_i32_0 : i32, i32
  }
  func.func @transform_3(%arg0: i32) -> (i32, i32) {
    %c0_i32 = arith.constant 0 : i32
    %c0_i32_0 = arith.constant 0 : i32
    return %c0_i32, %arg0 : i32, i32
  }
  func.func @transform_4(%arg0: i32) -> (i32, i32) {
    %c0_i32 = arith.constant 0 : i32
    %c0_i32_0 = arith.constant 0 : i32
    return %c0_i32, %arg0 : i32, i32
  }
}

module attributes {stable_mosaic.version = 11 : i64} {
  func.func @_gemm_kernel(%arg0: i32, %arg1: memref<16x16xf32, #tpu.memory_space<vmem>>, %arg2: memref<16x16xf32, #tpu.memory_space<vmem>>, %arg3: memref<16x16xf32, #tpu.memory_space<vmem>>, %arg4: memref<16x16xf32, #tpu.memory_space<vmem>>, %arg5: memref<16x256xf32, #tpu.memory_space<vmem>>, %arg6: memref<16x256xf32, #tpu.memory_space<vmem>>, %arg7: memref<16x256xf32, #tpu.memory_space<vmem>>, %arg8: memref<16x256xf32, #tpu.memory_space<vmem>>, %arg9: memref<16x1xf32, #tpu.memory_space<vmem>>, %arg10: memref<16x256xf32, #tpu.memory_space<vmem>>) attributes {dimension_semantics = [#tpu.dimension_semantics<parallel>], iteration_bounds = array<i64: 2>, scalar_prefetch = 0 : i64, scratch_operands = 0 : i64, tpu.core_type = #tpu.core_type<tc>, window_params = [{pipeline_mode = #tpu.pipeline_mode<synchronous>, transform_indices = @transform_0, window_bounds = array<i64: 16, 16>}, {pipeline_mode = #tpu.pipeline_mode<synchronous>, transform_indices = @transform_1, window_bounds = array<i64: 16, 16>}, {pipeline_mode = #tpu.pipeline_mode<synchronous>, transform_indices = @transform_2, window_bounds = array<i64: 16, 16>}, {pipeline_mode = #tpu.pipeline_mode<synchronous>, transform_indices = @transform_3, window_bounds = array<i64: 16, 16>}, {transform_indices = @transform_4, window_bounds = array<i64: 16, 256>}, {transform_indices = @transform_5, window_bounds = array<i64: 16, 256>}, {transform_indices = @transform_6, window_bounds = array<i64: 16, 256>}, {transform_indices = @transform_7, window_bounds = array<i64: 16, 256>}, {pipeline_mode = #tpu.pipeline_mode<synchronous>, transform_indices = @transform_8, window_bounds = array<i64: 16, 1>}, {transform_indices = @transform_9, window_bounds = array<i64: 16, 256>}]} {
    %c0 = arith.constant 0 : index
    %c0_0 = arith.constant 0 : index
    %0 = vector.load %arg1[%c0, %c0_0] : memref<16x16xf32, #tpu.memory_space<vmem>>, vector<16x16xf32>
    %c0_1 = arith.constant 0 : index
    %c0_2 = arith.constant 0 : index
    %1 = vector.load %arg5[%c0_1, %c0_2] : memref<16x256xf32, #tpu.memory_space<vmem>>, vector<16x256xf32>
    %cst = arith.constant dense<0.000000e+00> : vector<16x256xf32>
    %2 = tpu.matmul %0, %1, %cst {dimension_numbers = #tpu.dot_dimension_numbers<[1], [0], [0], [1], [0, 0, 1, 1], [], []>} : vector<16x16xf32>, vector<16x256xf32>, vector<16x256xf32> -> vector<16x256xf32>
    %c0_3 = arith.constant 0 : index
    %c0_4 = arith.constant 0 : index
    %3 = vector.load %arg2[%c0_3, %c0_4] : memref<16x16xf32, #tpu.memory_space<vmem>>, vector<16x16xf32>
    %c0_5 = arith.constant 0 : index
    %c0_6 = arith.constant 0 : index
    %4 = vector.load %arg6[%c0_5, %c0_6] : memref<16x256xf32, #tpu.memory_space<vmem>>, vector<16x256xf32>
    %cst_7 = arith.constant dense<0.000000e+00> : vector<16x256xf32>
    %5 = tpu.matmul %3, %4, %cst_7 {dimension_numbers = #tpu.dot_dimension_numbers<[1], [0], [0], [1], [0, 0, 1, 1], [], []>} : vector<16x16xf32>, vector<16x256xf32>, vector<16x256xf32> -> vector<16x256xf32>
    %6 = arith.addf %2, %5 : vector<16x256xf32>
    %c0_8 = arith.constant 0 : index
    %c0_9 = arith.constant 0 : index
    %7 = vector.load %arg3[%c0_8, %c0_9] : memref<16x16xf32, #tpu.memory_space<vmem>>, vector<16x16xf32>
    %c0_10 = arith.constant 0 : index
    %c0_11 = arith.constant 0 : index
    %8 = vector.load %arg7[%c0_10, %c0_11] : memref<16x256xf32, #tpu.memory_space<vmem>>, vector<16x256xf32>
    %cst_12 = arith.constant dense<0.000000e+00> : vector<16x256xf32>
    %9 = tpu.matmul %7, %8, %cst_12 {dimension_numbers = #tpu.dot_dimension_numbers<[1], [0], [0], [1], [0, 0, 1, 1], [], []>} : vector<16x16xf32>, vector<16x256xf32>, vector<16x256xf32> -> vector<16x256xf32>
    %10 = arith.addf %6, %9 : vector<16x256xf32>
    %c0_13 = arith.constant 0 : index
    %c0_14 = arith.constant 0 : index
    %11 = vector.load %arg4[%c0_13, %c0_14] : memref<16x16xf32, #tpu.memory_space<vmem>>, vector<16x16xf32>
    %c0_15 = arith.constant 0 : index
    %c0_16 = arith.constant 0 : index
    %12 = vector.load %arg8[%c0_15, %c0_16] : memref<16x256xf32, #tpu.memory_space<vmem>>, vector<16x256xf32>
    %cst_17 = arith.constant dense<0.000000e+00> : vector<16x256xf32>
    %13 = tpu.matmul %11, %12, %cst_17 {dimension_numbers = #tpu.dot_dimension_numbers<[1], [0], [0], [1], [0, 0, 1, 1], [], []>} : vector<16x16xf32>, vector<16x256xf32>, vector<16x256xf32> -> vector<16x256xf32>
    %14 = arith.addf %10, %13 : vector<16x256xf32>
    %c0_18 = arith.constant 0 : index
    %c0_19 = arith.constant 0 : index
    %15 = vector.load %arg9[%c0_18, %c0_19] : memref<16x1xf32, #tpu.memory_space<vmem>>, vector<16x1xf32>
    %16 = vector.broadcast %15 : vector<16x1xf32> to vector<16x256xf32>
    %17 = arith.addf %14, %16 : vector<16x256xf32>
    %cst_20 = arith.constant 0.000000e+00 : f32
    %18 = vector.broadcast %cst_20 : f32 to vector<16x256xf32>
    %19 = arith.cmpf oge, %17, %18 : vector<16x256xf32>
    %cst_21 = arith.constant 5.000000e-02 : f32
    %20 = vector.broadcast %cst_21 : f32 to vector<16x256xf32>
    %21 = arith.mulf %20, %17 : vector<16x256xf32>
    %22 = arith.select %19, %17, %21 : vector<16x256xi1>, vector<16x256xf32>
    %c0_22 = arith.constant 0 : index
    %c0_23 = arith.constant 0 : index
    %23 = vector.load %arg10[%c0_22, %c0_23] : memref<16x256xf32, #tpu.memory_space<vmem>>, vector<16x256xf32>
    tpu.vector_store %arg10[%c0_22, %c0_23], %22 {strides = array<i32>} : memref<16x256xf32, #tpu.memory_space<vmem>>, vector<16x256xf32>,
    return
  }
  func.func @transform_0(%arg0: i32) -> (i32, i32) {
    %c0_i32 = arith.constant 0 : i32
    %c0_i32_0 = arith.constant 0 : i32
    %c0_i32_1 = arith.constant 0 : i32
    return %c0_i32, %c0_i32_0 : i32, i32
  }
  func.func @transform_1(%arg0: i32) -> (i32, i32) {
    %c0_i32 = arith.constant 0 : i32
    %c0_i32_0 = arith.constant 0 : i32
    %c0_i32_1 = arith.constant 0 : i32
    return %c0_i32, %c0_i32_0 : i32, i32
  }
  func.func @transform_2(%arg0: i32) -> (i32, i32) {
    %c0_i32 = arith.constant 0 : i32
    %c0_i32_0 = arith.constant 0 : i32
    %c0_i32_1 = arith.constant 0 : i32
    return %c0_i32, %c0_i32_0 : i32, i32
  }
  func.func @transform_3(%arg0: i32) -> (i32, i32) {
    %c0_i32 = arith.constant 0 : i32
    %c0_i32_0 = arith.constant 0 : i32
    %c0_i32_1 = arith.constant 0 : i32
    return %c0_i32, %c0_i32_0 : i32, i32
  }
  func.func @transform_4(%arg0: i32) -> (i32, i32) {
    %c0_i32 = arith.constant 0 : i32
    %c0_i32_0 = arith.constant 0 : i32
    return %c0_i32, %arg0 : i32, i32
  }
  func.func @transform_5(%arg0: i32) -> (i32, i32) {
    %c0_i32 = arith.constant 0 : i32
    %c0_i32_0 = arith.constant 0 : i32
    return %c0_i32, %arg0 : i32, i32
  }
  func.func @transform_6(%arg0: i32) -> (i32, i32) {
    %c0_i32 = arith.constant 0 : i32
    %c0_i32_0 = arith.constant 0 : i32
    return %c0_i32, %arg0 : i32, i32
  }
  func.func @transform_7(%arg0: i32) -> (i32, i32) {
    %c0_i32 = arith.constant 0 : i32
    %c0_i32_0 = arith.constant 0 : i32
    return %c0_i32, %arg0 : i32, i32
  }
  func.func @transform_8(%arg0: i32) -> (i32, i32) {
    %c0_i32 = arith.constant 0 : i32
    %c0_i32_0 = arith.constant 0 : i32
    %c0_i32_1 = arith.constant 0 : i32
    return %c0_i32, %c0_i32_0 : i32, i32
  }
  func.func @transform_9(%arg0: i32) -> (i32, i32) {
    %c0_i32 = arith.constant 0 : i32
    %c0_i32_0 = arith.constant 0 : i32
    return %c0_i32, %arg0 : i32, i32
  }
}

module attributes {stable_mosaic.version = 11 : i64} {
  func.func @_gemm_kernel(%arg0: i32, %arg1: memref<16x144xf32, #tpu.memory_space<vmem>>, %arg2: memref<144x256xf32, #tpu.memory_space<vmem>>, %arg3: memref<16x1xf32, #tpu.memory_space<vmem>>, %arg4: memref<16x256xf32, #tpu.memory_space<vmem>>, %arg5: memref<16x256xf32, #tpu.memory_space<vmem>>) attributes {dimension_semantics = [#tpu.dimension_semantics<parallel>], iteration_bounds = array<i64: 2>, scalar_prefetch = 0 : i64, scratch_operands = 0 : i64, tpu.core_type = #tpu.core_type<tc>, window_params = [{pipeline_mode = #tpu.pipeline_mode<synchronous>, transform_indices = @transform_0, window_bounds = array<i64: 16, 144>}, {transform_indices = @transform_1, window_bounds = array<i64: 144, 256>}, {pipeline_mode = #tpu.pipeline_mode<synchronous>, transform_indices = @transform_2, window_bounds = array<i64: 16, 1>}, {transform_indices = @transform_3, window_bounds = array<i64: 16, 256>}, {transform_indices = @transform_4, window_bounds = array<i64: 16, 256>}]} {
    %c0 = arith.constant 0 : index
    %c0_0 = arith.constant 0 : index
    %0 = vector.load %arg1[%c0, %c0_0] : memref<16x144xf32, #tpu.memory_space<vmem>>, vector<16x144xf32>
    %c0_1 = arith.constant 0 : index
    %c0_2 = arith.constant 0 : index
    %1 = vector.load %arg2[%c0_1, %c0_2] : memref<144x256xf32, #tpu.memory_space<vmem>>, vector<144x256xf32>
    %cst = arith.constant dense<0.000000e+00> : vector<16x256xf32>
    %2 = tpu.matmul %0, %1, %cst {dimension_numbers = #tpu.dot_dimension_numbers<[1], [0], [0], [1], [0, 0, 1, 1], [], []>} : vector<16x144xf32>, vector<144x256xf32>, vector<16x256xf32> -> vector<16x256xf32>
    %c0_3 = arith.constant 0 : index
    %c0_4 = arith.constant 0 : index
    %3 = vector.load %arg3[%c0_3, %c0_4] : memref<16x1xf32, #tpu.memory_space<vmem>>, vector<16x1xf32>
    %4 = vector.broadcast %3 : vector<16x1xf32> to vector<16x256xf32>
    %5 = arith.addf %2, %4 : vector<16x256xf32>
    %c0_5 = arith.constant 0 : index
    %c0_6 = arith.constant 0 : index
    %6 = vector.load %arg4[%c0_5, %c0_6] : memref<16x256xf32, #tpu.memory_space<vmem>>, vector<16x256xf32>
    %7 = arith.addf %5, %6 : vector<16x256xf32>
    %c0_7 = arith.constant 0 : index
    %c0_8 = arith.constant 0 : index
    %8 = vector.load %arg5[%c0_7, %c0_8] : memref<16x256xf32, #tpu.memory_space<vmem>>, vector<16x256xf32>
    tpu.vector_store %arg5[%c0_7, %c0_8], %7 {strides = array<i32>} : memref<16x256xf32, #tpu.memory_space<vmem>>, vector<16x256xf32>,
    return
  }
  func.func @transform_0(%arg0: i32) -> (i32, i32) {
    %c0_i32 = arith.constant 0 : i32
    %c0_i32_0 = arith.constant 0 : i32
    %c0_i32_1 = arith.constant 0 : i32
    return %c0_i32, %c0_i32_0 : i32, i32
  }
  func.func @transform_1(%arg0: i32) -> (i32, i32) {
    %c0_i32 = arith.constant 0 : i32
    %c0_i32_0 = arith.constant 0 : i32
    return %c0_i32, %arg0 : i32, i32
  }
  func.func @transform_2(%arg0: i32) -> (i32, i32) {
    %c0_i32 = arith.constant 0 : i32
    %c0_i32_0 = arith.constant 0 : i32
    %c0_i32_1 = arith.constant 0 : i32
    return %c0_i32, %c0_i32_0 : i32, i32
  }
  func.func @transform_3(%arg0: i32) -> (i32, i32) {
    %c0_i32 = arith.constant 0 : i32
    %c0_i32_0 = arith.constant 0 : i32
    return %c0_i32, %arg0 : i32, i32
  }
  func.func @transform_4(%arg0: i32) -> (i32, i32) {
    %c0_i32 = arith.constant 0 : i32
    %c0_i32_0 = arith.constant 0 : i32
    return %c0_i32, %arg0 : i32, i32
  }
}

module attributes {stable_mosaic.version = 11 : i64} {
  func.func @_gemm_kernel(%arg0: i32, %arg1: memref<48x144xf32, #tpu.memory_space<vmem>>, %arg2: memref<144x256xf32, #tpu.memory_space<vmem>>, %arg3: memref<48x1xf32, #tpu.memory_space<vmem>>, %arg4: memref<48x256xf32, #tpu.memory_space<vmem>>) attributes {dimension_semantics = [#tpu.dimension_semantics<parallel>], iteration_bounds = array<i64: 2>, scalar_prefetch = 0 : i64, scratch_operands = 0 : i64, tpu.core_type = #tpu.core_type<tc>, window_params = [{pipeline_mode = #tpu.pipeline_mode<synchronous>, transform_indices = @transform_0, window_bounds = array<i64: 48, 144>}, {transform_indices = @transform_1, window_bounds = array<i64: 144, 256>}, {pipeline_mode = #tpu.pipeline_mode<synchronous>, transform_indices = @transform_2, window_bounds = array<i64: 48, 1>}, {transform_indices = @transform_3, window_bounds = array<i64: 48, 256>}]} {
    %c0 = arith.constant 0 : index
    %c0_0 = arith.constant 0 : index
    %0 = vector.load %arg1[%c0, %c0_0] : memref<48x144xf32, #tpu.memory_space<vmem>>, vector<48x144xf32>
    %c0_1 = arith.constant 0 : index
    %c0_2 = arith.constant 0 : index
    %1 = vector.load %arg2[%c0_1, %c0_2] : memref<144x256xf32, #tpu.memory_space<vmem>>, vector<144x256xf32>
    %cst = arith.constant dense<0.000000e+00> : vector<48x256xf32>
    %2 = tpu.matmul %0, %1, %cst {dimension_numbers = #tpu.dot_dimension_numbers<[1], [0], [0], [1], [0, 0, 1, 1], [], []>} : vector<48x144xf32>, vector<144x256xf32>, vector<48x256xf32> -> vector<48x256xf32>
    %c0_3 = arith.constant 0 : index
    %c0_4 = arith.constant 0 : index
    %3 = vector.load %arg3[%c0_3, %c0_4] : memref<48x1xf32, #tpu.memory_space<vmem>>, vector<48x1xf32>
    %4 = vector.broadcast %3 : vector<48x1xf32> to vector<48x256xf32>
    %5 = arith.addf %2, %4 : vector<48x256xf32>
    %c0_5 = arith.constant 0 : index
    %c0_6 = arith.constant 0 : index
    %6 = vector.load %arg4[%c0_5, %c0_6] : memref<48x256xf32, #tpu.memory_space<vmem>>, vector<48x256xf32>
    tpu.vector_store %arg4[%c0_5, %c0_6], %5 {strides = array<i32>} : memref<48x256xf32, #tpu.memory_space<vmem>>, vector<48x256xf32>,
    return
  }
  func.func @transform_0(%arg0: i32) -> (i32, i32) {
    %c0_i32 = arith.constant 0 : i32
    %c0_i32_0 = arith.constant 0 : i32
    %c0_i32_1 = arith.constant 0 : i32
    return %c0_i32, %c0_i32_0 : i32, i32
  }
  func.func @transform_1(%arg0: i32) -> (i32, i32) {
    %c0_i32 = arith.constant 0 : i32
    %c0_i32_0 = arith.constant 0 : i32
    return %c0_i32, %arg0 : i32, i32
  }
  func.func @transform_2(%arg0: i32) -> (i32, i32) {
    %c0_i32 = arith.constant 0 : i32
    %c0_i32_0 = arith.constant 0 : i32
    %c0_i32_1 = arith.constant 0 : i32
    return %c0_i32, %c0_i32_0 : i32, i32
  }
  func.func @transform_3(%arg0: i32) -> (i32, i32) {
    %c0_i32 = arith.constant 0 : i32
    %c0_i32_0 = arith.constant 0 : i32
    return %c0_i32, %arg0 : i32, i32
  }
}

</mosaic_0001>

<llo_original>
// kernel: rfdn_forward.52
$region0: #{rfdn_forward.52}
  #allocation0 [shape = 'u32[]', space=smem, size = 0x4, offset = 0x4, fixed_abs, tag = 'smem constant byte address 0x4 - core index']
  #allocation1 [shape = 'u32[72,128]{1,0:T(1,128)}', space=vmem, size = 0x9000, scoped, tag = 'internal scratch']
  %s0 = inlined_call_operand.vmem [shape: f32[16,27], index: 0, kind: input, shape index: {}]
  %s1 = inlined_call_operand.vmem [shape: f32[27,512], index: 1, kind: input, shape index: {}]
  %s2 = inlined_call_operand.vmem [shape: f32[16,1], index: 2, kind: input, shape index: {}]
  %s3 = inlined_call_operand.vmem [shape: f32[16,512], index: 3, kind: output, shape index: {}]
  %s4 = sld [smem:[#allocation0]]
  $region87: #{rfdn_forward.52} parent=0
    _
  %s6 = ssub.s32 1, %s4
  %s7 = scalar_select 0, %s6, %s4
  $region1: #{rfdn_forward.52} parent=0
    #allocation2 [shape = 'u8[65536]{0}', space=vmem, size = 0x10000, scoped, tag = 'input window, operand 1']
    #allocation3 [shape = 'u8[32768]{0}', space=vmem, size = 0x8000, scoped, tag = 'output window, operand 0']
    loop: start=0, step=1, limit=4
    $region2: #{rfdn_forward.52} parent=1 // loop_pre_header
      _
    $region3: #{rfdn_forward.52} parent=1 // loop_header
      %s9 = sphi 0, %s13
      %p10 = scmp.ge.s32.totalorder %s9, 4
      %s17 = sphi 0, %s17
      %s19 = sphi 0, %s17
      %s20 = sphi 0, %s19
      %s34 = sphi 0, %s20
      %s40 = sphi 0, %s42
      %s43 = sphi 0, %s40
      %s44 = sphi 0, %s43
      %s60 = sphi 0, %s44
      %s64 = sphi 0, %s64
      %s66 = sphi 0, %s64
      %s67 = sphi 0, %s66
      %s81 = sphi 0, %s67
      %s87 = sphi 0, %s89
      %s90 = sphi 0, %s87
      %s91 = sphi 0, %s90
      %s107 = sphi 0, %s91
    $region4: #{rfdn_forward.52} parent=1 // loop_header_branch
      %12 = sbr.rel (%p10) target = $region8
    $region5: #{rfdn_forward.52} parent=1 // loop_body
      %s14 = ssub.s32 %s9, 1
      %s15 = ssub.s32 %s9, 2
      %s16 = sadd.s32 %s9, 1
      %s18 = sadd.s32 %s17, 1
      %p21 = scmp.eq.s32.totalorder %s9, 1
      %p22 = scmp.ne.s32.totalorder %s17, %s19
      %p23 = scmp.eq.s32.totalorder %s9, 0
      %p24 = por %p22, %p23
      %p25 = scmp.ne.s32.totalorder %s17, %s19
      %p26 = scmp.eq.s32.totalorder %s14, 1
      %p27 = por %p25, %p26
      %p28 = scmp.ne.s32.totalorder %s19, %s20
      %p29 = scmp.eq.s32.totalorder %s14, 0
      %p30 = por %p28, %p29
      %p31 = scmp.ne.s32.totalorder %s19, %s20
      %p32 = scmp.eq.s32.totalorder %s15, 1
      %p33 = por %p31, %p32
      %p35 = scmp.ne.s32.totalorder %s20, %s34
      %p36 = scmp.eq.s32.totalorder %s15, 0
      %p37 = por %p35, %p36
      %s38 = ssub.s32 %s9, %s16
      %p39 = scmp.eq.s32.totalorder %s38, 0
      %s41 = sadd.s32 %s40, 1
      %s42 = scalar_select %p39, %s40, %s41
      %p45 = pneg %p39
      %p46 = scmp.eq.s32.totalorder %s9, 1
      %p47 = por %p45, %p46
      %p48 = scmp.ne.s32.totalorder %s40, %s43
      %p49 = scmp.eq.s32.totalorder %s9, 0
      %p50 = por %p48, %p49
      %p51 = scmp.ne.s32.totalorder %s40, %s43
      %p52 = scmp.eq.s32.totalorder %s14, 1
      %p53 = por %p51, %p52
      %p54 = scmp.ne.s32.totalorder %s43, %s44
      %p55 = scmp.eq.s32.totalorder %s14, 0
      %p56 = por %p54, %p55
      %p57 = scmp.ne.s32.totalorder %s43, %s44
      %p58 = scmp.eq.s32.totalorder %s15, 1
      %p59 = por %p57, %p58
      %p61 = scmp.ne.s32.totalorder %s44, %s60
      %p62 = scmp.eq.s32.totalorder %s15, 0
      %p63 = por %p61, %p62
      %s65 = sadd.s32 %s64, 1
      %p68 = scmp.eq.s32.totalorder %s9, 1
      %p69 = scmp.ne.s32.totalorder %s64, %s66
      %p70 = scmp.eq.s32.totalorder %s9, 0
      %p71 = por %p69, %p70
      %p72 = scmp.ne.s32.totalorder %s64, %s66
      %p73 = scmp.eq.s32.totalorder %s14, 1
      %p74 = por %p72, %p73
      %p75 = scmp.ne.s32.totalorder %s66, %s67
      %p76 = scmp.eq.s32.totalorder %s14, 0
      %p77 = por %p75, %p76
      %p78 = scmp.ne.s32.totalorder %s66, %s67
      %p79 = scmp.eq.s32.totalorder %s15, 1
      %p80 = por %p78, %p79
      %p82 = scmp.ne.s32.totalorder %s67, %s81
      %p83 = scmp.eq.s32.totalorder %s15, 0
      %p84 = por %p82, %p83
      %s85 = ssub.s32 %s9, %s16
      %p86 = scmp.eq.s32.totalorder %s85, 0
      %s88 = sadd.s32 %s87, 1
      %s89 = scalar_select %p86, %s87, %s88
      %p92 = pneg %p86
      %p93 = scmp.eq.s32.totalorder %s9, 1
      %p94 = por %p92, %p93
      %p95 = scmp.ne.s32.totalorder %s87, %s90
      %p96 = scmp.eq.s32.totalorder %s9, 0
      %p97 = por %p95, %p96
      %p98 = scmp.ne.s32.totalorder %s87, %s90
      %p99 = scmp.eq.s32.totalorder %s14, 1
      %p100 = por %p98, %p99
      %p101 = scmp.ne.s32.totalorder %s90, %s91
      %p102 = scmp.eq.s32.totalorder %s14, 0
      %p103 = por %p101, %p102
      %p104 = scmp.ne.s32.totalorder %s90, %s91
      %p105 = scmp.eq.s32.totalorder %s15, 1
      %p106 = por %p104, %p105
      %p108 = scmp.ne.s32.totalorder %s91, %s107
      %p109 = scmp.eq.s32.totalorder %s15, 0
      %p110 = por %p108, %p109
      %p111 = scmp.le.s32.totalorder 1, %s9
      %p112 = scmp.lt.s32.totalorder %s9, 3
      %p113 = pnand %p111, %p112
      %p114 = pneg %p113
      // Predicated region
      $region9: #{rfdn_forward.52} parent=5 // pred_check
        _
      $region10: #{rfdn_forward.52} parent=5 // pred_check_branch
        %116 = sbr.rel (%p113) target = $region12
      $region11: #{rfdn_forward.52} parent=5 // pred_region
        %s117 = ssub.s32 %s9, 1
        // Predicated region
        $region13: #{rfdn_forward.52} parent=11 // pred_check
          %p118 = pneg %p30
        $region14: #{rfdn_forward.52} parent=11 // pred_check_branch
          %120 = sbr.rel (%p118) target = $region16
        $region15: #{rfdn_forward.52} parent=11 // pred_region
          _
        $region16: #{rfdn_forward.52} parent=11 // pred_fallthru
          _
        // Predicated region
        $region17: #{rfdn_forward.52} parent=11 // pred_check
          %p121 = pneg %p77
        $region18: #{rfdn_forward.52} parent=11 // pred_check_branch
          %123 = sbr.rel (%p121) target = $region20
        $region19: #{rfdn_forward.52} parent=11 // pred_region
          _
        $region20: #{rfdn_forward.52} parent=11 // pred_fallthru
          _
      $region12: #{rfdn_forward.52} parent=5 // pred_fallthru
        _
      %p124 = scmp.lt.s32.totalorder %s9, 2
      // Predicated region
      $region21: #{rfdn_forward.52} parent=5 // pred_check
        %p125 = pneg %p124
      $region22: #{rfdn_forward.52} parent=5 // pred_check_branch
        %127 = sbr.rel (%p125) target = $region24
      $region23: #{rfdn_forward.52} parent=5 // pred_region
        // Predicated region
        $region25: #{rfdn_forward.52} parent=23 // pred_check
          %p128 = pneg %p50
        $region26: #{rfdn_forward.52} parent=23 // pred_check_branch
          %130 = sbr.rel (%p128) target = $region28
        $region27: #{rfdn_forward.52} parent=23 // pred_region
          %s131 = sand.u32 %s40, 1
          %s132 = sand.u32 %s40, 1
          %s133 = smul.addr %s132, 64
          %s134 = scalar_lea.vmem [#allocation2], %s133
          %s135 = smul.u32 2, %s9
          %s136 = smul.addr %s135, 8
          %s137 = scalar_lea.vmem %s1, %s136
          // Predicated region
          $region29: #{rfdn_forward.52} parent=27 // pred_check
            _
          $region30: #{rfdn_forward.52} parent=27 // pred_check_branch
            %139 = sbr.rel (0) target = $region32
          $region31: #{rfdn_forward.52} parent=27 // pred_region
            // Predicated region
            $region33: #{rfdn_forward.52} parent=31 // pred_check
              _
            $region34: #{rfdn_forward.52} parent=31 // pred_check_branch
              %141 = sbr.rel (0) target = $region36
            $region35: #{rfdn_forward.52} parent=31 // pred_region
              loop: start=0, step=1, limit=1
              $region37: #{rfdn_forward.52} parent=35 // loop_pre_header
                _
              $region38: #{rfdn_forward.52} parent=35 // loop_header
                %s143 = sphi 0, %s147
                %p144 = scmp.ge.s32.totalorder %s143, 1
                %s148 = sphi %s137, %s137
                %s149 = sphi %s134, %s134
              $region39: #{rfdn_forward.52} parent=35 // loop_header_branch
                %146 = sbr.rel (%p144) target = $region43
              $region40: #{rfdn_forward.52} parent=35 // loop_body
                %v150 = vld [vmem:[%s148] sm:$0xff]
                %151 = vst [vmem:[%s149] sm:$0xff] %v150
                %v152 = vld [vmem:[%s148 + $0x8] sm:$0xff]
                %153 = vst [vmem:[%s149 + $0x8] sm:$0xff] %v152
                %v154 = vld [vmem:[%s148 + $0x20] sm:$0xff]
                %155 = vst [vmem:[%s149 + $0x10] sm:$0xff] %v154
                %v156 = vld [vmem:[%s148 + $0x28] sm:$0xff]
                %157 = vst [vmem:[%s149 + $0x18] sm:$0xff] %v156
                %v158 = vld [vmem:[%s148 + $0x40] sm:$0xff]
                %159 = vst [vmem:[%s149 + $0x20] sm:$0xff] %v158
                %v160 = vld [vmem:[%s148 + $0x48] sm:$0xff]
                %161 = vst [vmem:[%s149 + $0x28] sm:$0xff] %v160
                %v162 = vld [vmem:[%s148 + $0x60] sm:$0xff]
                %163 = vst [vmem:[%s149 + $0x30] sm:$0xff] %v162
                %v164 = vld [vmem:[%s148 + $0x68] sm:$0xff]
                %165 = vst [vmem:[%s149 + $0x38] sm:$0xff] %v164
              $region41: #{rfdn_forward.52} parent=35 // loop_footer
                %s147 = sadd.s32 1, %s143
              $region42: #{rfdn_forward.52} parent=35 // loop_footer_branch
                %142 = sbr.rel target = $region38
              $region43: #{rfdn_forward.52} parent=35 // loop_exit
                _
            $region36: #{rfdn_forward.52} parent=31 // pred_fallthru
              _
            // Predicated region
            $region44: #{rfdn_forward.52} parent=31 // pred_check
              _
            $region45: #{rfdn_forward.52} parent=31 // pred_check_branch
              %167 = sbr.rel target = $region47
            $region46: #{rfdn_forward.52} parent=31 // pred_region
              _
            $region47: #{rfdn_forward.52} parent=31 // pred_fallthru
              _
          $region32: #{rfdn_forward.52} parent=27 // pred_fallthru
            _
          %168 = vnop
        $region28: #{rfdn_forward.52} parent=23 // pred_fallthru
          _
      $region24: #{rfdn_forward.52} parent=5 // pred_fallthru
        _
      %p169 = scmp.le.s32.totalorder 1, %s9
      %p170 = scmp.lt.s32.totalorder %s9, 3
      %p171 = pnand %p169, %p170
      %p172 = pneg %p171
      // Predicated region
      $region48: #{rfdn_forward.52} parent=5 // pred_check
        _
      $region49: #{rfdn_forward.52} parent=5 // pred_check_branch
        %174 = sbr.rel (%p171) target = $region51
      $region50: #{rfdn_forward.52} parent=5 // pred_region
        %s175 = ssub.s32 %s9, 1
        %s176 = sand.u32 %s43, 1
        %s177 = sand.u32 %s43, 1
        %s178 = smul.addr %s177, 64
        %s179 = scalar_lea.vmem [#allocation2], %s178
        // Predicated region
        $region52: #{rfdn_forward.52} parent=50 // pred_check
          %p180 = pneg %p56
        $region53: #{rfdn_forward.52} parent=50 // pred_check_branch
          %182 = sbr.rel (%p180) target = $region55
        $region54: #{rfdn_forward.52} parent=50 // pred_region
          _
        $region55: #{rfdn_forward.52} parent=50 // pred_fallthru
          _
        %p183 = pneg %p30
        %p184 = pneg %p27
        %s185 = sand.u32 %s43, 1
        %s186 = sand.u32 %s43, 1
        %s187 = smul.addr %s186, 64
        %s188 = scalar_lea.vmem [#allocation2], %s187
        %p189 = pneg %p56
        %p190 = pneg %p53
        %p191 = pneg %p77
        %p192 = pneg %p74
        %p193 = pneg %p103
        %p194 = pneg %p100
        %s195 = sand.u32 %s90, 1
        %s196 = sand.u32 %s90, 1
        %s197 = smul.addr %s196, 32
        %s198 = scalar_lea.vmem [#allocation3], %s197
        %s199 = smul.u32 2, %s14
        %s200 = smul.u32 2, %s14
        %v201 = vld [vmem:[%s0] sm:$0xff]
        %v202 = vld [vmem:[%s0 + $0x8] sm:$0xff]
        %v203 = vld [vmem:[%s179] sm:$0xff]
        %v204 = vld [vmem:[%s179 + $0x8] sm:$0xff]
        %v205 = vld [vmem:[%s179 + $0x10] sm:$0xff]
        %v206 = vld [vmem:[%s179 + $0x18] sm:$0xff]
        %v207 = vld [vmem:[%s179 + $0x20] sm:$0xff]
        %v208 = vld [vmem:[%s179 + $0x28] sm:$0xff]
        %v209 = vld [vmem:[%s179 + $0x30] sm:$0x7]
        %v210 = vld [vmem:[%s179 + $0x38] sm:$0x7]
        %v211 = vld [vmem:[%s2] sm:$0xff]
        %v212 = vld [vmem:[%s2 + $0x8] sm:$0xff]
        %214 = vset.pattern.permute.xlu0 0
        %215 = vperm.xlu0 %214, %v211
        %v216 = vpop.permute.xlu0 %215
        %219 = vset.pattern.permute.xlu0 0
        %220 = vperm.xlu0 %219, %v212
        %v221 = vpop.permute.xlu0 %220
        %vm223 = vcmask 220160
        %v225 = vsel %vm223, %v201, 0
        %v228 = vsel %vm223, %v202, 0
        %vm230 = vcmask 1042432
        %v232 = vsel %vm230, %v209, 0
        %v235 = vsel %vm230, %v210, 0
        %237 = vmatpush.msra.mxu0 0.0
        %238 = vmatpush.msra.mxu0 0.0
        %239 = vmatpush.msra.mxu0 0.0
        %240 = vmatpush.msra.mxu0 0.0
        %241 = vmatpush.msra.mxu0 0.0
        %242 = vmatpush.msra.mxu0 0.0
        %243 = vmatpush.msra.mxu0 0.0
        %244 = vmatpush.msra.mxu0 0.0
        %245 = vmatpush.msra.mxu0 0.0
        %246 = vmatpush.msra.mxu0 0.0
        %247 = vmatpush.msra.mxu0 0.0
        %248 = vmatpush.msra.mxu0 0.0
        %249 = vmatpush.msra.mxu0 %v232
        %250 = vmatpush.msra.mxu0 %v207
        %251 = vmatpush.msra.mxu0 %v205
        %252 = vmatpush.msra.mxu0 %v203
        %253 = vmatmul.f32.gmra.mxu0 %v225
        %v254 = vpop.f32.mrf.mxu0
        %v255 = vadd.f32 %v216, %v254
        %256 = vmatmul.f32.gmra.mxu0 %v228
        %v257 = vpop.f32.mrf.mxu0
        %v258 = vadd.f32 %v221, %v257
        %259 = vdwg.mxu0
        %260 = vmatpush.msra.mxu0 0.0
        %261 = vmatpush.msra.mxu0 0.0
        %262 = vmatpush.msra.mxu0 0.0
        %263 = vmatpush.msra.mxu0 0.0
        %264 = vmatpush.msra.mxu0 0.0
        %265 = vmatpush.msra.mxu0 0.0
        %266 = vmatpush.msra.mxu0 0.0
        %267 = vmatpush.msra.mxu0 0.0
        %268 = vmatpush.msra.mxu0 0.0
        %269 = vmatpush.msra.mxu0 0.0
        %270 = vmatpush.msra.mxu0 0.0
        %271 = vmatpush.msra.mxu0 0.0
        %272 = vmatpush.msra.mxu0 %v235
        %273 = vmatpush.msra.mxu0 %v208
        %274 = vmatpush.msra.mxu0 %v206
        %275 = vmatpush.msra.mxu0 %v204
        %276 = vmatmul.f32.gmra.mxu0 %v225
        %v277 = vpop.f32.mrf.mxu0
        %v278 = vadd.f32 %v216, %v277
        %279 = vmatmul.f32.gmra.mxu0 %v228
        %v280 = vpop.f32.mrf.mxu0
        %v281 = vadd.f32 %v221, %v280
        %282 = vdwg.mxu0
        %283 = vst [vmem:[%s198] sm:$0xff] %v255
        %284 = vst [vmem:[%s198 + $0x8] sm:$0xff] %v278
        %285 = vst [vmem:[%s198 + $0x10] sm:$0xff] %v258
        %286 = vst [vmem:[%s198 + $0x18] sm:$0xff] %v281
        %s287 = sand.u32 %s90, 1
        %s288 = sand.u32 %s90, 1
        %s289 = smul.addr %s288, 32
        %s290 = scalar_lea.vmem [#allocation3], %s289
        // Predicated region
        $region56: #{rfdn_forward.52} parent=50 // pred_check
          %p291 = pneg %p100
        $region57: #{rfdn_forward.52} parent=50 // pred_check_branch
          %293 = sbr.rel (%p291) target = $region59
        $region58: #{rfdn_forward.52} parent=50 // pred_region
          %s294 = smul.u32 2, %s14
          %s295 = smul.addr %s294, 8
          %s296 = scalar_lea.vmem %s3, %s295
          // Predicated region
          $region60: #{rfdn_forward.52} parent=58 // pred_check
            _
          $region61: #{rfdn_forward.52} parent=58 // pred_check_branch
            %298 = sbr.rel (0) target = $region63
          $region62: #{rfdn_forward.52} parent=58 // pred_region
            // Predicated region
            $region64: #{rfdn_forward.52} parent=62 // pred_check
              _
            $region65: #{rfdn_forward.52} parent=62 // pred_check_branch
              %300 = sbr.rel (0) target = $region67
            $region66: #{rfdn_forward.52} parent=62 // pred_region
              loop: start=0, step=1, limit=1
              $region68: #{rfdn_forward.52} parent=66 // loop_pre_header
                _
              $region69: #{rfdn_forward.52} parent=66 // loop_header
                %s302 = sphi 0, %s306
                %p303 = scmp.ge.s32.totalorder %s302, 1
                %s307 = sphi %s290, %s290
                %s308 = sphi %s296, %s296
              $region70: #{rfdn_forward.52} parent=66 // loop_header_branch
                %305 = sbr.rel (%p303) target = $region74
              $region71: #{rfdn_forward.52} parent=66 // loop_body
                %v309 = vld [vmem:[%s307] sm:$0xff]
                %310 = vst [vmem:[%s308] sm:$0xff] %v309
                %v311 = vld [vmem:[%s307 + $0x8] sm:$0xff]
                %312 = vst [vmem:[%s308 + $0x8] sm:$0xff] %v311
                %v313 = vld [vmem:[%s307 + $0x10] sm:$0xff]
                %314 = vst [vmem:[%s308 + $0x20] sm:$0xff] %v313
                %v315 = vld [vmem:[%s307 + $0x18] sm:$0xff]
                %316 = vst [vmem:[%s308 + $0x28] sm:$0xff] %v315
              $region72: #{rfdn_forward.52} parent=66 // loop_footer
                %s306 = sadd.s32 1, %s302
              $region73: #{rfdn_forward.52} parent=66 // loop_footer_branch
                %301 = sbr.rel target = $region69
              $region74: #{rfdn_forward.52} parent=66 // loop_exit
                _
            $region67: #{rfdn_forward.52} parent=62 // pred_fallthru
              _
            // Predicated region
            $region75: #{rfdn_forward.52} parent=62 // pred_check
              _
            $region76: #{rfdn_forward.52} parent=62 // pred_check_branch
              %318 = sbr.rel target = $region78
            $region77: #{rfdn_forward.52} parent=62 // pred_region
              _
            $region78: #{rfdn_forward.52} parent=62 // pred_fallthru
              _
          $region63: #{rfdn_forward.52} parent=58 // pred_fallthru
            _
          %319 = vnop
        $region59: #{rfdn_forward.52} parent=50 // pred_fallthru
          _
      $region51: #{rfdn_forward.52} parent=5 // pred_fallthru
        _
      %p320 = scmp.le.s32.totalorder 2, %s9
      // Predicated region
      $region79: #{rfdn_forward.52} parent=5 // pred_check
        %p321 = pneg %p320
      $region80: #{rfdn_forward.52} parent=5 // pred_check_branch
        %323 = sbr.rel (%p321) target = $region82
      $region81: #{rfdn_forward.52} parent=5 // pred_region
        %s324 = ssub.s32 %s9, 2
        // Predicated region
        $region83: #{rfdn_forward.52} parent=81 // pred_check
          %p325 = pneg %p106
        $region84: #{rfdn_forward.52} parent=81 // pred_check_branch
          %327 = sbr.rel (%p325) target = $region86
        $region85: #{rfdn_forward.52} parent=81 // pred_region
          %s328 = sand.u32 %s91, 1
          %s329 = sand.u32 %s91, 1
          %s330 = smul.addr %s329, 32
          %s331 = scalar_lea.vmem [#allocation3], %s330
        $region86: #{rfdn_forward.52} parent=81 // pred_fallthru
          _
      $region82: #{rfdn_forward.52} parent=5 // pred_fallthru
        _
    $region6: #{rfdn_forward.52} parent=1 // loop_footer
      %s13 = sadd.s32 1, %s9
    $region7: #{rfdn_forward.52} parent=1 // loop_footer_branch
      %8 = sbr.rel target = $region3
    $region8: #{rfdn_forward.52} parent=1 // loop_exit
      _

// kernel: rfdn_forward.56
$region0: #{rfdn_forward.56}
  #allocation0 [shape = 'u32[]', space=smem, size = 0x4, offset = 0x4, fixed_abs, tag = 'smem constant byte address 0x4 - core index']
  #allocation1 [shape = 'u32[72,128]{1,0:T(1,128)}', space=vmem, size = 0x9000, scoped, tag = 'internal scratch']
  %s0 = inlined_call_operand.vmem [shape: f32[8,144], index: 0, kind: input, shape index: {}]
  %s1 = inlined_call_operand.vmem [shape: f32[144,512], index: 1, kind: input, shape index: {}]
  %s2 = inlined_call_operand.vmem [shape: f32[8,1], index: 2, kind: input, shape index: {}]
  %s3 = inlined_call_operand.vmem [shape: f32[8,512], index: 3, kind: output, shape index: {}]
  %s4 = sld [smem:[#allocation0]]
  $region68: #{rfdn_forward.56} parent=0
    _
  %s6 = ssub.s32 1, %s4
  %s7 = scalar_select 0, %s6, %s4
  $region1: #{rfdn_forward.56} parent=0
    #allocation2 [shape = 'u8[294912]{0}', space=vmem, size = 0x48000, scoped, tag = 'input window, operand 1']
    loop: start=0, step=1, limit=4
    $region2: #{rfdn_forward.56} parent=1 // loop_pre_header
      _
    $region3: #{rfdn_forward.56} parent=1 // loop_header
      %s9 = sphi 0, %s13
      %p10 = scmp.ge.s32.totalorder %s9, 4
      %s17 = sphi 0, %s17
      %s19 = sphi 0, %s17
      %s20 = sphi 0, %s19
      %s34 = sphi 0, %s20
      %s40 = sphi 0, %s42
      %s43 = sphi 0, %s40
      %s44 = sphi 0, %s43
      %s60 = sphi 0, %s44
      %s64 = sphi 0, %s64
      %s66 = sphi 0, %s64
      %s67 = sphi 0, %s66
      %s81 = sphi 0, %s67
      %s87 = sphi 0, %s89
      %s90 = sphi 0, %s87
      %s91 = sphi 0, %s90
      %s107 = sphi 0, %s91
    $region4: #{rfdn_forward.56} parent=1 // loop_header_branch
      %12 = sbr.rel (%p10) target = $region8
    $region5: #{rfdn_forward.56} parent=1 // loop_body
      %s14 = ssub.s32 %s9, 1
      %s15 = ssub.s32 %s9, 2
      %s16 = sadd.s32 %s9, 1
      %s18 = sadd.s32 %s17, 1
      %p21 = scmp.eq.s32.totalorder %s9, 1
      %p22 = scmp.ne.s32.totalorder %s17, %s19
      %p23 = scmp.eq.s32.totalorder %s9, 0
      %p24 = por %p22, %p23
      %p25 = scmp.ne.s32.totalorder %s17, %s19
      %p26 = scmp.eq.s32.totalorder %s14, 1
      %p27 = por %p25, %p26
      %p28 = scmp.ne.s32.totalorder %s19, %s20
      %p29 = scmp.eq.s32.totalorder %s14, 0
      %p30 = por %p28, %p29
      %p31 = scmp.ne.s32.totalorder %s19, %s20
      %p32 = scmp.eq.s32.totalorder %s15, 1
      %p33 = por %p31, %p32
      %p35 = scmp.ne.s32.totalorder %s20, %s34
      %p36 = scmp.eq.s32.totalorder %s15, 0
      %p37 = por %p35, %p36
      %s38 = ssub.s32 %s9, %s16
      %p39 = scmp.eq.s32.totalorder %s38, 0
      %s41 = sadd.s32 %s40, 1
      %s42 = scalar_select %p39, %s40, %s41
      %p45 = pneg %p39
      %p46 = scmp.eq.s32.totalorder %s9, 1
      %p47 = por %p45, %p46
      %p48 = scmp.ne.s32.totalorder %s40, %s43
      %p49 = scmp.eq.s32.totalorder %s9, 0
      %p50 = por %p48, %p49
      %p51 = scmp.ne.s32.totalorder %s40, %s43
      %p52 = scmp.eq.s32.totalorder %s14, 1
      %p53 = por %p51, %p52
      %p54 = scmp.ne.s32.totalorder %s43, %s44
      %p55 = scmp.eq.s32.totalorder %s14, 0
      %p56 = por %p54, %p55
      %p57 = scmp.ne.s32.totalorder %s43, %s44
      %p58 = scmp.eq.s32.totalorder %s15, 1
      %p59 = por %p57, %p58
      %p61 = scmp.ne.s32.totalorder %s44, %s60
      %p62 = scmp.eq.s32.totalorder %s15, 0
      %p63 = por %p61, %p62
      %s65 = sadd.s32 %s64, 1
      %p68 = scmp.eq.s32.totalorder %s9, 1
      %p69 = scmp.ne.s32.totalorder %s64, %s66
      %p70 = scmp.eq.s32.totalorder %s9, 0
      %p71 = por %p69, %p70
      %p72 = scmp.ne.s32.totalorder %s64, %s66
      %p73 = scmp.eq.s32.totalorder %s14, 1
      %p74 = por %p72, %p73
      %p75 = scmp.ne.s32.totalorder %s66, %s67
      %p76 = scmp.eq.s32.totalorder %s14, 0
      %p77 = por %p75, %p76
      %p78 = scmp.ne.s32.totalorder %s66, %s67
      %p79 = scmp.eq.s32.totalorder %s15, 1
      %p80 = por %p78, %p79
      %p82 = scmp.ne.s32.totalorder %s67, %s81
      %p83 = scmp.eq.s32.totalorder %s15, 0
      %p84 = por %p82, %p83
      %s85 = ssub.s32 %s9, %s16
      %p86 = scmp.eq.s32.totalorder %s85, 0
      %s88 = sadd.s32 %s87, 1
      %s89 = scalar_select %p86, %s87, %s88
      %p92 = pneg %p86
      %p93 = scmp.eq.s32.totalorder %s9, 1
      %p94 = por %p92, %p93
      %p95 = scmp.ne.s32.totalorder %s87, %s90
      %p96 = scmp.eq.s32.totalorder %s9, 0
      %p97 = por %p95, %p96
      %p98 = scmp.ne.s32.totalorder %s87, %s90
      %p99 = scmp.eq.s32.totalorder %s14, 1
      %p100 = por %p98, %p99
      %p101 = scmp.ne.s32.totalorder %s90, %s91
      %p102 = scmp.eq.s32.totalorder %s14, 0
      %p103 = por %p101, %p102
      %p104 = scmp.ne.s32.totalorder %s90, %s91
      %p105 = scmp.eq.s32.totalorder %s15, 1
      %p106 = por %p104, %p105
      %p108 = scmp.ne.s32.totalorder %s91, %s107
      %p109 = scmp.eq.s32.totalorder %s15, 0
      %p110 = por %p108, %p109
      %p111 = scmp.le.s32.totalorder 1, %s9
      %p112 = scmp.lt.s32.totalorder %s9, 3
      %p113 = pnand %p111, %p112
      %p114 = pneg %p113
      // Predicated region
      $region9: #{rfdn_forward.56} parent=5 // pred_check
        _
      $region10: #{rfdn_forward.56} parent=5 // pred_check_branch
        %116 = sbr.rel (%p113) target = $region12
      $region11: #{rfdn_forward.56} parent=5 // pred_region
        %s117 = ssub.s32 %s9, 1
        // Predicated region
        $region13: #{rfdn_forward.56} parent=11 // pred_check
          %p118 = pneg %p30
        $region14: #{rfdn_forward.56} parent=11 // pred_check_branch
          %120 = sbr.rel (%p118) target = $region16
        $region15: #{rfdn_forward.56} parent=11 // pred_region
          _
        $region16: #{rfdn_forward.56} parent=11 // pred_fallthru
          _
        // Predicated region
        $region17: #{rfdn_forward.56} parent=11 // pred_check
          %p121 = pneg %p77
        $region18: #{rfdn_forward.56} parent=11 // pred_check_branch
          %123 = sbr.rel (%p121) target = $region20
        $region19: #{rfdn_forward.56} parent=11 // pred_region
          _
        $region20: #{rfdn_forward.56} parent=11 // pred_fallthru
          _
      $region12: #{rfdn_forward.56} parent=5 // pred_fallthru
        _
      %p124 = scmp.lt.s32.totalorder %s9, 2
      // Predicated region
      $region21: #{rfdn_forward.56} parent=5 // pred_check
        %p125 = pneg %p124
      $region22: #{rfdn_forward.56} parent=5 // pred_check_branch
        %127 = sbr.rel (%p125) target = $region24
      $region23: #{rfdn_forward.56} parent=5 // pred_region
        // Predicated region
        $region25: #{rfdn_forward.56} parent=23 // pred_check
          %p128 = pneg %p50
        $region26: #{rfdn_forward.56} parent=23 // pred_check_branch
          %130 = sbr.rel (%p128) target = $region28
        $region27: #{rfdn_forward.56} parent=23 // pred_region
          %s131 = sand.u32 %s40, 1
          %s132 = sand.u32 %s40, 1
          %s133 = smul.addr %s132, 288
          %s134 = scalar_lea.vmem [#allocation2], %s133
          %s135 = smul.u32 2, %s9
          %s136 = smul.addr %s135, 8
          %s137 = scalar_lea.vmem %s1, %s136
          // Predicated region
          $region29: #{rfdn_forward.56} parent=27 // pred_check
            _
          $region30: #{rfdn_forward.56} parent=27 // pred_check_branch
            %139 = sbr.rel (0) target = $region32
          $region31: #{rfdn_forward.56} parent=27 // pred_region
            // Predicated region
            $region33: #{rfdn_forward.56} parent=31 // pred_check
              _
            $region34: #{rfdn_forward.56} parent=31 // pred_check_branch
              %141 = sbr.rel (0) target = $region36
            $region35: #{rfdn_forward.56} parent=31 // pred_region
              loop: start=0, step=1, limit=1
              $region37: #{rfdn_forward.56} parent=35 // loop_pre_header
                _
              $region38: #{rfdn_forward.56} parent=35 // loop_header
                %s143 = sphi 0, %s147
                %p144 = scmp.ge.s32.totalorder %s143, 1
                %s148 = sphi %s137, %s137
                %s149 = sphi %s134, %s134
              $region39: #{rfdn_forward.56} parent=35 // loop_header_branch
                %146 = sbr.rel (%p144) target = $region43
              $region40: #{rfdn_forward.56} parent=35 // loop_body
                %v150 = vld [vmem:[%s148] sm:$0xff]
                %151 = vst [vmem:[%s149] sm:$0xff] %v150
                %v152 = vld [vmem:[%s148 + $0x8] sm:$0xff]
                %153 = vst [vmem:[%s149 + $0x8] sm:$0xff] %v152
                %v154 = vld [vmem:[%s148 + $0x20] sm:$0xff]
                %155 = vst [vmem:[%s149 + $0x10] sm:$0xff] %v154
                %v156 = vld [vmem:[%s148 + $0x28] sm:$0xff]
                %157 = vst [vmem:[%s149 + $0x18] sm:$0xff] %v156
                %v158 = vld [vmem:[%s148 + $0x40] sm:$0xff]
                %159 = vst [vmem:[%s149 + $0x20] sm:$0xff] %v158
                %v160 = vld [vmem:[%s148 + $0x48] sm:$0xff]
                %161 = vst [vmem:[%s149 + $0x28] sm:$0xff] %v160
                %v162 = vld [vmem:[%s148 + $0x60] sm:$0xff]
                %163 = vst [vmem:[%s149 + $0x30] sm:$0xff] %v162
                %v164 = vld [vmem:[%s148 + $0x68] sm:$0xff]
                %165 = vst [vmem:[%s149 + $0x38] sm:$0xff] %v164
                %v166 = vld [vmem:[%s148 + $0x80] sm:$0xff]
                %167 = vst [vmem:[%s149 + $0x40] sm:$0xff] %v166
                %v168 = vld [vmem:[%s148 + $0x88] sm:$0xff]
                %169 = vst [vmem:[%s149 + $0x48] sm:$0xff] %v168
                %v170 = vld [vmem:[%s148 + $0xa0] sm:$0xff]
                %171 = vst [vmem:[%s149 + $0x50] sm:$0xff] %v170
                %v172 = vld [vmem:[%s148 + $0xa8] sm:$0xff]
                %173 = vst [vmem:[%s149 + $0x58] sm:$0xff] %v172
                %v174 = vld [vmem:[%s148 + $0xc0] sm:$0xff]
                %175 = vst [vmem:[%s149 + $0x60] sm:$0xff] %v174
                %v176 = vld [vmem:[%s148 + $0xc8] sm:$0xff]
                %177 = vst [vmem:[%s149 + $0x68] sm:$0xff] %v176
                %v178 = vld [vmem:[%s148 + $0xe0] sm:$0xff]
                %179 = vst [vmem:[%s149 + $0x70] sm:$0xff] %v178
                %v180 = vld [vmem:[%s148 + $0xe8] sm:$0xff]
                %181 = vst [vmem:[%s149 + $0x78] sm:$0xff] %v180
                %v182 = vld [vmem:[%s148 + $0x100] sm:$0xff]
                %183 = vst [vmem:[%s149 + $0x80] sm:$0xff] %v182
                %v184 = vld [vmem:[%s148 + $0x108] sm:$0xff]
                %185 = vst [vmem:[%s149 + $0x88] sm:$0xff] %v184
                %v186 = vld [vmem:[%s148 + $0x120] sm:$0xff]
                %187 = vst [vmem:[%s149 + $0x90] sm:$0xff] %v186
                %v188 = vld [vmem:[%s148 + $0x128] sm:$0xff]
                %189 = vst [vmem:[%s149 + $0x98] sm:$0xff] %v188
                %v190 = vld [vmem:[%s148 + $0x140] sm:$0xff]
                %191 = vst [vmem:[%s149 + $0xa0] sm:$0xff] %v190
                %v192 = vld [vmem:[%s148 + $0x148] sm:$0xff]
                %193 = vst [vmem:[%s149 + $0xa8] sm:$0xff] %v192
                %v194 = vld [vmem:[%s148 + $0x160] sm:$0xff]
                %195 = vst [vmem:[%s149 + $0xb0] sm:$0xff] %v194
                %v196 = vld [vmem:[%s148 + $0x168] sm:$0xff]
                %197 = vst [vmem:[%s149 + $0xb8] sm:$0xff] %v196
                %v198 = vld [vmem:[%s148 + $0x180] sm:$0xff]
                %199 = vst [vmem:[%s149 + $0xc0] sm:$0xff] %v198
                %v200 = vld [vmem:[%s148 + $0x188] sm:$0xff]
                %201 = vst [vmem:[%s149 + $0xc8] sm:$0xff] %v200
                %v202 = vld [vmem:[%s148 + $0x1a0] sm:$0xff]
                %203 = vst [vmem:[%s149 + $0xd0] sm:$0xff] %v202
                %v204 = vld [vmem:[%s148 + $0x1a8] sm:$0xff]
                %205 = vst [vmem:[%s149 + $0xd8] sm:$0xff] %v204
                %v206 = vld [vmem:[%s148 + $0x1c0] sm:$0xff]
                %207 = vst [vmem:[%s149 + $0xe0] sm:$0xff] %v206
                %v208 = vld [vmem:[%s148 + $0x1c8] sm:$0xff]
                %209 = vst [vmem:[%s149 + $0xe8] sm:$0xff] %v208
                %v210 = vld [vmem:[%s148 + $0x1e0] sm:$0xff]
                %211 = vst [vmem:[%s149 + $0xf0] sm:$0xff] %v210
                %v212 = vld [vmem:[%s148 + $0x1e8] sm:$0xff]
                %213 = vst [vmem:[%s149 + $0xf8] sm:$0xff] %v212
                %v214 = vld [vmem:[%s148 + $0x200] sm:$0xff]
                %215 = vst [vmem:[%s149 + $0x100] sm:$0xff] %v214
                %v216 = vld [vmem:[%s148 + $0x208] sm:$0xff]
                %217 = vst [vmem:[%s149 + $0x108] sm:$0xff] %v216
                %v218 = vld [vmem:[%s148 + $0x220] sm:$0xff]
                %219 = vst [vmem:[%s149 + $0x110] sm:$0xff] %v218
                %v220 = vld [vmem:[%s148 + $0x228] sm:$0xff]
                %221 = vst [vmem:[%s149 + $0x118] sm:$0xff] %v220
              $region41: #{rfdn_forward.56} parent=35 // loop_footer
                %s147 = sadd.s32 1, %s143
              $region42: #{rfdn_forward.56} parent=35 // loop_footer_branch
                %142 = sbr.rel target = $region38
              $region43: #{rfdn_forward.56} parent=35 // loop_exit
                _
            $region36: #{rfdn_forward.56} parent=31 // pred_fallthru
              _
            // Predicated region
            $region44: #{rfdn_forward.56} parent=31 // pred_check
              _
            $region45: #{rfdn_forward.56} parent=31 // pred_check_branch
              %223 = sbr.rel target = $region47
            $region46: #{rfdn_forward.56} parent=31 // pred_region
              _
            $region47: #{rfdn_forward.56} parent=31 // pred_fallthru
              _
          $region32: #{rfdn_forward.56} parent=27 // pred_fallthru
            _
          %224 = vnop
        $region28: #{rfdn_forward.56} parent=23 // pred_fallthru
          _
      $region24: #{rfdn_forward.56} parent=5 // pred_fallthru
        _
      %p225 = scmp.le.s32.totalorder 1, %s9
      %p226 = scmp.lt.s32.totalorder %s9, 3
      %p227 = pnand %p225, %p226
      %p228 = pneg %p227
      // Predicated region
      $region48: #{rfdn_forward.56} parent=5 // pred_check
        _
      $region49: #{rfdn_forward.56} parent=5 // pred_check_branch
        %230 = sbr.rel (%p227) target = $region51
      $region50: #{rfdn_forward.56} parent=5 // pred_region
        %s231 = ssub.s32 %s9, 1
        %s232 = sand.u32 %s43, 1
        %s233 = sand.u32 %s43, 1
        %s234 = smul.addr %s233, 288
        %s235 = scalar_lea.vmem [#allocation2], %s234
        // Predicated region
        $region52: #{rfdn_forward.56} parent=50 // pred_check
          %p236 = pneg %p56
        $region53: #{rfdn_forward.56} parent=50 // pred_check_branch
          %238 = sbr.rel (%p236) target = $region55
        $region54: #{rfdn_forward.56} parent=50 // pred_region
          _
        $region55: #{rfdn_forward.56} parent=50 // pred_fallthru
          _
        %p239 = pneg %p30
        %p240 = pneg %p27
        %s241 = sand.u32 %s43, 1
        %s242 = sand.u32 %s43, 1
        %s243 = smul.addr %s242, 288
        %s244 = scalar_lea.vmem [#allocation2], %s243
        %p245 = pneg %p56
        %p246 = pneg %p53
        %p247 = pneg %p77
        %p248 = pneg %p74
        %p249 = pneg %p103
        %p250 = pneg %p100
        %s251 = smul.u32 2, %s14
        %p252 = scmp.lt.s32.totalorder %s251, 3
        %s253 = scalar_select %p252, %s251, 3
        %s254 = smul.addr %s253, 8
        %s255 = scalar_lea.vmem %s3, %s254
        %s256 = smul.u32 2, %s14
        %s257 = smul.u32 2, %s14
        %p258 = scmp.lt.s32.totalorder %s257, 3
        %s259 = scalar_select %p258, %s257, 3
        %s260 = smul.addr %s259, 8
        %s261 = scalar_lea.vmem %s3, %s260
        %s262 = smul.u32 2, %s14
        %v263 = vld [vmem:[%s0] sm:$0xff]
        %v264 = vld [vmem:[%s0 + $0x8] sm:$0xff]
        %v265 = vld [vmem:[%s235] sm:$0xff]
        %v266 = vld [vmem:[%s235 + $0x8] sm:$0xff]
        %v267 = vld [vmem:[%s235 + $0x10] sm:$0xff]
        %v268 = vld [vmem:[%s235 + $0x18] sm:$0xff]
        %v269 = vld [vmem:[%s235 + $0x20] sm:$0xff]
        %v270 = vld [vmem:[%s235 + $0x28] sm:$0xff]
        %v271 = vld [vmem:[%s235 + $0x30] sm:$0xff]
        %v272 = vld [vmem:[%s235 + $0x38] sm:$0xff]
        %v273 = vld [vmem:[%s235 + $0x40] sm:$0xff]
        %v274 = vld [vmem:[%s235 + $0x48] sm:$0xff]
        %v275 = vld [vmem:[%s235 + $0x50] sm:$0xff]
        %v276 = vld [vmem:[%s235 + $0x58] sm:$0xff]
        %v277 = vld [vmem:[%s235 + $0x60] sm:$0xff]
        %v278 = vld [vmem:[%s235 + $0x68] sm:$0xff]
        %v279 = vld [vmem:[%s235 + $0x70] sm:$0xff]
        %v280 = vld [vmem:[%s235 + $0x78] sm:$0xff]
        %v281 = vld [vmem:[%s235 + $0x80] sm:$0xff]
        %v282 = vld [vmem:[%s235 + $0x88] sm:$0xff]
        %v283 = vld [vmem:[%s235 + $0x90] sm:$0xff]
        %v284 = vld [vmem:[%s235 + $0x98] sm:$0xff]
        %v285 = vld [vmem:[%s235 + $0xa0] sm:$0xff]
        %v286 = vld [vmem:[%s235 + $0xa8] sm:$0xff]
        %v287 = vld [vmem:[%s235 + $0xb0] sm:$0xff]
        %v288 = vld [vmem:[%s235 + $0xb8] sm:$0xff]
        %v289 = vld [vmem:[%s235 + $0xc0] sm:$0xff]
        %v290 = vld [vmem:[%s235 + $0xc8] sm:$0xff]
        %v291 = vld [vmem:[%s235 + $0xd0] sm:$0xff]
        %v292 = vld [vmem:[%s235 + $0xd8] sm:$0xff]
        %v293 = vld [vmem:[%s235 + $0xe0] sm:$0xff]
        %v294 = vld [vmem:[%s235 + $0xe8] sm:$0xff]
        %v295 = vld [vmem:[%s235 + $0xf0] sm:$0xff]
        %v296 = vld [vmem:[%s235 + $0xf8] sm:$0xff]
        %v297 = vld [vmem:[%s235 + $0x100] sm:$0xff]
        %v298 = vld [vmem:[%s235 + $0x108] sm:$0xff]
        %v299 = vld [vmem:[%s235 + $0x110] sm:$0xff]
        %v300 = vld [vmem:[%s235 + $0x118] sm:$0xff]
        %v301 = vld [vmem:[%s2] sm:$0xff]
        %303 = vset.pattern.permute.xlu0 0
        %304 = vperm.xlu0 %303, %v301
        %v305 = vpop.permute.xlu0 %304
        %vm307 = vcmask 130048
        %v309 = vsel %vm307, %v264, 0
        %311 = vmatpush.msra.mxu0 %v295
        %312 = vmatpush.msra.mxu0 %v293
        %313 = vmatpush.msra.mxu0 %v291
        %314 = vmatpush.msra.mxu0 %v289
        %315 = vmatpush.msra.mxu0 %v287
        %316 = vmatpush.msra.mxu0 %v285
        %317 = vmatpush.msra.mxu0 %v283
        %318 = vmatpush.msra.mxu0 %v281
        %319 = vmatpush.msra.mxu0 %v279
        %320 = vmatpush.msra.mxu0 %v277
        %321 = vmatpush.msra.mxu0 %v275
        %322 = vmatpush.msra.mxu0 %v273
        %323 = vmatpush.msra.mxu0 %v271
        %324 = vmatpush.msra.mxu0 %v269
        %325 = vmatpush.msra.mxu0 %v267
        %326 = vmatpush.msra.mxu0 %v265
        %327 = vmatmul.f32.gmra.mxu0 %v263
        %v328 = vpop.f32.mrf.mxu0
        %v329 = vadd.f32 %v305, %v328
        %330 = vdwg.mxu0
        %331 = vmatpush.msra.mxu0 0.0
        %332 = vmatpush.msra.mxu0 0.0
        %333 = vmatpush.msra.mxu0 0.0
        %334 = vmatpush.msra.mxu0 0.0
        %335 = vmatpush.msra.mxu0 0.0
        %336 = vmatpush.msra.mxu0 0.0
        %337 = vmatpush.msra.mxu0 0.0
        %338 = vmatpush.msra.mxu0 0.0
        %339 = vmatpush.msra.mxu0 0.0
        %340 = vmatpush.msra.mxu0 0.0
        %341 = vmatpush.msra.mxu0 0.0
        %342 = vmatpush.msra.mxu0 0.0
        %343 = vmatpush.msra.mxu0 0.0
        %344 = vmatpush.msra.mxu0 0.0
        %345 = vmatpush.msra.mxu0 %v299
        %346 = vmatpush.msra.mxu0 %v297
        %347 = vmatmul.f32.gmra.mxu0 %v309
        %v348 = vpop.f32.mrf.mxu0
        %v349 = vadd.f32 %v329, %v348
        %350 = vdwg.mxu0
        %351 = vmatpush.msra.mxu0 %v296
        %352 = vmatpush.msra.mxu0 %v294
        %353 = vmatpush.msra.mxu0 %v292
        %354 = vmatpush.msra.mxu0 %v290
        %355 = vmatpush.msra.mxu0 %v288
        %356 = vmatpush.msra.mxu0 %v286
        %357 = vmatpush.msra.mxu0 %v284
        %358 = vmatpush.msra.mxu0 %v282
        %359 = vmatpush.msra.mxu0 %v280
        %360 = vmatpush.msra.mxu0 %v278
        %361 = vmatpush.msra.mxu0 %v276
        %362 = vmatpush.msra.mxu0 %v274
        %363 = vmatpush.msra.mxu0 %v272
        %364 = vmatpush.msra.mxu0 %v270
        %365 = vmatpush.msra.mxu0 %v268
        %366 = vmatpush.msra.mxu0 %v266
        %367 = vmatmul.f32.gmra.mxu0 %v263
        %v368 = vpop.f32.mrf.mxu0
        %v369 = vadd.f32 %v305, %v368
        %370 = vdwg.mxu0
        %371 = vmatpush.msra.mxu0 0.0
        %372 = vmatpush.msra.mxu0 0.0
        %373 = vmatpush.msra.mxu0 0.0
        %374 = vmatpush.msra.mxu0 0.0
        %375 = vmatpush.msra.mxu0 0.0
        %376 = vmatpush.msra.mxu0 0.0
        %377 = vmatpush.msra.mxu0 0.0
        %378 = vmatpush.msra.mxu0 0.0
        %379 = vmatpush.msra.mxu0 0.0
        %380 = vmatpush.msra.mxu0 0.0
        %381 = vmatpush.msra.mxu0 0.0
        %382 = vmatpush.msra.mxu0 0.0
        %383 = vmatpush.msra.mxu0 0.0
        %384 = vmatpush.msra.mxu0 0.0
        %385 = vmatpush.msra.mxu0 %v300
        %386 = vmatpush.msra.mxu0 %v298
        %387 = vmatmul.f32.gmra.mxu0 %v309
        %v388 = vpop.f32.mrf.mxu0
        %v389 = vadd.f32 %v369, %v388
        %390 = vdwg.mxu0
        %vm391 = vcmp.ge.f32.partialorder %v349, 0.0
        %vm392 = vcmp.ge.f32.partialorder %v389, 0.0
        %v393 = vmul.f32 %v349, 0.05
        %v394 = vmul.f32 %v389, 0.05
        %v395 = vsel %vm391, %v349, %v393
        %v396 = vsel %vm392, %v389, %v394
        %397 = vst [vmem:[%s261] sm:$0xff] %v395
        %398 = vst [vmem:[%s261 + $0x8] sm:$0xff] %v396
        %s399 = smul.u32 2, %s14
        %p400 = scmp.lt.s32.totalorder %s399, 3
        %s401 = scalar_select %p400, %s399, 3
        %s402 = smul.addr %s401, 8
        %s403 = scalar_lea.vmem %s3, %s402
        // Predicated region
        $region56: #{rfdn_forward.56} parent=50 // pred_check
          %p404 = pneg %p100
        $region57: #{rfdn_forward.56} parent=50 // pred_check_branch
          %406 = sbr.rel (%p404) target = $region59
        $region58: #{rfdn_forward.56} parent=50 // pred_region
          %s407 = smul.u32 2, %s14
        $region59: #{rfdn_forward.56} parent=50 // pred_fallthru
          _
      $region51: #{rfdn_forward.56} parent=5 // pred_fallthru
        _
      %p408 = scmp.le.s32.totalorder 2, %s9
      // Predicated region
      $region60: #{rfdn_forward.56} parent=5 // pred_check
        %p409 = pneg %p408
      $region61: #{rfdn_forward.56} parent=5 // pred_check_branch
        %411 = sbr.rel (%p409) target = $region63
      $region62: #{rfdn_forward.56} parent=5 // pred_region
        %s412 = ssub.s32 %s9, 2
        // Predicated region
        $region64: #{rfdn_forward.56} parent=62 // pred_check
          %p413 = pneg %p106
        $region65: #{rfdn_forward.56} parent=62 // pred_check_branch
          %415 = sbr.rel (%p413) target = $region67
        $region66: #{rfdn_forward.56} parent=62 // pred_region
          %s416 = smul.u32 2, %s15
          %p417 = scmp.lt.s32.totalorder %s416, 3
          %s418 = scalar_select %p417, %s416, 3
          %s419 = smul.addr %s418, 8
          %s420 = scalar_lea.vmem %s3, %s419
        $region67: #{rfdn_forward.56} parent=62 // pred_fallthru
          _
      $region63: #{rfdn_forward.56} parent=5 // pred_fallthru
        _
    $region6: #{rfdn_forward.56} parent=1 // loop_footer
      %s13 = sadd.s32 1, %s9
    $region7: #{rfdn_forward.56} parent=1 // loop_footer_branch
      %8 = sbr.rel target = $region3
    $region8: #{rfdn_forward.56} parent=1 // loop_exit
      _

// kernel: rfdn_forward.53
$region0: #{rfdn_forward.53}
  #allocation0 [shape = 'u32[]', space=smem, size = 0x4, offset = 0x4, fixed_abs, tag = 'smem constant byte address 0x4 - core index']
  #allocation1 [shape = 'u32[72,128]{1,0:T(1,128)}', space=vmem, size = 0x9000, scoped, tag = 'internal scratch']
  %s0 = inlined_call_operand.vmem [shape: f32[24,144], index: 0, kind: input, shape index: {}]
  %s1 = inlined_call_operand.vmem [shape: f32[144,512], index: 1, kind: input, shape index: {}]
  %s2 = inlined_call_operand.vmem [shape: f32[24,1], index: 2, kind: input, shape index: {}]
  %s3 = inlined_call_operand.vmem [shape: f32[16,512], index: 3, kind: output, shape index: {0}]
  %s4 = inlined_call_operand.vmem [shape: f32[8,512], index: 4, kind: output, shape index: {1}]
  %5 = xla_tuple %s3, %s4
  %s6 = sld [smem:[#allocation0]]
  $region95: #{rfdn_forward.53} parent=0
    _
  %s8 = ssub.s32 1, %s6
  %s9 = scalar_select 0, %s8, %s6
  $region1: #{rfdn_forward.53} parent=0
    #allocation2 [shape = 'u8[294912]{0}', space=vmem, size = 0x48000, scoped, tag = 'input window, operand 1']
    #allocation3 [shape = 'u8[32768]{0}', space=vmem, size = 0x8000, scoped, tag = 'output window, operand 0']
    loop: start=0, step=1, limit=4
    $region2: #{rfdn_forward.53} parent=1 // loop_pre_header
      _
    $region3: #{rfdn_forward.53} parent=1 // loop_header
      %s11 = sphi 0, %s15
      %p12 = scmp.ge.s32.totalorder %s11, 4
      %s19 = sphi 0, %s19
      %s21 = sphi 0, %s19
      %s22 = sphi 0, %s21
      %s36 = sphi 0, %s22
      %s42 = sphi 0, %s44
      %s45 = sphi 0, %s42
      %s46 = sphi 0, %s45
      %s62 = sphi 0, %s46
      %s66 = sphi 0, %s66
      %s68 = sphi 0, %s66
      %s69 = sphi 0, %s68
      %s83 = sphi 0, %s69
      %s89 = sphi 0, %s91
      %s92 = sphi 0, %s89
      %s93 = sphi 0, %s92
      %s109 = sphi 0, %s93
      %s115 = sphi 0, %s117
      %s118 = sphi 0, %s115
      %s119 = sphi 0, %s118
      %s135 = sphi 0, %s119
    $region4: #{rfdn_forward.53} parent=1 // loop_header_branch
      %14 = sbr.rel (%p12) target = $region8
    $region5: #{rfdn_forward.53} parent=1 // loop_body
      %s16 = ssub.s32 %s11, 1
      %s17 = ssub.s32 %s11, 2
      %s18 = sadd.s32 %s11, 1
      %s20 = sadd.s32 %s19, 1
      %p23 = scmp.eq.s32.totalorder %s11, 1
      %p24 = scmp.ne.s32.totalorder %s19, %s21
      %p25 = scmp.eq.s32.totalorder %s11, 0
      %p26 = por %p24, %p25
      %p27 = scmp.ne.s32.totalorder %s19, %s21
      %p28 = scmp.eq.s32.totalorder %s16, 1
      %p29 = por %p27, %p28
      %p30 = scmp.ne.s32.totalorder %s21, %s22
      %p31 = scmp.eq.s32.totalorder %s16, 0
      %p32 = por %p30, %p31
      %p33 = scmp.ne.s32.totalorder %s21, %s22
      %p34 = scmp.eq.s32.totalorder %s17, 1
      %p35 = por %p33, %p34
      %p37 = scmp.ne.s32.totalorder %s22, %s36
      %p38 = scmp.eq.s32.totalorder %s17, 0
      %p39 = por %p37, %p38
      %s40 = ssub.s32 %s11, %s18
      %p41 = scmp.eq.s32.totalorder %s40, 0
      %s43 = sadd.s32 %s42, 1
      %s44 = scalar_select %p41, %s42, %s43
      %p47 = pneg %p41
      %p48 = scmp.eq.s32.totalorder %s11, 1
      %p49 = por %p47, %p48
      %p50 = scmp.ne.s32.totalorder %s42, %s45
      %p51 = scmp.eq.s32.totalorder %s11, 0
      %p52 = por %p50, %p51
      %p53 = scmp.ne.s32.totalorder %s42, %s45
      %p54 = scmp.eq.s32.totalorder %s16, 1
      %p55 = por %p53, %p54
      %p56 = scmp.ne.s32.totalorder %s45, %s46
      %p57 = scmp.eq.s32.totalorder %s16, 0
      %p58 = por %p56, %p57
      %p59 = scmp.ne.s32.totalorder %s45, %s46
      %p60 = scmp.eq.s32.totalorder %s17, 1
      %p61 = por %p59, %p60
      %p63 = scmp.ne.s32.totalorder %s46, %s62
      %p64 = scmp.eq.s32.totalorder %s17, 0
      %p65 = por %p63, %p64
      %s67 = sadd.s32 %s66, 1
      %p70 = scmp.eq.s32.totalorder %s11, 1
      %p71 = scmp.ne.s32.totalorder %s66, %s68
      %p72 = scmp.eq.s32.totalorder %s11, 0
      %p73 = por %p71, %p72
      %p74 = scmp.ne.s32.totalorder %s66, %s68
      %p75 = scmp.eq.s32.totalorder %s16, 1
      %p76 = por %p74, %p75
      %p77 = scmp.ne.s32.totalorder %s68, %s69
      %p78 = scmp.eq.s32.totalorder %s16, 0
      %p79 = por %p77, %p78
      %p80 = scmp.ne.s32.totalorder %s68, %s69
      %p81 = scmp.eq.s32.totalorder %s17, 1
      %p82 = por %p80, %p81
      %p84 = scmp.ne.s32.totalorder %s69, %s83
      %p85 = scmp.eq.s32.totalorder %s17, 0
      %p86 = por %p84, %p85
      %s87 = ssub.s32 %s11, %s18
      %p88 = scmp.eq.s32.totalorder %s87, 0
      %s90 = sadd.s32 %s89, 1
      %s91 = scalar_select %p88, %s89, %s90
      %p94 = pneg %p88
      %p95 = scmp.eq.s32.totalorder %s11, 1
      %p96 = por %p94, %p95
      %p97 = scmp.ne.s32.totalorder %s89, %s92
      %p98 = scmp.eq.s32.totalorder %s11, 0
      %p99 = por %p97, %p98
      %p100 = scmp.ne.s32.totalorder %s89, %s92
      %p101 = scmp.eq.s32.totalorder %s16, 1
      %p102 = por %p100, %p101
      %p103 = scmp.ne.s32.totalorder %s92, %s93
      %p104 = scmp.eq.s32.totalorder %s16, 0
      %p105 = por %p103, %p104
      %p106 = scmp.ne.s32.totalorder %s92, %s93
      %p107 = scmp.eq.s32.totalorder %s17, 1
      %p108 = por %p106, %p107
      %p110 = scmp.ne.s32.totalorder %s93, %s109
      %p111 = scmp.eq.s32.totalorder %s17, 0
      %p112 = por %p110, %p111
      %s113 = ssub.s32 %s11, %s18
      %p114 = scmp.eq.s32.totalorder %s113, 0
      %s116 = sadd.s32 %s115, 1
      %s117 = scalar_select %p114, %s115, %s116
      %p120 = pneg %p114
      %p121 = scmp.eq.s32.totalorder %s11, 1
      %p122 = por %p120, %p121
      %p123 = scmp.ne.s32.totalorder %s115, %s118
      %p124 = scmp.eq.s32.totalorder %s11, 0
      %p125 = por %p123, %p124
      %p126 = scmp.ne.s32.totalorder %s115, %s118
      %p127 = scmp.eq.s32.totalorder %s16, 1
      %p128 = por %p126, %p127
      %p129 = scmp.ne.s32.totalorder %s118, %s119
      %p130 = scmp.eq.s32.totalorder %s16, 0
      %p131 = por %p129, %p130
      %p132 = scmp.ne.s32.totalorder %s118, %s119
      %p133 = scmp.eq.s32.totalorder %s17, 1
      %p134 = por %p132, %p133
      %p136 = scmp.ne.s32.totalorder %s119, %s135
      %p137 = scmp.eq.s32.totalorder %s17, 0
      %p138 = por %p136, %p137
      %p139 = scmp.le.s32.totalorder 1, %s11
      %p140 = scmp.lt.s32.totalorder %s11, 3
      %p141 = pnand %p139, %p140
      %p142 = pneg %p141
      // Predicated region
      $region9: #{rfdn_forward.53} parent=5 // pred_check
        _
      $region10: #{rfdn_forward.53} parent=5 // pred_check_branch
        %144 = sbr.rel (%p141) target = $region12
      $region11: #{rfdn_forward.53} parent=5 // pred_region
        %s145 = ssub.s32 %s11, 1
        // Predicated region
        $region13: #{rfdn_forward.53} parent=11 // pred_check
          %p146 = pneg %p32
        $region14: #{rfdn_forward.53} parent=11 // pred_check_branch
          %148 = sbr.rel (%p146) target = $region16
        $region15: #{rfdn_forward.53} parent=11 // pred_region
          _
        $region16: #{rfdn_forward.53} parent=11 // pred_fallthru
          _
        // Predicated region
        $region17: #{rfdn_forward.53} parent=11 // pred_check
          %p149 = pneg %p79
        $region18: #{rfdn_forward.53} parent=11 // pred_check_branch
          %151 = sbr.rel (%p149) target = $region20
        $region19: #{rfdn_forward.53} parent=11 // pred_region
          _
        $region20: #{rfdn_forward.53} parent=11 // pred_fallthru
          _
      $region12: #{rfdn_forward.53} parent=5 // pred_fallthru
        _
      %p152 = scmp.lt.s32.totalorder %s11, 2
      // Predicated region
      $region21: #{rfdn_forward.53} parent=5 // pred_check
        %p153 = pneg %p152
      $region22: #{rfdn_forward.53} parent=5 // pred_check_branch
        %155 = sbr.rel (%p153) target = $region24
      $region23: #{rfdn_forward.53} parent=5 // pred_region
        // Predicated region
        $region25: #{rfdn_forward.53} parent=23 // pred_check
          %p156 = pneg %p52
        $region26: #{rfdn_forward.53} parent=23 // pred_check_branch
          %158 = sbr.rel (%p156) target = $region28
        $region27: #{rfdn_forward.53} parent=23 // pred_region
          %s159 = sand.u32 %s42, 1
          %s160 = sand.u32 %s42, 1
          %s161 = smul.addr %s160, 288
          %s162 = scalar_lea.vmem [#allocation2], %s161
          %s163 = smul.u32 2, %s11
          %s164 = smul.addr %s163, 8
          %s165 = scalar_lea.vmem %s1, %s164
          // Predicated region
          $region29: #{rfdn_forward.53} parent=27 // pred_check
            _
          $region30: #{rfdn_forward.53} parent=27 // pred_check_branch
            %167 = sbr.rel (0) target = $region32
          $region31: #{rfdn_forward.53} parent=27 // pred_region
            // Predicated region
            $region33: #{rfdn_forward.53} parent=31 // pred_check
              _
            $region34: #{rfdn_forward.53} parent=31 // pred_check_branch
              %169 = sbr.rel (0) target = $region36
            $region35: #{rfdn_forward.53} parent=31 // pred_region
              loop: start=0, step=1, limit=1
              $region37: #{rfdn_forward.53} parent=35 // loop_pre_header
                _
              $region38: #{rfdn_forward.53} parent=35 // loop_header
                %s171 = sphi 0, %s175
                %p172 = scmp.ge.s32.totalorder %s171, 1
                %s176 = sphi %s165, %s165
                %s177 = sphi %s162, %s162
              $region39: #{rfdn_forward.53} parent=35 // loop_header_branch
                %174 = sbr.rel (%p172) target = $region43
              $region40: #{rfdn_forward.53} parent=35 // loop_body
                %v178 = vld [vmem:[%s176] sm:$0xff]
                %179 = vst [vmem:[%s177] sm:$0xff] %v178
                %v180 = vld [vmem:[%s176 + $0x8] sm:$0xff]
                %181 = vst [vmem:[%s177 + $0x8] sm:$0xff] %v180
                %v182 = vld [vmem:[%s176 + $0x20] sm:$0xff]
                %183 = vst [vmem:[%s177 + $0x10] sm:$0xff] %v182
                %v184 = vld [vmem:[%s176 + $0x28] sm:$0xff]
                %185 = vst [vmem:[%s177 + $0x18] sm:$0xff] %v184
                %v186 = vld [vmem:[%s176 + $0x40] sm:$0xff]
                %187 = vst [vmem:[%s177 + $0x20] sm:$0xff] %v186
                %v188 = vld [vmem:[%s176 + $0x48] sm:$0xff]
                %189 = vst [vmem:[%s177 + $0x28] sm:$0xff] %v188
                %v190 = vld [vmem:[%s176 + $0x60] sm:$0xff]
                %191 = vst [vmem:[%s177 + $0x30] sm:$0xff] %v190
                %v192 = vld [vmem:[%s176 + $0x68] sm:$0xff]
                %193 = vst [vmem:[%s177 + $0x38] sm:$0xff] %v192
                %v194 = vld [vmem:[%s176 + $0x80] sm:$0xff]
                %195 = vst [vmem:[%s177 + $0x40] sm:$0xff] %v194
                %v196 = vld [vmem:[%s176 + $0x88] sm:$0xff]
                %197 = vst [vmem:[%s177 + $0x48] sm:$0xff] %v196
                %v198 = vld [vmem:[%s176 + $0xa0] sm:$0xff]
                %199 = vst [vmem:[%s177 + $0x50] sm:$0xff] %v198
                %v200 = vld [vmem:[%s176 + $0xa8] sm:$0xff]
                %201 = vst [vmem:[%s177 + $0x58] sm:$0xff] %v200
                %v202 = vld [vmem:[%s176 + $0xc0] sm:$0xff]
                %203 = vst [vmem:[%s177 + $0x60] sm:$0xff] %v202
                %v204 = vld [vmem:[%s176 + $0xc8] sm:$0xff]
                %205 = vst [vmem:[%s177 + $0x68] sm:$0xff] %v204
                %v206 = vld [vmem:[%s176 + $0xe0] sm:$0xff]
                %207 = vst [vmem:[%s177 + $0x70] sm:$0xff] %v206
                %v208 = vld [vmem:[%s176 + $0xe8] sm:$0xff]
                %209 = vst [vmem:[%s177 + $0x78] sm:$0xff] %v208
                %v210 = vld [vmem:[%s176 + $0x100] sm:$0xff]
                %211 = vst [vmem:[%s177 + $0x80] sm:$0xff] %v210
                %v212 = vld [vmem:[%s176 + $0x108] sm:$0xff]
                %213 = vst [vmem:[%s177 + $0x88] sm:$0xff] %v212
                %v214 = vld [vmem:[%s176 + $0x120] sm:$0xff]
                %215 = vst [vmem:[%s177 + $0x90] sm:$0xff] %v214
                %v216 = vld [vmem:[%s176 + $0x128] sm:$0xff]
                %217 = vst [vmem:[%s177 + $0x98] sm:$0xff] %v216
                %v218 = vld [vmem:[%s176 + $0x140] sm:$0xff]
                %219 = vst [vmem:[%s177 + $0xa0] sm:$0xff] %v218
                %v220 = vld [vmem:[%s176 + $0x148] sm:$0xff]
                %221 = vst [vmem:[%s177 + $0xa8] sm:$0xff] %v220
                %v222 = vld [vmem:[%s176 + $0x160] sm:$0xff]
                %223 = vst [vmem:[%s177 + $0xb0] sm:$0xff] %v222
                %v224 = vld [vmem:[%s176 + $0x168] sm:$0xff]
                %225 = vst [vmem:[%s177 + $0xb8] sm:$0xff] %v224
                %v226 = vld [vmem:[%s176 + $0x180] sm:$0xff]
                %227 = vst [vmem:[%s177 + $0xc0] sm:$0xff] %v226
                %v228 = vld [vmem:[%s176 + $0x188] sm:$0xff]
                %229 = vst [vmem:[%s177 + $0xc8] sm:$0xff] %v228
                %v230 = vld [vmem:[%s176 + $0x1a0] sm:$0xff]
                %231 = vst [vmem:[%s177 + $0xd0] sm:$0xff] %v230
                %v232 = vld [vmem:[%s176 + $0x1a8] sm:$0xff]
                %233 = vst [vmem:[%s177 + $0xd8] sm:$0xff] %v232
                %v234 = vld [vmem:[%s176 + $0x1c0] sm:$0xff]
                %235 = vst [vmem:[%s177 + $0xe0] sm:$0xff] %v234
                %v236 = vld [vmem:[%s176 + $0x1c8] sm:$0xff]
                %237 = vst [vmem:[%s177 + $0xe8] sm:$0xff] %v236
                %v238 = vld [vmem:[%s176 + $0x1e0] sm:$0xff]
                %239 = vst [vmem:[%s177 + $0xf0] sm:$0xff] %v238
                %v240 = vld [vmem:[%s176 + $0x1e8] sm:$0xff]
                %241 = vst [vmem:[%s177 + $0xf8] sm:$0xff] %v240
                %v242 = vld [vmem:[%s176 + $0x200] sm:$0xff]
                %243 = vst [vmem:[%s177 + $0x100] sm:$0xff] %v242
                %v244 = vld [vmem:[%s176 + $0x208] sm:$0xff]
                %245 = vst [vmem:[%s177 + $0x108] sm:$0xff] %v244
                %v246 = vld [vmem:[%s176 + $0x220] sm:$0xff]
                %247 = vst [vmem:[%s177 + $0x110] sm:$0xff] %v246
                %v248 = vld [vmem:[%s176 + $0x228] sm:$0xff]
                %249 = vst [vmem:[%s177 + $0x118] sm:$0xff] %v248
              $region41: #{rfdn_forward.53} parent=35 // loop_footer
                %s175 = sadd.s32 1, %s171
              $region42: #{rfdn_forward.53} parent=35 // loop_footer_branch
                %170 = sbr.rel target = $region38
              $region43: #{rfdn_forward.53} parent=35 // loop_exit
                _
            $region36: #{rfdn_forward.53} parent=31 // pred_fallthru
              _
            // Predicated region
            $region44: #{rfdn_forward.53} parent=31 // pred_check
              _
            $region45: #{rfdn_forward.53} parent=31 // pred_check_branch
              %251 = sbr.rel target = $region47
            $region46: #{rfdn_forward.53} parent=31 // pred_region
              _
            $region47: #{rfdn_forward.53} parent=31 // pred_fallthru
              _
          $region32: #{rfdn_forward.53} parent=27 // pred_fallthru
            _
          %252 = vnop
        $region28: #{rfdn_forward.53} parent=23 // pred_fallthru
          _
      $region24: #{rfdn_forward.53} parent=5 // pred_fallthru
        _
      %p253 = scmp.le.s32.totalorder 1, %s11
      %p254 = scmp.lt.s32.totalorder %s11, 3
      %p255 = pnand %p253, %p254
      %p256 = pneg %p255
      // Predicated region
      $region48: #{rfdn_forward.53} parent=5 // pred_check
        _
      $region49: #{rfdn_forward.53} parent=5 // pred_check_branch
        %258 = sbr.rel (%p255) target = $region51
      $region50: #{rfdn_forward.53} parent=5 // pred_region
        %s259 = ssub.s32 %s11, 1
        %s260 = sand.u32 %s45, 1
        %s261 = sand.u32 %s45, 1
        %s262 = smul.addr %s261, 288
        %s263 = scalar_lea.vmem [#allocation2], %s262
        // Predicated region
        $region52: #{rfdn_forward.53} parent=50 // pred_check
          %p264 = pneg %p58
        $region53: #{rfdn_forward.53} parent=50 // pred_check_branch
          %266 = sbr.rel (%p264) target = $region55
        $region54: #{rfdn_forward.53} parent=50 // pred_region
          _
        $region55: #{rfdn_forward.53} parent=50 // pred_fallthru
          _
        %p267 = pneg %p32
        %p268 = pneg %p29
        %s269 = sand.u32 %s45, 1
        %s270 = sand.u32 %s45, 1
        %s271 = smul.addr %s270, 288
        %s272 = scalar_lea.vmem [#allocation2], %s271
        %p273 = pneg %p58
        %p274 = pneg %p55
        %p275 = pneg %p79
        %p276 = pneg %p76
        %p277 = pneg %p105
        %p278 = pneg %p102
        %s279 = sand.u32 %s92, 1
        %s280 = sand.u32 %s92, 1
        %s281 = smul.addr %s280, 32
        %s282 = scalar_lea.vmem [#allocation3], %s281
        %p283 = pneg %p131
        %p284 = pneg %p128
        %s285 = smul.u32 2, %s16
        %p286 = scmp.lt.s32.totalorder %s285, 3
        %s287 = scalar_select %p286, %s285, 3
        %s288 = smul.addr %s287, 8
        %s289 = scalar_lea.vmem %s4, %s288
        %s290 = smul.u32 2, %s16
        %s291 = smul.u32 2, %s16
        %s292 = smul.u32 2, %s16
        %p293 = scmp.lt.s32.totalorder %s292, 3
        %s294 = scalar_select %p293, %s292, 3
        %s295 = smul.addr %s294, 8
        %s296 = scalar_lea.vmem %s4, %s295
        %s297 = smul.u32 2, %s16
        %v298 = vld [vmem:[%s263] sm:$0xff]
        %v299 = vld [vmem:[%s263 + $0x8] sm:$0xff]
        %v300 = vld [vmem:[%s263 + $0x10] sm:$0xff]
        %v301 = vld [vmem:[%s263 + $0x18] sm:$0xff]
        %v302 = vld [vmem:[%s263 + $0x20] sm:$0xff]
        %v303 = vld [vmem:[%s263 + $0x28] sm:$0xff]
        %v304 = vld [vmem:[%s263 + $0x30] sm:$0xff]
        %v305 = vld [vmem:[%s263 + $0x38] sm:$0xff]
        %v306 = vld [vmem:[%s263 + $0x40] sm:$0xff]
        %v307 = vld [vmem:[%s263 + $0x48] sm:$0xff]
        %v308 = vld [vmem:[%s263 + $0x50] sm:$0xff]
        %v309 = vld [vmem:[%s263 + $0x58] sm:$0xff]
        %v310 = vld [vmem:[%s263 + $0x60] sm:$0xff]
        %v311 = vld [vmem:[%s263 + $0x68] sm:$0xff]
        %v312 = vld [vmem:[%s263 + $0x70] sm:$0xff]
        %v313 = vld [vmem:[%s263 + $0x78] sm:$0xff]
        %v314 = vld [vmem:[%s263 + $0x80] sm:$0xff]
        %v315 = vld [vmem:[%s263 + $0x88] sm:$0xff]
        %v316 = vld [vmem:[%s263 + $0x90] sm:$0xff]
        %v317 = vld [vmem:[%s263 + $0x98] sm:$0xff]
        %v318 = vld [vmem:[%s263 + $0xa0] sm:$0xff]
        %v319 = vld [vmem:[%s263 + $0xa8] sm:$0xff]
        %v320 = vld [vmem:[%s263 + $0xb0] sm:$0xff]
        %v321 = vld [vmem:[%s263 + $0xb8] sm:$0xff]
        %v322 = vld [vmem:[%s263 + $0xc0] sm:$0xff]
        %v323 = vld [vmem:[%s263 + $0xc8] sm:$0xff]
        %v324 = vld [vmem:[%s263 + $0xd0] sm:$0xff]
        %v325 = vld [vmem:[%s263 + $0xd8] sm:$0xff]
        %v326 = vld [vmem:[%s263 + $0xe0] sm:$0xff]
        %v327 = vld [vmem:[%s263 + $0xe8] sm:$0xff]
        %v328 = vld [vmem:[%s263 + $0xf0] sm:$0xff]
        %v329 = vld [vmem:[%s263 + $0xf8] sm:$0xff]
        %v330 = vld [vmem:[%s263 + $0x100] sm:$0xff]
        %v331 = vld [vmem:[%s263 + $0x108] sm:$0xff]
        %v332 = vld [vmem:[%s263 + $0x110] sm:$0xff]
        %v333 = vld [vmem:[%s263 + $0x118] sm:$0xff]
        %v334 = vld [vmem:[%s0] sm:$0xff]
        %v335 = vld [vmem:[%s0 + $0x8] sm:$0xff]
        %v336 = vld [vmem:[%s0 + $0x10] sm:$0xff]
        %v337 = vld [vmem:[%s0 + $0x18] sm:$0xff]
        %v338 = vld [vmem:[%s0 + $0x20] sm:$0xff]
        %v339 = vld [vmem:[%s0 + $0x28] sm:$0xff]
        %v340 = vld [vmem:[%s2] sm:$0xff]
        %v341 = vld [vmem:[%s2 + $0x8] sm:$0xff]
        %v342 = vld [vmem:[%s2 + $0x10] sm:$0xff]
        %344 = vset.pattern.permute.xlu0 0
        %345 = vperm.xlu0 %344, %v340
        %v346 = vpop.permute.xlu0 %345
        %349 = vset.pattern.permute.xlu0 0
        %350 = vperm.xlu0 %349, %v341
        %v351 = vpop.permute.xlu0 %350
        %354 = vset.pattern.permute.xlu0 0
        %355 = vperm.xlu0 %354, %v342
        %v356 = vpop.permute.xlu0 %355
        %vm358 = vcmask 130048
        %v360 = vsel %vm358, %v335, 0
        %v363 = vsel %vm358, %v337, 0
        %v366 = vsel %vm358, %v339, 0
        %368 = vmatpush.msra.mxu0 %v328
        %369 = vmatpush.msra.mxu0 %v326
        %370 = vmatpush.msra.mxu0 %v324
        %371 = vmatpush.msra.mxu0 %v322
        %372 = vmatpush.msra.mxu0 %v320
        %373 = vmatpush.msra.mxu0 %v318
        %374 = vmatpush.msra.mxu0 %v316
        %375 = vmatpush.msra.mxu0 %v314
        %376 = vmatpush.msra.mxu0 %v312
        %377 = vmatpush.msra.mxu0 %v310
        %378 = vmatpush.msra.mxu0 %v308
        %379 = vmatpush.msra.mxu0 %v306
        %380 = vmatpush.msra.mxu0 %v304
        %381 = vmatpush.msra.mxu0 %v302
        %382 = vmatpush.msra.mxu0 %v300
        %383 = vmatpush.msra.mxu0 %v298
        %384 = vmatmul.f32.gmra.mxu0 %v334
        %v385 = vpop.f32.mrf.mxu0
        %v386 = vadd.f32 %v346, %v385
        %387 = vmatmul.f32.gmra.mxu0 %v336
        %v388 = vpop.f32.mrf.mxu0
        %v389 = vadd.f32 %v351, %v388
        %390 = vmatmul.f32.gmra.mxu0 %v338
        %v391 = vpop.f32.mrf.mxu0
        %v392 = vadd.f32 %v356, %v391
        %393 = vdwg.mxu0
        %394 = vmatpush.msra.mxu0 0.0
        %395 = vmatpush.msra.mxu0 0.0
        %396 = vmatpush.msra.mxu0 0.0
        %397 = vmatpush.msra.mxu0 0.0
        %398 = vmatpush.msra.mxu0 0.0
        %399 = vmatpush.msra.mxu0 0.0
        %400 = vmatpush.msra.mxu0 0.0
        %401 = vmatpush.msra.mxu0 0.0
        %402 = vmatpush.msra.mxu0 0.0
        %403 = vmatpush.msra.mxu0 0.0
        %404 = vmatpush.msra.mxu0 0.0
        %405 = vmatpush.msra.mxu0 0.0
        %406 = vmatpush.msra.mxu0 0.0
        %407 = vmatpush.msra.mxu0 0.0
        %408 = vmatpush.msra.mxu0 %v332
        %409 = vmatpush.msra.mxu0 %v330
        %410 = vmatmul.f32.gmra.mxu0 %v360
        %v411 = vpop.f32.mrf.mxu0
        %v412 = vadd.f32 %v386, %v411
        %413 = vmatmul.f32.gmra.mxu0 %v363
        %v414 = vpop.f32.mrf.mxu0
        %v415 = vadd.f32 %v389, %v414
        %416 = vmatmul.f32.gmra.mxu0 %v366
        %v417 = vpop.f32.mrf.mxu0
        %v418 = vadd.f32 %v392, %v417
        %419 = vdwg.mxu0
        %420 = vmatpush.msra.mxu0 %v329
        %421 = vmatpush.msra.mxu0 %v327
        %422 = vmatpush.msra.mxu0 %v325
        %423 = vmatpush.msra.mxu0 %v323
        %424 = vmatpush.msra.mxu0 %v321
        %425 = vmatpush.msra.mxu0 %v319
        %426 = vmatpush.msra.mxu0 %v317
        %427 = vmatpush.msra.mxu0 %v315
        %428 = vmatpush.msra.mxu0 %v313
        %429 = vmatpush.msra.mxu0 %v311
        %430 = vmatpush.msra.mxu0 %v309
        %431 = vmatpush.msra.mxu0 %v307
        %432 = vmatpush.msra.mxu0 %v305
        %433 = vmatpush.msra.mxu0 %v303
        %434 = vmatpush.msra.mxu0 %v301
        %435 = vmatpush.msra.mxu0 %v299
        %436 = vmatmul.f32.gmra.mxu0 %v334
        %v437 = vpop.f32.mrf.mxu0
        %v438 = vadd.f32 %v346, %v437
        %439 = vmatmul.f32.gmra.mxu0 %v336
        %v440 = vpop.f32.mrf.mxu0
        %v441 = vadd.f32 %v351, %v440
        %442 = vmatmul.f32.gmra.mxu0 %v338
        %v443 = vpop.f32.mrf.mxu0
        %v444 = vadd.f32 %v356, %v443
        %445 = vdwg.mxu0
        %446 = vmatpush.msra.mxu0 0.0
        %447 = vmatpush.msra.mxu0 0.0
        %448 = vmatpush.msra.mxu0 0.0
        %449 = vmatpush.msra.mxu0 0.0
        %450 = vmatpush.msra.mxu0 0.0
        %451 = vmatpush.msra.mxu0 0.0
        %452 = vmatpush.msra.mxu0 0.0
        %453 = vmatpush.msra.mxu0 0.0
        %454 = vmatpush.msra.mxu0 0.0
        %455 = vmatpush.msra.mxu0 0.0
        %456 = vmatpush.msra.mxu0 0.0
        %457 = vmatpush.msra.mxu0 0.0
        %458 = vmatpush.msra.mxu0 0.0
        %459 = vmatpush.msra.mxu0 0.0
        %460 = vmatpush.msra.mxu0 %v333
        %461 = vmatpush.msra.mxu0 %v331
        %462 = vmatmul.f32.gmra.mxu0 %v360
        %v463 = vpop.f32.mrf.mxu0
        %v464 = vadd.f32 %v438, %v463
        %465 = vmatmul.f32.gmra.mxu0 %v363
        %v466 = vpop.f32.mrf.mxu0
        %v467 = vadd.f32 %v441, %v466
        %468 = vmatmul.f32.gmra.mxu0 %v366
        %v469 = vpop.f32.mrf.mxu0
        %v470 = vadd.f32 %v444, %v469
        %471 = vdwg.mxu0
        %v472 = vadd.f32 %v412, %v314
        %v473 = vadd.f32 %v464, %v315
        %v474 = vadd.f32 %v415, %v316
        %v475 = vadd.f32 %v467, %v317
        %vm476 = vcmp.ge.f32.partialorder %v472, 0.0
        %vm477 = vcmp.ge.f32.partialorder %v473, 0.0
        %vm478 = vcmp.ge.f32.partialorder %v474, 0.0
        %vm479 = vcmp.ge.f32.partialorder %v475, 0.0
        %v480 = vmul.f32 %v472, 0.05
        %v481 = vmul.f32 %v473, 0.05
        %v482 = vmul.f32 %v474, 0.05
        %v483 = vmul.f32 %v475, 0.05
        %v484 = vsel %vm476, %v472, %v480
        %v485 = vsel %vm477, %v473, %v481
        %v486 = vsel %vm478, %v474, %v482
        %v487 = vsel %vm479, %v475, %v483
        %488 = vst [vmem:[%s282] sm:$0xff] %v484
        %489 = vst [vmem:[%s282 + $0x8] sm:$0xff] %v485
        %490 = vst [vmem:[%s282 + $0x10] sm:$0xff] %v486
        %491 = vst [vmem:[%s282 + $0x18] sm:$0xff] %v487
        %vm492 = vcmp.ge.f32.partialorder %v418, 0.0
        %vm493 = vcmp.ge.f32.partialorder %v470, 0.0
        %v494 = vmul.f32 %v418, 0.05
        %v495 = vmul.f32 %v470, 0.05
        %v496 = vsel %vm492, %v418, %v494
        %v497 = vsel %vm493, %v470, %v495
        %498 = vst [vmem:[%s296] sm:$0xff] %v496
        %499 = vst [vmem:[%s296 + $0x8] sm:$0xff] %v497
        %s500 = sand.u32 %s92, 1
        %s501 = sand.u32 %s92, 1
        %s502 = smul.addr %s501, 32
        %s503 = scalar_lea.vmem [#allocation3], %s502
        %s504 = smul.u32 2, %s16
        %p505 = scmp.lt.s32.totalorder %s504, 3
        %s506 = scalar_select %p505, %s504, 3
        %s507 = smul.addr %s506, 8
        %s508 = scalar_lea.vmem %s4, %s507
        // Predicated region
        $region56: #{rfdn_forward.53} parent=50 // pred_check
          %p509 = pneg %p102
        $region57: #{rfdn_forward.53} parent=50 // pred_check_branch
          %511 = sbr.rel (%p509) target = $region59
        $region58: #{rfdn_forward.53} parent=50 // pred_region
          %s512 = smul.u32 2, %s16
          %s513 = smul.addr %s512, 8
          %s514 = scalar_lea.vmem %s3, %s513
          // Predicated region
          $region60: #{rfdn_forward.53} parent=58 // pred_check
            _
          $region61: #{rfdn_forward.53} parent=58 // pred_check_branch
            %516 = sbr.rel (0) target = $region63
          $region62: #{rfdn_forward.53} parent=58 // pred_region
            // Predicated region
            $region64: #{rfdn_forward.53} parent=62 // pred_check
              _
            $region65: #{rfdn_forward.53} parent=62 // pred_check_branch
              %518 = sbr.rel (0) target = $region67
            $region66: #{rfdn_forward.53} parent=62 // pred_region
              loop: start=0, step=1, limit=1
              $region68: #{rfdn_forward.53} parent=66 // loop_pre_header
                _
              $region69: #{rfdn_forward.53} parent=66 // loop_header
                %s520 = sphi 0, %s524
                %p521 = scmp.ge.s32.totalorder %s520, 1
                %s525 = sphi %s503, %s503
                %s526 = sphi %s514, %s514
              $region70: #{rfdn_forward.53} parent=66 // loop_header_branch
                %523 = sbr.rel (%p521) target = $region74
              $region71: #{rfdn_forward.53} parent=66 // loop_body
                %v527 = vld [vmem:[%s525] sm:$0xff]
                %528 = vst [vmem:[%s526] sm:$0xff] %v527
                %v529 = vld [vmem:[%s525 + $0x8] sm:$0xff]
                %530 = vst [vmem:[%s526 + $0x8] sm:$0xff] %v529
                %v531 = vld [vmem:[%s525 + $0x10] sm:$0xff]
                %532 = vst [vmem:[%s526 + $0x20] sm:$0xff] %v531
                %v533 = vld [vmem:[%s525 + $0x18] sm:$0xff]
                %534 = vst [vmem:[%s526 + $0x28] sm:$0xff] %v533
              $region72: #{rfdn_forward.53} parent=66 // loop_footer
                %s524 = sadd.s32 1, %s520
              $region73: #{rfdn_forward.53} parent=66 // loop_footer_branch
                %519 = sbr.rel target = $region69
              $region74: #{rfdn_forward.53} parent=66 // loop_exit
                _
            $region67: #{rfdn_forward.53} parent=62 // pred_fallthru
              _
            // Predicated region
            $region75: #{rfdn_forward.53} parent=62 // pred_check
              _
            $region76: #{rfdn_forward.53} parent=62 // pred_check_branch
              %536 = sbr.rel target = $region78
            $region77: #{rfdn_forward.53} parent=62 // pred_region
              _
            $region78: #{rfdn_forward.53} parent=62 // pred_fallthru
              _
          $region63: #{rfdn_forward.53} parent=58 // pred_fallthru
            _
          %537 = vnop
        $region59: #{rfdn_forward.53} parent=50 // pred_fallthru
          _
        // Predicated region
        $region79: #{rfdn_forward.53} parent=50 // pred_check
          %p538 = pneg %p128
        $region80: #{rfdn_forward.53} parent=50 // pred_check_branch
          %540 = sbr.rel (%p538) target = $region82
        $region81: #{rfdn_forward.53} parent=50 // pred_region
          %s541 = smul.u32 2, %s16
        $region82: #{rfdn_forward.53} parent=50 // pred_fallthru
          _
      $region51: #{rfdn_forward.53} parent=5 // pred_fallthru
        _
      %p542 = scmp.le.s32.totalorder 2, %s11
      // Predicated region
      $region83: #{rfdn_forward.53} parent=5 // pred_check
        %p543 = pneg %p542
      $region84: #{rfdn_forward.53} parent=5 // pred_check_branch
        %545 = sbr.rel (%p543) target = $region86
      $region85: #{rfdn_forward.53} parent=5 // pred_region
        %s546 = ssub.s32 %s11, 2
        // Predicated region
        $region87: #{rfdn_forward.53} parent=85 // pred_check
          %p547 = pneg %p108
        $region88: #{rfdn_forward.53} parent=85 // pred_check_branch
          %549 = sbr.rel (%p547) target = $region90
        $region89: #{rfdn_forward.53} parent=85 // pred_region
          %s550 = sand.u32 %s93, 1
          %s551 = sand.u32 %s93, 1
          %s552 = smul.addr %s551, 32
          %s553 = scalar_lea.vmem [#allocation3], %s552
        $region90: #{rfdn_forward.53} parent=85 // pred_fallthru
          _
        // Predicated region
        $region91: #{rfdn_forward.53} parent=85 // pred_check
          %p554 = pneg %p134
        $region92: #{rfdn_forward.53} parent=85 // pred_check_branch
          %556 = sbr.rel (%p554) target = $region94
        $region93: #{rfdn_forward.53} parent=85 // pred_region
          %s557 = smul.u32 2, %s17
          %p558 = scmp.lt.s32.totalorder %s557, 3
          %s559 = scalar_select %p558, %s557, 3
          %s560 = smul.addr %s559, 8
          %s561 = scalar_lea.vmem %s4, %s560
        $region94: #{rfdn_forward.53} parent=85 // pred_fallthru
          _
      $region86: #{rfdn_forward.53} parent=5 // pred_fallthru
        _
    $region6: #{rfdn_forward.53} parent=1 // loop_footer
      %s15 = sadd.s32 1, %s11
    $region7: #{rfdn_forward.53} parent=1 // loop_footer_branch
      %10 = sbr.rel target = $region3
    $region8: #{rfdn_forward.53} parent=1 // loop_exit
      _

// kernel: rfdn_forward.57
$region0: #{rfdn_forward.57}
  #allocation0 [shape = 'u32[]', space=smem, size = 0x4, offset = 0x4, fixed_abs, tag = 'smem constant byte address 0x4 - core index']
  #allocation1 [shape = 'u32[72,128]{1,0:T(1,128)}', space=vmem, size = 0x9000, scoped, tag = 'internal scratch']
  %s0 = inlined_call_operand.vmem [shape: f32[16,8], index: 0, kind: input, shape index: {}]
  %s1 = inlined_call_operand.vmem [shape: f32[16,8], index: 1, kind: input, shape index: {}]
  %s2 = inlined_call_operand.vmem [shape: f32[16,8], index: 2, kind: input, shape index: {}]
  %s3 = inlined_call_operand.vmem [shape: f32[16,8], index: 3, kind: input, shape index: {}]
  %s4 = inlined_call_operand.vmem [shape: f32[8,512], index: 4, kind: input, shape index: {}]
  %s5 = inlined_call_operand.vmem [shape: f32[8,512], index: 5, kind: input, shape index: {}]
  %s6 = inlined_call_operand.vmem [shape: f32[8,512], index: 6, kind: input, shape index: {}]
  %s7 = inlined_call_operand.vmem [shape: f32[8,512], index: 7, kind: input, shape index: {}]
  %s8 = inlined_call_operand.vmem [shape: f32[16,1], index: 8, kind: input, shape index: {}]
  %s9 = inlined_call_operand.vmem [shape: f32[16,512], index: 9, kind: output, shape index: {}]
  %s10 = sld [smem:[#allocation0]]
  $region88: #{rfdn_forward.57} parent=0
    _
  %s12 = ssub.s32 1, %s10
  %s13 = scalar_select 0, %s12, %s10
  $region1: #{rfdn_forward.57} parent=0
    #allocation2 [shape = 'u8[32768]{0}', space=vmem, size = 0x8000, scoped, tag = 'output window, operand 0']
    loop: start=0, step=1, limit=4
    $region2: #{rfdn_forward.57} parent=1 // loop_pre_header
      _
    $region3: #{rfdn_forward.57} parent=1 // loop_header
      %s15 = sphi 0, %s19
      %p16 = scmp.ge.s32.totalorder %s15, 4
      %s23 = sphi 0, %s23
      %s25 = sphi 0, %s23
      %s26 = sphi 0, %s25
      %s40 = sphi 0, %s26
      %s44 = sphi 0, %s44
      %s46 = sphi 0, %s44
      %s47 = sphi 0, %s46
      %s61 = sphi 0, %s47
      %s65 = sphi 0, %s65
      %s67 = sphi 0, %s65
      %s68 = sphi 0, %s67
      %s82 = sphi 0, %s68
      %s86 = sphi 0, %s86
      %s88 = sphi 0, %s86
      %s89 = sphi 0, %s88
      %s103 = sphi 0, %s89
      %s109 = sphi 0, %s111
      %s112 = sphi 0, %s109
      %s113 = sphi 0, %s112
      %s129 = sphi 0, %s113
      %s135 = sphi 0, %s137
      %s138 = sphi 0, %s135
      %s139 = sphi 0, %s138
      %s155 = sphi 0, %s139
      %s161 = sphi 0, %s163
      %s164 = sphi 0, %s161
      %s165 = sphi 0, %s164
      %s181 = sphi 0, %s165
      %s187 = sphi 0, %s189
      %s190 = sphi 0, %s187
      %s191 = sphi 0, %s190
      %s207 = sphi 0, %s191
      %s211 = sphi 0, %s211
      %s213 = sphi 0, %s211
      %s214 = sphi 0, %s213
      %s228 = sphi 0, %s214
      %s234 = sphi 0, %s236
      %s237 = sphi 0, %s234
      %s238 = sphi 0, %s237
      %s254 = sphi 0, %s238
    $region4: #{rfdn_forward.57} parent=1 // loop_header_branch
      %18 = sbr.rel (%p16) target = $region8
    $region5: #{rfdn_forward.57} parent=1 // loop_body
      %s20 = ssub.s32 %s15, 1
      %s21 = ssub.s32 %s15, 2
      %s22 = sadd.s32 %s15, 1
      %s24 = sadd.s32 %s23, 1
      %p27 = scmp.eq.s32.totalorder %s15, 1
      %p28 = scmp.ne.s32.totalorder %s23, %s25
      %p29 = scmp.eq.s32.totalorder %s15, 0
      %p30 = por %p28, %p29
      %p31 = scmp.ne.s32.totalorder %s23, %s25
      %p32 = scmp.eq.s32.totalorder %s20, 1
      %p33 = por %p31, %p32
      %p34 = scmp.ne.s32.totalorder %s25, %s26
      %p35 = scmp.eq.s32.totalorder %s20, 0
      %p36 = por %p34, %p35
      %p37 = scmp.ne.s32.totalorder %s25, %s26
      %p38 = scmp.eq.s32.totalorder %s21, 1
      %p39 = por %p37, %p38
      %p41 = scmp.ne.s32.totalorder %s26, %s40
      %p42 = scmp.eq.s32.totalorder %s21, 0
      %p43 = por %p41, %p42
      %s45 = sadd.s32 %s44, 1
      %p48 = scmp.eq.s32.totalorder %s15, 1
      %p49 = scmp.ne.s32.totalorder %s44, %s46
      %p50 = scmp.eq.s32.totalorder %s15, 0
      %p51 = por %p49, %p50
      %p52 = scmp.ne.s32.totalorder %s44, %s46
      %p53 = scmp.eq.s32.totalorder %s20, 1
      %p54 = por %p52, %p53
      %p55 = scmp.ne.s32.totalorder %s46, %s47
      %p56 = scmp.eq.s32.totalorder %s20, 0
      %p57 = por %p55, %p56
      %p58 = scmp.ne.s32.totalorder %s46, %s47
      %p59 = scmp.eq.s32.totalorder %s21, 1
      %p60 = por %p58, %p59
      %p62 = scmp.ne.s32.totalorder %s47, %s61
      %p63 = scmp.eq.s32.totalorder %s21, 0
      %p64 = por %p62, %p63
      %s66 = sadd.s32 %s65, 1
      %p69 = scmp.eq.s32.totalorder %s15, 1
      %p70 = scmp.ne.s32.totalorder %s65, %s67
      %p71 = scmp.eq.s32.totalorder %s15, 0
      %p72 = por %p70, %p71
      %p73 = scmp.ne.s32.totalorder %s65, %s67
      %p74 = scmp.eq.s32.totalorder %s20, 1
      %p75 = por %p73, %p74
      %p76 = scmp.ne.s32.totalorder %s67, %s68
      %p77 = scmp.eq.s32.totalorder %s20, 0
      %p78 = por %p76, %p77
      %p79 = scmp.ne.s32.totalorder %s67, %s68
      %p80 = scmp.eq.s32.totalorder %s21, 1
      %p81 = por %p79, %p80
      %p83 = scmp.ne.s32.totalorder %s68, %s82
      %p84 = scmp.eq.s32.totalorder %s21, 0
      %p85 = por %p83, %p84
      %s87 = sadd.s32 %s86, 1
      %p90 = scmp.eq.s32.totalorder %s15, 1
      %p91 = scmp.ne.s32.totalorder %s86, %s88
      %p92 = scmp.eq.s32.totalorder %s15, 0
      %p93 = por %p91, %p92
      %p94 = scmp.ne.s32.totalorder %s86, %s88
      %p95 = scmp.eq.s32.totalorder %s20, 1
      %p96 = por %p94, %p95
      %p97 = scmp.ne.s32.totalorder %s88, %s89
      %p98 = scmp.eq.s32.totalorder %s20, 0
      %p99 = por %p97, %p98
      %p100 = scmp.ne.s32.totalorder %s88, %s89
      %p101 = scmp.eq.s32.totalorder %s21, 1
      %p102 = por %p100, %p101
      %p104 = scmp.ne.s32.totalorder %s89, %s103
      %p105 = scmp.eq.s32.totalorder %s21, 0
      %p106 = por %p104, %p105
      %s107 = ssub.s32 %s15, %s22
      %p108 = scmp.eq.s32.totalorder %s107, 0
      %s110 = sadd.s32 %s109, 1
      %s111 = scalar_select %p108, %s109, %s110
      %p114 = pneg %p108
      %p115 = scmp.eq.s32.totalorder %s15, 1
      %p116 = por %p114, %p115
      %p117 = scmp.ne.s32.totalorder %s109, %s112
      %p118 = scmp.eq.s32.totalorder %s15, 0
      %p119 = por %p117, %p118
      %p120 = scmp.ne.s32.totalorder %s109, %s112
      %p121 = scmp.eq.s32.totalorder %s20, 1
      %p122 = por %p120, %p121
      %p123 = scmp.ne.s32.totalorder %s112, %s113
      %p124 = scmp.eq.s32.totalorder %s20, 0
      %p125 = por %p123, %p124
      %p126 = scmp.ne.s32.totalorder %s112, %s113
      %p127 = scmp.eq.s32.totalorder %s21, 1
      %p128 = por %p126, %p127
      %p130 = scmp.ne.s32.totalorder %s113, %s129
      %p131 = scmp.eq.s32.totalorder %s21, 0
      %p132 = por %p130, %p131
      %s133 = ssub.s32 %s15, %s22
      %p134 = scmp.eq.s32.totalorder %s133, 0
      %s136 = sadd.s32 %s135, 1
      %s137 = scalar_select %p134, %s135, %s136
      %p140 = pneg %p134
      %p141 = scmp.eq.s32.totalorder %s15, 1
      %p142 = por %p140, %p141
      %p143 = scmp.ne.s32.totalorder %s135, %s138
      %p144 = scmp.eq.s32.totalorder %s15, 0
      %p145 = por %p143, %p144
      %p146 = scmp.ne.s32.totalorder %s135, %s138
      %p147 = scmp.eq.s32.totalorder %s20, 1
      %p148 = por %p146, %p147
      %p149 = scmp.ne.s32.totalorder %s138, %s139
      %p150 = scmp.eq.s32.totalorder %s20, 0
      %p151 = por %p149, %p150
      %p152 = scmp.ne.s32.totalorder %s138, %s139
      %p153 = scmp.eq.s32.totalorder %s21, 1
      %p154 = por %p152, %p153
      %p156 = scmp.ne.s32.totalorder %s139, %s155
      %p157 = scmp.eq.s32.totalorder %s21, 0
      %p158 = por %p156, %p157
      %s159 = ssub.s32 %s15, %s22
      %p160 = scmp.eq.s32.totalorder %s159, 0
      %s162 = sadd.s32 %s161, 1
      %s163 = scalar_select %p160, %s161, %s162
      %p166 = pneg %p160
      %p167 = scmp.eq.s32.totalorder %s15, 1
      %p168 = por %p166, %p167
      %p169 = scmp.ne.s32.totalorder %s161, %s164
      %p170 = scmp.eq.s32.totalorder %s15, 0
      %p171 = por %p169, %p170
      %p172 = scmp.ne.s32.totalorder %s161, %s164
      %p173 = scmp.eq.s32.totalorder %s20, 1
      %p174 = por %p172, %p173
      %p175 = scmp.ne.s32.totalorder %s164, %s165
      %p176 = scmp.eq.s32.totalorder %s20, 0
      %p177 = por %p175, %p176
      %p178 = scmp.ne.s32.totalorder %s164, %s165
      %p179 = scmp.eq.s32.totalorder %s21, 1
      %p180 = por %p178, %p179
      %p182 = scmp.ne.s32.totalorder %s165, %s181
      %p183 = scmp.eq.s32.totalorder %s21, 0
      %p184 = por %p182, %p183
      %s185 = ssub.s32 %s15, %s22
      %p186 = scmp.eq.s32.totalorder %s185, 0
      %s188 = sadd.s32 %s187, 1
      %s189 = scalar_select %p186, %s187, %s188
      %p192 = pneg %p186
      %p193 = scmp.eq.s32.totalorder %s15, 1
      %p194 = por %p192, %p193
      %p195 = scmp.ne.s32.totalorder %s187, %s190
      %p196 = scmp.eq.s32.totalorder %s15, 0
      %p197 = por %p195, %p196
      %p198 = scmp.ne.s32.totalorder %s187, %s190
      %p199 = scmp.eq.s32.totalorder %s20, 1
      %p200 = por %p198, %p199
      %p201 = scmp.ne.s32.totalorder %s190, %s191
      %p202 = scmp.eq.s32.totalorder %s20, 0
      %p203 = por %p201, %p202
      %p204 = scmp.ne.s32.totalorder %s190, %s191
      %p205 = scmp.eq.s32.totalorder %s21, 1
      %p206 = por %p204, %p205
      %p208 = scmp.ne.s32.totalorder %s191, %s207
      %p209 = scmp.eq.s32.totalorder %s21, 0
      %p210 = por %p208, %p209
      %s212 = sadd.s32 %s211, 1
      %p215 = scmp.eq.s32.totalorder %s15, 1
      %p216 = scmp.ne.s32.totalorder %s211, %s213
      %p217 = scmp.eq.s32.totalorder %s15, 0
      %p218 = por %p216, %p217
      %p219 = scmp.ne.s32.totalorder %s211, %s213
      %p220 = scmp.eq.s32.totalorder %s20, 1
      %p221 = por %p219, %p220
      %p222 = scmp.ne.s32.totalorder %s213, %s214
      %p223 = scmp.eq.s32.totalorder %s20, 0
      %p224 = por %p222, %p223
      %p225 = scmp.ne.s32.totalorder %s213, %s214
      %p226 = scmp.eq.s32.totalorder %s21, 1
      %p227 = por %p225, %p226
      %p229 = scmp.ne.s32.totalorder %s214, %s228
      %p230 = scmp.eq.s32.totalorder %s21, 0
      %p231 = por %p229, %p230
      %s232 = ssub.s32 %s15, %s22
      %p233 = scmp.eq.s32.totalorder %s232, 0
      %s235 = sadd.s32 %s234, 1
      %s236 = scalar_select %p233, %s234, %s235
      %p239 = pneg %p233
      %p240 = scmp.eq.s32.totalorder %s15, 1
      %p241 = por %p239, %p240
      %p242 = scmp.ne.s32.totalorder %s234, %s237
      %p243 = scmp.eq.s32.totalorder %s15, 0
      %p244 = por %p242, %p243
      %p245 = scmp.ne.s32.totalorder %s234, %s237
      %p246 = scmp.eq.s32.totalorder %s20, 1
      %p247 = por %p245, %p246
      %p248 = scmp.ne.s32.totalorder %s237, %s238
      %p249 = scmp.eq.s32.totalorder %s20, 0
      %p250 = por %p248, %p249
      %p251 = scmp.ne.s32.totalorder %s237, %s238
      %p252 = scmp.eq.s32.totalorder %s21, 1
      %p253 = por %p251, %p252
      %p255 = scmp.ne.s32.totalorder %s238, %s254
      %p256 = scmp.eq.s32.totalorder %s21, 0
      %p257 = por %p255, %p256
      %p258 = scmp.le.s32.totalorder 1, %s15
      %p259 = scmp.lt.s32.totalorder %s15, 3
      %p260 = pnand %p258, %p259
      %p261 = pneg %p260
      // Predicated region
      $region9: #{rfdn_forward.57} parent=5 // pred_check
        _
      $region10: #{rfdn_forward.57} parent=5 // pred_check_branch
        %263 = sbr.rel (%p260) target = $region12
      $region11: #{rfdn_forward.57} parent=5 // pred_region
        %s264 = ssub.s32 %s15, 1
        // Predicated region
        $region13: #{rfdn_forward.57} parent=11 // pred_check
          %p265 = pneg %p36
        $region14: #{rfdn_forward.57} parent=11 // pred_check_branch
          %267 = sbr.rel (%p265) target = $region16
        $region15: #{rfdn_forward.57} parent=11 // pred_region
          _
        $region16: #{rfdn_forward.57} parent=11 // pred_fallthru
          _
        // Predicated region
        $region17: #{rfdn_forward.57} parent=11 // pred_check
          %p268 = pneg %p57
        $region18: #{rfdn_forward.57} parent=11 // pred_check_branch
          %270 = sbr.rel (%p268) target = $region20
        $region19: #{rfdn_forward.57} parent=11 // pred_region
          _
        $region20: #{rfdn_forward.57} parent=11 // pred_fallthru
          _
        // Predicated region
        $region21: #{rfdn_forward.57} parent=11 // pred_check
          %p271 = pneg %p78
        $region22: #{rfdn_forward.57} parent=11 // pred_check_branch
          %273 = sbr.rel (%p271) target = $region24
        $region23: #{rfdn_forward.57} parent=11 // pred_region
          _
        $region24: #{rfdn_forward.57} parent=11 // pred_fallthru
          _
        // Predicated region
        $region25: #{rfdn_forward.57} parent=11 // pred_check
          %p274 = pneg %p99
        $region26: #{rfdn_forward.57} parent=11 // pred_check_branch
          %276 = sbr.rel (%p274) target = $region28
        $region27: #{rfdn_forward.57} parent=11 // pred_region
          _
        $region28: #{rfdn_forward.57} parent=11 // pred_fallthru
          _
        // Predicated region
        $region29: #{rfdn_forward.57} parent=11 // pred_check
          %p277 = pneg %p224
        $region30: #{rfdn_forward.57} parent=11 // pred_check_branch
          %279 = sbr.rel (%p277) target = $region32
        $region31: #{rfdn_forward.57} parent=11 // pred_region
          _
        $region32: #{rfdn_forward.57} parent=11 // pred_fallthru
          _
      $region12: #{rfdn_forward.57} parent=5 // pred_fallthru
        _
      %p280 = scmp.lt.s32.totalorder %s15, 2
      // Predicated region
      $region33: #{rfdn_forward.57} parent=5 // pred_check
        %p281 = pneg %p280
      $region34: #{rfdn_forward.57} parent=5 // pred_check_branch
        %283 = sbr.rel (%p281) target = $region36
      $region35: #{rfdn_forward.57} parent=5 // pred_region
        // Predicated region
        $region37: #{rfdn_forward.57} parent=35 // pred_check
          %p284 = pneg %p119
        $region38: #{rfdn_forward.57} parent=35 // pred_check_branch
          %286 = sbr.rel (%p284) target = $region40
        $region39: #{rfdn_forward.57} parent=35 // pred_region
          %s287 = smul.u32 2, %s15
          %p288 = scmp.lt.s32.totalorder %s287, 3
          %s289 = scalar_select %p288, %s287, 3
          %s290 = smul.addr %s289, 8
          %s291 = scalar_lea.vmem %s4, %s290
          %s292 = smul.u32 2, %s15
        $region40: #{rfdn_forward.57} parent=35 // pred_fallthru
          _
        // Predicated region
        $region41: #{rfdn_forward.57} parent=35 // pred_check
          %p293 = pneg %p145
        $region42: #{rfdn_forward.57} parent=35 // pred_check_branch
          %295 = sbr.rel (%p293) target = $region44
        $region43: #{rfdn_forward.57} parent=35 // pred_region
          %s296 = smul.u32 2, %s15
          %p297 = scmp.lt.s32.totalorder %s296, 3
          %s298 = scalar_select %p297, %s296, 3
          %s299 = smul.addr %s298, 8
          %s300 = scalar_lea.vmem %s5, %s299
          %s301 = smul.u32 2, %s15
        $region44: #{rfdn_forward.57} parent=35 // pred_fallthru
          _
        // Predicated region
        $region45: #{rfdn_forward.57} parent=35 // pred_check
          %p302 = pneg %p171
        $region46: #{rfdn_forward.57} parent=35 // pred_check_branch
          %304 = sbr.rel (%p302) target = $region48
        $region47: #{rfdn_forward.57} parent=35 // pred_region
          %s305 = smul.u32 2, %s15
          %p306 = scmp.lt.s32.totalorder %s305, 3
          %s307 = scalar_select %p306, %s305, 3
          %s308 = smul.addr %s307, 8
          %s309 = scalar_lea.vmem %s6, %s308
          %s310 = smul.u32 2, %s15
        $region48: #{rfdn_forward.57} parent=35 // pred_fallthru
          _
        // Predicated region
        $region49: #{rfdn_forward.57} parent=35 // pred_check
          %p311 = pneg %p197
        $region50: #{rfdn_forward.57} parent=35 // pred_check_branch
          %313 = sbr.rel (%p311) target = $region52
        $region51: #{rfdn_forward.57} parent=35 // pred_region
          %s314 = smul.u32 2, %s15
          %p315 = scmp.lt.s32.totalorder %s314, 3
          %s316 = scalar_select %p315, %s314, 3
          %s317 = smul.addr %s316, 8
          %s318 = scalar_lea.vmem %s7, %s317
          %s319 = smul.u32 2, %s15
        $region52: #{rfdn_forward.57} parent=35 // pred_fallthru
          _
      $region36: #{rfdn_forward.57} parent=5 // pred_fallthru
        _
      %p320 = scmp.le.s32.totalorder 1, %s15
      %p321 = scmp.lt.s32.totalorder %s15, 3
      %p322 = pnand %p320, %p321
      %p323 = pneg %p322
      // Predicated region
      $region53: #{rfdn_forward.57} parent=5 // pred_check
        _
      $region54: #{rfdn_forward.57} parent=5 // pred_check_branch
        %325 = sbr.rel (%p322) target = $region56
      $region55: #{rfdn_forward.57} parent=5 // pred_region
        %s326 = ssub.s32 %s15, 1
        %p327 = pneg %p36
        %p328 = pneg %p33
        %p329 = pneg %p57
        %p330 = pneg %p54
        %p331 = pneg %p78
        %p332 = pneg %p75
        %p333 = pneg %p99
        %p334 = pneg %p96
        %s335 = smul.u32 2, %s20
        %p336 = scmp.lt.s32.totalorder %s335, 3
        %s337 = scalar_select %p336, %s335, 3
        %s338 = smul.addr %s337, 8
        %s339 = scalar_lea.vmem %s4, %s338
        %p340 = pneg %p125
        %p341 = pneg %p122
        %s342 = smul.u32 2, %s20
        %p343 = scmp.lt.s32.totalorder %s342, 3
        %s344 = scalar_select %p343, %s342, 3
        %s345 = smul.addr %s344, 8
        %s346 = scalar_lea.vmem %s5, %s345
        %p347 = pneg %p151
        %p348 = pneg %p148
        %s349 = smul.u32 2, %s20
        %p350 = scmp.lt.s32.totalorder %s349, 3
        %s351 = scalar_select %p350, %s349, 3
        %s352 = smul.addr %s351, 8
        %s353 = scalar_lea.vmem %s6, %s352
        %p354 = pneg %p177
        %p355 = pneg %p174
        %s356 = smul.u32 2, %s20
        %p357 = scmp.lt.s32.totalorder %s356, 3
        %s358 = scalar_select %p357, %s356, 3
        %s359 = smul.addr %s358, 8
        %s360 = scalar_lea.vmem %s7, %s359
        %p361 = pneg %p203
        %p362 = pneg %p200
        %p363 = pneg %p224
        %p364 = pneg %p221
        %p365 = pneg %p250
        %p366 = pneg %p247
        %s367 = sand.u32 %s237, 1
        %s368 = sand.u32 %s237, 1
        %s369 = smul.addr %s368, 32
        %s370 = scalar_lea.vmem [#allocation2], %s369
        %s371 = smul.u32 2, %s20
        %p372 = scmp.lt.s32.totalorder %s371, 3
        %s373 = scalar_select %p372, %s371, 3
        %s374 = smul.addr %s373, 8
        %s375 = scalar_lea.vmem %s4, %s374
        %s376 = smul.u32 2, %s20
        %s377 = smul.u32 2, %s20
        %p378 = scmp.lt.s32.totalorder %s377, 3
        %s379 = scalar_select %p378, %s377, 3
        %s380 = smul.addr %s379, 8
        %s381 = scalar_lea.vmem %s5, %s380
        %s382 = smul.u32 2, %s20
        %s383 = smul.u32 2, %s20
        %p384 = scmp.lt.s32.totalorder %s383, 3
        %s385 = scalar_select %p384, %s383, 3
        %s386 = smul.addr %s385, 8
        %s387 = scalar_lea.vmem %s6, %s386
        %s388 = smul.u32 2, %s20
        %s389 = smul.u32 2, %s20
        %p390 = scmp.lt.s32.totalorder %s389, 3
        %s391 = scalar_select %p390, %s389, 3
        %s392 = smul.addr %s391, 8
        %s393 = scalar_lea.vmem %s7, %s392
        %s394 = smul.u32 2, %s20
        %s395 = smul.u32 2, %s20
        %v396 = vld [vmem:[%s0] sm:$0xff]
        %v397 = vld [vmem:[%s0 + $0x8] sm:$0xff]
        %v398 = vld [vmem:[%s375] sm:$0xff]
        %v399 = vld [vmem:[%s375 + $0x8] sm:$0xff]
        %v400 = vld [vmem:[%s1] sm:$0xff]
        %v401 = vld [vmem:[%s1 + $0x8] sm:$0xff]
        %v402 = vld [vmem:[%s381] sm:$0xff]
        %v403 = vld [vmem:[%s381 + $0x8] sm:$0xff]
        %vm404 = vcmask 64512
        %v406 = vsel %vm404, %v400, 0
        %v409 = vsel %vm404, %v401, 0
        %411 = vmatpush.msra.mxu0 0.0
        %412 = vmatpush.msra.mxu0 0.0
        %413 = vmatpush.msra.mxu0 0.0
        %414 = vmatpush.msra.mxu0 0.0
        %415 = vmatpush.msra.mxu0 0.0
        %416 = vmatpush.msra.mxu0 0.0
        %417 = vmatpush.msra.mxu0 0.0
        %418 = vmatpush.msra.mxu0 0.0
        %419 = vmatpush.msra.mxu0 0.0
        %420 = vmatpush.msra.mxu0 0.0
        %421 = vmatpush.msra.mxu0 0.0
        %422 = vmatpush.msra.mxu0 0.0
        %423 = vmatpush.msra.mxu0 0.0
        %424 = vmatpush.msra.mxu0 0.0
        %425 = vmatpush.msra.mxu0 0.0
        %426 = vmatpush.msra.mxu0 %v402
        %427 = vmatmul.f32.gmra.mxu0 %v406
        %v428 = vpop.f32.mrf.mxu0
        %v429 = vadd.f32 0.0, %v428
        %430 = vmatmul.f32.gmra.mxu0 %v409
        %v431 = vpop.f32.mrf.mxu0
        %v432 = vadd.f32 0.0, %v431
        %433 = vdwg.mxu0
        %434 = vmatpush.msra.mxu0 0.0
        %435 = vmatpush.msra.mxu0 0.0
        %436 = vmatpush.msra.mxu0 0.0
        %437 = vmatpush.msra.mxu0 0.0
        %438 = vmatpush.msra.mxu0 0.0
        %439 = vmatpush.msra.mxu0 0.0
        %440 = vmatpush.msra.mxu0 0.0
        %441 = vmatpush.msra.mxu0 0.0
        %442 = vmatpush.msra.mxu0 0.0
        %443 = vmatpush.msra.mxu0 0.0
        %444 = vmatpush.msra.mxu0 0.0
        %445 = vmatpush.msra.mxu0 0.0
        %446 = vmatpush.msra.mxu0 0.0
        %447 = vmatpush.msra.mxu0 0.0
        %448 = vmatpush.msra.mxu0 0.0
        %449 = vmatpush.msra.mxu0 %v403
        %450 = vmatmul.f32.gmra.mxu0 %v406
        %v451 = vpop.f32.mrf.mxu0
        %v452 = vadd.f32 0.0, %v451
        %453 = vmatmul.f32.gmra.mxu0 %v409
        %v454 = vpop.f32.mrf.mxu0
        %v455 = vadd.f32 0.0, %v454
        %456 = vdwg.mxu0
        %v458 = vsel %vm404, %v396, 0
        %v461 = vsel %vm404, %v397, 0
        %463 = vmatpush.msra.mxu0 0.0
        %464 = vmatpush.msra.mxu0 0.0
        %465 = vmatpush.msra.mxu0 0.0
        %466 = vmatpush.msra.mxu0 0.0
        %467 = vmatpush.msra.mxu0 0.0
        %468 = vmatpush.msra.mxu0 0.0
        %469 = vmatpush.msra.mxu0 0.0
        %470 = vmatpush.msra.mxu0 0.0
        %471 = vmatpush.msra.mxu0 0.0
        %472 = vmatpush.msra.mxu0 0.0
        %473 = vmatpush.msra.mxu0 0.0
        %474 = vmatpush.msra.mxu0 0.0
        %475 = vmatpush.msra.mxu0 0.0
        %476 = vmatpush.msra.mxu0 0.0
        %477 = vmatpush.msra.mxu0 0.0
        %478 = vmatpush.msra.mxu0 %v398
        %479 = vmatmul.f32.gmra.mxu0 %v458
        %v480 = vpop.f32.mrf.mxu0
        %v481 = vadd.f32 %v429, %v480
        %482 = vmatmul.f32.gmra.mxu0 %v461
        %v483 = vpop.f32.mrf.mxu0
        %v484 = vadd.f32 %v432, %v483
        %485 = vdwg.mxu0
        %486 = vmatpush.msra.mxu0 0.0
        %487 = vmatpush.msra.mxu0 0.0
        %488 = vmatpush.msra.mxu0 0.0
        %489 = vmatpush.msra.mxu0 0.0
        %490 = vmatpush.msra.mxu0 0.0
        %491 = vmatpush.msra.mxu0 0.0
        %492 = vmatpush.msra.mxu0 0.0
        %493 = vmatpush.msra.mxu0 0.0
        %494 = vmatpush.msra.mxu0 0.0
        %495 = vmatpush.msra.mxu0 0.0
        %496 = vmatpush.msra.mxu0 0.0
        %497 = vmatpush.msra.mxu0 0.0
        %498 = vmatpush.msra.mxu0 0.0
        %499 = vmatpush.msra.mxu0 0.0
        %500 = vmatpush.msra.mxu0 0.0
        %501 = vmatpush.msra.mxu0 %v399
        %502 = vmatmul.f32.gmra.mxu0 %v458
        %v503 = vpop.f32.mrf.mxu0
        %v504 = vadd.f32 %v452, %v503
        %505 = vmatmul.f32.gmra.mxu0 %v461
        %v506 = vpop.f32.mrf.mxu0
        %v507 = vadd.f32 %v455, %v506
        %508 = vdwg.mxu0
        %v509 = vld [vmem:[%s2] sm:$0xff]
        %v510 = vld [vmem:[%s2 + $0x8] sm:$0xff]
        %v511 = vld [vmem:[%s387] sm:$0xff]
        %v512 = vld [vmem:[%s387 + $0x8] sm:$0xff]
        %v514 = vsel %vm404, %v509, 0
        %v517 = vsel %vm404, %v510, 0
        %519 = vmatpush.msra.mxu0 0.0
        %520 = vmatpush.msra.mxu0 0.0
        %521 = vmatpush.msra.mxu0 0.0
        %522 = vmatpush.msra.mxu0 0.0
        %523 = vmatpush.msra.mxu0 0.0
        %524 = vmatpush.msra.mxu0 0.0
        %525 = vmatpush.msra.mxu0 0.0
        %526 = vmatpush.msra.mxu0 0.0
        %527 = vmatpush.msra.mxu0 0.0
        %528 = vmatpush.msra.mxu0 0.0
        %529 = vmatpush.msra.mxu0 0.0
        %530 = vmatpush.msra.mxu0 0.0
        %531 = vmatpush.msra.mxu0 0.0
        %532 = vmatpush.msra.mxu0 0.0
        %533 = vmatpush.msra.mxu0 0.0
        %534 = vmatpush.msra.mxu0 %v511
        %535 = vmatmul.f32.gmra.mxu0 %v514
        %v536 = vpop.f32.mrf.mxu0
        %v537 = vadd.f32 0.0, %v536
        %538 = vmatmul.f32.gmra.mxu0 %v517
        %v539 = vpop.f32.mrf.mxu0
        %v540 = vadd.f32 0.0, %v539
        %541 = vdwg.mxu0
        %542 = vmatpush.msra.mxu0 0.0
        %543 = vmatpush.msra.mxu0 0.0
        %544 = vmatpush.msra.mxu0 0.0
        %545 = vmatpush.msra.mxu0 0.0
        %546 = vmatpush.msra.mxu0 0.0
        %547 = vmatpush.msra.mxu0 0.0
        %548 = vmatpush.msra.mxu0 0.0
        %549 = vmatpush.msra.mxu0 0.0
        %550 = vmatpush.msra.mxu0 0.0
        %551 = vmatpush.msra.mxu0 0.0
        %552 = vmatpush.msra.mxu0 0.0
        %553 = vmatpush.msra.mxu0 0.0
        %554 = vmatpush.msra.mxu0 0.0
        %555 = vmatpush.msra.mxu0 0.0
        %556 = vmatpush.msra.mxu0 0.0
        %557 = vmatpush.msra.mxu0 %v512
        %558 = vmatmul.f32.gmra.mxu0 %v514
        %v559 = vpop.f32.mrf.mxu0
        %v560 = vadd.f32 0.0, %v559
        %561 = vmatmul.f32.gmra.mxu0 %v517
        %v562 = vpop.f32.mrf.mxu0
        %v563 = vadd.f32 0.0, %v562
        %564 = vdwg.mxu0
        %v565 = vadd.f32 %v481, %v537
        %v566 = vadd.f32 %v504, %v560
        %v567 = vadd.f32 %v484, %v540
        %v568 = vadd.f32 %v507, %v563
        %v569 = vld [vmem:[%s3] sm:$0xff]
        %v570 = vld [vmem:[%s3 + $0x8] sm:$0xff]
        %v571 = vld [vmem:[%s393] sm:$0xff]
        %v572 = vld [vmem:[%s393 + $0x8] sm:$0xff]
        %v574 = vsel %vm404, %v569, 0
        %v577 = vsel %vm404, %v570, 0
        %579 = vmatpush.msra.mxu0 0.0
        %580 = vmatpush.msra.mxu0 0.0
        %581 = vmatpush.msra.mxu0 0.0
        %582 = vmatpush.msra.mxu0 0.0
        %583 = vmatpush.msra.mxu0 0.0
        %584 = vmatpush.msra.mxu0 0.0
        %585 = vmatpush.msra.mxu0 0.0
        %586 = vmatpush.msra.mxu0 0.0
        %587 = vmatpush.msra.mxu0 0.0
        %588 = vmatpush.msra.mxu0 0.0
        %589 = vmatpush.msra.mxu0 0.0
        %590 = vmatpush.msra.mxu0 0.0
        %591 = vmatpush.msra.mxu0 0.0
        %592 = vmatpush.msra.mxu0 0.0
        %593 = vmatpush.msra.mxu0 0.0
        %594 = vmatpush.msra.mxu0 %v571
        %595 = vmatmul.f32.gmra.mxu0 %v574
        %v596 = vpop.f32.mrf.mxu0
        %v597 = vadd.f32 0.0, %v596
        %598 = vmatmul.f32.gmra.mxu0 %v577
        %v599 = vpop.f32.mrf.mxu0
        %v600 = vadd.f32 0.0, %v599
        %601 = vdwg.mxu0
        %602 = vmatpush.msra.mxu0 0.0
        %603 = vmatpush.msra.mxu0 0.0
        %604 = vmatpush.msra.mxu0 0.0
        %605 = vmatpush.msra.mxu0 0.0
        %606 = vmatpush.msra.mxu0 0.0
        %607 = vmatpush.msra.mxu0 0.0
        %608 = vmatpush.msra.mxu0 0.0
        %609 = vmatpush.msra.mxu0 0.0
        %610 = vmatpush.msra.mxu0 0.0
        %611 = vmatpush.msra.mxu0 0.0
        %612 = vmatpush.msra.mxu0 0.0
        %613 = vmatpush.msra.mxu0 0.0
        %614 = vmatpush.msra.mxu0 0.0
        %615 = vmatpush.msra.mxu0 0.0
        %616 = vmatpush.msra.mxu0 0.0
        %617 = vmatpush.msra.mxu0 %v572
        %618 = vmatmul.f32.gmra.mxu0 %v574
        %v619 = vpop.f32.mrf.mxu0
        %v620 = vadd.f32 0.0, %v619
        %621 = vmatmul.f32.gmra.mxu0 %v577
        %v622 = vpop.f32.mrf.mxu0
        %v623 = vadd.f32 0.0, %v622
        %624 = vdwg.mxu0
        %v625 = vadd.f32 %v565, %v597
        %v626 = vadd.f32 %v566, %v620
        %v627 = vadd.f32 %v567, %v600
        %v628 = vadd.f32 %v568, %v623
        %v629 = vld [vmem:[%s8] sm:$0xff]
        %v630 = vld [vmem:[%s8 + $0x8] sm:$0xff]
        %632 = vset.pattern.permute.xlu0 0
        %633 = vperm.xlu0 %632, %v629
        %v634 = vpop.permute.xlu0 %633
        %637 = vset.pattern.permute.xlu0 0
        %638 = vperm.xlu0 %637, %v630
        %v639 = vpop.permute.xlu0 %638
        %v641 = vadd.f32 %v625, %v634
        %v642 = vadd.f32 %v626, %v634
        %v643 = vadd.f32 %v627, %v639
        %v644 = vadd.f32 %v628, %v639
        %645 = vst [vmem:[%s370] sm:$0xff] %v641
        %646 = vst [vmem:[%s370 + $0x8] sm:$0xff] %v642
        %647 = vst [vmem:[%s370 + $0x10] sm:$0xff] %v643
        %648 = vst [vmem:[%s370 + $0x18] sm:$0xff] %v644
        %s649 = sand.u32 %s237, 1
        %s650 = sand.u32 %s237, 1
        %s651 = smul.addr %s650, 32
        %s652 = scalar_lea.vmem [#allocation2], %s651
        // Predicated region
        $region57: #{rfdn_forward.57} parent=55 // pred_check
          %p653 = pneg %p247
        $region58: #{rfdn_forward.57} parent=55 // pred_check_branch
          %655 = sbr.rel (%p653) target = $region60
        $region59: #{rfdn_forward.57} parent=55 // pred_region
          %s656 = smul.u32 2, %s20
          %s657 = smul.addr %s656, 8
          %s658 = scalar_lea.vmem %s9, %s657
          // Predicated region
          $region61: #{rfdn_forward.57} parent=59 // pred_check
            _
          $region62: #{rfdn_forward.57} parent=59 // pred_check_branch
            %660 = sbr.rel (0) target = $region64
          $region63: #{rfdn_forward.57} parent=59 // pred_region
            // Predicated region
            $region65: #{rfdn_forward.57} parent=63 // pred_check
              _
            $region66: #{rfdn_forward.57} parent=63 // pred_check_branch
              %662 = sbr.rel (0) target = $region68
            $region67: #{rfdn_forward.57} parent=63 // pred_region
              loop: start=0, step=1, limit=1
              $region69: #{rfdn_forward.57} parent=67 // loop_pre_header
                _
              $region70: #{rfdn_forward.57} parent=67 // loop_header
                %s664 = sphi 0, %s668
                %p665 = scmp.ge.s32.totalorder %s664, 1
                %s669 = sphi %s652, %s652
                %s670 = sphi %s658, %s658
              $region71: #{rfdn_forward.57} parent=67 // loop_header_branch
                %667 = sbr.rel (%p665) target = $region75
              $region72: #{rfdn_forward.57} parent=67 // loop_body
                %v671 = vld [vmem:[%s669] sm:$0xff]
                %672 = vst [vmem:[%s670] sm:$0xff] %v671
                %v673 = vld [vmem:[%s669 + $0x8] sm:$0xff]
                %674 = vst [vmem:[%s670 + $0x8] sm:$0xff] %v673
                %v675 = vld [vmem:[%s669 + $0x10] sm:$0xff]
                %676 = vst [vmem:[%s670 + $0x20] sm:$0xff] %v675
                %v677 = vld [vmem:[%s669 + $0x18] sm:$0xff]
                %678 = vst [vmem:[%s670 + $0x28] sm:$0xff] %v677
              $region73: #{rfdn_forward.57} parent=67 // loop_footer
                %s668 = sadd.s32 1, %s664
              $region74: #{rfdn_forward.57} parent=67 // loop_footer_branch
                %663 = sbr.rel target = $region70
              $region75: #{rfdn_forward.57} parent=67 // loop_exit
                _
            $region68: #{rfdn_forward.57} parent=63 // pred_fallthru
              _
            // Predicated region
            $region76: #{rfdn_forward.57} parent=63 // pred_check
              _
            $region77: #{rfdn_forward.57} parent=63 // pred_check_branch
              %680 = sbr.rel target = $region79
            $region78: #{rfdn_forward.57} parent=63 // pred_region
              _
            $region79: #{rfdn_forward.57} parent=63 // pred_fallthru
              _
          $region64: #{rfdn_forward.57} parent=59 // pred_fallthru
            _
          %681 = vnop
        $region60: #{rfdn_forward.57} parent=55 // pred_fallthru
          _
      $region56: #{rfdn_forward.57} parent=5 // pred_fallthru
        _
      %p682 = scmp.le.s32.totalorder 2, %s15
      // Predicated region
      $region80: #{rfdn_forward.57} parent=5 // pred_check
        %p683 = pneg %p682
      $region81: #{rfdn_forward.57} parent=5 // pred_check_branch
        %685 = sbr.rel (%p683) target = $region83
      $region82: #{rfdn_forward.57} parent=5 // pred_region
        %s686 = ssub.s32 %s15, 2
        // Predicated region
        $region84: #{rfdn_forward.57} parent=82 // pred_check
          %p687 = pneg %p253
        $region85: #{rfdn_forward.57} parent=82 // pred_check_branch
          %689 = sbr.rel (%p687) target = $region87
        $region86: #{rfdn_forward.57} parent=82 // pred_region
          %s690 = sand.u32 %s238, 1
          %s691 = sand.u32 %s238, 1
          %s692 = smul.addr %s691, 32
          %s693 = scalar_lea.vmem [#allocation2], %s692
        $region87: #{rfdn_forward.57} parent=82 // pred_fallthru
          _
      $region83: #{rfdn_forward.57} parent=5 // pred_fallthru
        _
    $region6: #{rfdn_forward.57} parent=1 // loop_footer
      %s19 = sadd.s32 1, %s15
    $region7: #{rfdn_forward.57} parent=1 // loop_footer_branch
      %14 = sbr.rel target = $region3
    $region8: #{rfdn_forward.57} parent=1 // loop_exit
      _

// kernel: rfdn_forward.58
$region0: #{rfdn_forward.58}
  #allocation0 [shape = 'u32[]', space=smem, size = 0x4, offset = 0x4, fixed_abs, tag = 'smem constant byte address 0x4 - core index']
  #allocation1 [shape = 'u32[72,128]{1,0:T(1,128)}', space=vmem, size = 0x9000, scoped, tag = 'internal scratch']
  %s0 = inlined_call_operand.vmem [shape: f32[4,16], index: 0, kind: input, shape index: {}]
  %s1 = inlined_call_operand.vmem [shape: f32[16,512], index: 1, kind: input, shape index: {}]
  %s2 = inlined_call_operand.vmem [shape: f32[4,1], index: 2, kind: input, shape index: {}]
  %s3 = inlined_call_operand.vmem [shape: f32[4,512], index: 3, kind: output, shape index: {}]
  %s4 = sld [smem:[#allocation0]]
  $region68: #{rfdn_forward.58} parent=0
    _
  %s6 = ssub.s32 1, %s4
  %s7 = scalar_select 0, %s6, %s4
  $region1: #{rfdn_forward.58} parent=0
    #allocation2 [shape = 'u8[32768]{0}', space=vmem, size = 0x8000, scoped, tag = 'input window, operand 1']
    loop: start=0, step=1, limit=4
    $region2: #{rfdn_forward.58} parent=1 // loop_pre_header
      _
    $region3: #{rfdn_forward.58} parent=1 // loop_header
      %s9 = sphi 0, %s13
      %p10 = scmp.ge.s32.totalorder %s9, 4
      %s17 = sphi 0, %s17
      %s19 = sphi 0, %s17
      %s20 = sphi 0, %s19
      %s34 = sphi 0, %s20
      %s40 = sphi 0, %s42
      %s43 = sphi 0, %s40
      %s44 = sphi 0, %s43
      %s60 = sphi 0, %s44
      %s64 = sphi 0, %s64
      %s66 = sphi 0, %s64
      %s67 = sphi 0, %s66
      %s81 = sphi 0, %s67
      %s87 = sphi 0, %s89
      %s90 = sphi 0, %s87
      %s91 = sphi 0, %s90
      %s107 = sphi 0, %s91
    $region4: #{rfdn_forward.58} parent=1 // loop_header_branch
      %12 = sbr.rel (%p10) target = $region8
    $region5: #{rfdn_forward.58} parent=1 // loop_body
      %s14 = ssub.s32 %s9, 1
      %s15 = ssub.s32 %s9, 2
      %s16 = sadd.s32 %s9, 1
      %s18 = sadd.s32 %s17, 1
      %p21 = scmp.eq.s32.totalorder %s9, 1
      %p22 = scmp.ne.s32.totalorder %s17, %s19
      %p23 = scmp.eq.s32.totalorder %s9, 0
      %p24 = por %p22, %p23
      %p25 = scmp.ne.s32.totalorder %s17, %s19
      %p26 = scmp.eq.s32.totalorder %s14, 1
      %p27 = por %p25, %p26
      %p28 = scmp.ne.s32.totalorder %s19, %s20
      %p29 = scmp.eq.s32.totalorder %s14, 0
      %p30 = por %p28, %p29
      %p31 = scmp.ne.s32.totalorder %s19, %s20
      %p32 = scmp.eq.s32.totalorder %s15, 1
      %p33 = por %p31, %p32
      %p35 = scmp.ne.s32.totalorder %s20, %s34
      %p36 = scmp.eq.s32.totalorder %s15, 0
      %p37 = por %p35, %p36
      %s38 = ssub.s32 %s9, %s16
      %p39 = scmp.eq.s32.totalorder %s38, 0
      %s41 = sadd.s32 %s40, 1
      %s42 = scalar_select %p39, %s40, %s41
      %p45 = pneg %p39
      %p46 = scmp.eq.s32.totalorder %s9, 1
      %p47 = por %p45, %p46
      %p48 = scmp.ne.s32.totalorder %s40, %s43
      %p49 = scmp.eq.s32.totalorder %s9, 0
      %p50 = por %p48, %p49
      %p51 = scmp.ne.s32.totalorder %s40, %s43
      %p52 = scmp.eq.s32.totalorder %s14, 1
      %p53 = por %p51, %p52
      %p54 = scmp.ne.s32.totalorder %s43, %s44
      %p55 = scmp.eq.s32.totalorder %s14, 0
      %p56 = por %p54, %p55
      %p57 = scmp.ne.s32.totalorder %s43, %s44
      %p58 = scmp.eq.s32.totalorder %s15, 1
      %p59 = por %p57, %p58
      %p61 = scmp.ne.s32.totalorder %s44, %s60
      %p62 = scmp.eq.s32.totalorder %s15, 0
      %p63 = por %p61, %p62
      %s65 = sadd.s32 %s64, 1
      %p68 = scmp.eq.s32.totalorder %s9, 1
      %p69 = scmp.ne.s32.totalorder %s64, %s66
      %p70 = scmp.eq.s32.totalorder %s9, 0
      %p71 = por %p69, %p70
      %p72 = scmp.ne.s32.totalorder %s64, %s66
      %p73 = scmp.eq.s32.totalorder %s14, 1
      %p74 = por %p72, %p73
      %p75 = scmp.ne.s32.totalorder %s66, %s67
      %p76 = scmp.eq.s32.totalorder %s14, 0
      %p77 = por %p75, %p76
      %p78 = scmp.ne.s32.totalorder %s66, %s67
      %p79 = scmp.eq.s32.totalorder %s15, 1
      %p80 = por %p78, %p79
      %p82 = scmp.ne.s32.totalorder %s67, %s81
      %p83 = scmp.eq.s32.totalorder %s15, 0
      %p84 = por %p82, %p83
      %s85 = ssub.s32 %s9, %s16
      %p86 = scmp.eq.s32.totalorder %s85, 0
      %s88 = sadd.s32 %s87, 1
      %s89 = scalar_select %p86, %s87, %s88
      %p92 = pneg %p86
      %p93 = scmp.eq.s32.totalorder %s9, 1
      %p94 = por %p92, %p93
      %p95 = scmp.ne.s32.totalorder %s87, %s90
      %p96 = scmp.eq.s32.totalorder %s9, 0
      %p97 = por %p95, %p96
      %p98 = scmp.ne.s32.totalorder %s87, %s90
      %p99 = scmp.eq.s32.totalorder %s14, 1
      %p100 = por %p98, %p99
      %p101 = scmp.ne.s32.totalorder %s90, %s91
      %p102 = scmp.eq.s32.totalorder %s14, 0
      %p103 = por %p101, %p102
      %p104 = scmp.ne.s32.totalorder %s90, %s91
      %p105 = scmp.eq.s32.totalorder %s15, 1
      %p106 = por %p104, %p105
      %p108 = scmp.ne.s32.totalorder %s91, %s107
      %p109 = scmp.eq.s32.totalorder %s15, 0
      %p110 = por %p108, %p109
      %p111 = scmp.le.s32.totalorder 1, %s9
      %p112 = scmp.lt.s32.totalorder %s9, 3
      %p113 = pnand %p111, %p112
      %p114 = pneg %p113
      // Predicated region
      $region9: #{rfdn_forward.58} parent=5 // pred_check
        _
      $region10: #{rfdn_forward.58} parent=5 // pred_check_branch
        %116 = sbr.rel (%p113) target = $region12
      $region11: #{rfdn_forward.58} parent=5 // pred_region
        %s117 = ssub.s32 %s9, 1
        // Predicated region
        $region13: #{rfdn_forward.58} parent=11 // pred_check
          %p118 = pneg %p30
        $region14: #{rfdn_forward.58} parent=11 // pred_check_branch
          %120 = sbr.rel (%p118) target = $region16
        $region15: #{rfdn_forward.58} parent=11 // pred_region
          _
        $region16: #{rfdn_forward.58} parent=11 // pred_fallthru
          _
        // Predicated region
        $region17: #{rfdn_forward.58} parent=11 // pred_check
          %p121 = pneg %p77
        $region18: #{rfdn_forward.58} parent=11 // pred_check_branch
          %123 = sbr.rel (%p121) target = $region20
        $region19: #{rfdn_forward.58} parent=11 // pred_region
          _
        $region20: #{rfdn_forward.58} parent=11 // pred_fallthru
          _
      $region12: #{rfdn_forward.58} parent=5 // pred_fallthru
        _
      %p124 = scmp.lt.s32.totalorder %s9, 2
      // Predicated region
      $region21: #{rfdn_forward.58} parent=5 // pred_check
        %p125 = pneg %p124
      $region22: #{rfdn_forward.58} parent=5 // pred_check_branch
        %127 = sbr.rel (%p125) target = $region24
      $region23: #{rfdn_forward.58} parent=5 // pred_region
        // Predicated region
        $region25: #{rfdn_forward.58} parent=23 // pred_check
          %p128 = pneg %p50
        $region26: #{rfdn_forward.58} parent=23 // pred_check_branch
          %130 = sbr.rel (%p128) target = $region28
        $region27: #{rfdn_forward.58} parent=23 // pred_region
          %s131 = sand.u32 %s40, 1
          %s132 = sand.u32 %s40, 1
          %s133 = smul.addr %s132, 32
          %s134 = scalar_lea.vmem [#allocation2], %s133
          %s135 = smul.u32 2, %s9
          %s136 = smul.addr %s135, 8
          %s137 = scalar_lea.vmem %s1, %s136
          // Predicated region
          $region29: #{rfdn_forward.58} parent=27 // pred_check
            _
          $region30: #{rfdn_forward.58} parent=27 // pred_check_branch
            %139 = sbr.rel (0) target = $region32
          $region31: #{rfdn_forward.58} parent=27 // pred_region
            // Predicated region
            $region33: #{rfdn_forward.58} parent=31 // pred_check
              _
            $region34: #{rfdn_forward.58} parent=31 // pred_check_branch
              %141 = sbr.rel (0) target = $region36
            $region35: #{rfdn_forward.58} parent=31 // pred_region
              loop: start=0, step=1, limit=1
              $region37: #{rfdn_forward.58} parent=35 // loop_pre_header
                _
              $region38: #{rfdn_forward.58} parent=35 // loop_header
                %s143 = sphi 0, %s147
                %p144 = scmp.ge.s32.totalorder %s143, 1
                %s148 = sphi %s137, %s137
                %s149 = sphi %s134, %s134
              $region39: #{rfdn_forward.58} parent=35 // loop_header_branch
                %146 = sbr.rel (%p144) target = $region43
              $region40: #{rfdn_forward.58} parent=35 // loop_body
                %v150 = vld [vmem:[%s148] sm:$0xff]
                %151 = vst [vmem:[%s149] sm:$0xff] %v150
                %v152 = vld [vmem:[%s148 + $0x8] sm:$0xff]
                %153 = vst [vmem:[%s149 + $0x8] sm:$0xff] %v152
                %v154 = vld [vmem:[%s148 + $0x20] sm:$0xff]
                %155 = vst [vmem:[%s149 + $0x10] sm:$0xff] %v154
                %v156 = vld [vmem:[%s148 + $0x28] sm:$0xff]
                %157 = vst [vmem:[%s149 + $0x18] sm:$0xff] %v156
              $region41: #{rfdn_forward.58} parent=35 // loop_footer
                %s147 = sadd.s32 1, %s143
              $region42: #{rfdn_forward.58} parent=35 // loop_footer_branch
                %142 = sbr.rel target = $region38
              $region43: #{rfdn_forward.58} parent=35 // loop_exit
                _
            $region36: #{rfdn_forward.58} parent=31 // pred_fallthru
              _
            // Predicated region
            $region44: #{rfdn_forward.58} parent=31 // pred_check
              _
            $region45: #{rfdn_forward.58} parent=31 // pred_check_branch
              %159 = sbr.rel target = $region47
            $region46: #{rfdn_forward.58} parent=31 // pred_region
              _
            $region47: #{rfdn_forward.58} parent=31 // pred_fallthru
              _
          $region32: #{rfdn_forward.58} parent=27 // pred_fallthru
            _
          %160 = vnop
        $region28: #{rfdn_forward.58} parent=23 // pred_fallthru
          _
      $region24: #{rfdn_forward.58} parent=5 // pred_fallthru
        _
      %p161 = scmp.le.s32.totalorder 1, %s9
      %p162 = scmp.lt.s32.totalorder %s9, 3
      %p163 = pnand %p161, %p162
      %p164 = pneg %p163
      // Predicated region
      $region48: #{rfdn_forward.58} parent=5 // pred_check
        _
      $region49: #{rfdn_forward.58} parent=5 // pred_check_branch
        %166 = sbr.rel (%p163) target = $region51
      $region50: #{rfdn_forward.58} parent=5 // pred_region
        %s167 = ssub.s32 %s9, 1
        %s168 = sand.u32 %s43, 1
        %s169 = sand.u32 %s43, 1
        %s170 = smul.addr %s169, 32
        %s171 = scalar_lea.vmem [#allocation2], %s170
        // Predicated region
        $region52: #{rfdn_forward.58} parent=50 // pred_check
          %p172 = pneg %p56
        $region53: #{rfdn_forward.58} parent=50 // pred_check_branch
          %174 = sbr.rel (%p172) target = $region55
        $region54: #{rfdn_forward.58} parent=50 // pred_region
          _
        $region55: #{rfdn_forward.58} parent=50 // pred_fallthru
          _
        %p175 = pneg %p30
        %p176 = pneg %p27
        %s177 = sand.u32 %s43, 1
        %s178 = sand.u32 %s43, 1
        %s179 = smul.addr %s178, 32
        %s180 = scalar_lea.vmem [#allocation2], %s179
        %p181 = pneg %p56
        %p182 = pneg %p53
        %p183 = pneg %p77
        %p184 = pneg %p74
        %p185 = pneg %p103
        %p186 = pneg %p100
        %s187 = smul.u32 2, %s14
        %p188 = scmp.lt.s32.totalorder %s187, 3
        %s189 = scalar_select %p188, %s187, 3
        %s190 = smul.addr %s189, 4
        %s191 = scalar_lea.vmem %s3, %s190
        %s192 = smul.u32 2, %s14
        %s193 = smul.u32 2, %s14
        %p194 = scmp.lt.s32.totalorder %s193, 3
        %s195 = scalar_select %p194, %s193, 3
        %s196 = smul.addr %s195, 4
        %s197 = scalar_lea.vmem %s3, %s196
        %s198 = smul.u32 2, %s14
        %v199 = vld [vmem:[%s0] sm:$0xf]
        %v200 = vld [vmem:[%s171] sm:$0xff]
        %v201 = vld [vmem:[%s171 + $0x8] sm:$0xff]
        %v202 = vld [vmem:[%s171 + $0x10] sm:$0xff]
        %v203 = vld [vmem:[%s171 + $0x18] sm:$0xff]
        %v204 = vld [vmem:[%s2] sm:$0xf]
        %206 = vset.pattern.permute.xlu0 0
        %207 = vperm.xlu0 %206, %v204
        %v208 = vpop.permute.xlu0 %207
        %vm210 = vcmask 130048
        %v212 = vsel %vm210, %v199, 0
        %214 = vmatpush.msra.mxu0 0.0
        %215 = vmatpush.msra.mxu0 0.0
        %216 = vmatpush.msra.mxu0 0.0
        %217 = vmatpush.msra.mxu0 0.0
        %218 = vmatpush.msra.mxu0 0.0
        %219 = vmatpush.msra.mxu0 0.0
        %220 = vmatpush.msra.mxu0 0.0
        %221 = vmatpush.msra.mxu0 0.0
        %222 = vmatpush.msra.mxu0 0.0
        %223 = vmatpush.msra.mxu0 0.0
        %224 = vmatpush.msra.mxu0 0.0
        %225 = vmatpush.msra.mxu0 0.0
        %226 = vmatpush.msra.mxu0 0.0
        %227 = vmatpush.msra.mxu0 0.0
        %228 = vmatpush.msra.mxu0 %v202
        %229 = vmatpush.msra.mxu0 %v200
        %230 = vmatmul.f32.gmra.mxu0 %v212
        %v231 = vpop.f32.mrf.mxu0
        %v232 = vadd.f32 %v208, %v231
        %233 = vdwg.mxu0
        %234 = vmatpush.msra.mxu0 0.0
        %235 = vmatpush.msra.mxu0 0.0
        %236 = vmatpush.msra.mxu0 0.0
        %237 = vmatpush.msra.mxu0 0.0
        %238 = vmatpush.msra.mxu0 0.0
        %239 = vmatpush.msra.mxu0 0.0
        %240 = vmatpush.msra.mxu0 0.0
        %241 = vmatpush.msra.mxu0 0.0
        %242 = vmatpush.msra.mxu0 0.0
        %243 = vmatpush.msra.mxu0 0.0
        %244 = vmatpush.msra.mxu0 0.0
        %245 = vmatpush.msra.mxu0 0.0
        %246 = vmatpush.msra.mxu0 0.0
        %247 = vmatpush.msra.mxu0 0.0
        %248 = vmatpush.msra.mxu0 %v203
        %249 = vmatpush.msra.mxu0 %v201
        %250 = vmatmul.f32.gmra.mxu0 %v212
        %v251 = vpop.f32.mrf.mxu0
        %v252 = vadd.f32 %v208, %v251
        %253 = vdwg.mxu0
        %v256 = vrot.slane %v252, 4
        %vm257 = vcmask 1043456
        %v258 = vsel %vm257, %v232, %v256
        %260 = vst [vmem:[%s197] sm:$0xff] %v258
        %s261 = smul.u32 2, %s14
        %p262 = scmp.lt.s32.totalorder %s261, 3
        %s263 = scalar_select %p262, %s261, 3
        %s264 = smul.addr %s263, 4
        %s265 = scalar_lea.vmem %s3, %s264
        // Predicated region
        $region56: #{rfdn_forward.58} parent=50 // pred_check
          %p266 = pneg %p100
        $region57: #{rfdn_forward.58} parent=50 // pred_check_branch
          %268 = sbr.rel (%p266) target = $region59
        $region58: #{rfdn_forward.58} parent=50 // pred_region
          %s269 = smul.u32 2, %s14
        $region59: #{rfdn_forward.58} parent=50 // pred_fallthru
          _
      $region51: #{rfdn_forward.58} parent=5 // pred_fallthru
        _
      %p270 = scmp.le.s32.totalorder 2, %s9
      // Predicated region
      $region60: #{rfdn_forward.58} parent=5 // pred_check
        %p271 = pneg %p270
      $region61: #{rfdn_forward.58} parent=5 // pred_check_branch
        %273 = sbr.rel (%p271) target = $region63
      $region62: #{rfdn_forward.58} parent=5 // pred_region
        %s274 = ssub.s32 %s9, 2
        // Predicated region
        $region64: #{rfdn_forward.58} parent=62 // pred_check
          %p275 = pneg %p106
        $region65: #{rfdn_forward.58} parent=62 // pred_check_branch
          %277 = sbr.rel (%p275) target = $region67
        $region66: #{rfdn_forward.58} parent=62 // pred_region
          %s278 = smul.u32 2, %s15
          %p279 = scmp.lt.s32.totalorder %s278, 3
          %s280 = scalar_select %p279, %s278, 3
          %s281 = smul.addr %s280, 4
          %s282 = scalar_lea.vmem %s3, %s281
        $region67: #{rfdn_forward.58} parent=62 // pred_fallthru
          _
      $region63: #{rfdn_forward.58} parent=5 // pred_fallthru
        _
    $region6: #{rfdn_forward.58} parent=1 // loop_footer
      %s13 = sadd.s32 1, %s9
    $region7: #{rfdn_forward.58} parent=1 // loop_footer_branch
      %8 = sbr.rel target = $region3
    $region8: #{rfdn_forward.58} parent=1 // loop_exit
      _

// kernel: rfdn_forward.59
$region0: #{rfdn_forward.59}
  #allocation0 [shape = 'u32[]', space=smem, size = 0x4, offset = 0x4, fixed_abs, tag = 'smem constant byte address 0x4 - core index']
  #allocation1 [shape = 'u32[72,128]{1,0:T(1,128)}', space=vmem, size = 0x9000, scoped, tag = 'internal scratch']
  %s0 = inlined_call_operand.vmem [shape: f32[4,36], index: 0, kind: input, shape index: {}]
  %s1 = inlined_call_operand.vmem [shape: f32[36,128], index: 1, kind: input, shape index: {}]
  %s2 = inlined_call_operand.vmem [shape: f32[4,1], index: 2, kind: input, shape index: {}]
  %s3 = inlined_call_operand.vmem [shape: f32[4,128], index: 3, kind: output, shape index: {}]
  %s4 = sld [smem:[#allocation0]]
  $region22: #{rfdn_forward.59} parent=0
    _
  %s6 = ssub.s32 1, %s4
  %s7 = scalar_select 0, %s6, %s4
  // Predicated region
  $region2: #{rfdn_forward.59} parent=0 // pred_check
    _
  $region3: #{rfdn_forward.59} parent=0 // pred_check_branch
    %9 = sbr.rel (0) target = $region5
  $region4: #{rfdn_forward.59} parent=0 // pred_region
    _
  $region5: #{rfdn_forward.59} parent=0 // pred_fallthru
    _
  // Predicated region
  $region6: #{rfdn_forward.59} parent=0 // pred_check
    _
  $region7: #{rfdn_forward.59} parent=0 // pred_check_branch
    %11 = sbr.rel (0) target = $region9
  $region8: #{rfdn_forward.59} parent=0 // pred_region
    _
  $region9: #{rfdn_forward.59} parent=0 // pred_fallthru
    _
  // Predicated region
  $region10: #{rfdn_forward.59} parent=0 // pred_check
    _
  $region11: #{rfdn_forward.59} parent=0 // pred_check_branch
    %13 = sbr.rel (0) target = $region13
  $region12: #{rfdn_forward.59} parent=0 // pred_region
    _
  $region13: #{rfdn_forward.59} parent=0 // pred_fallthru
    _
  %v14 = vld [vmem:[%s0] sm:$0xf]
  %v15 = vld [vmem:[%s1] sm:$0xff]
  %v16 = vld [vmem:[%s1 + $0x8] sm:$0xff]
  %v17 = vld [vmem:[%s1 + $0x10] sm:$0xff]
  %v18 = vld [vmem:[%s1 + $0x18] sm:$0xff]
  %v19 = vld [vmem:[%s1 + $0x20] sm:$0xf]
  %v20 = vld [vmem:[%s2] sm:$0xf]
  %22 = vset.pattern.permute.xlu0 0
  %23 = vperm.xlu0 %22, %v20
  %v24 = vpop.permute.xlu0 %23
  %vm26 = vcmask 293888
  %v28 = vsel %vm26, %v14, 0
  %vm30 = vcmask 1043456
  %v32 = vsel %vm30, %v19, 0
  %34 = vmatpush.msra.mxu0 0.0
  %35 = vmatpush.msra.mxu0 0.0
  %36 = vmatpush.msra.mxu0 0.0
  %37 = vmatpush.msra.mxu0 0.0
  %38 = vmatpush.msra.mxu0 0.0
  %39 = vmatpush.msra.mxu0 0.0
  %40 = vmatpush.msra.mxu0 0.0
  %41 = vmatpush.msra.mxu0 0.0
  %42 = vmatpush.msra.mxu0 0.0
  %43 = vmatpush.msra.mxu0 0.0
  %44 = vmatpush.msra.mxu0 0.0
  %45 = vmatpush.msra.mxu0 %v32
  %46 = vmatpush.msra.mxu0 %v18
  %47 = vmatpush.msra.mxu0 %v17
  %48 = vmatpush.msra.mxu0 %v16
  %49 = vmatpush.msra.mxu0 %v15
  %50 = vmatmul.f32.gmra.mxu0 %v28
  %v51 = vpop.f32.mrf.mxu0
  %v52 = vadd.f32 %v24, %v51
  %53 = vdwg.mxu0
  %54 = vst [vmem:[%s3] sm:$0xf] %v52
  // Predicated region
  $region14: #{rfdn_forward.59} parent=0 // pred_check
    _
  $region15: #{rfdn_forward.59} parent=0 // pred_check_branch
    %56 = sbr.rel (0) target = $region17
  $region16: #{rfdn_forward.59} parent=0 // pred_region
    _
  $region17: #{rfdn_forward.59} parent=0 // pred_fallthru
    _
  // Predicated region
  $region18: #{rfdn_forward.59} parent=0 // pred_check
    _
  $region19: #{rfdn_forward.59} parent=0 // pred_check_branch
    %58 = sbr.rel (0) target = $region21
  $region20: #{rfdn_forward.59} parent=0 // pred_region
    _
  $region21: #{rfdn_forward.59} parent=0 // pred_fallthru
    _

// kernel: rfdn_forward.60
$region0: #{rfdn_forward.60}
  #allocation0 [shape = 'u32[]', space=smem, size = 0x4, offset = 0x4, fixed_abs, tag = 'smem constant byte address 0x4 - core index']
  #allocation1 [shape = 'u32[72,128]{1,0:T(1,128)}', space=vmem, size = 0x9000, scoped, tag = 'internal scratch']
  %s0 = inlined_call_operand.vmem [shape: f32[4,36], index: 0, kind: input, shape index: {}]
  %s1 = inlined_call_operand.vmem [shape: f32[36,128], index: 1, kind: input, shape index: {}]
  %s2 = inlined_call_operand.vmem [shape: f32[4,1], index: 2, kind: input, shape index: {}]
  %s3 = inlined_call_operand.vmem [shape: f32[4,128], index: 3, kind: output, shape index: {}]
  %s4 = sld [smem:[#allocation0]]
  $region22: #{rfdn_forward.60} parent=0
    _
  %s6 = ssub.s32 1, %s4
  %s7 = scalar_select 0, %s6, %s4
  // Predicated region
  $region2: #{rfdn_forward.60} parent=0 // pred_check
    _
  $region3: #{rfdn_forward.60} parent=0 // pred_check_branch
    %9 = sbr.rel (0) target = $region5
  $region4: #{rfdn_forward.60} parent=0 // pred_region
    _
  $region5: #{rfdn_forward.60} parent=0 // pred_fallthru
    _
  // Predicated region
  $region6: #{rfdn_forward.60} parent=0 // pred_check
    _
  $region7: #{rfdn_forward.60} parent=0 // pred_check_branch
    %11 = sbr.rel (0) target = $region9
  $region8: #{rfdn_forward.60} parent=0 // pred_region
    _
  $region9: #{rfdn_forward.60} parent=0 // pred_fallthru
    _
  // Predicated region
  $region10: #{rfdn_forward.60} parent=0 // pred_check
    _
  $region11: #{rfdn_forward.60} parent=0 // pred_check_branch
    %13 = sbr.rel (0) target = $region13
  $region12: #{rfdn_forward.60} parent=0 // pred_region
    _
  $region13: #{rfdn_forward.60} parent=0 // pred_fallthru
    _
  %v14 = vld [vmem:[%s0] sm:$0xf]
  %v15 = vld [vmem:[%s1] sm:$0xff]
  %v16 = vld [vmem:[%s1 + $0x8] sm:$0xff]
  %v17 = vld [vmem:[%s1 + $0x10] sm:$0xff]
  %v18 = vld [vmem:[%s1 + $0x18] sm:$0xff]
  %v19 = vld [vmem:[%s1 + $0x20] sm:$0xf]
  %v20 = vld [vmem:[%s2] sm:$0xf]
  %22 = vset.pattern.permute.xlu0 0
  %23 = vperm.xlu0 %22, %v20
  %v24 = vpop.permute.xlu0 %23
  %vm26 = vcmask 293888
  %v28 = vsel %vm26, %v14, 0
  %vm30 = vcmask 1043456
  %v32 = vsel %vm30, %v19, 0
  %34 = vmatpush.msra.mxu0 0.0
  %35 = vmatpush.msra.mxu0 0.0
  %36 = vmatpush.msra.mxu0 0.0
  %37 = vmatpush.msra.mxu0 0.0
  %38 = vmatpush.msra.mxu0 0.0
  %39 = vmatpush.msra.mxu0 0.0
  %40 = vmatpush.msra.mxu0 0.0
  %41 = vmatpush.msra.mxu0 0.0
  %42 = vmatpush.msra.mxu0 0.0
  %43 = vmatpush.msra.mxu0 0.0
  %44 = vmatpush.msra.mxu0 0.0
  %45 = vmatpush.msra.mxu0 %v32
  %46 = vmatpush.msra.mxu0 %v18
  %47 = vmatpush.msra.mxu0 %v17
  %48 = vmatpush.msra.mxu0 %v16
  %49 = vmatpush.msra.mxu0 %v15
  %50 = vmatmul.f32.gmra.mxu0 %v28
  %v51 = vpop.f32.mrf.mxu0
  %v52 = vadd.f32 %v24, %v51
  %53 = vdwg.mxu0
  %v54 = vmax.f32 %v52, 0.0
  %55 = vst [vmem:[%s3] sm:$0xf] %v54
  // Predicated region
  $region14: #{rfdn_forward.60} parent=0 // pred_check
    _
  $region15: #{rfdn_forward.60} parent=0 // pred_check_branch
    %57 = sbr.rel (0) target = $region17
  $region16: #{rfdn_forward.60} parent=0 // pred_region
    _
  $region17: #{rfdn_forward.60} parent=0 // pred_fallthru
    _
  // Predicated region
  $region18: #{rfdn_forward.60} parent=0 // pred_check
    _
  $region19: #{rfdn_forward.60} parent=0 // pred_check_branch
    %59 = sbr.rel (0) target = $region21
  $region20: #{rfdn_forward.60} parent=0 // pred_region
    _
  $region21: #{rfdn_forward.60} parent=0 // pred_fallthru
    _

// kernel: rfdn_forward.63
$region0: #{rfdn_forward.63}
  #allocation0 [shape = 'u32[]', space=smem, size = 0x4, offset = 0x4, fixed_abs, tag = 'smem constant byte address 0x4 - core index']
  #allocation1 [shape = 'u32[72,128]{1,0:T(1,128)}', space=vmem, size = 0x9000, scoped, tag = 'internal scratch']
  %s0 = inlined_call_operand.vmem [shape: f32[4,4], index: 0, kind: input, shape index: {}]
  %s1 = inlined_call_operand.vmem [shape: f32[4,512], index: 1, kind: input, shape index: {}]
  %s2 = inlined_call_operand.vmem [shape: f32[4,1], index: 2, kind: input, shape index: {}]
  %s3 = inlined_call_operand.vmem [shape: f32[4,512], index: 3, kind: input, shape index: {}]
  %s4 = inlined_call_operand.vmem [shape: f32[4,512], index: 4, kind: output, shape index: {}]
  %s5 = sld [smem:[#allocation0]]
  $region49: #{rfdn_forward.63} parent=0
    _
  %s7 = ssub.s32 1, %s5
  %s8 = scalar_select 0, %s7, %s5
  loop: start=0, step=1, limit=4
  $region2: #{rfdn_forward.63} parent=0 // loop_pre_header
    _
  $region3: #{rfdn_forward.63} parent=0 // loop_header
    %s10 = sphi 0, %s14
    %p11 = scmp.ge.s32.totalorder %s10, 4
    %s18 = sphi 0, %s18
    %s20 = sphi 0, %s18
    %s21 = sphi 0, %s20
    %s35 = sphi 0, %s21
    %s41 = sphi 0, %s43
    %s44 = sphi 0, %s41
    %s45 = sphi 0, %s44
    %s61 = sphi 0, %s45
    %s65 = sphi 0, %s65
    %s67 = sphi 0, %s65
    %s68 = sphi 0, %s67
    %s82 = sphi 0, %s68
    %s88 = sphi 0, %s90
    %s91 = sphi 0, %s88
    %s92 = sphi 0, %s91
    %s108 = sphi 0, %s92
    %s114 = sphi 0, %s116
    %s117 = sphi 0, %s114
    %s118 = sphi 0, %s117
    %s134 = sphi 0, %s118
  $region4: #{rfdn_forward.63} parent=0 // loop_header_branch
    %13 = sbr.rel (%p11) target = $region8
  $region5: #{rfdn_forward.63} parent=0 // loop_body
    %s15 = ssub.s32 %s10, 1
    %s16 = ssub.s32 %s10, 2
    %s17 = sadd.s32 %s10, 1
    %s19 = sadd.s32 %s18, 1
    %p22 = scmp.eq.s32.totalorder %s10, 1
    %p23 = scmp.ne.s32.totalorder %s18, %s20
    %p24 = scmp.eq.s32.totalorder %s10, 0
    %p25 = por %p23, %p24
    %p26 = scmp.ne.s32.totalorder %s18, %s20
    %p27 = scmp.eq.s32.totalorder %s15, 1
    %p28 = por %p26, %p27
    %p29 = scmp.ne.s32.totalorder %s20, %s21
    %p30 = scmp.eq.s32.totalorder %s15, 0
    %p31 = por %p29, %p30
    %p32 = scmp.ne.s32.totalorder %s20, %s21
    %p33 = scmp.eq.s32.totalorder %s16, 1
    %p34 = por %p32, %p33
    %p36 = scmp.ne.s32.totalorder %s21, %s35
    %p37 = scmp.eq.s32.totalorder %s16, 0
    %p38 = por %p36, %p37
    %s39 = ssub.s32 %s10, %s17
    %p40 = scmp.eq.s32.totalorder %s39, 0
    %s42 = sadd.s32 %s41, 1
    %s43 = scalar_select %p40, %s41, %s42
    %p46 = pneg %p40
    %p47 = scmp.eq.s32.totalorder %s10, 1
    %p48 = por %p46, %p47
    %p49 = scmp.ne.s32.totalorder %s41, %s44
    %p50 = scmp.eq.s32.totalorder %s10, 0
    %p51 = por %p49, %p50
    %p52 = scmp.ne.s32.totalorder %s41, %s44
    %p53 = scmp.eq.s32.totalorder %s15, 1
    %p54 = por %p52, %p53
    %p55 = scmp.ne.s32.totalorder %s44, %s45
    %p56 = scmp.eq.s32.totalorder %s15, 0
    %p57 = por %p55, %p56
    %p58 = scmp.ne.s32.totalorder %s44, %s45
    %p59 = scmp.eq.s32.totalorder %s16, 1
    %p60 = por %p58, %p59
    %p62 = scmp.ne.s32.totalorder %s45, %s61
    %p63 = scmp.eq.s32.totalorder %s16, 0
    %p64 = por %p62, %p63
    %s66 = sadd.s32 %s65, 1
    %p69 = scmp.eq.s32.totalorder %s10, 1
    %p70 = scmp.ne.s32.totalorder %s65, %s67
    %p71 = scmp.eq.s32.totalorder %s10, 0
    %p72 = por %p70, %p71
    %p73 = scmp.ne.s32.totalorder %s65, %s67
    %p74 = scmp.eq.s32.totalorder %s15, 1
    %p75 = por %p73, %p74
    %p76 = scmp.ne.s32.totalorder %s67, %s68
    %p77 = scmp.eq.s32.totalorder %s15, 0
    %p78 = por %p76, %p77
    %p79 = scmp.ne.s32.totalorder %s67, %s68
    %p80 = scmp.eq.s32.totalorder %s16, 1
    %p81 = por %p79, %p80
    %p83 = scmp.ne.s32.totalorder %s68, %s82
    %p84 = scmp.eq.s32.totalorder %s16, 0
    %p85 = por %p83, %p84
    %s86 = ssub.s32 %s10, %s17
    %p87 = scmp.eq.s32.totalorder %s86, 0
    %s89 = sadd.s32 %s88, 1
    %s90 = scalar_select %p87, %s88, %s89
    %p93 = pneg %p87
    %p94 = scmp.eq.s32.totalorder %s10, 1
    %p95 = por %p93, %p94
    %p96 = scmp.ne.s32.totalorder %s88, %s91
    %p97 = scmp.eq.s32.totalorder %s10, 0
    %p98 = por %p96, %p97
    %p99 = scmp.ne.s32.totalorder %s88, %s91
    %p100 = scmp.eq.s32.totalorder %s15, 1
    %p101 = por %p99, %p100
    %p102 = scmp.ne.s32.totalorder %s91, %s92
    %p103 = scmp.eq.s32.totalorder %s15, 0
    %p104 = por %p102, %p103
    %p105 = scmp.ne.s32.totalorder %s91, %s92
    %p106 = scmp.eq.s32.totalorder %s16, 1
    %p107 = por %p105, %p106
    %p109 = scmp.ne.s32.totalorder %s92, %s108
    %p110 = scmp.eq.s32.totalorder %s16, 0
    %p111 = por %p109, %p110
    %s112 = ssub.s32 %s10, %s17
    %p113 = scmp.eq.s32.totalorder %s112, 0
    %s115 = sadd.s32 %s114, 1
    %s116 = scalar_select %p113, %s114, %s115
    %p119 = pneg %p113
    %p120 = scmp.eq.s32.totalorder %s10, 1
    %p121 = por %p119, %p120
    %p122 = scmp.ne.s32.totalorder %s114, %s117
    %p123 = scmp.eq.s32.totalorder %s10, 0
    %p124 = por %p122, %p123
    %p125 = scmp.ne.s32.totalorder %s114, %s117
    %p126 = scmp.eq.s32.totalorder %s15, 1
    %p127 = por %p125, %p126
    %p128 = scmp.ne.s32.totalorder %s117, %s118
    %p129 = scmp.eq.s32.totalorder %s15, 0
    %p130 = por %p128, %p129
    %p131 = scmp.ne.s32.totalorder %s117, %s118
    %p132 = scmp.eq.s32.totalorder %s16, 1
    %p133 = por %p131, %p132
    %p135 = scmp.ne.s32.totalorder %s118, %s134
    %p136 = scmp.eq.s32.totalorder %s16, 0
    %p137 = por %p135, %p136
    %p138 = scmp.le.s32.totalorder 1, %s10
    %p139 = scmp.lt.s32.totalorder %s10, 3
    %p140 = pnand %p138, %p139
    %p141 = pneg %p140
    // Predicated region
    $region9: #{rfdn_forward.63} parent=5 // pred_check
      _
    $region10: #{rfdn_forward.63} parent=5 // pred_check_branch
      %143 = sbr.rel (%p140) target = $region12
    $region11: #{rfdn_forward.63} parent=5 // pred_region
      %s144 = ssub.s32 %s10, 1
      // Predicated region
      $region13: #{rfdn_forward.63} parent=11 // pred_check
        %p145 = pneg %p31
      $region14: #{rfdn_forward.63} parent=11 // pred_check_branch
        %147 = sbr.rel (%p145) target = $region16
      $region15: #{rfdn_forward.63} parent=11 // pred_region
        _
      $region16: #{rfdn_forward.63} parent=11 // pred_fallthru
        _
      // Predicated region
      $region17: #{rfdn_forward.63} parent=11 // pred_check
        %p148 = pneg %p78
      $region18: #{rfdn_forward.63} parent=11 // pred_check_branch
        %150 = sbr.rel (%p148) target = $region20
      $region19: #{rfdn_forward.63} parent=11 // pred_region
        _
      $region20: #{rfdn_forward.63} parent=11 // pred_fallthru
        _
    $region12: #{rfdn_forward.63} parent=5 // pred_fallthru
      _
    %p151 = scmp.lt.s32.totalorder %s10, 2
    // Predicated region
    $region21: #{rfdn_forward.63} parent=5 // pred_check
      %p152 = pneg %p151
    $region22: #{rfdn_forward.63} parent=5 // pred_check_branch
      %154 = sbr.rel (%p152) target = $region24
    $region23: #{rfdn_forward.63} parent=5 // pred_region
      // Predicated region
      $region25: #{rfdn_forward.63} parent=23 // pred_check
        %p155 = pneg %p51
      $region26: #{rfdn_forward.63} parent=23 // pred_check_branch
        %157 = sbr.rel (%p155) target = $region28
      $region27: #{rfdn_forward.63} parent=23 // pred_region
        %s158 = smul.u32 2, %s10
        %p159 = scmp.lt.s32.totalorder %s158, 3
        %s160 = scalar_select %p159, %s158, 3
        %s161 = smul.addr %s160, 4
        %s162 = scalar_lea.vmem %s1, %s161
        %s163 = smul.u32 2, %s10
      $region28: #{rfdn_forward.63} parent=23 // pred_fallthru
        _
      // Predicated region
      $region29: #{rfdn_forward.63} parent=23 // pred_check
        %p164 = pneg %p98
      $region30: #{rfdn_forward.63} parent=23 // pred_check_branch
        %166 = sbr.rel (%p164) target = $region32
      $region31: #{rfdn_forward.63} parent=23 // pred_region
        %s167 = smul.u32 2, %s10
        %p168 = scmp.lt.s32.totalorder %s167, 3
        %s169 = scalar_select %p168, %s167, 3
        %s170 = smul.addr %s169, 4
        %s171 = scalar_lea.vmem %s3, %s170
        %s172 = smul.u32 2, %s10
      $region32: #{rfdn_forward.63} parent=23 // pred_fallthru
        _
    $region24: #{rfdn_forward.63} parent=5 // pred_fallthru
      _
    %p173 = scmp.le.s32.totalorder 1, %s10
    %p174 = scmp.lt.s32.totalorder %s10, 3
    %p175 = pnand %p173, %p174
    %p176 = pneg %p175
    // Predicated region
    $region33: #{rfdn_forward.63} parent=5 // pred_check
      _
    $region34: #{rfdn_forward.63} parent=5 // pred_check_branch
      %178 = sbr.rel (%p175) target = $region36
    $region35: #{rfdn_forward.63} parent=5 // pred_region
      %s179 = ssub.s32 %s10, 1
      %p180 = pneg %p31
      %p181 = pneg %p28
      %s182 = smul.u32 2, %s15
      %p183 = scmp.lt.s32.totalorder %s182, 3
      %s184 = scalar_select %p183, %s182, 3
      %s185 = smul.addr %s184, 4
      %s186 = scalar_lea.vmem %s1, %s185
      %p187 = pneg %p57
      %p188 = pneg %p54
      %p189 = pneg %p78
      %p190 = pneg %p75
      %s191 = smul.u32 2, %s15
      %p192 = scmp.lt.s32.totalorder %s191, 3
      %s193 = scalar_select %p192, %s191, 3
      %s194 = smul.addr %s193, 4
      %s195 = scalar_lea.vmem %s3, %s194
      %p196 = pneg %p104
      %p197 = pneg %p101
      %p198 = pneg %p130
      %p199 = pneg %p127
      %s200 = smul.u32 2, %s15
      %p201 = scmp.lt.s32.totalorder %s200, 3
      %s202 = scalar_select %p201, %s200, 3
      %s203 = smul.addr %s202, 4
      %s204 = scalar_lea.vmem %s4, %s203
      %s205 = smul.u32 2, %s15
      %p206 = scmp.lt.s32.totalorder %s205, 3
      %s207 = scalar_select %p206, %s205, 3
      %s208 = smul.addr %s207, 4
      %s209 = scalar_lea.vmem %s1, %s208
      %s210 = smul.u32 2, %s15
      %s211 = smul.u32 2, %s15
      %p212 = scmp.lt.s32.totalorder %s211, 3
      %s213 = scalar_select %p212, %s211, 3
      %s214 = smul.addr %s213, 4
      %s215 = scalar_lea.vmem %s3, %s214
      %s216 = smul.u32 2, %s15
      %s217 = smul.u32 2, %s15
      %p218 = scmp.lt.s32.totalorder %s217, 3
      %s219 = scalar_select %p218, %s217, 3
      %s220 = smul.addr %s219, 4
      %s221 = scalar_lea.vmem %s4, %s220
      %s222 = smul.u32 2, %s15
      %v223 = vld [vmem:[%s0] sm:$0xf]
      %v224 = vld [vmem:[%s209] sm:$0xff]
      %v225 = vld [vmem:[%s2] sm:$0xf]
      %227 = vset.pattern.permute.xlu0 0
      %228 = vperm.xlu0 %227, %v225
      %v229 = vpop.permute.xlu0 %228
      %232 = vst [vmem:[#allocation1] ss:$2 sm:$0xff] %v224
      %v233 = vld.sshfl [vmem:[#allocation1] sm:$0xff pattern:$0x75316420]
      %v234 = vld.sshfl [vmem:[#allocation1 + $0x8] sm:$0xff pattern:$0x75316420]
      %vm235 = vcmask 31744
      %v237 = vsel %vm235, %v223, 0
      %vm239 = vcmask 1043456
      %v240 = vsel %vm239, %v233, 0
      %v242 = vsel %vm239, %v234, 0
      %244 = vmatpush.msra.mxu0 0.0
      %245 = vmatpush.msra.mxu0 0.0
      %246 = vmatpush.msra.mxu0 0.0
      %247 = vmatpush.msra.mxu0 0.0
      %248 = vmatpush.msra.mxu0 0.0
      %249 = vmatpush.msra.mxu0 0.0
      %250 = vmatpush.msra.mxu0 0.0
      %251 = vmatpush.msra.mxu0 0.0
      %252 = vmatpush.msra.mxu0 0.0
      %253 = vmatpush.msra.mxu0 0.0
      %254 = vmatpush.msra.mxu0 0.0
      %255 = vmatpush.msra.mxu0 0.0
      %256 = vmatpush.msra.mxu0 0.0
      %257 = vmatpush.msra.mxu0 0.0
      %258 = vmatpush.msra.mxu0 0.0
      %259 = vmatpush.msra.mxu0 %v240
      %260 = vmatmul.f32.gmra.mxu0 %v237
      %v261 = vpop.f32.mrf.mxu0
      %v262 = vadd.f32 %v229, %v261
      %263 = vdwg.mxu0
      %264 = vmatpush.msra.mxu0 0.0
      %265 = vmatpush.msra.mxu0 0.0
      %266 = vmatpush.msra.mxu0 0.0
      %267 = vmatpush.msra.mxu0 0.0
      %268 = vmatpush.msra.mxu0 0.0
      %269 = vmatpush.msra.mxu0 0.0
      %270 = vmatpush.msra.mxu0 0.0
      %271 = vmatpush.msra.mxu0 0.0
      %272 = vmatpush.msra.mxu0 0.0
      %273 = vmatpush.msra.mxu0 0.0
      %274 = vmatpush.msra.mxu0 0.0
      %275 = vmatpush.msra.mxu0 0.0
      %276 = vmatpush.msra.mxu0 0.0
      %277 = vmatpush.msra.mxu0 0.0
      %278 = vmatpush.msra.mxu0 0.0
      %279 = vmatpush.msra.mxu0 %v242
      %280 = vmatmul.f32.gmra.mxu0 %v237
      %v281 = vpop.f32.mrf.mxu0
      %v282 = vadd.f32 %v229, %v281
      %283 = vdwg.mxu0
      %v284 = vld [vmem:[%s215] sm:$0xff]
      %286 = vst [vmem:[#allocation1] ss:$2 sm:$0xff] %v284
      %v287 = vld.sshfl [vmem:[#allocation1] sm:$0xff pattern:$0x75316420]
      %v288 = vld.sshfl [vmem:[#allocation1 + $0x8] sm:$0xff pattern:$0x75316420]
      %v291 = vadd.f32 %v262, %v287
      %v292 = vadd.f32 %v282, %v288
      %v295 = vrot.slane %v292, 4
      %v296 = vsel %vm239, %v291, %v295
      %298 = vst [vmem:[%s221] sm:$0xff] %v296
      %s299 = smul.u32 2, %s15
      %p300 = scmp.lt.s32.totalorder %s299, 3
      %s301 = scalar_select %p300, %s299, 3
      %s302 = smul.addr %s301, 4
      %s303 = scalar_lea.vmem %s4, %s302
      // Predicated region
      $region37: #{rfdn_forward.63} parent=35 // pred_check
        %p304 = pneg %p127
      $region38: #{rfdn_forward.63} parent=35 // pred_check_branch
        %306 = sbr.rel (%p304) target = $region40
      $region39: #{rfdn_forward.63} parent=35 // pred_region
        %s307 = smul.u32 2, %s15
      $region40: #{rfdn_forward.63} parent=35 // pred_fallthru
        _
    $region36: #{rfdn_forward.63} parent=5 // pred_fallthru
      _
    %p308 = scmp.le.s32.totalorder 2, %s10
    // Predicated region
    $region41: #{rfdn_forward.63} parent=5 // pred_check
      %p309 = pneg %p308
    $region42: #{rfdn_forward.63} parent=5 // pred_check_branch
      %311 = sbr.rel (%p309) target = $region44
    $region43: #{rfdn_forward.63} parent=5 // pred_region
      %s312 = ssub.s32 %s10, 2
      // Predicated region
      $region45: #{rfdn_forward.63} parent=43 // pred_check
        %p313 = pneg %p133
      $region46: #{rfdn_forward.63} parent=43 // pred_check_branch
        %315 = sbr.rel (%p313) target = $region48
      $region47: #{rfdn_forward.63} parent=43 // pred_region
        %s316 = smul.u32 2, %s16
        %p317 = scmp.lt.s32.totalorder %s316, 3
        %s318 = scalar_select %p317, %s316, 3
        %s319 = smul.addr %s318, 4
        %s320 = scalar_lea.vmem %s4, %s319
      $region48: #{rfdn_forward.63} parent=43 // pred_fallthru
        _
    $region44: #{rfdn_forward.63} parent=5 // pred_fallthru
      _
  $region6: #{rfdn_forward.63} parent=0 // loop_footer
    %s14 = sadd.s32 1, %s10
  $region7: #{rfdn_forward.63} parent=0 // loop_footer_branch
    %9 = sbr.rel target = $region3
  $region8: #{rfdn_forward.63} parent=0 // loop_exit
    _

// kernel: rfdn_forward.64
$region0: #{rfdn_forward.64}
  #allocation0 [shape = 'u32[]', space=smem, size = 0x4, offset = 0x4, fixed_abs, tag = 'smem constant byte address 0x4 - core index']
  #allocation1 [shape = 'u32[72,128]{1,0:T(1,128)}', space=vmem, size = 0x9000, scoped, tag = 'internal scratch']
  %s0 = inlined_call_operand.vmem [shape: f32[16,4], index: 0, kind: input, shape index: {}]
  %s1 = inlined_call_operand.vmem [shape: f32[4,512], index: 1, kind: input, shape index: {}]
  %s2 = inlined_call_operand.vmem [shape: f32[16,1], index: 2, kind: input, shape index: {}]
  %s3 = inlined_call_operand.vmem [shape: f32[16,512], index: 3, kind: input, shape index: {}]
  %s4 = inlined_call_operand.vmem [shape: f32[16,512], index: 4, kind: output, shape index: {}]
  %s5 = sld [smem:[#allocation0]]
  $region91: #{rfdn_forward.64} parent=0
    _
  %s7 = ssub.s32 1, %s5
  %s8 = scalar_select 0, %s7, %s5
  $region1: #{rfdn_forward.64} parent=0
    #allocation2 [shape = 'u8[32768]{0}', space=vmem, size = 0x8000, scoped, tag = 'input window, operand 3']
    #allocation3 [shape = 'u8[32768]{0}', space=vmem, size = 0x8000, scoped, tag = 'output window, operand 0']
    loop: start=0, step=1, limit=4
    $region2: #{rfdn_forward.64} parent=1 // loop_pre_header
      _
    $region3: #{rfdn_forward.64} parent=1 // loop_header
      %s10 = sphi 0, %s14
      %p11 = scmp.ge.s32.totalorder %s10, 4
      %s18 = sphi 0, %s18
      %s20 = sphi 0, %s18
      %s21 = sphi 0, %s20
      %s35 = sphi 0, %s21
      %s41 = sphi 0, %s43
      %s44 = sphi 0, %s41
      %s45 = sphi 0, %s44
      %s61 = sphi 0, %s45
      %s65 = sphi 0, %s65
      %s67 = sphi 0, %s65
      %s68 = sphi 0, %s67
      %s82 = sphi 0, %s68
      %s88 = sphi 0, %s90
      %s91 = sphi 0, %s88
      %s92 = sphi 0, %s91
      %s108 = sphi 0, %s92
      %s114 = sphi 0, %s116
      %s117 = sphi 0, %s114
      %s118 = sphi 0, %s117
      %s134 = sphi 0, %s118
    $region4: #{rfdn_forward.64} parent=1 // loop_header_branch
      %13 = sbr.rel (%p11) target = $region8
    $region5: #{rfdn_forward.64} parent=1 // loop_body
      %s15 = ssub.s32 %s10, 1
      %s16 = ssub.s32 %s10, 2
      %s17 = sadd.s32 %s10, 1
      %s19 = sadd.s32 %s18, 1
      %p22 = scmp.eq.s32.totalorder %s10, 1
      %p23 = scmp.ne.s32.totalorder %s18, %s20
      %p24 = scmp.eq.s32.totalorder %s10, 0
      %p25 = por %p23, %p24
      %p26 = scmp.ne.s32.totalorder %s18, %s20
      %p27 = scmp.eq.s32.totalorder %s15, 1
      %p28 = por %p26, %p27
      %p29 = scmp.ne.s32.totalorder %s20, %s21
      %p30 = scmp.eq.s32.totalorder %s15, 0
      %p31 = por %p29, %p30
      %p32 = scmp.ne.s32.totalorder %s20, %s21
      %p33 = scmp.eq.s32.totalorder %s16, 1
      %p34 = por %p32, %p33
      %p36 = scmp.ne.s32.totalorder %s21, %s35
      %p37 = scmp.eq.s32.totalorder %s16, 0
      %p38 = por %p36, %p37
      %s39 = ssub.s32 %s10, %s17
      %p40 = scmp.eq.s32.totalorder %s39, 0
      %s42 = sadd.s32 %s41, 1
      %s43 = scalar_select %p40, %s41, %s42
      %p46 = pneg %p40
      %p47 = scmp.eq.s32.totalorder %s10, 1
      %p48 = por %p46, %p47
      %p49 = scmp.ne.s32.totalorder %s41, %s44
      %p50 = scmp.eq.s32.totalorder %s10, 0
      %p51 = por %p49, %p50
      %p52 = scmp.ne.s32.totalorder %s41, %s44
      %p53 = scmp.eq.s32.totalorder %s15, 1
      %p54 = por %p52, %p53
      %p55 = scmp.ne.s32.totalorder %s44, %s45
      %p56 = scmp.eq.s32.totalorder %s15, 0
      %p57 = por %p55, %p56
      %p58 = scmp.ne.s32.totalorder %s44, %s45
      %p59 = scmp.eq.s32.totalorder %s16, 1
      %p60 = por %p58, %p59
      %p62 = scmp.ne.s32.totalorder %s45, %s61
      %p63 = scmp.eq.s32.totalorder %s16, 0
      %p64 = por %p62, %p63
      %s66 = sadd.s32 %s65, 1
      %p69 = scmp.eq.s32.totalorder %s10, 1
      %p70 = scmp.ne.s32.totalorder %s65, %s67
      %p71 = scmp.eq.s32.totalorder %s10, 0
      %p72 = por %p70, %p71
      %p73 = scmp.ne.s32.totalorder %s65, %s67
      %p74 = scmp.eq.s32.totalorder %s15, 1
      %p75 = por %p73, %p74
      %p76 = scmp.ne.s32.totalorder %s67, %s68
      %p77 = scmp.eq.s32.totalorder %s15, 0
      %p78 = por %p76, %p77
      %p79 = scmp.ne.s32.totalorder %s67, %s68
      %p80 = scmp.eq.s32.totalorder %s16, 1
      %p81 = por %p79, %p80
      %p83 = scmp.ne.s32.totalorder %s68, %s82
      %p84 = scmp.eq.s32.totalorder %s16, 0
      %p85 = por %p83, %p84
      %s86 = ssub.s32 %s10, %s17
      %p87 = scmp.eq.s32.totalorder %s86, 0
      %s89 = sadd.s32 %s88, 1
      %s90 = scalar_select %p87, %s88, %s89
      %p93 = pneg %p87
      %p94 = scmp.eq.s32.totalorder %s10, 1
      %p95 = por %p93, %p94
      %p96 = scmp.ne.s32.totalorder %s88, %s91
      %p97 = scmp.eq.s32.totalorder %s10, 0
      %p98 = por %p96, %p97
      %p99 = scmp.ne.s32.totalorder %s88, %s91
      %p100 = scmp.eq.s32.totalorder %s15, 1
      %p101 = por %p99, %p100
      %p102 = scmp.ne.s32.totalorder %s91, %s92
      %p103 = scmp.eq.s32.totalorder %s15, 0
      %p104 = por %p102, %p103
      %p105 = scmp.ne.s32.totalorder %s91, %s92
      %p106 = scmp.eq.s32.totalorder %s16, 1
      %p107 = por %p105, %p106
      %p109 = scmp.ne.s32.totalorder %s92, %s108
      %p110 = scmp.eq.s32.totalorder %s16, 0
      %p111 = por %p109, %p110
      %s112 = ssub.s32 %s10, %s17
      %p113 = scmp.eq.s32.totalorder %s112, 0
      %s115 = sadd.s32 %s114, 1
      %s116 = scalar_select %p113, %s114, %s115
      %p119 = pneg %p113
      %p120 = scmp.eq.s32.totalorder %s10, 1
      %p121 = por %p119, %p120
      %p122 = scmp.ne.s32.totalorder %s114, %s117
      %p123 = scmp.eq.s32.totalorder %s10, 0
      %p124 = por %p122, %p123
      %p125 = scmp.ne.s32.totalorder %s114, %s117
      %p126 = scmp.eq.s32.totalorder %s15, 1
      %p127 = por %p125, %p126
      %p128 = scmp.ne.s32.totalorder %s117, %s118
      %p129 = scmp.eq.s32.totalorder %s15, 0
      %p130 = por %p128, %p129
      %p131 = scmp.ne.s32.totalorder %s117, %s118
      %p132 = scmp.eq.s32.totalorder %s16, 1
      %p133 = por %p131, %p132
      %p135 = scmp.ne.s32.totalorder %s118, %s134
      %p136 = scmp.eq.s32.totalorder %s16, 0
      %p137 = por %p135, %p136
      %p138 = scmp.le.s32.totalorder 1, %s10
      %p139 = scmp.lt.s32.totalorder %s10, 3
      %p140 = pnand %p138, %p139
      %p141 = pneg %p140
      // Predicated region
      $region9: #{rfdn_forward.64} parent=5 // pred_check
        _
      $region10: #{rfdn_forward.64} parent=5 // pred_check_branch
        %143 = sbr.rel (%p140) target = $region12
      $region11: #{rfdn_forward.64} parent=5 // pred_region
        %s144 = ssub.s32 %s10, 1
        // Predicated region
        $region13: #{rfdn_forward.64} parent=11 // pred_check
          %p145 = pneg %p31
        $region14: #{rfdn_forward.64} parent=11 // pred_check_branch
          %147 = sbr.rel (%p145) target = $region16
        $region15: #{rfdn_forward.64} parent=11 // pred_region
          _
        $region16: #{rfdn_forward.64} parent=11 // pred_fallthru
          _
        // Predicated region
        $region17: #{rfdn_forward.64} parent=11 // pred_check
          %p148 = pneg %p78
        $region18: #{rfdn_forward.64} parent=11 // pred_check_branch
          %150 = sbr.rel (%p148) target = $region20
        $region19: #{rfdn_forward.64} parent=11 // pred_region
          _
        $region20: #{rfdn_forward.64} parent=11 // pred_fallthru
          _
      $region12: #{rfdn_forward.64} parent=5 // pred_fallthru
        _
      %p151 = scmp.lt.s32.totalorder %s10, 2
      // Predicated region
      $region21: #{rfdn_forward.64} parent=5 // pred_check
        %p152 = pneg %p151
      $region22: #{rfdn_forward.64} parent=5 // pred_check_branch
        %154 = sbr.rel (%p152) target = $region24
      $region23: #{rfdn_forward.64} parent=5 // pred_region
        // Predicated region
        $region25: #{rfdn_forward.64} parent=23 // pred_check
          %p155 = pneg %p51
        $region26: #{rfdn_forward.64} parent=23 // pred_check_branch
          %157 = sbr.rel (%p155) target = $region28
        $region27: #{rfdn_forward.64} parent=23 // pred_region
          %s158 = smul.u32 2, %s10
          %p159 = scmp.lt.s32.totalorder %s158, 3
          %s160 = scalar_select %p159, %s158, 3
          %s161 = smul.addr %s160, 4
          %s162 = scalar_lea.vmem %s1, %s161
          %s163 = smul.u32 2, %s10
        $region28: #{rfdn_forward.64} parent=23 // pred_fallthru
          _
        // Predicated region
        $region29: #{rfdn_forward.64} parent=23 // pred_check
          %p164 = pneg %p98
        $region30: #{rfdn_forward.64} parent=23 // pred_check_branch
          %166 = sbr.rel (%p164) target = $region32
        $region31: #{rfdn_forward.64} parent=23 // pred_region
          %s167 = sand.u32 %s88, 1
          %s168 = sand.u32 %s88, 1
          %s169 = smul.addr %s168, 32
          %s170 = scalar_lea.vmem [#allocation2], %s169
          %s171 = smul.u32 2, %s10
          %s172 = smul.addr %s171, 8
          %s173 = scalar_lea.vmem %s3, %s172
          // Predicated region
          $region33: #{rfdn_forward.64} parent=31 // pred_check
            _
          $region34: #{rfdn_forward.64} parent=31 // pred_check_branch
            %175 = sbr.rel (0) target = $region36
          $region35: #{rfdn_forward.64} parent=31 // pred_region
            // Predicated region
            $region37: #{rfdn_forward.64} parent=35 // pred_check
              _
            $region38: #{rfdn_forward.64} parent=35 // pred_check_branch
              %177 = sbr.rel (0) target = $region40
            $region39: #{rfdn_forward.64} parent=35 // pred_region
              loop: start=0, step=1, limit=1
              $region41: #{rfdn_forward.64} parent=39 // loop_pre_header
                _
              $region42: #{rfdn_forward.64} parent=39 // loop_header
                %s179 = sphi 0, %s183
                %p180 = scmp.ge.s32.totalorder %s179, 1
                %s184 = sphi %s173, %s173
                %s185 = sphi %s170, %s170
              $region43: #{rfdn_forward.64} parent=39 // loop_header_branch
                %182 = sbr.rel (%p180) target = $region47
              $region44: #{rfdn_forward.64} parent=39 // loop_body
                %v186 = vld [vmem:[%s184] sm:$0xff]
                %187 = vst [vmem:[%s185] sm:$0xff] %v186
                %v188 = vld [vmem:[%s184 + $0x8] sm:$0xff]
                %189 = vst [vmem:[%s185 + $0x8] sm:$0xff] %v188
                %v190 = vld [vmem:[%s184 + $0x20] sm:$0xff]
                %191 = vst [vmem:[%s185 + $0x10] sm:$0xff] %v190
                %v192 = vld [vmem:[%s184 + $0x28] sm:$0xff]
                %193 = vst [vmem:[%s185 + $0x18] sm:$0xff] %v192
              $region45: #{rfdn_forward.64} parent=39 // loop_footer
                %s183 = sadd.s32 1, %s179
              $region46: #{rfdn_forward.64} parent=39 // loop_footer_branch
                %178 = sbr.rel target = $region42
              $region47: #{rfdn_forward.64} parent=39 // loop_exit
                _
            $region40: #{rfdn_forward.64} parent=35 // pred_fallthru
              _
            // Predicated region
            $region48: #{rfdn_forward.64} parent=35 // pred_check
              _
            $region49: #{rfdn_forward.64} parent=35 // pred_check_branch
              %195 = sbr.rel target = $region51
            $region50: #{rfdn_forward.64} parent=35 // pred_region
              _
            $region51: #{rfdn_forward.64} parent=35 // pred_fallthru
              _
          $region36: #{rfdn_forward.64} parent=31 // pred_fallthru
            _
          %196 = vnop
        $region32: #{rfdn_forward.64} parent=23 // pred_fallthru
          _
      $region24: #{rfdn_forward.64} parent=5 // pred_fallthru
        _
      %p197 = scmp.le.s32.totalorder 1, %s10
      %p198 = scmp.lt.s32.totalorder %s10, 3
      %p199 = pnand %p197, %p198
      %p200 = pneg %p199
      // Predicated region
      $region52: #{rfdn_forward.64} parent=5 // pred_check
        _
      $region53: #{rfdn_forward.64} parent=5 // pred_check_branch
        %202 = sbr.rel (%p199) target = $region55
      $region54: #{rfdn_forward.64} parent=5 // pred_region
        %s203 = ssub.s32 %s10, 1
        %s204 = sand.u32 %s91, 1
        %s205 = sand.u32 %s91, 1
        %s206 = smul.addr %s205, 32
        %s207 = scalar_lea.vmem [#allocation2], %s206
        // Predicated region
        $region56: #{rfdn_forward.64} parent=54 // pred_check
          %p208 = pneg %p104
        $region57: #{rfdn_forward.64} parent=54 // pred_check_branch
          %210 = sbr.rel (%p208) target = $region59
        $region58: #{rfdn_forward.64} parent=54 // pred_region
          _
        $region59: #{rfdn_forward.64} parent=54 // pred_fallthru
          _
        %p211 = pneg %p31
        %p212 = pneg %p28
        %s213 = smul.u32 2, %s15
        %p214 = scmp.lt.s32.totalorder %s213, 3
        %s215 = scalar_select %p214, %s213, 3
        %s216 = smul.addr %s215, 4
        %s217 = scalar_lea.vmem %s1, %s216
        %p218 = pneg %p57
        %p219 = pneg %p54
        %p220 = pneg %p78
        %p221 = pneg %p75
        %s222 = sand.u32 %s91, 1
        %s223 = sand.u32 %s91, 1
        %s224 = smul.addr %s223, 32
        %s225 = scalar_lea.vmem [#allocation2], %s224
        %p226 = pneg %p104
        %p227 = pneg %p101
        %p228 = pneg %p130
        %p229 = pneg %p127
        %s230 = sand.u32 %s117, 1
        %s231 = sand.u32 %s117, 1
        %s232 = smul.addr %s231, 32
        %s233 = scalar_lea.vmem [#allocation3], %s232
        %s234 = smul.u32 2, %s15
        %p235 = scmp.lt.s32.totalorder %s234, 3
        %s236 = scalar_select %p235, %s234, 3
        %s237 = smul.addr %s236, 4
        %s238 = scalar_lea.vmem %s1, %s237
        %s239 = smul.u32 2, %s15
        %s240 = smul.u32 2, %s15
        %s241 = smul.u32 2, %s15
        %v242 = vld [vmem:[%s0] sm:$0xff]
        %v243 = vld [vmem:[%s0 + $0x8] sm:$0xff]
        %v244 = vld [vmem:[%s238] sm:$0xff]
        %v245 = vld [vmem:[%s2] sm:$0xff]
        %v246 = vld [vmem:[%s2 + $0x8] sm:$0xff]
        %248 = vset.pattern.permute.xlu0 0
        %249 = vperm.xlu0 %248, %v245
        %v250 = vpop.permute.xlu0 %249
        %253 = vset.pattern.permute.xlu0 0
        %254 = vperm.xlu0 %253, %v246
        %v255 = vpop.permute.xlu0 %254
        %258 = vst [vmem:[#allocation1] ss:$2 sm:$0xff] %v244
        %v259 = vld.sshfl [vmem:[#allocation1] sm:$0xff pattern:$0x75316420]
        %v260 = vld.sshfl [vmem:[#allocation1 + $0x8] sm:$0xff pattern:$0x75316420]
        %vm261 = vcmask 31744
        %v263 = vsel %vm261, %v242, 0
        %v266 = vsel %vm261, %v243, 0
        %vm268 = vcmask 1043456
        %v269 = vsel %vm268, %v259, 0
        %v271 = vsel %vm268, %v260, 0
        %273 = vmatpush.msra.mxu0 0.0
        %274 = vmatpush.msra.mxu0 0.0
        %275 = vmatpush.msra.mxu0 0.0
        %276 = vmatpush.msra.mxu0 0.0
        %277 = vmatpush.msra.mxu0 0.0
        %278 = vmatpush.msra.mxu0 0.0
        %279 = vmatpush.msra.mxu0 0.0
        %280 = vmatpush.msra.mxu0 0.0
        %281 = vmatpush.msra.mxu0 0.0
        %282 = vmatpush.msra.mxu0 0.0
        %283 = vmatpush.msra.mxu0 0.0
        %284 = vmatpush.msra.mxu0 0.0
        %285 = vmatpush.msra.mxu0 0.0
        %286 = vmatpush.msra.mxu0 0.0
        %287 = vmatpush.msra.mxu0 0.0
        %288 = vmatpush.msra.mxu0 %v269
        %289 = vmatmul.f32.gmra.mxu0 %v263
        %v290 = vpop.f32.mrf.mxu0
        %v291 = vadd.f32 %v250, %v290
        %292 = vmatmul.f32.gmra.mxu0 %v266
        %v293 = vpop.f32.mrf.mxu0
        %v294 = vadd.f32 %v255, %v293
        %295 = vdwg.mxu0
        %296 = vmatpush.msra.mxu0 0.0
        %297 = vmatpush.msra.mxu0 0.0
        %298 = vmatpush.msra.mxu0 0.0
        %299 = vmatpush.msra.mxu0 0.0
        %300 = vmatpush.msra.mxu0 0.0
        %301 = vmatpush.msra.mxu0 0.0
        %302 = vmatpush.msra.mxu0 0.0
        %303 = vmatpush.msra.mxu0 0.0
        %304 = vmatpush.msra.mxu0 0.0
        %305 = vmatpush.msra.mxu0 0.0
        %306 = vmatpush.msra.mxu0 0.0
        %307 = vmatpush.msra.mxu0 0.0
        %308 = vmatpush.msra.mxu0 0.0
        %309 = vmatpush.msra.mxu0 0.0
        %310 = vmatpush.msra.mxu0 0.0
        %311 = vmatpush.msra.mxu0 %v271
        %312 = vmatmul.f32.gmra.mxu0 %v263
        %v313 = vpop.f32.mrf.mxu0
        %v314 = vadd.f32 %v250, %v313
        %315 = vmatmul.f32.gmra.mxu0 %v266
        %v316 = vpop.f32.mrf.mxu0
        %v317 = vadd.f32 %v255, %v316
        %318 = vdwg.mxu0
        %v319 = vld [vmem:[%s207] sm:$0xff]
        %v320 = vld [vmem:[%s207 + $0x8] sm:$0xff]
        %v321 = vld [vmem:[%s207 + $0x10] sm:$0xff]
        %v322 = vld [vmem:[%s207 + $0x18] sm:$0xff]
        %v323 = vxor.u32 %v291, 2147483648
        %v324 = vxor.u32 %v314, 2147483648
        %v325 = vxor.u32 %v294, 2147483648
        %v326 = vxor.u32 %v317, 2147483648
        %v327 = vmul.f32 %v323, 1.442695
        %v328 = vpow.pop %v327
        %v329 = vmul.f32 %v324, 1.442695
        %v330 = vpow.pop %v329
        %v331 = vmul.f32 %v325, 1.442695
        %v332 = vpow.pop %v331
        %v333 = vmul.f32 %v326, 1.442695
        %v334 = vpow.pop %v333
        %v335 = vadd.f32 %v328, 1.0
        %v336 = vadd.f32 %v330, 1.0
        %v337 = vadd.f32 %v332, 1.0
        %v338 = vadd.f32 %v334, 1.0
        %v339 = vrcp.pop %v335
        %v340 = vmul.f32 %v335, %v339
        %v341 = vsub.f32 1.0, %v340
        %v342 = vmul.f32 %v339, %v341
        %v343 = vadd.f32 %v339, %v342
        %vm344 = vweird.f32 %v335
        %vm345 = vweird.f32 %v339
        %vm346 = vmor %vm344, %vm345
        %v347 = vsel %vm346, %v339, %v343
        %v348 = vand.u32 2147483647, %v335
        %vm349 = vcmp.eq.f32.partialorder %v348, 8.507059e+37
        %v350 = vand.u32 %v335, 2147483648
        %v351 = vor.u32 1.1754944e-38, %v350
        %v352 = vsel %vm349, %v351, %v347
        %v353 = vmul.f32 1.0, %v352
        %v354 = vrcp.pop %v336
        %v355 = vmul.f32 %v336, %v354
        %v356 = vsub.f32 1.0, %v355
        %v357 = vmul.f32 %v354, %v356
        %v358 = vadd.f32 %v354, %v357
        %vm359 = vweird.f32 %v336
        %vm360 = vweird.f32 %v354
        %vm361 = vmor %vm359, %vm360
        %v362 = vsel %vm361, %v354, %v358
        %v363 = vand.u32 2147483647, %v336
        %vm364 = vcmp.eq.f32.partialorder %v363, 8.507059e+37
        %v365 = vand.u32 %v336, 2147483648
        %v366 = vor.u32 1.1754944e-38, %v365
        %v367 = vsel %vm364, %v366, %v362
        %v368 = vmul.f32 1.0, %v367
        %v369 = vrcp.pop %v337
        %v370 = vmul.f32 %v337, %v369
        %v371 = vsub.f32 1.0, %v370
        %v372 = vmul.f32 %v369, %v371
        %v373 = vadd.f32 %v369, %v372
        %vm374 = vweird.f32 %v337
        %vm375 = vweird.f32 %v369
        %vm376 = vmor %vm374, %vm375
        %v377 = vsel %vm376, %v369, %v373
        %v378 = vand.u32 2147483647, %v337
        %vm379 = vcmp.eq.f32.partialorder %v378, 8.507059e+37
        %v380 = vand.u32 %v337, 2147483648
        %v381 = vor.u32 1.1754944e-38, %v380
        %v382 = vsel %vm379, %v381, %v377
        %v383 = vmul.f32 1.0, %v382
        %v384 = vrcp.pop %v338
        %v385 = vmul.f32 %v338, %v384
        %v386 = vsub.f32 1.0, %v385
        %v387 = vmul.f32 %v384, %v386
        %v388 = vadd.f32 %v384, %v387
        %vm389 = vweird.f32 %v338
        %vm390 = vweird.f32 %v384
        %vm391 = vmor %vm389, %vm390
        %v392 = vsel %vm391, %v384, %v388
        %v393 = vand.u32 2147483647, %v338
        %vm394 = vcmp.eq.f32.partialorder %v393, 8.507059e+37
        %v395 = vand.u32 %v338, 2147483648
        %v396 = vor.u32 1.1754944e-38, %v395
        %v397 = vsel %vm394, %v396, %v392
        %v398 = vmul.f32 1.0, %v397
        %v399 = vmul.f32 %v319, %v353
        %v400 = vmul.f32 %v320, %v368
        %v401 = vmul.f32 %v321, %v383
        %v402 = vmul.f32 %v322, %v398
        %403 = vst [vmem:[%s233] sm:$0xff] %v399
        %404 = vst [vmem:[%s233 + $0x8] sm:$0xff] %v400
        %405 = vst [vmem:[%s233 + $0x10] sm:$0xff] %v401
        %406 = vst [vmem:[%s233 + $0x18] sm:$0xff] %v402
        %s407 = sand.u32 %s117, 1
        %s408 = sand.u32 %s117, 1
        %s409 = smul.addr %s408, 32
        %s410 = scalar_lea.vmem [#allocation3], %s409
        // Predicated region
        $region60: #{rfdn_forward.64} parent=54 // pred_check
          %p411 = pneg %p127
        $region61: #{rfdn_forward.64} parent=54 // pred_check_branch
          %413 = sbr.rel (%p411) target = $region63
        $region62: #{rfdn_forward.64} parent=54 // pred_region
          %s414 = smul.u32 2, %s15
          %s415 = smul.addr %s414, 8
          %s416 = scalar_lea.vmem %s4, %s415
          // Predicated region
          $region64: #{rfdn_forward.64} parent=62 // pred_check
            _
          $region65: #{rfdn_forward.64} parent=62 // pred_check_branch
            %418 = sbr.rel (0) target = $region67
          $region66: #{rfdn_forward.64} parent=62 // pred_region
            // Predicated region
            $region68: #{rfdn_forward.64} parent=66 // pred_check
              _
            $region69: #{rfdn_forward.64} parent=66 // pred_check_branch
              %420 = sbr.rel (0) target = $region71
            $region70: #{rfdn_forward.64} parent=66 // pred_region
              loop: start=0, step=1, limit=1
              $region72: #{rfdn_forward.64} parent=70 // loop_pre_header
                _
              $region73: #{rfdn_forward.64} parent=70 // loop_header
                %s422 = sphi 0, %s426
                %p423 = scmp.ge.s32.totalorder %s422, 1
                %s427 = sphi %s410, %s410
                %s428 = sphi %s416, %s416
              $region74: #{rfdn_forward.64} parent=70 // loop_header_branch
                %425 = sbr.rel (%p423) target = $region78
              $region75: #{rfdn_forward.64} parent=70 // loop_body
                %v429 = vld [vmem:[%s427] sm:$0xff]
                %430 = vst [vmem:[%s428] sm:$0xff] %v429
                %v431 = vld [vmem:[%s427 + $0x8] sm:$0xff]
                %432 = vst [vmem:[%s428 + $0x8] sm:$0xff] %v431
                %v433 = vld [vmem:[%s427 + $0x10] sm:$0xff]
                %434 = vst [vmem:[%s428 + $0x20] sm:$0xff] %v433
                %v435 = vld [vmem:[%s427 + $0x18] sm:$0xff]
                %436 = vst [vmem:[%s428 + $0x28] sm:$0xff] %v435
              $region76: #{rfdn_forward.64} parent=70 // loop_footer
                %s426 = sadd.s32 1, %s422
              $region77: #{rfdn_forward.64} parent=70 // loop_footer_branch
                %421 = sbr.rel target = $region73
              $region78: #{rfdn_forward.64} parent=70 // loop_exit
                _
            $region71: #{rfdn_forward.64} parent=66 // pred_fallthru
              _
            // Predicated region
            $region79: #{rfdn_forward.64} parent=66 // pred_check
              _
            $region80: #{rfdn_forward.64} parent=66 // pred_check_branch
              %438 = sbr.rel target = $region82
            $region81: #{rfdn_forward.64} parent=66 // pred_region
              _
            $region82: #{rfdn_forward.64} parent=66 // pred_fallthru
              _
          $region67: #{rfdn_forward.64} parent=62 // pred_fallthru
            _
          %439 = vnop
        $region63: #{rfdn_forward.64} parent=54 // pred_fallthru
          _
      $region55: #{rfdn_forward.64} parent=5 // pred_fallthru
        _
      %p440 = scmp.le.s32.totalorder 2, %s10
      // Predicated region
      $region83: #{rfdn_forward.64} parent=5 // pred_check
        %p441 = pneg %p440
      $region84: #{rfdn_forward.64} parent=5 // pred_check_branch
        %443 = sbr.rel (%p441) target = $region86
      $region85: #{rfdn_forward.64} parent=5 // pred_region
        %s444 = ssub.s32 %s10, 2
        // Predicated region
        $region87: #{rfdn_forward.64} parent=85 // pred_check
          %p445 = pneg %p133
        $region88: #{rfdn_forward.64} parent=85 // pred_check_branch
          %447 = sbr.rel (%p445) target = $region90
        $region89: #{rfdn_forward.64} parent=85 // pred_region
          %s448 = sand.u32 %s118, 1
          %s449 = sand.u32 %s118, 1
          %s450 = smul.addr %s449, 32
          %s451 = scalar_lea.vmem [#allocation3], %s450
        $region90: #{rfdn_forward.64} parent=85 // pred_fallthru
          _
      $region86: #{rfdn_forward.64} parent=5 // pred_fallthru
        _
    $region6: #{rfdn_forward.64} parent=1 // loop_footer
      %s14 = sadd.s32 1, %s10
    $region7: #{rfdn_forward.64} parent=1 // loop_footer_branch
      %9 = sbr.rel target = $region3
    $region8: #{rfdn_forward.64} parent=1 // loop_exit
      _

// kernel: rfdn_forward.101
$region0: #{rfdn_forward.101}
  #allocation0 [shape = 'u32[]', space=smem, size = 0x4, offset = 0x4, fixed_abs, tag = 'smem constant byte address 0x4 - core index']
  #allocation1 [shape = 'u32[72,128]{1,0:T(1,128)}', space=vmem, size = 0x9000, scoped, tag = 'internal scratch']
  %s0 = inlined_call_operand.vmem [shape: f32[16,16], index: 0, kind: input, shape index: {}]
  %s1 = inlined_call_operand.vmem [shape: f32[16,16], index: 1, kind: input, shape index: {}]
  %s2 = inlined_call_operand.vmem [shape: f32[16,16], index: 2, kind: input, shape index: {}]
  %s3 = inlined_call_operand.vmem [shape: f32[16,16], index: 3, kind: input, shape index: {}]
  %s4 = inlined_call_operand.vmem [shape: f32[16,512], index: 4, kind: input, shape index: {}]
  %s5 = inlined_call_operand.vmem [shape: f32[16,512], index: 5, kind: input, shape index: {}]
  %s6 = inlined_call_operand.vmem [shape: f32[16,512], index: 6, kind: input, shape index: {}]
  %s7 = inlined_call_operand.vmem [shape: f32[16,512], index: 7, kind: input, shape index: {}]
  %s8 = inlined_call_operand.vmem [shape: f32[16,1], index: 8, kind: input, shape index: {}]
  %s9 = inlined_call_operand.vmem [shape: f32[16,512], index: 9, kind: output, shape index: {}]
  %s10 = sld [smem:[#allocation0]]
  $region180: #{rfdn_forward.101} parent=0
    _
  %s12 = ssub.s32 1, %s10
  %s13 = scalar_select 0, %s12, %s10
  $region1: #{rfdn_forward.101} parent=0
    #allocation2 [shape = 'u8[32768]{0}', space=vmem, size = 0x8000, scoped, tag = 'input window, operand 4']
    #allocation3 [shape = 'u8[32768]{0}', space=vmem, size = 0x8000, scoped, tag = 'input window, operand 5']
    #allocation4 [shape = 'u8[32768]{0}', space=vmem, size = 0x8000, scoped, tag = 'input window, operand 6']
    #allocation5 [shape = 'u8[32768]{0}', space=vmem, size = 0x8000, scoped, tag = 'input window, operand 7']
    #allocation6 [shape = 'u8[32768]{0}', space=vmem, size = 0x8000, scoped, tag = 'output window, operand 0']
    loop: start=0, step=1, limit=4
    $region2: #{rfdn_forward.101} parent=1 // loop_pre_header
      _
    $region3: #{rfdn_forward.101} parent=1 // loop_header
      %s15 = sphi 0, %s19
      %p16 = scmp.ge.s32.totalorder %s15, 4
      %s23 = sphi 0, %s23
      %s25 = sphi 0, %s23
      %s26 = sphi 0, %s25
      %s40 = sphi 0, %s26
      %s44 = sphi 0, %s44
      %s46 = sphi 0, %s44
      %s47 = sphi 0, %s46
      %s61 = sphi 0, %s47
      %s65 = sphi 0, %s65
      %s67 = sphi 0, %s65
      %s68 = sphi 0, %s67
      %s82 = sphi 0, %s68
      %s86 = sphi 0, %s86
      %s88 = sphi 0, %s86
      %s89 = sphi 0, %s88
      %s103 = sphi 0, %s89
      %s109 = sphi 0, %s111
      %s112 = sphi 0, %s109
      %s113 = sphi 0, %s112
      %s129 = sphi 0, %s113
      %s135 = sphi 0, %s137
      %s138 = sphi 0, %s135
      %s139 = sphi 0, %s138
      %s155 = sphi 0, %s139
      %s161 = sphi 0, %s163
      %s164 = sphi 0, %s161
      %s165 = sphi 0, %s164
      %s181 = sphi 0, %s165
      %s187 = sphi 0, %s189
      %s190 = sphi 0, %s187
      %s191 = sphi 0, %s190
      %s207 = sphi 0, %s191
      %s211 = sphi 0, %s211
      %s213 = sphi 0, %s211
      %s214 = sphi 0, %s213
      %s228 = sphi 0, %s214
      %s234 = sphi 0, %s236
      %s237 = sphi 0, %s234
      %s238 = sphi 0, %s237
      %s254 = sphi 0, %s238
    $region4: #{rfdn_forward.101} parent=1 // loop_header_branch
      %18 = sbr.rel (%p16) target = $region8
    $region5: #{rfdn_forward.101} parent=1 // loop_body
      %s20 = ssub.s32 %s15, 1
      %s21 = ssub.s32 %s15, 2
      %s22 = sadd.s32 %s15, 1
      %s24 = sadd.s32 %s23, 1
      %p27 = scmp.eq.s32.totalorder %s15, 1
      %p28 = scmp.ne.s32.totalorder %s23, %s25
      %p29 = scmp.eq.s32.totalorder %s15, 0
      %p30 = por %p28, %p29
      %p31 = scmp.ne.s32.totalorder %s23, %s25
      %p32 = scmp.eq.s32.totalorder %s20, 1
      %p33 = por %p31, %p32
      %p34 = scmp.ne.s32.totalorder %s25, %s26
      %p35 = scmp.eq.s32.totalorder %s20, 0
      %p36 = por %p34, %p35
      %p37 = scmp.ne.s32.totalorder %s25, %s26
      %p38 = scmp.eq.s32.totalorder %s21, 1
      %p39 = por %p37, %p38
      %p41 = scmp.ne.s32.totalorder %s26, %s40
      %p42 = scmp.eq.s32.totalorder %s21, 0
      %p43 = por %p41, %p42
      %s45 = sadd.s32 %s44, 1
      %p48 = scmp.eq.s32.totalorder %s15, 1
      %p49 = scmp.ne.s32.totalorder %s44, %s46
      %p50 = scmp.eq.s32.totalorder %s15, 0
      %p51 = por %p49, %p50
      %p52 = scmp.ne.s32.totalorder %s44, %s46
      %p53 = scmp.eq.s32.totalorder %s20, 1
      %p54 = por %p52, %p53
      %p55 = scmp.ne.s32.totalorder %s46, %s47
      %p56 = scmp.eq.s32.totalorder %s20, 0
      %p57 = por %p55, %p56
      %p58 = scmp.ne.s32.totalorder %s46, %s47
      %p59 = scmp.eq.s32.totalorder %s21, 1
      %p60 = por %p58, %p59
      %p62 = scmp.ne.s32.totalorder %s47, %s61
      %p63 = scmp.eq.s32.totalorder %s21, 0
      %p64 = por %p62, %p63
      %s66 = sadd.s32 %s65, 1
      %p69 = scmp.eq.s32.totalorder %s15, 1
      %p70 = scmp.ne.s32.totalorder %s65, %s67
      %p71 = scmp.eq.s32.totalorder %s15, 0
      %p72 = por %p70, %p71
      %p73 = scmp.ne.s32.totalorder %s65, %s67
      %p74 = scmp.eq.s32.totalorder %s20, 1
      %p75 = por %p73, %p74
      %p76 = scmp.ne.s32.totalorder %s67, %s68
      %p77 = scmp.eq.s32.totalorder %s20, 0
      %p78 = por %p76, %p77
      %p79 = scmp.ne.s32.totalorder %s67, %s68
      %p80 = scmp.eq.s32.totalorder %s21, 1
      %p81 = por %p79, %p80
      %p83 = scmp.ne.s32.totalorder %s68, %s82
      %p84 = scmp.eq.s32.totalorder %s21, 0
      %p85 = por %p83, %p84
      %s87 = sadd.s32 %s86, 1
      %p90 = scmp.eq.s32.totalorder %s15, 1
      %p91 = scmp.ne.s32.totalorder %s86, %s88
      %p92 = scmp.eq.s32.totalorder %s15, 0
      %p93 = por %p91, %p92
      %p94 = scmp.ne.s32.totalorder %s86, %s88
      %p95 = scmp.eq.s32.totalorder %s20, 1
      %p96 = por %p94, %p95
      %p97 = scmp.ne.s32.totalorder %s88, %s89
      %p98 = scmp.eq.s32.totalorder %s20, 0
      %p99 = por %p97, %p98
      %p100 = scmp.ne.s32.totalorder %s88, %s89
      %p101 = scmp.eq.s32.totalorder %s21, 1
      %p102 = por %p100, %p101
      %p104 = scmp.ne.s32.totalorder %s89, %s103
      %p105 = scmp.eq.s32.totalorder %s21, 0
      %p106 = por %p104, %p105
      %s107 = ssub.s32 %s15, %s22
      %p108 = scmp.eq.s32.totalorder %s107, 0
      %s110 = sadd.s32 %s109, 1
      %s111 = scalar_select %p108, %s109, %s110
      %p114 = pneg %p108
      %p115 = scmp.eq.s32.totalorder %s15, 1
      %p116 = por %p114, %p115
      %p117 = scmp.ne.s32.totalorder %s109, %s112
      %p118 = scmp.eq.s32.totalorder %s15, 0
      %p119 = por %p117, %p118
      %p120 = scmp.ne.s32.totalorder %s109, %s112
      %p121 = scmp.eq.s32.totalorder %s20, 1
      %p122 = por %p120, %p121
      %p123 = scmp.ne.s32.totalorder %s112, %s113
      %p124 = scmp.eq.s32.totalorder %s20, 0
      %p125 = por %p123, %p124
      %p126 = scmp.ne.s32.totalorder %s112, %s113
      %p127 = scmp.eq.s32.totalorder %s21, 1
      %p128 = por %p126, %p127
      %p130 = scmp.ne.s32.totalorder %s113, %s129
      %p131 = scmp.eq.s32.totalorder %s21, 0
      %p132 = por %p130, %p131
      %s133 = ssub.s32 %s15, %s22
      %p134 = scmp.eq.s32.totalorder %s133, 0
      %s136 = sadd.s32 %s135, 1
      %s137 = scalar_select %p134, %s135, %s136
      %p140 = pneg %p134
      %p141 = scmp.eq.s32.totalorder %s15, 1
      %p142 = por %p140, %p141
      %p143 = scmp.ne.s32.totalorder %s135, %s138
      %p144 = scmp.eq.s32.totalorder %s15, 0
      %p145 = por %p143, %p144
      %p146 = scmp.ne.s32.totalorder %s135, %s138
      %p147 = scmp.eq.s32.totalorder %s20, 1
      %p148 = por %p146, %p147
      %p149 = scmp.ne.s32.totalorder %s138, %s139
      %p150 = scmp.eq.s32.totalorder %s20, 0
      %p151 = por %p149, %p150
      %p152 = scmp.ne.s32.totalorder %s138, %s139
      %p153 = scmp.eq.s32.totalorder %s21, 1
      %p154 = por %p152, %p153
      %p156 = scmp.ne.s32.totalorder %s139, %s155
      %p157 = scmp.eq.s32.totalorder %s21, 0
      %p158 = por %p156, %p157
      %s159 = ssub.s32 %s15, %s22
      %p160 = scmp.eq.s32.totalorder %s159, 0
      %s162 = sadd.s32 %s161, 1
      %s163 = scalar_select %p160, %s161, %s162
      %p166 = pneg %p160
      %p167 = scmp.eq.s32.totalorder %s15, 1
      %p168 = por %p166, %p167
      %p169 = scmp.ne.s32.totalorder %s161, %s164
      %p170 = scmp.eq.s32.totalorder %s15, 0
      %p171 = por %p169, %p170
      %p172 = scmp.ne.s32.totalorder %s161, %s164
      %p173 = scmp.eq.s32.totalorder %s20, 1
      %p174 = por %p172, %p173
      %p175 = scmp.ne.s32.totalorder %s164, %s165
      %p176 = scmp.eq.s32.totalorder %s20, 0
      %p177 = por %p175, %p176
      %p178 = scmp.ne.s32.totalorder %s164, %s165
      %p179 = scmp.eq.s32.totalorder %s21, 1
      %p180 = por %p178, %p179
      %p182 = scmp.ne.s32.totalorder %s165, %s181
      %p183 = scmp.eq.s32.totalorder %s21, 0
      %p184 = por %p182, %p183
      %s185 = ssub.s32 %s15, %s22
      %p186 = scmp.eq.s32.totalorder %s185, 0
      %s188 = sadd.s32 %s187, 1
      %s189 = scalar_select %p186, %s187, %s188
      %p192 = pneg %p186
      %p193 = scmp.eq.s32.totalorder %s15, 1
      %p194 = por %p192, %p193
      %p195 = scmp.ne.s32.totalorder %s187, %s190
      %p196 = scmp.eq.s32.totalorder %s15, 0
      %p197 = por %p195, %p196
      %p198 = scmp.ne.s32.totalorder %s187, %s190
      %p199 = scmp.eq.s32.totalorder %s20, 1
      %p200 = por %p198, %p199
      %p201 = scmp.ne.s32.totalorder %s190, %s191
      %p202 = scmp.eq.s32.totalorder %s20, 0
      %p203 = por %p201, %p202
      %p204 = scmp.ne.s32.totalorder %s190, %s191
      %p205 = scmp.eq.s32.totalorder %s21, 1
      %p206 = por %p204, %p205
      %p208 = scmp.ne.s32.totalorder %s191, %s207
      %p209 = scmp.eq.s32.totalorder %s21, 0
      %p210 = por %p208, %p209
      %s212 = sadd.s32 %s211, 1
      %p215 = scmp.eq.s32.totalorder %s15, 1
      %p216 = scmp.ne.s32.totalorder %s211, %s213
      %p217 = scmp.eq.s32.totalorder %s15, 0
      %p218 = por %p216, %p217
      %p219 = scmp.ne.s32.totalorder %s211, %s213
      %p220 = scmp.eq.s32.totalorder %s20, 1
      %p221 = por %p219, %p220
      %p222 = scmp.ne.s32.totalorder %s213, %s214
      %p223 = scmp.eq.s32.totalorder %s20, 0
      %p224 = por %p222, %p223
      %p225 = scmp.ne.s32.totalorder %s213, %s214
      %p226 = scmp.eq.s32.totalorder %s21, 1
      %p227 = por %p225, %p226
      %p229 = scmp.ne.s32.totalorder %s214, %s228
      %p230 = scmp.eq.s32.totalorder %s21, 0
      %p231 = por %p229, %p230
      %s232 = ssub.s32 %s15, %s22
      %p233 = scmp.eq.s32.totalorder %s232, 0
      %s235 = sadd.s32 %s234, 1
      %s236 = scalar_select %p233, %s234, %s235
      %p239 = pneg %p233
      %p240 = scmp.eq.s32.totalorder %s15, 1
      %p241 = por %p239, %p240
      %p242 = scmp.ne.s32.totalorder %s234, %s237
      %p243 = scmp.eq.s32.totalorder %s15, 0
      %p244 = por %p242, %p243
      %p245 = scmp.ne.s32.totalorder %s234, %s237
      %p246 = scmp.eq.s32.totalorder %s20, 1
      %p247 = por %p245, %p246
      %p248 = scmp.ne.s32.totalorder %s237, %s238
      %p249 = scmp.eq.s32.totalorder %s20, 0
      %p250 = por %p248, %p249
      %p251 = scmp.ne.s32.totalorder %s237, %s238
      %p252 = scmp.eq.s32.totalorder %s21, 1
      %p253 = por %p251, %p252
      %p255 = scmp.ne.s32.totalorder %s238, %s254
      %p256 = scmp.eq.s32.totalorder %s21, 0
      %p257 = por %p255, %p256
      %p258 = scmp.le.s32.totalorder 1, %s15
      %p259 = scmp.lt.s32.totalorder %s15, 3
      %p260 = pnand %p258, %p259
      %p261 = pneg %p260
      // Predicated region
      $region9: #{rfdn_forward.101} parent=5 // pred_check
        _
      $region10: #{rfdn_forward.101} parent=5 // pred_check_branch
        %263 = sbr.rel (%p260) target = $region12
      $region11: #{rfdn_forward.101} parent=5 // pred_region
        %s264 = ssub.s32 %s15, 1
        // Predicated region
        $region13: #{rfdn_forward.101} parent=11 // pred_check
          %p265 = pneg %p36
        $region14: #{rfdn_forward.101} parent=11 // pred_check_branch
          %267 = sbr.rel (%p265) target = $region16
        $region15: #{rfdn_forward.101} parent=11 // pred_region
          _
        $region16: #{rfdn_forward.101} parent=11 // pred_fallthru
          _
        // Predicated region
        $region17: #{rfdn_forward.101} parent=11 // pred_check
          %p268 = pneg %p57
        $region18: #{rfdn_forward.101} parent=11 // pred_check_branch
          %270 = sbr.rel (%p268) target = $region20
        $region19: #{rfdn_forward.101} parent=11 // pred_region
          _
        $region20: #{rfdn_forward.101} parent=11 // pred_fallthru
          _
        // Predicated region
        $region21: #{rfdn_forward.101} parent=11 // pred_check
          %p271 = pneg %p78
        $region22: #{rfdn_forward.101} parent=11 // pred_check_branch
          %273 = sbr.rel (%p271) target = $region24
        $region23: #{rfdn_forward.101} parent=11 // pred_region
          _
        $region24: #{rfdn_forward.101} parent=11 // pred_fallthru
          _
        // Predicated region
        $region25: #{rfdn_forward.101} parent=11 // pred_check
          %p274 = pneg %p99
        $region26: #{rfdn_forward.101} parent=11 // pred_check_branch
          %276 = sbr.rel (%p274) target = $region28
        $region27: #{rfdn_forward.101} parent=11 // pred_region
          _
        $region28: #{rfdn_forward.101} parent=11 // pred_fallthru
          _
        // Predicated region
        $region29: #{rfdn_forward.101} parent=11 // pred_check
          %p277 = pneg %p224
        $region30: #{rfdn_forward.101} parent=11 // pred_check_branch
          %279 = sbr.rel (%p277) target = $region32
        $region31: #{rfdn_forward.101} parent=11 // pred_region
          _
        $region32: #{rfdn_forward.101} parent=11 // pred_fallthru
          _
      $region12: #{rfdn_forward.101} parent=5 // pred_fallthru
        _
      %p280 = scmp.lt.s32.totalorder %s15, 2
      // Predicated region
      $region33: #{rfdn_forward.101} parent=5 // pred_check
        %p281 = pneg %p280
      $region34: #{rfdn_forward.101} parent=5 // pred_check_branch
        %283 = sbr.rel (%p281) target = $region36
      $region35: #{rfdn_forward.101} parent=5 // pred_region
        // Predicated region
        $region37: #{rfdn_forward.101} parent=35 // pred_check
          %p284 = pneg %p119
        $region38: #{rfdn_forward.101} parent=35 // pred_check_branch
          %286 = sbr.rel (%p284) target = $region40
        $region39: #{rfdn_forward.101} parent=35 // pred_region
          %s287 = sand.u32 %s109, 1
          %s288 = sand.u32 %s109, 1
          %s289 = smul.addr %s288, 32
          %s290 = scalar_lea.vmem [#allocation2], %s289
          %s291 = smul.u32 2, %s15
          %s292 = smul.addr %s291, 8
          %s293 = scalar_lea.vmem %s4, %s292
          // Predicated region
          $region41: #{rfdn_forward.101} parent=39 // pred_check
            _
          $region42: #{rfdn_forward.101} parent=39 // pred_check_branch
            %295 = sbr.rel (0) target = $region44
          $region43: #{rfdn_forward.101} parent=39 // pred_region
            // Predicated region
            $region45: #{rfdn_forward.101} parent=43 // pred_check
              _
            $region46: #{rfdn_forward.101} parent=43 // pred_check_branch
              %297 = sbr.rel (0) target = $region48
            $region47: #{rfdn_forward.101} parent=43 // pred_region
              loop: start=0, step=1, limit=1
              $region49: #{rfdn_forward.101} parent=47 // loop_pre_header
                _
              $region50: #{rfdn_forward.101} parent=47 // loop_header
                %s299 = sphi 0, %s303
                %p300 = scmp.ge.s32.totalorder %s299, 1
                %s304 = sphi %s293, %s293
                %s305 = sphi %s290, %s290
              $region51: #{rfdn_forward.101} parent=47 // loop_header_branch
                %302 = sbr.rel (%p300) target = $region55
              $region52: #{rfdn_forward.101} parent=47 // loop_body
                %v306 = vld [vmem:[%s304] sm:$0xff]
                %307 = vst [vmem:[%s305] sm:$0xff] %v306
                %v308 = vld [vmem:[%s304 + $0x8] sm:$0xff]
                %309 = vst [vmem:[%s305 + $0x8] sm:$0xff] %v308
                %v310 = vld [vmem:[%s304 + $0x20] sm:$0xff]
                %311 = vst [vmem:[%s305 + $0x10] sm:$0xff] %v310
                %v312 = vld [vmem:[%s304 + $0x28] sm:$0xff]
                %313 = vst [vmem:[%s305 + $0x18] sm:$0xff] %v312
              $region53: #{rfdn_forward.101} parent=47 // loop_footer
                %s303 = sadd.s32 1, %s299
              $region54: #{rfdn_forward.101} parent=47 // loop_footer_branch
                %298 = sbr.rel target = $region50
              $region55: #{rfdn_forward.101} parent=47 // loop_exit
                _
            $region48: #{rfdn_forward.101} parent=43 // pred_fallthru
              _
            // Predicated region
            $region56: #{rfdn_forward.101} parent=43 // pred_check
              _
            $region57: #{rfdn_forward.101} parent=43 // pred_check_branch
              %315 = sbr.rel target = $region59
            $region58: #{rfdn_forward.101} parent=43 // pred_region
              _
            $region59: #{rfdn_forward.101} parent=43 // pred_fallthru
              _
          $region44: #{rfdn_forward.101} parent=39 // pred_fallthru
            _
          %316 = vnop
        $region40: #{rfdn_forward.101} parent=35 // pred_fallthru
          _
        // Predicated region
        $region60: #{rfdn_forward.101} parent=35 // pred_check
          %p317 = pneg %p145
        $region61: #{rfdn_forward.101} parent=35 // pred_check_branch
          %319 = sbr.rel (%p317) target = $region63
        $region62: #{rfdn_forward.101} parent=35 // pred_region
          %s320 = sand.u32 %s135, 1
          %s321 = sand.u32 %s135, 1
          %s322 = smul.addr %s321, 32
          %s323 = scalar_lea.vmem [#allocation3], %s322
          %s324 = smul.u32 2, %s15
          %s325 = smul.addr %s324, 8
          %s326 = scalar_lea.vmem %s5, %s325
          // Predicated region
          $region64: #{rfdn_forward.101} parent=62 // pred_check
            _
          $region65: #{rfdn_forward.101} parent=62 // pred_check_branch
            %328 = sbr.rel (0) target = $region67
          $region66: #{rfdn_forward.101} parent=62 // pred_region
            // Predicated region
            $region68: #{rfdn_forward.101} parent=66 // pred_check
              _
            $region69: #{rfdn_forward.101} parent=66 // pred_check_branch
              %330 = sbr.rel (0) target = $region71
            $region70: #{rfdn_forward.101} parent=66 // pred_region
              loop: start=0, step=1, limit=1
              $region72: #{rfdn_forward.101} parent=70 // loop_pre_header
                _
              $region73: #{rfdn_forward.101} parent=70 // loop_header
                %s332 = sphi 0, %s336
                %p333 = scmp.ge.s32.totalorder %s332, 1
                %s337 = sphi %s326, %s326
                %s338 = sphi %s323, %s323
              $region74: #{rfdn_forward.101} parent=70 // loop_header_branch
                %335 = sbr.rel (%p333) target = $region78
              $region75: #{rfdn_forward.101} parent=70 // loop_body
                %v339 = vld [vmem:[%s337] sm:$0xff]
                %340 = vst [vmem:[%s338] sm:$0xff] %v339
                %v341 = vld [vmem:[%s337 + $0x8] sm:$0xff]
                %342 = vst [vmem:[%s338 + $0x8] sm:$0xff] %v341
                %v343 = vld [vmem:[%s337 + $0x20] sm:$0xff]
                %344 = vst [vmem:[%s338 + $0x10] sm:$0xff] %v343
                %v345 = vld [vmem:[%s337 + $0x28] sm:$0xff]
                %346 = vst [vmem:[%s338 + $0x18] sm:$0xff] %v345
              $region76: #{rfdn_forward.101} parent=70 // loop_footer
                %s336 = sadd.s32 1, %s332
              $region77: #{rfdn_forward.101} parent=70 // loop_footer_branch
                %331 = sbr.rel target = $region73
              $region78: #{rfdn_forward.101} parent=70 // loop_exit
                _
            $region71: #{rfdn_forward.101} parent=66 // pred_fallthru
              _
            // Predicated region
            $region79: #{rfdn_forward.101} parent=66 // pred_check
              _
            $region80: #{rfdn_forward.101} parent=66 // pred_check_branch
              %348 = sbr.rel target = $region82
            $region81: #{rfdn_forward.101} parent=66 // pred_region
              _
            $region82: #{rfdn_forward.101} parent=66 // pred_fallthru
              _
          $region67: #{rfdn_forward.101} parent=62 // pred_fallthru
            _
          %349 = vnop
        $region63: #{rfdn_forward.101} parent=35 // pred_fallthru
          _
        // Predicated region
        $region83: #{rfdn_forward.101} parent=35 // pred_check
          %p350 = pneg %p171
        $region84: #{rfdn_forward.101} parent=35 // pred_check_branch
          %352 = sbr.rel (%p350) target = $region86
        $region85: #{rfdn_forward.101} parent=35 // pred_region
          %s353 = sand.u32 %s161, 1
          %s354 = sand.u32 %s161, 1
          %s355 = smul.addr %s354, 32
          %s356 = scalar_lea.vmem [#allocation4], %s355
          %s357 = smul.u32 2, %s15
          %s358 = smul.addr %s357, 8
          %s359 = scalar_lea.vmem %s6, %s358
          // Predicated region
          $region87: #{rfdn_forward.101} parent=85 // pred_check
            _
          $region88: #{rfdn_forward.101} parent=85 // pred_check_branch
            %361 = sbr.rel (0) target = $region90
          $region89: #{rfdn_forward.101} parent=85 // pred_region
            // Predicated region
            $region91: #{rfdn_forward.101} parent=89 // pred_check
              _
            $region92: #{rfdn_forward.101} parent=89 // pred_check_branch
              %363 = sbr.rel (0) target = $region94
            $region93: #{rfdn_forward.101} parent=89 // pred_region
              loop: start=0, step=1, limit=1
              $region95: #{rfdn_forward.101} parent=93 // loop_pre_header
                _
              $region96: #{rfdn_forward.101} parent=93 // loop_header
                %s365 = sphi 0, %s369
                %p366 = scmp.ge.s32.totalorder %s365, 1
                %s370 = sphi %s359, %s359
                %s371 = sphi %s356, %s356
              $region97: #{rfdn_forward.101} parent=93 // loop_header_branch
                %368 = sbr.rel (%p366) target = $region101
              $region98: #{rfdn_forward.101} parent=93 // loop_body
                %v372 = vld [vmem:[%s370] sm:$0xff]
                %373 = vst [vmem:[%s371] sm:$0xff] %v372
                %v374 = vld [vmem:[%s370 + $0x8] sm:$0xff]
                %375 = vst [vmem:[%s371 + $0x8] sm:$0xff] %v374
                %v376 = vld [vmem:[%s370 + $0x20] sm:$0xff]
                %377 = vst [vmem:[%s371 + $0x10] sm:$0xff] %v376
                %v378 = vld [vmem:[%s370 + $0x28] sm:$0xff]
                %379 = vst [vmem:[%s371 + $0x18] sm:$0xff] %v378
              $region99: #{rfdn_forward.101} parent=93 // loop_footer
                %s369 = sadd.s32 1, %s365
              $region100: #{rfdn_forward.101} parent=93 // loop_footer_branch
                %364 = sbr.rel target = $region96
              $region101: #{rfdn_forward.101} parent=93 // loop_exit
                _
            $region94: #{rfdn_forward.101} parent=89 // pred_fallthru
              _
            // Predicated region
            $region102: #{rfdn_forward.101} parent=89 // pred_check
              _
            $region103: #{rfdn_forward.101} parent=89 // pred_check_branch
              %381 = sbr.rel target = $region105
            $region104: #{rfdn_forward.101} parent=89 // pred_region
              _
            $region105: #{rfdn_forward.101} parent=89 // pred_fallthru
              _
          $region90: #{rfdn_forward.101} parent=85 // pred_fallthru
            _
          %382 = vnop
        $region86: #{rfdn_forward.101} parent=35 // pred_fallthru
          _
        // Predicated region
        $region106: #{rfdn_forward.101} parent=35 // pred_check
          %p383 = pneg %p197
        $region107: #{rfdn_forward.101} parent=35 // pred_check_branch
          %385 = sbr.rel (%p383) target = $region109
        $region108: #{rfdn_forward.101} parent=35 // pred_region
          %s386 = sand.u32 %s187, 1
          %s387 = sand.u32 %s187, 1
          %s388 = smul.addr %s387, 32
          %s389 = scalar_lea.vmem [#allocation5], %s388
          %s390 = smul.u32 2, %s15
          %s391 = smul.addr %s390, 8
          %s392 = scalar_lea.vmem %s7, %s391
          // Predicated region
          $region110: #{rfdn_forward.101} parent=108 // pred_check
            _
          $region111: #{rfdn_forward.101} parent=108 // pred_check_branch
            %394 = sbr.rel (0) target = $region113
          $region112: #{rfdn_forward.101} parent=108 // pred_region
            // Predicated region
            $region114: #{rfdn_forward.101} parent=112 // pred_check
              _
            $region115: #{rfdn_forward.101} parent=112 // pred_check_branch
              %396 = sbr.rel (0) target = $region117
            $region116: #{rfdn_forward.101} parent=112 // pred_region
              loop: start=0, step=1, limit=1
              $region118: #{rfdn_forward.101} parent=116 // loop_pre_header
                _
              $region119: #{rfdn_forward.101} parent=116 // loop_header
                %s398 = sphi 0, %s402
                %p399 = scmp.ge.s32.totalorder %s398, 1
                %s403 = sphi %s392, %s392
                %s404 = sphi %s389, %s389
              $region120: #{rfdn_forward.101} parent=116 // loop_header_branch
                %401 = sbr.rel (%p399) target = $region124
              $region121: #{rfdn_forward.101} parent=116 // loop_body
                %v405 = vld [vmem:[%s403] sm:$0xff]
                %406 = vst [vmem:[%s404] sm:$0xff] %v405
                %v407 = vld [vmem:[%s403 + $0x8] sm:$0xff]
                %408 = vst [vmem:[%s404 + $0x8] sm:$0xff] %v407
                %v409 = vld [vmem:[%s403 + $0x20] sm:$0xff]
                %410 = vst [vmem:[%s404 + $0x10] sm:$0xff] %v409
                %v411 = vld [vmem:[%s403 + $0x28] sm:$0xff]
                %412 = vst [vmem:[%s404 + $0x18] sm:$0xff] %v411
              $region122: #{rfdn_forward.101} parent=116 // loop_footer
                %s402 = sadd.s32 1, %s398
              $region123: #{rfdn_forward.101} parent=116 // loop_footer_branch
                %397 = sbr.rel target = $region119
              $region124: #{rfdn_forward.101} parent=116 // loop_exit
                _
            $region117: #{rfdn_forward.101} parent=112 // pred_fallthru
              _
            // Predicated region
            $region125: #{rfdn_forward.101} parent=112 // pred_check
              _
            $region126: #{rfdn_forward.101} parent=112 // pred_check_branch
              %414 = sbr.rel target = $region128
            $region127: #{rfdn_forward.101} parent=112 // pred_region
              _
            $region128: #{rfdn_forward.101} parent=112 // pred_fallthru
              _
          $region113: #{rfdn_forward.101} parent=108 // pred_fallthru
            _
          %415 = vnop
        $region109: #{rfdn_forward.101} parent=35 // pred_fallthru
          _
      $region36: #{rfdn_forward.101} parent=5 // pred_fallthru
        _
      %p416 = scmp.le.s32.totalorder 1, %s15
      %p417 = scmp.lt.s32.totalorder %s15, 3
      %p418 = pnand %p416, %p417
      %p419 = pneg %p418
      // Predicated region
      $region129: #{rfdn_forward.101} parent=5 // pred_check
        _
      $region130: #{rfdn_forward.101} parent=5 // pred_check_branch
        %421 = sbr.rel (%p418) target = $region132
      $region131: #{rfdn_forward.101} parent=5 // pred_region
        %s422 = ssub.s32 %s15, 1
        %s423 = sand.u32 %s112, 1
        %s424 = sand.u32 %s112, 1
        %s425 = smul.addr %s424, 32
        %s426 = scalar_lea.vmem [#allocation2], %s425
        // Predicated region
        $region133: #{rfdn_forward.101} parent=131 // pred_check
          %p427 = pneg %p125
        $region134: #{rfdn_forward.101} parent=131 // pred_check_branch
          %429 = sbr.rel (%p427) target = $region136
        $region135: #{rfdn_forward.101} parent=131 // pred_region
          _
        $region136: #{rfdn_forward.101} parent=131 // pred_fallthru
          _
        %s430 = sand.u32 %s138, 1
        %s431 = sand.u32 %s138, 1
        %s432 = smul.addr %s431, 32
        %s433 = scalar_lea.vmem [#allocation3], %s432
        // Predicated region
        $region137: #{rfdn_forward.101} parent=131 // pred_check
          %p434 = pneg %p151
        $region138: #{rfdn_forward.101} parent=131 // pred_check_branch
          %436 = sbr.rel (%p434) target = $region140
        $region139: #{rfdn_forward.101} parent=131 // pred_region
          _
        $region140: #{rfdn_forward.101} parent=131 // pred_fallthru
          _
        %s437 = sand.u32 %s164, 1
        %s438 = sand.u32 %s164, 1
        %s439 = smul.addr %s438, 32
        %s440 = scalar_lea.vmem [#allocation4], %s439
        // Predicated region
        $region141: #{rfdn_forward.101} parent=131 // pred_check
          %p441 = pneg %p177
        $region142: #{rfdn_forward.101} parent=131 // pred_check_branch
          %443 = sbr.rel (%p441) target = $region144
        $region143: #{rfdn_forward.101} parent=131 // pred_region
          _
        $region144: #{rfdn_forward.101} parent=131 // pred_fallthru
          _
        %s444 = sand.u32 %s190, 1
        %s445 = sand.u32 %s190, 1
        %s446 = smul.addr %s445, 32
        %s447 = scalar_lea.vmem [#allocation5], %s446
        // Predicated region
        $region145: #{rfdn_forward.101} parent=131 // pred_check
          %p448 = pneg %p203
        $region146: #{rfdn_forward.101} parent=131 // pred_check_branch
          %450 = sbr.rel (%p448) target = $region148
        $region147: #{rfdn_forward.101} parent=131 // pred_region
          _
        $region148: #{rfdn_forward.101} parent=131 // pred_fallthru
          _
        %p451 = pneg %p36
        %p452 = pneg %p33
        %p453 = pneg %p57
        %p454 = pneg %p54
        %p455 = pneg %p78
        %p456 = pneg %p75
        %p457 = pneg %p99
        %p458 = pneg %p96
        %s459 = sand.u32 %s112, 1
        %s460 = sand.u32 %s112, 1
        %s461 = smul.addr %s460, 32
        %s462 = scalar_lea.vmem [#allocation2], %s461
        %p463 = pneg %p125
        %p464 = pneg %p122
        %s465 = sand.u32 %s138, 1
        %s466 = sand.u32 %s138, 1
        %s467 = smul.addr %s466, 32
        %s468 = scalar_lea.vmem [#allocation3], %s467
        %p469 = pneg %p151
        %p470 = pneg %p148
        %s471 = sand.u32 %s164, 1
        %s472 = sand.u32 %s164, 1
        %s473 = smul.addr %s472, 32
        %s474 = scalar_lea.vmem [#allocation4], %s473
        %p475 = pneg %p177
        %p476 = pneg %p174
        %s477 = sand.u32 %s190, 1
        %s478 = sand.u32 %s190, 1
        %s479 = smul.addr %s478, 32
        %s480 = scalar_lea.vmem [#allocation5], %s479
        %p481 = pneg %p203
        %p482 = pneg %p200
        %p483 = pneg %p224
        %p484 = pneg %p221
        %p485 = pneg %p250
        %p486 = pneg %p247
        %s487 = sand.u32 %s237, 1
        %s488 = sand.u32 %s237, 1
        %s489 = smul.addr %s488, 32
        %s490 = scalar_lea.vmem [#allocation6], %s489
        %s491 = smul.u32 2, %s20
        %s492 = smul.u32 2, %s20
        %s493 = smul.u32 2, %s20
        %s494 = smul.u32 2, %s20
        %s495 = smul.u32 2, %s20
        %v496 = vld [vmem:[%s0] sm:$0xff]
        %v497 = vld [vmem:[%s0 + $0x8] sm:$0xff]
        %v498 = vld [vmem:[%s426] sm:$0xff]
        %v499 = vld [vmem:[%s426 + $0x8] sm:$0xff]
        %v500 = vld [vmem:[%s426 + $0x10] sm:$0xff]
        %v501 = vld [vmem:[%s426 + $0x18] sm:$0xff]
        %v502 = vld [vmem:[%s1] sm:$0xff]
        %v503 = vld [vmem:[%s1 + $0x8] sm:$0xff]
        %v504 = vld [vmem:[%s433] sm:$0xff]
        %v505 = vld [vmem:[%s433 + $0x8] sm:$0xff]
        %v506 = vld [vmem:[%s433 + $0x10] sm:$0xff]
        %v507 = vld [vmem:[%s433 + $0x18] sm:$0xff]
        %vm508 = vcmask 130048
        %v510 = vsel %vm508, %v502, 0
        %v513 = vsel %vm508, %v503, 0
        %515 = vmatpush.msra.mxu0 0.0
        %516 = vmatpush.msra.mxu0 0.0
        %517 = vmatpush.msra.mxu0 0.0
        %518 = vmatpush.msra.mxu0 0.0
        %519 = vmatpush.msra.mxu0 0.0
        %520 = vmatpush.msra.mxu0 0.0
        %521 = vmatpush.msra.mxu0 0.0
        %522 = vmatpush.msra.mxu0 0.0
        %523 = vmatpush.msra.mxu0 0.0
        %524 = vmatpush.msra.mxu0 0.0
        %525 = vmatpush.msra.mxu0 0.0
        %526 = vmatpush.msra.mxu0 0.0
        %527 = vmatpush.msra.mxu0 0.0
        %528 = vmatpush.msra.mxu0 0.0
        %529 = vmatpush.msra.mxu0 %v506
        %530 = vmatpush.msra.mxu0 %v504
        %531 = vmatmul.f32.gmra.mxu0 %v510
        %v532 = vpop.f32.mrf.mxu0
        %v533 = vadd.f32 0.0, %v532
        %534 = vmatmul.f32.gmra.mxu0 %v513
        %v535 = vpop.f32.mrf.mxu0
        %v536 = vadd.f32 0.0, %v535
        %537 = vdwg.mxu0
        %538 = vmatpush.msra.mxu0 0.0
        %539 = vmatpush.msra.mxu0 0.0
        %540 = vmatpush.msra.mxu0 0.0
        %541 = vmatpush.msra.mxu0 0.0
        %542 = vmatpush.msra.mxu0 0.0
        %543 = vmatpush.msra.mxu0 0.0
        %544 = vmatpush.msra.mxu0 0.0
        %545 = vmatpush.msra.mxu0 0.0
        %546 = vmatpush.msra.mxu0 0.0
        %547 = vmatpush.msra.mxu0 0.0
        %548 = vmatpush.msra.mxu0 0.0
        %549 = vmatpush.msra.mxu0 0.0
        %550 = vmatpush.msra.mxu0 0.0
        %551 = vmatpush.msra.mxu0 0.0
        %552 = vmatpush.msra.mxu0 %v507
        %553 = vmatpush.msra.mxu0 %v505
        %554 = vmatmul.f32.gmra.mxu0 %v510
        %v555 = vpop.f32.mrf.mxu0
        %v556 = vadd.f32 0.0, %v555
        %557 = vmatmul.f32.gmra.mxu0 %v513
        %v558 = vpop.f32.mrf.mxu0
        %v559 = vadd.f32 0.0, %v558
        %560 = vdwg.mxu0
        %v562 = vsel %vm508, %v496, 0
        %v565 = vsel %vm508, %v497, 0
        %567 = vmatpush.msra.mxu0 0.0
        %568 = vmatpush.msra.mxu0 0.0
        %569 = vmatpush.msra.mxu0 0.0
        %570 = vmatpush.msra.mxu0 0.0
        %571 = vmatpush.msra.mxu0 0.0
        %572 = vmatpush.msra.mxu0 0.0
        %573 = vmatpush.msra.mxu0 0.0
        %574 = vmatpush.msra.mxu0 0.0
        %575 = vmatpush.msra.mxu0 0.0
        %576 = vmatpush.msra.mxu0 0.0
        %577 = vmatpush.msra.mxu0 0.0
        %578 = vmatpush.msra.mxu0 0.0
        %579 = vmatpush.msra.mxu0 0.0
        %580 = vmatpush.msra.mxu0 0.0
        %581 = vmatpush.msra.mxu0 %v500
        %582 = vmatpush.msra.mxu0 %v498
        %583 = vmatmul.f32.gmra.mxu0 %v562
        %v584 = vpop.f32.mrf.mxu0
        %v585 = vadd.f32 %v533, %v584
        %586 = vmatmul.f32.gmra.mxu0 %v565
        %v587 = vpop.f32.mrf.mxu0
        %v588 = vadd.f32 %v536, %v587
        %589 = vdwg.mxu0
        %590 = vmatpush.msra.mxu0 0.0
        %591 = vmatpush.msra.mxu0 0.0
        %592 = vmatpush.msra.mxu0 0.0
        %593 = vmatpush.msra.mxu0 0.0
        %594 = vmatpush.msra.mxu0 0.0
        %595 = vmatpush.msra.mxu0 0.0
        %596 = vmatpush.msra.mxu0 0.0
        %597 = vmatpush.msra.mxu0 0.0
        %598 = vmatpush.msra.mxu0 0.0
        %599 = vmatpush.msra.mxu0 0.0
        %600 = vmatpush.msra.mxu0 0.0
        %601 = vmatpush.msra.mxu0 0.0
        %602 = vmatpush.msra.mxu0 0.0
        %603 = vmatpush.msra.mxu0 0.0
        %604 = vmatpush.msra.mxu0 %v501
        %605 = vmatpush.msra.mxu0 %v499
        %606 = vmatmul.f32.gmra.mxu0 %v562
        %v607 = vpop.f32.mrf.mxu0
        %v608 = vadd.f32 %v556, %v607
        %609 = vmatmul.f32.gmra.mxu0 %v565
        %v610 = vpop.f32.mrf.mxu0
        %v611 = vadd.f32 %v559, %v610
        %612 = vdwg.mxu0
        %v613 = vld [vmem:[%s2] sm:$0xff]
        %v614 = vld [vmem:[%s2 + $0x8] sm:$0xff]
        %v615 = vld [vmem:[%s440] sm:$0xff]
        %v616 = vld [vmem:[%s440 + $0x8] sm:$0xff]
        %v617 = vld [vmem:[%s440 + $0x10] sm:$0xff]
        %v618 = vld [vmem:[%s440 + $0x18] sm:$0xff]
        %v620 = vsel %vm508, %v613, 0
        %v623 = vsel %vm508, %v614, 0
        %625 = vmatpush.msra.mxu0 0.0
        %626 = vmatpush.msra.mxu0 0.0
        %627 = vmatpush.msra.mxu0 0.0
        %628 = vmatpush.msra.mxu0 0.0
        %629 = vmatpush.msra.mxu0 0.0
        %630 = vmatpush.msra.mxu0 0.0
        %631 = vmatpush.msra.mxu0 0.0
        %632 = vmatpush.msra.mxu0 0.0
        %633 = vmatpush.msra.mxu0 0.0
        %634 = vmatpush.msra.mxu0 0.0
        %635 = vmatpush.msra.mxu0 0.0
        %636 = vmatpush.msra.mxu0 0.0
        %637 = vmatpush.msra.mxu0 0.0
        %638 = vmatpush.msra.mxu0 0.0
        %639 = vmatpush.msra.mxu0 %v617
        %640 = vmatpush.msra.mxu0 %v615
        %641 = vmatmul.f32.gmra.mxu0 %v620
        %v642 = vpop.f32.mrf.mxu0
        %v643 = vadd.f32 0.0, %v642
        %644 = vmatmul.f32.gmra.mxu0 %v623
        %v645 = vpop.f32.mrf.mxu0
        %v646 = vadd.f32 0.0, %v645
        %647 = vdwg.mxu0
        %648 = vmatpush.msra.mxu0 0.0
        %649 = vmatpush.msra.mxu0 0.0
        %650 = vmatpush.msra.mxu0 0.0
        %651 = vmatpush.msra.mxu0 0.0
        %652 = vmatpush.msra.mxu0 0.0
        %653 = vmatpush.msra.mxu0 0.0
        %654 = vmatpush.msra.mxu0 0.0
        %655 = vmatpush.msra.mxu0 0.0
        %656 = vmatpush.msra.mxu0 0.0
        %657 = vmatpush.msra.mxu0 0.0
        %658 = vmatpush.msra.mxu0 0.0
        %659 = vmatpush.msra.mxu0 0.0
        %660 = vmatpush.msra.mxu0 0.0
        %661 = vmatpush.msra.mxu0 0.0
        %662 = vmatpush.msra.mxu0 %v618
        %663 = vmatpush.msra.mxu0 %v616
        %664 = vmatmul.f32.gmra.mxu0 %v620
        %v665 = vpop.f32.mrf.mxu0
        %v666 = vadd.f32 0.0, %v665
        %667 = vmatmul.f32.gmra.mxu0 %v623
        %v668 = vpop.f32.mrf.mxu0
        %v669 = vadd.f32 0.0, %v668
        %670 = vdwg.mxu0
        %v671 = vadd.f32 %v585, %v643
        %v672 = vadd.f32 %v608, %v666
        %v673 = vadd.f32 %v588, %v646
        %v674 = vadd.f32 %v611, %v669
        %v675 = vld [vmem:[%s3] sm:$0xff]
        %v676 = vld [vmem:[%s3 + $0x8] sm:$0xff]
        %v677 = vld [vmem:[%s447] sm:$0xff]
        %v678 = vld [vmem:[%s447 + $0x8] sm:$0xff]
        %v679 = vld [vmem:[%s447 + $0x10] sm:$0xff]
        %v680 = vld [vmem:[%s447 + $0x18] sm:$0xff]
        %v682 = vsel %vm508, %v675, 0
        %v685 = vsel %vm508, %v676, 0
        %687 = vmatpush.msra.mxu0 0.0
        %688 = vmatpush.msra.mxu0 0.0
        %689 = vmatpush.msra.mxu0 0.0
        %690 = vmatpush.msra.mxu0 0.0
        %691 = vmatpush.msra.mxu0 0.0
        %692 = vmatpush.msra.mxu0 0.0
        %693 = vmatpush.msra.mxu0 0.0
        %694 = vmatpush.msra.mxu0 0.0
        %695 = vmatpush.msra.mxu0 0.0
        %696 = vmatpush.msra.mxu0 0.0
        %697 = vmatpush.msra.mxu0 0.0
        %698 = vmatpush.msra.mxu0 0.0
        %699 = vmatpush.msra.mxu0 0.0
        %700 = vmatpush.msra.mxu0 0.0
        %701 = vmatpush.msra.mxu0 %v679
        %702 = vmatpush.msra.mxu0 %v677
        %703 = vmatmul.f32.gmra.mxu0 %v682
        %v704 = vpop.f32.mrf.mxu0
        %v705 = vadd.f32 0.0, %v704
        %706 = vmatmul.f32.gmra.mxu0 %v685
        %v707 = vpop.f32.mrf.mxu0
        %v708 = vadd.f32 0.0, %v707
        %709 = vdwg.mxu0
        %710 = vmatpush.msra.mxu0 0.0
        %711 = vmatpush.msra.mxu0 0.0
        %712 = vmatpush.msra.mxu0 0.0
        %713 = vmatpush.msra.mxu0 0.0
        %714 = vmatpush.msra.mxu0 0.0
        %715 = vmatpush.msra.mxu0 0.0
        %716 = vmatpush.msra.mxu0 0.0
        %717 = vmatpush.msra.mxu0 0.0
        %718 = vmatpush.msra.mxu0 0.0
        %719 = vmatpush.msra.mxu0 0.0
        %720 = vmatpush.msra.mxu0 0.0
        %721 = vmatpush.msra.mxu0 0.0
        %722 = vmatpush.msra.mxu0 0.0
        %723 = vmatpush.msra.mxu0 0.0
        %724 = vmatpush.msra.mxu0 %v680
        %725 = vmatpush.msra.mxu0 %v678
        %726 = vmatmul.f32.gmra.mxu0 %v682
        %v727 = vpop.f32.mrf.mxu0
        %v728 = vadd.f32 0.0, %v727
        %729 = vmatmul.f32.gmra.mxu0 %v685
        %v730 = vpop.f32.mrf.mxu0
        %v731 = vadd.f32 0.0, %v730
        %732 = vdwg.mxu0
        %v733 = vadd.f32 %v671, %v705
        %v734 = vadd.f32 %v672, %v728
        %v735 = vadd.f32 %v673, %v708
        %v736 = vadd.f32 %v674, %v731
        %v737 = vld [vmem:[%s8] sm:$0xff]
        %v738 = vld [vmem:[%s8 + $0x8] sm:$0xff]
        %740 = vset.pattern.permute.xlu0 0
        %741 = vperm.xlu0 %740, %v737
        %v742 = vpop.permute.xlu0 %741
        %745 = vset.pattern.permute.xlu0 0
        %746 = vperm.xlu0 %745, %v738
        %v747 = vpop.permute.xlu0 %746
        %v749 = vadd.f32 %v733, %v742
        %v750 = vadd.f32 %v734, %v742
        %v751 = vadd.f32 %v735, %v747
        %v752 = vadd.f32 %v736, %v747
        %vm753 = vcmp.ge.f32.partialorder %v749, 0.0
        %vm754 = vcmp.ge.f32.partialorder %v750, 0.0
        %vm755 = vcmp.ge.f32.partialorder %v751, 0.0
        %vm756 = vcmp.ge.f32.partialorder %v752, 0.0
        %v757 = vmul.f32 %v749, 0.05
        %v758 = vmul.f32 %v750, 0.05
        %v759 = vmul.f32 %v751, 0.05
        %v760 = vmul.f32 %v752, 0.05
        %v761 = vsel %vm753, %v749, %v757
        %v762 = vsel %vm754, %v750, %v758
        %v763 = vsel %vm755, %v751, %v759
        %v764 = vsel %vm756, %v752, %v760
        %765 = vst [vmem:[%s490] sm:$0xff] %v761
        %766 = vst [vmem:[%s490 + $0x8] sm:$0xff] %v762
        %767 = vst [vmem:[%s490 + $0x10] sm:$0xff] %v763
        %768 = vst [vmem:[%s490 + $0x18] sm:$0xff] %v764
        %s769 = sand.u32 %s237, 1
        %s770 = sand.u32 %s237, 1
        %s771 = smul.addr %s770, 32
        %s772 = scalar_lea.vmem [#allocation6], %s771
        // Predicated region
        $region149: #{rfdn_forward.101} parent=131 // pred_check
          %p773 = pneg %p247
        $region150: #{rfdn_forward.101} parent=131 // pred_check_branch
          %775 = sbr.rel (%p773) target = $region152
        $region151: #{rfdn_forward.101} parent=131 // pred_region
          %s776 = smul.u32 2, %s20
          %s777 = smul.addr %s776, 8
          %s778 = scalar_lea.vmem %s9, %s777
          // Predicated region
          $region153: #{rfdn_forward.101} parent=151 // pred_check
            _
          $region154: #{rfdn_forward.101} parent=151 // pred_check_branch
            %780 = sbr.rel (0) target = $region156
          $region155: #{rfdn_forward.101} parent=151 // pred_region
            // Predicated region
            $region157: #{rfdn_forward.101} parent=155 // pred_check
              _
            $region158: #{rfdn_forward.101} parent=155 // pred_check_branch
              %782 = sbr.rel (0) target = $region160
            $region159: #{rfdn_forward.101} parent=155 // pred_region
              loop: start=0, step=1, limit=1
              $region161: #{rfdn_forward.101} parent=159 // loop_pre_header
                _
              $region162: #{rfdn_forward.101} parent=159 // loop_header
                %s784 = sphi 0, %s788
                %p785 = scmp.ge.s32.totalorder %s784, 1
                %s789 = sphi %s772, %s772
                %s790 = sphi %s778, %s778
              $region163: #{rfdn_forward.101} parent=159 // loop_header_branch
                %787 = sbr.rel (%p785) target = $region167
              $region164: #{rfdn_forward.101} parent=159 // loop_body
                %v791 = vld [vmem:[%s789] sm:$0xff]
                %792 = vst [vmem:[%s790] sm:$0xff] %v791
                %v793 = vld [vmem:[%s789 + $0x8] sm:$0xff]
                %794 = vst [vmem:[%s790 + $0x8] sm:$0xff] %v793
                %v795 = vld [vmem:[%s789 + $0x10] sm:$0xff]
                %796 = vst [vmem:[%s790 + $0x20] sm:$0xff] %v795
                %v797 = vld [vmem:[%s789 + $0x18] sm:$0xff]
                %798 = vst [vmem:[%s790 + $0x28] sm:$0xff] %v797
              $region165: #{rfdn_forward.101} parent=159 // loop_footer
                %s788 = sadd.s32 1, %s784
              $region166: #{rfdn_forward.101} parent=159 // loop_footer_branch
                %783 = sbr.rel target = $region162
              $region167: #{rfdn_forward.101} parent=159 // loop_exit
                _
            $region160: #{rfdn_forward.101} parent=155 // pred_fallthru
              _
            // Predicated region
            $region168: #{rfdn_forward.101} parent=155 // pred_check
              _
            $region169: #{rfdn_forward.101} parent=155 // pred_check_branch
              %800 = sbr.rel target = $region171
            $region170: #{rfdn_forward.101} parent=155 // pred_region
              _
            $region171: #{rfdn_forward.101} parent=155 // pred_fallthru
              _
          $region156: #{rfdn_forward.101} parent=151 // pred_fallthru
            _
          %801 = vnop
        $region152: #{rfdn_forward.101} parent=131 // pred_fallthru
          _
      $region132: #{rfdn_forward.101} parent=5 // pred_fallthru
        _
      %p802 = scmp.le.s32.totalorder 2, %s15
      // Predicated region
      $region172: #{rfdn_forward.101} parent=5 // pred_check
        %p803 = pneg %p802
      $region173: #{rfdn_forward.101} parent=5 // pred_check_branch
        %805 = sbr.rel (%p803) target = $region175
      $region174: #{rfdn_forward.101} parent=5 // pred_region
        %s806 = ssub.s32 %s15, 2
        // Predicated region
        $region176: #{rfdn_forward.101} parent=174 // pred_check
          %p807 = pneg %p253
        $region177: #{rfdn_forward.101} parent=174 // pred_check_branch
          %809 = sbr.rel (%p807) target = $region179
        $region178: #{rfdn_forward.101} parent=174 // pred_region
          %s810 = sand.u32 %s238, 1
          %s811 = sand.u32 %s238, 1
          %s812 = smul.addr %s811, 32
          %s813 = scalar_lea.vmem [#allocation6], %s812
        $region179: #{rfdn_forward.101} parent=174 // pred_fallthru
          _
      $region175: #{rfdn_forward.101} parent=5 // pred_fallthru
        _
    $region6: #{rfdn_forward.101} parent=1 // loop_footer
      %s19 = sadd.s32 1, %s15
    $region7: #{rfdn_forward.101} parent=1 // loop_footer_branch
      %14 = sbr.rel target = $region3
    $region8: #{rfdn_forward.101} parent=1 // loop_exit
      _

// kernel: rfdn_forward.102
$region0: #{rfdn_forward.102}
  #allocation0 [shape = 'u32[]', space=smem, size = 0x4, offset = 0x4, fixed_abs, tag = 'smem constant byte address 0x4 - core index']
  #allocation1 [shape = 'u32[72,128]{1,0:T(1,128)}', space=vmem, size = 0x9000, scoped, tag = 'internal scratch']
  %s0 = inlined_call_operand.vmem [shape: f32[16,144], index: 0, kind: input, shape index: {}]
  %s1 = inlined_call_operand.vmem [shape: f32[144,512], index: 1, kind: input, shape index: {}]
  %s2 = inlined_call_operand.vmem [shape: f32[16,1], index: 2, kind: input, shape index: {}]
  %s3 = inlined_call_operand.vmem [shape: f32[16,512], index: 3, kind: input, shape index: {}]
  %s4 = inlined_call_operand.vmem [shape: f32[16,512], index: 4, kind: output, shape index: {}]
  %s5 = sld [smem:[#allocation0]]
  $region114: #{rfdn_forward.102} parent=0
    _
  %s7 = ssub.s32 1, %s5
  %s8 = scalar_select 0, %s7, %s5
  $region1: #{rfdn_forward.102} parent=0
    #allocation2 [shape = 'u8[294912]{0}', space=vmem, size = 0x48000, scoped, tag = 'input window, operand 1']
    #allocation3 [shape = 'u8[32768]{0}', space=vmem, size = 0x8000, scoped, tag = 'input window, operand 3']
    #allocation4 [shape = 'u8[32768]{0}', space=vmem, size = 0x8000, scoped, tag = 'output window, operand 0']
    loop: start=0, step=1, limit=4
    $region2: #{rfdn_forward.102} parent=1 // loop_pre_header
      _
    $region3: #{rfdn_forward.102} parent=1 // loop_header
      %s10 = sphi 0, %s14
      %p11 = scmp.ge.s32.totalorder %s10, 4
      %s18 = sphi 0, %s18
      %s20 = sphi 0, %s18
      %s21 = sphi 0, %s20
      %s35 = sphi 0, %s21
      %s41 = sphi 0, %s43
      %s44 = sphi 0, %s41
      %s45 = sphi 0, %s44
      %s61 = sphi 0, %s45
      %s65 = sphi 0, %s65
      %s67 = sphi 0, %s65
      %s68 = sphi 0, %s67
      %s82 = sphi 0, %s68
      %s88 = sphi 0, %s90
      %s91 = sphi 0, %s88
      %s92 = sphi 0, %s91
      %s108 = sphi 0, %s92
      %s114 = sphi 0, %s116
      %s117 = sphi 0, %s114
      %s118 = sphi 0, %s117
      %s134 = sphi 0, %s118
    $region4: #{rfdn_forward.102} parent=1 // loop_header_branch
      %13 = sbr.rel (%p11) target = $region8
    $region5: #{rfdn_forward.102} parent=1 // loop_body
      %s15 = ssub.s32 %s10, 1
      %s16 = ssub.s32 %s10, 2
      %s17 = sadd.s32 %s10, 1
      %s19 = sadd.s32 %s18, 1
      %p22 = scmp.eq.s32.totalorder %s10, 1
      %p23 = scmp.ne.s32.totalorder %s18, %s20
      %p24 = scmp.eq.s32.totalorder %s10, 0
      %p25 = por %p23, %p24
      %p26 = scmp.ne.s32.totalorder %s18, %s20
      %p27 = scmp.eq.s32.totalorder %s15, 1
      %p28 = por %p26, %p27
      %p29 = scmp.ne.s32.totalorder %s20, %s21
      %p30 = scmp.eq.s32.totalorder %s15, 0
      %p31 = por %p29, %p30
      %p32 = scmp.ne.s32.totalorder %s20, %s21
      %p33 = scmp.eq.s32.totalorder %s16, 1
      %p34 = por %p32, %p33
      %p36 = scmp.ne.s32.totalorder %s21, %s35
      %p37 = scmp.eq.s32.totalorder %s16, 0
      %p38 = por %p36, %p37
      %s39 = ssub.s32 %s10, %s17
      %p40 = scmp.eq.s32.totalorder %s39, 0
      %s42 = sadd.s32 %s41, 1
      %s43 = scalar_select %p40, %s41, %s42
      %p46 = pneg %p40
      %p47 = scmp.eq.s32.totalorder %s10, 1
      %p48 = por %p46, %p47
      %p49 = scmp.ne.s32.totalorder %s41, %s44
      %p50 = scmp.eq.s32.totalorder %s10, 0
      %p51 = por %p49, %p50
      %p52 = scmp.ne.s32.totalorder %s41, %s44
      %p53 = scmp.eq.s32.totalorder %s15, 1
      %p54 = por %p52, %p53
      %p55 = scmp.ne.s32.totalorder %s44, %s45
      %p56 = scmp.eq.s32.totalorder %s15, 0
      %p57 = por %p55, %p56
      %p58 = scmp.ne.s32.totalorder %s44, %s45
      %p59 = scmp.eq.s32.totalorder %s16, 1
      %p60 = por %p58, %p59
      %p62 = scmp.ne.s32.totalorder %s45, %s61
      %p63 = scmp.eq.s32.totalorder %s16, 0
      %p64 = por %p62, %p63
      %s66 = sadd.s32 %s65, 1
      %p69 = scmp.eq.s32.totalorder %s10, 1
      %p70 = scmp.ne.s32.totalorder %s65, %s67
      %p71 = scmp.eq.s32.totalorder %s10, 0
      %p72 = por %p70, %p71
      %p73 = scmp.ne.s32.totalorder %s65, %s67
      %p74 = scmp.eq.s32.totalorder %s15, 1
      %p75 = por %p73, %p74
      %p76 = scmp.ne.s32.totalorder %s67, %s68
      %p77 = scmp.eq.s32.totalorder %s15, 0
      %p78 = por %p76, %p77
      %p79 = scmp.ne.s32.totalorder %s67, %s68
      %p80 = scmp.eq.s32.totalorder %s16, 1
      %p81 = por %p79, %p80
      %p83 = scmp.ne.s32.totalorder %s68, %s82
      %p84 = scmp.eq.s32.totalorder %s16, 0
      %p85 = por %p83, %p84
      %s86 = ssub.s32 %s10, %s17
      %p87 = scmp.eq.s32.totalorder %s86, 0
      %s89 = sadd.s32 %s88, 1
      %s90 = scalar_select %p87, %s88, %s89
      %p93 = pneg %p87
      %p94 = scmp.eq.s32.totalorder %s10, 1
      %p95 = por %p93, %p94
      %p96 = scmp.ne.s32.totalorder %s88, %s91
      %p97 = scmp.eq.s32.totalorder %s10, 0
      %p98 = por %p96, %p97
      %p99 = scmp.ne.s32.totalorder %s88, %s91
      %p100 = scmp.eq.s32.totalorder %s15, 1
      %p101 = por %p99, %p100
      %p102 = scmp.ne.s32.totalorder %s91, %s92
      %p103 = scmp.eq.s32.totalorder %s15, 0
      %p104 = por %p102, %p103
      %p105 = scmp.ne.s32.totalorder %s91, %s92
      %p106 = scmp.eq.s32.totalorder %s16, 1
      %p107 = por %p105, %p106
      %p109 = scmp.ne.s32.totalorder %s92, %s108
      %p110 = scmp.eq.s32.totalorder %s16, 0
      %p111 = por %p109, %p110
      %s112 = ssub.s32 %s10, %s17
      %p113 = scmp.eq.s32.totalorder %s112, 0
      %s115 = sadd.s32 %s114, 1
      %s116 = scalar_select %p113, %s114, %s115
      %p119 = pneg %p113
      %p120 = scmp.eq.s32.totalorder %s10, 1
      %p121 = por %p119, %p120
      %p122 = scmp.ne.s32.totalorder %s114, %s117
      %p123 = scmp.eq.s32.totalorder %s10, 0
      %p124 = por %p122, %p123
      %p125 = scmp.ne.s32.totalorder %s114, %s117
      %p126 = scmp.eq.s32.totalorder %s15, 1
      %p127 = por %p125, %p126
      %p128 = scmp.ne.s32.totalorder %s117, %s118
      %p129 = scmp.eq.s32.totalorder %s15, 0
      %p130 = por %p128, %p129
      %p131 = scmp.ne.s32.totalorder %s117, %s118
      %p132 = scmp.eq.s32.totalorder %s16, 1
      %p133 = por %p131, %p132
      %p135 = scmp.ne.s32.totalorder %s118, %s134
      %p136 = scmp.eq.s32.totalorder %s16, 0
      %p137 = por %p135, %p136
      %p138 = scmp.le.s32.totalorder 1, %s10
      %p139 = scmp.lt.s32.totalorder %s10, 3
      %p140 = pnand %p138, %p139
      %p141 = pneg %p140
      // Predicated region
      $region9: #{rfdn_forward.102} parent=5 // pred_check
        _
      $region10: #{rfdn_forward.102} parent=5 // pred_check_branch
        %143 = sbr.rel (%p140) target = $region12
      $region11: #{rfdn_forward.102} parent=5 // pred_region
        %s144 = ssub.s32 %s10, 1
        // Predicated region
        $region13: #{rfdn_forward.102} parent=11 // pred_check
          %p145 = pneg %p31
        $region14: #{rfdn_forward.102} parent=11 // pred_check_branch
          %147 = sbr.rel (%p145) target = $region16
        $region15: #{rfdn_forward.102} parent=11 // pred_region
          _
        $region16: #{rfdn_forward.102} parent=11 // pred_fallthru
          _
        // Predicated region
        $region17: #{rfdn_forward.102} parent=11 // pred_check
          %p148 = pneg %p78
        $region18: #{rfdn_forward.102} parent=11 // pred_check_branch
          %150 = sbr.rel (%p148) target = $region20
        $region19: #{rfdn_forward.102} parent=11 // pred_region
          _
        $region20: #{rfdn_forward.102} parent=11 // pred_fallthru
          _
      $region12: #{rfdn_forward.102} parent=5 // pred_fallthru
        _
      %p151 = scmp.lt.s32.totalorder %s10, 2
      // Predicated region
      $region21: #{rfdn_forward.102} parent=5 // pred_check
        %p152 = pneg %p151
      $region22: #{rfdn_forward.102} parent=5 // pred_check_branch
        %154 = sbr.rel (%p152) target = $region24
      $region23: #{rfdn_forward.102} parent=5 // pred_region
        // Predicated region
        $region25: #{rfdn_forward.102} parent=23 // pred_check
          %p155 = pneg %p51
        $region26: #{rfdn_forward.102} parent=23 // pred_check_branch
          %157 = sbr.rel (%p155) target = $region28
        $region27: #{rfdn_forward.102} parent=23 // pred_region
          %s158 = sand.u32 %s41, 1
          %s159 = sand.u32 %s41, 1
          %s160 = smul.addr %s159, 288
          %s161 = scalar_lea.vmem [#allocation2], %s160
          %s162 = smul.u32 2, %s10
          %s163 = smul.addr %s162, 8
          %s164 = scalar_lea.vmem %s1, %s163
          // Predicated region
          $region29: #{rfdn_forward.102} parent=27 // pred_check
            _
          $region30: #{rfdn_forward.102} parent=27 // pred_check_branch
            %166 = sbr.rel (0) target = $region32
          $region31: #{rfdn_forward.102} parent=27 // pred_region
            // Predicated region
            $region33: #{rfdn_forward.102} parent=31 // pred_check
              _
            $region34: #{rfdn_forward.102} parent=31 // pred_check_branch
              %168 = sbr.rel (0) target = $region36
            $region35: #{rfdn_forward.102} parent=31 // pred_region
              loop: start=0, step=1, limit=1
              $region37: #{rfdn_forward.102} parent=35 // loop_pre_header
                _
              $region38: #{rfdn_forward.102} parent=35 // loop_header
                %s170 = sphi 0, %s174
                %p171 = scmp.ge.s32.totalorder %s170, 1
                %s175 = sphi %s164, %s164
                %s176 = sphi %s161, %s161
              $region39: #{rfdn_forward.102} parent=35 // loop_header_branch
                %173 = sbr.rel (%p171) target = $region43
              $region40: #{rfdn_forward.102} parent=35 // loop_body
                %v177 = vld [vmem:[%s175] sm:$0xff]
                %178 = vst [vmem:[%s176] sm:$0xff] %v177
                %v179 = vld [vmem:[%s175 + $0x8] sm:$0xff]
                %180 = vst [vmem:[%s176 + $0x8] sm:$0xff] %v179
                %v181 = vld [vmem:[%s175 + $0x20] sm:$0xff]
                %182 = vst [vmem:[%s176 + $0x10] sm:$0xff] %v181
                %v183 = vld [vmem:[%s175 + $0x28] sm:$0xff]
                %184 = vst [vmem:[%s176 + $0x18] sm:$0xff] %v183
                %v185 = vld [vmem:[%s175 + $0x40] sm:$0xff]
                %186 = vst [vmem:[%s176 + $0x20] sm:$0xff] %v185
                %v187 = vld [vmem:[%s175 + $0x48] sm:$0xff]
                %188 = vst [vmem:[%s176 + $0x28] sm:$0xff] %v187
                %v189 = vld [vmem:[%s175 + $0x60] sm:$0xff]
                %190 = vst [vmem:[%s176 + $0x30] sm:$0xff] %v189
                %v191 = vld [vmem:[%s175 + $0x68] sm:$0xff]
                %192 = vst [vmem:[%s176 + $0x38] sm:$0xff] %v191
                %v193 = vld [vmem:[%s175 + $0x80] sm:$0xff]
                %194 = vst [vmem:[%s176 + $0x40] sm:$0xff] %v193
                %v195 = vld [vmem:[%s175 + $0x88] sm:$0xff]
                %196 = vst [vmem:[%s176 + $0x48] sm:$0xff] %v195
                %v197 = vld [vmem:[%s175 + $0xa0] sm:$0xff]
                %198 = vst [vmem:[%s176 + $0x50] sm:$0xff] %v197
                %v199 = vld [vmem:[%s175 + $0xa8] sm:$0xff]
                %200 = vst [vmem:[%s176 + $0x58] sm:$0xff] %v199
                %v201 = vld [vmem:[%s175 + $0xc0] sm:$0xff]
                %202 = vst [vmem:[%s176 + $0x60] sm:$0xff] %v201
                %v203 = vld [vmem:[%s175 + $0xc8] sm:$0xff]
                %204 = vst [vmem:[%s176 + $0x68] sm:$0xff] %v203
                %v205 = vld [vmem:[%s175 + $0xe0] sm:$0xff]
                %206 = vst [vmem:[%s176 + $0x70] sm:$0xff] %v205
                %v207 = vld [vmem:[%s175 + $0xe8] sm:$0xff]
                %208 = vst [vmem:[%s176 + $0x78] sm:$0xff] %v207
                %v209 = vld [vmem:[%s175 + $0x100] sm:$0xff]
                %210 = vst [vmem:[%s176 + $0x80] sm:$0xff] %v209
                %v211 = vld [vmem:[%s175 + $0x108] sm:$0xff]
                %212 = vst [vmem:[%s176 + $0x88] sm:$0xff] %v211
                %v213 = vld [vmem:[%s175 + $0x120] sm:$0xff]
                %214 = vst [vmem:[%s176 + $0x90] sm:$0xff] %v213
                %v215 = vld [vmem:[%s175 + $0x128] sm:$0xff]
                %216 = vst [vmem:[%s176 + $0x98] sm:$0xff] %v215
                %v217 = vld [vmem:[%s175 + $0x140] sm:$0xff]
                %218 = vst [vmem:[%s176 + $0xa0] sm:$0xff] %v217
                %v219 = vld [vmem:[%s175 + $0x148] sm:$0xff]
                %220 = vst [vmem:[%s176 + $0xa8] sm:$0xff] %v219
                %v221 = vld [vmem:[%s175 + $0x160] sm:$0xff]
                %222 = vst [vmem:[%s176 + $0xb0] sm:$0xff] %v221
                %v223 = vld [vmem:[%s175 + $0x168] sm:$0xff]
                %224 = vst [vmem:[%s176 + $0xb8] sm:$0xff] %v223
                %v225 = vld [vmem:[%s175 + $0x180] sm:$0xff]
                %226 = vst [vmem:[%s176 + $0xc0] sm:$0xff] %v225
                %v227 = vld [vmem:[%s175 + $0x188] sm:$0xff]
                %228 = vst [vmem:[%s176 + $0xc8] sm:$0xff] %v227
                %v229 = vld [vmem:[%s175 + $0x1a0] sm:$0xff]
                %230 = vst [vmem:[%s176 + $0xd0] sm:$0xff] %v229
                %v231 = vld [vmem:[%s175 + $0x1a8] sm:$0xff]
                %232 = vst [vmem:[%s176 + $0xd8] sm:$0xff] %v231
                %v233 = vld [vmem:[%s175 + $0x1c0] sm:$0xff]
                %234 = vst [vmem:[%s176 + $0xe0] sm:$0xff] %v233
                %v235 = vld [vmem:[%s175 + $0x1c8] sm:$0xff]
                %236 = vst [vmem:[%s176 + $0xe8] sm:$0xff] %v235
                %v237 = vld [vmem:[%s175 + $0x1e0] sm:$0xff]
                %238 = vst [vmem:[%s176 + $0xf0] sm:$0xff] %v237
                %v239 = vld [vmem:[%s175 + $0x1e8] sm:$0xff]
                %240 = vst [vmem:[%s176 + $0xf8] sm:$0xff] %v239
                %v241 = vld [vmem:[%s175 + $0x200] sm:$0xff]
                %242 = vst [vmem:[%s176 + $0x100] sm:$0xff] %v241
                %v243 = vld [vmem:[%s175 + $0x208] sm:$0xff]
                %244 = vst [vmem:[%s176 + $0x108] sm:$0xff] %v243
                %v245 = vld [vmem:[%s175 + $0x220] sm:$0xff]
                %246 = vst [vmem:[%s176 + $0x110] sm:$0xff] %v245
                %v247 = vld [vmem:[%s175 + $0x228] sm:$0xff]
                %248 = vst [vmem:[%s176 + $0x118] sm:$0xff] %v247
              $region41: #{rfdn_forward.102} parent=35 // loop_footer
                %s174 = sadd.s32 1, %s170
              $region42: #{rfdn_forward.102} parent=35 // loop_footer_branch
                %169 = sbr.rel target = $region38
              $region43: #{rfdn_forward.102} parent=35 // loop_exit
                _
            $region36: #{rfdn_forward.102} parent=31 // pred_fallthru
              _
            // Predicated region
            $region44: #{rfdn_forward.102} parent=31 // pred_check
              _
            $region45: #{rfdn_forward.102} parent=31 // pred_check_branch
              %250 = sbr.rel target = $region47
            $region46: #{rfdn_forward.102} parent=31 // pred_region
              _
            $region47: #{rfdn_forward.102} parent=31 // pred_fallthru
              _
          $region32: #{rfdn_forward.102} parent=27 // pred_fallthru
            _
          %251 = vnop
        $region28: #{rfdn_forward.102} parent=23 // pred_fallthru
          _
        // Predicated region
        $region48: #{rfdn_forward.102} parent=23 // pred_check
          %p252 = pneg %p98
        $region49: #{rfdn_forward.102} parent=23 // pred_check_branch
          %254 = sbr.rel (%p252) target = $region51
        $region50: #{rfdn_forward.102} parent=23 // pred_region
          %s255 = sand.u32 %s88, 1
          %s256 = sand.u32 %s88, 1
          %s257 = smul.addr %s256, 32
          %s258 = scalar_lea.vmem [#allocation3], %s257
          %s259 = smul.u32 2, %s10
          %s260 = smul.addr %s259, 8
          %s261 = scalar_lea.vmem %s3, %s260
          // Predicated region
          $region52: #{rfdn_forward.102} parent=50 // pred_check
            _
          $region53: #{rfdn_forward.102} parent=50 // pred_check_branch
            %263 = sbr.rel (0) target = $region55
          $region54: #{rfdn_forward.102} parent=50 // pred_region
            // Predicated region
            $region56: #{rfdn_forward.102} parent=54 // pred_check
              _
            $region57: #{rfdn_forward.102} parent=54 // pred_check_branch
              %265 = sbr.rel (0) target = $region59
            $region58: #{rfdn_forward.102} parent=54 // pred_region
              loop: start=0, step=1, limit=1
              $region60: #{rfdn_forward.102} parent=58 // loop_pre_header
                _
              $region61: #{rfdn_forward.102} parent=58 // loop_header
                %s267 = sphi 0, %s271
                %p268 = scmp.ge.s32.totalorder %s267, 1
                %s272 = sphi %s261, %s261
                %s273 = sphi %s258, %s258
              $region62: #{rfdn_forward.102} parent=58 // loop_header_branch
                %270 = sbr.rel (%p268) target = $region66
              $region63: #{rfdn_forward.102} parent=58 // loop_body
                %v274 = vld [vmem:[%s272] sm:$0xff]
                %275 = vst [vmem:[%s273] sm:$0xff] %v274
                %v276 = vld [vmem:[%s272 + $0x8] sm:$0xff]
                %277 = vst [vmem:[%s273 + $0x8] sm:$0xff] %v276
                %v278 = vld [vmem:[%s272 + $0x20] sm:$0xff]
                %279 = vst [vmem:[%s273 + $0x10] sm:$0xff] %v278
                %v280 = vld [vmem:[%s272 + $0x28] sm:$0xff]
                %281 = vst [vmem:[%s273 + $0x18] sm:$0xff] %v280
              $region64: #{rfdn_forward.102} parent=58 // loop_footer
                %s271 = sadd.s32 1, %s267
              $region65: #{rfdn_forward.102} parent=58 // loop_footer_branch
                %266 = sbr.rel target = $region61
              $region66: #{rfdn_forward.102} parent=58 // loop_exit
                _
            $region59: #{rfdn_forward.102} parent=54 // pred_fallthru
              _
            // Predicated region
            $region67: #{rfdn_forward.102} parent=54 // pred_check
              _
            $region68: #{rfdn_forward.102} parent=54 // pred_check_branch
              %283 = sbr.rel target = $region70
            $region69: #{rfdn_forward.102} parent=54 // pred_region
              _
            $region70: #{rfdn_forward.102} parent=54 // pred_fallthru
              _
          $region55: #{rfdn_forward.102} parent=50 // pred_fallthru
            _
          %284 = vnop
        $region51: #{rfdn_forward.102} parent=23 // pred_fallthru
          _
      $region24: #{rfdn_forward.102} parent=5 // pred_fallthru
        _
      %p285 = scmp.le.s32.totalorder 1, %s10
      %p286 = scmp.lt.s32.totalorder %s10, 3
      %p287 = pnand %p285, %p286
      %p288 = pneg %p287
      // Predicated region
      $region71: #{rfdn_forward.102} parent=5 // pred_check
        _
      $region72: #{rfdn_forward.102} parent=5 // pred_check_branch
        %290 = sbr.rel (%p287) target = $region74
      $region73: #{rfdn_forward.102} parent=5 // pred_region
        %s291 = ssub.s32 %s10, 1
        %s292 = sand.u32 %s44, 1
        %s293 = sand.u32 %s44, 1
        %s294 = smul.addr %s293, 288
        %s295 = scalar_lea.vmem [#allocation2], %s294
        // Predicated region
        $region75: #{rfdn_forward.102} parent=73 // pred_check
          %p296 = pneg %p57
        $region76: #{rfdn_forward.102} parent=73 // pred_check_branch
          %298 = sbr.rel (%p296) target = $region78
        $region77: #{rfdn_forward.102} parent=73 // pred_region
          _
        $region78: #{rfdn_forward.102} parent=73 // pred_fallthru
          _
        %s299 = sand.u32 %s91, 1
        %s300 = sand.u32 %s91, 1
        %s301 = smul.addr %s300, 32
        %s302 = scalar_lea.vmem [#allocation3], %s301
        // Predicated region
        $region79: #{rfdn_forward.102} parent=73 // pred_check
          %p303 = pneg %p104
        $region80: #{rfdn_forward.102} parent=73 // pred_check_branch
          %305 = sbr.rel (%p303) target = $region82
        $region81: #{rfdn_forward.102} parent=73 // pred_region
          _
        $region82: #{rfdn_forward.102} parent=73 // pred_fallthru
          _
        %p306 = pneg %p31
        %p307 = pneg %p28
        %s308 = sand.u32 %s44, 1
        %s309 = sand.u32 %s44, 1
        %s310 = smul.addr %s309, 288
        %s311 = scalar_lea.vmem [#allocation2], %s310
        %p312 = pneg %p57
        %p313 = pneg %p54
        %p314 = pneg %p78
        %p315 = pneg %p75
        %s316 = sand.u32 %s91, 1
        %s317 = sand.u32 %s91, 1
        %s318 = smul.addr %s317, 32
        %s319 = scalar_lea.vmem [#allocation3], %s318
        %p320 = pneg %p104
        %p321 = pneg %p101
        %p322 = pneg %p130
        %p323 = pneg %p127
        %s324 = sand.u32 %s117, 1
        %s325 = sand.u32 %s117, 1
        %s326 = smul.addr %s325, 32
        %s327 = scalar_lea.vmem [#allocation4], %s326
        %s328 = smul.u32 2, %s15
        %s329 = smul.u32 2, %s15
        %s330 = smul.u32 2, %s15
        %v331 = vld [vmem:[%s0] sm:$0xff]
        %v332 = vld [vmem:[%s0 + $0x8] sm:$0xff]
        %v333 = vld [vmem:[%s0 + $0x10] sm:$0xff]
        %v334 = vld [vmem:[%s0 + $0x18] sm:$0xff]
        %v335 = vld [vmem:[%s295] sm:$0xff]
        %v336 = vld [vmem:[%s295 + $0x8] sm:$0xff]
        %v337 = vld [vmem:[%s295 + $0x10] sm:$0xff]
        %v338 = vld [vmem:[%s295 + $0x18] sm:$0xff]
        %v339 = vld [vmem:[%s295 + $0x20] sm:$0xff]
        %v340 = vld [vmem:[%s295 + $0x28] sm:$0xff]
        %v341 = vld [vmem:[%s295 + $0x30] sm:$0xff]
        %v342 = vld [vmem:[%s295 + $0x38] sm:$0xff]
        %v343 = vld [vmem:[%s295 + $0x40] sm:$0xff]
        %v344 = vld [vmem:[%s295 + $0x48] sm:$0xff]
        %v345 = vld [vmem:[%s295 + $0x50] sm:$0xff]
        %v346 = vld [vmem:[%s295 + $0x58] sm:$0xff]
        %v347 = vld [vmem:[%s295 + $0x60] sm:$0xff]
        %v348 = vld [vmem:[%s295 + $0x68] sm:$0xff]
        %v349 = vld [vmem:[%s295 + $0x70] sm:$0xff]
        %v350 = vld [vmem:[%s295 + $0x78] sm:$0xff]
        %v351 = vld [vmem:[%s295 + $0x80] sm:$0xff]
        %v352 = vld [vmem:[%s295 + $0x88] sm:$0xff]
        %v353 = vld [vmem:[%s295 + $0x90] sm:$0xff]
        %v354 = vld [vmem:[%s295 + $0x98] sm:$0xff]
        %v355 = vld [vmem:[%s295 + $0xa0] sm:$0xff]
        %v356 = vld [vmem:[%s295 + $0xa8] sm:$0xff]
        %v357 = vld [vmem:[%s295 + $0xb0] sm:$0xff]
        %v358 = vld [vmem:[%s295 + $0xb8] sm:$0xff]
        %v359 = vld [vmem:[%s295 + $0xc0] sm:$0xff]
        %v360 = vld [vmem:[%s295 + $0xc8] sm:$0xff]
        %v361 = vld [vmem:[%s295 + $0xd0] sm:$0xff]
        %v362 = vld [vmem:[%s295 + $0xd8] sm:$0xff]
        %v363 = vld [vmem:[%s295 + $0xe0] sm:$0xff]
        %v364 = vld [vmem:[%s295 + $0xe8] sm:$0xff]
        %v365 = vld [vmem:[%s295 + $0xf0] sm:$0xff]
        %v366 = vld [vmem:[%s295 + $0xf8] sm:$0xff]
        %v367 = vld [vmem:[%s295 + $0x100] sm:$0xff]
        %v368 = vld [vmem:[%s295 + $0x108] sm:$0xff]
        %v369 = vld [vmem:[%s295 + $0x110] sm:$0xff]
        %v370 = vld [vmem:[%s295 + $0x118] sm:$0xff]
        %v371 = vld [vmem:[%s2] sm:$0xff]
        %v372 = vld [vmem:[%s2 + $0x8] sm:$0xff]
        %374 = vset.pattern.permute.xlu0 0
        %375 = vperm.xlu0 %374, %v371
        %v376 = vpop.permute.xlu0 %375
        %379 = vset.pattern.permute.xlu0 0
        %380 = vperm.xlu0 %379, %v372
        %v381 = vpop.permute.xlu0 %380
        %vm383 = vcmask 130048
        %v385 = vsel %vm383, %v332, 0
        %v388 = vsel %vm383, %v334, 0
        %390 = vmatpush.msra.mxu0 %v365
        %391 = vmatpush.msra.mxu0 %v363
        %392 = vmatpush.msra.mxu0 %v361
        %393 = vmatpush.msra.mxu0 %v359
        %394 = vmatpush.msra.mxu0 %v357
        %395 = vmatpush.msra.mxu0 %v355
        %396 = vmatpush.msra.mxu0 %v353
        %397 = vmatpush.msra.mxu0 %v351
        %398 = vmatpush.msra.mxu0 %v349
        %399 = vmatpush.msra.mxu0 %v347
        %400 = vmatpush.msra.mxu0 %v345
        %401 = vmatpush.msra.mxu0 %v343
        %402 = vmatpush.msra.mxu0 %v341
        %403 = vmatpush.msra.mxu0 %v339
        %404 = vmatpush.msra.mxu0 %v337
        %405 = vmatpush.msra.mxu0 %v335
        %406 = vmatmul.f32.gmra.mxu0 %v331
        %v407 = vpop.f32.mrf.mxu0
        %v408 = vadd.f32 %v376, %v407
        %409 = vmatmul.f32.gmra.mxu0 %v333
        %v410 = vpop.f32.mrf.mxu0
        %v411 = vadd.f32 %v381, %v410
        %412 = vdwg.mxu0
        %413 = vmatpush.msra.mxu0 0.0
        %414 = vmatpush.msra.mxu0 0.0
        %415 = vmatpush.msra.mxu0 0.0
        %416 = vmatpush.msra.mxu0 0.0
        %417 = vmatpush.msra.mxu0 0.0
        %418 = vmatpush.msra.mxu0 0.0
        %419 = vmatpush.msra.mxu0 0.0
        %420 = vmatpush.msra.mxu0 0.0
        %421 = vmatpush.msra.mxu0 0.0
        %422 = vmatpush.msra.mxu0 0.0
        %423 = vmatpush.msra.mxu0 0.0
        %424 = vmatpush.msra.mxu0 0.0
        %425 = vmatpush.msra.mxu0 0.0
        %426 = vmatpush.msra.mxu0 0.0
        %427 = vmatpush.msra.mxu0 %v369
        %428 = vmatpush.msra.mxu0 %v367
        %429 = vmatmul.f32.gmra.mxu0 %v385
        %v430 = vpop.f32.mrf.mxu0
        %v431 = vadd.f32 %v408, %v430
        %432 = vmatmul.f32.gmra.mxu0 %v388
        %v433 = vpop.f32.mrf.mxu0
        %v434 = vadd.f32 %v411, %v433
        %435 = vdwg.mxu0
        %436 = vmatpush.msra.mxu0 %v366
        %437 = vmatpush.msra.mxu0 %v364
        %438 = vmatpush.msra.mxu0 %v362
        %439 = vmatpush.msra.mxu0 %v360
        %440 = vmatpush.msra.mxu0 %v358
        %441 = vmatpush.msra.mxu0 %v356
        %442 = vmatpush.msra.mxu0 %v354
        %443 = vmatpush.msra.mxu0 %v352
        %444 = vmatpush.msra.mxu0 %v350
        %445 = vmatpush.msra.mxu0 %v348
        %446 = vmatpush.msra.mxu0 %v346
        %447 = vmatpush.msra.mxu0 %v344
        %448 = vmatpush.msra.mxu0 %v342
        %449 = vmatpush.msra.mxu0 %v340
        %450 = vmatpush.msra.mxu0 %v338
        %451 = vmatpush.msra.mxu0 %v336
        %452 = vmatmul.f32.gmra.mxu0 %v331
        %v453 = vpop.f32.mrf.mxu0
        %v454 = vadd.f32 %v376, %v453
        %455 = vmatmul.f32.gmra.mxu0 %v333
        %v456 = vpop.f32.mrf.mxu0
        %v457 = vadd.f32 %v381, %v456
        %458 = vdwg.mxu0
        %459 = vmatpush.msra.mxu0 0.0
        %460 = vmatpush.msra.mxu0 0.0
        %461 = vmatpush.msra.mxu0 0.0
        %462 = vmatpush.msra.mxu0 0.0
        %463 = vmatpush.msra.mxu0 0.0
        %464 = vmatpush.msra.mxu0 0.0
        %465 = vmatpush.msra.mxu0 0.0
        %466 = vmatpush.msra.mxu0 0.0
        %467 = vmatpush.msra.mxu0 0.0
        %468 = vmatpush.msra.mxu0 0.0
        %469 = vmatpush.msra.mxu0 0.0
        %470 = vmatpush.msra.mxu0 0.0
        %471 = vmatpush.msra.mxu0 0.0
        %472 = vmatpush.msra.mxu0 0.0
        %473 = vmatpush.msra.mxu0 %v370
        %474 = vmatpush.msra.mxu0 %v368
        %475 = vmatmul.f32.gmra.mxu0 %v385
        %v476 = vpop.f32.mrf.mxu0
        %v477 = vadd.f32 %v454, %v476
        %478 = vmatmul.f32.gmra.mxu0 %v388
        %v479 = vpop.f32.mrf.mxu0
        %v480 = vadd.f32 %v457, %v479
        %481 = vdwg.mxu0
        %v482 = vld [vmem:[%s302] sm:$0xff]
        %v483 = vld [vmem:[%s302 + $0x8] sm:$0xff]
        %v484 = vld [vmem:[%s302 + $0x10] sm:$0xff]
        %v485 = vld [vmem:[%s302 + $0x18] sm:$0xff]
        %v486 = vadd.f32 %v431, %v482
        %v487 = vadd.f32 %v477, %v483
        %v488 = vadd.f32 %v434, %v484
        %v489 = vadd.f32 %v480, %v485
        %490 = vst [vmem:[%s327] sm:$0xff] %v486
        %491 = vst [vmem:[%s327 + $0x8] sm:$0xff] %v487
        %492 = vst [vmem:[%s327 + $0x10] sm:$0xff] %v488
        %493 = vst [vmem:[%s327 + $0x18] sm:$0xff] %v489
        %s494 = sand.u32 %s117, 1
        %s495 = sand.u32 %s117, 1
        %s496 = smul.addr %s495, 32
        %s497 = scalar_lea.vmem [#allocation4], %s496
        // Predicated region
        $region83: #{rfdn_forward.102} parent=73 // pred_check
          %p498 = pneg %p127
        $region84: #{rfdn_forward.102} parent=73 // pred_check_branch
          %500 = sbr.rel (%p498) target = $region86
        $region85: #{rfdn_forward.102} parent=73 // pred_region
          %s501 = smul.u32 2, %s15
          %s502 = smul.addr %s501, 8
          %s503 = scalar_lea.vmem %s4, %s502
          // Predicated region
          $region87: #{rfdn_forward.102} parent=85 // pred_check
            _
          $region88: #{rfdn_forward.102} parent=85 // pred_check_branch
            %505 = sbr.rel (0) target = $region90
          $region89: #{rfdn_forward.102} parent=85 // pred_region
            // Predicated region
            $region91: #{rfdn_forward.102} parent=89 // pred_check
              _
            $region92: #{rfdn_forward.102} parent=89 // pred_check_branch
              %507 = sbr.rel (0) target = $region94
            $region93: #{rfdn_forward.102} parent=89 // pred_region
              loop: start=0, step=1, limit=1
              $region95: #{rfdn_forward.102} parent=93 // loop_pre_header
                _
              $region96: #{rfdn_forward.102} parent=93 // loop_header
                %s509 = sphi 0, %s513
                %p510 = scmp.ge.s32.totalorder %s509, 1
                %s514 = sphi %s497, %s497
                %s515 = sphi %s503, %s503
              $region97: #{rfdn_forward.102} parent=93 // loop_header_branch
                %512 = sbr.rel (%p510) target = $region101
              $region98: #{rfdn_forward.102} parent=93 // loop_body
                %v516 = vld [vmem:[%s514] sm:$0xff]
                %517 = vst [vmem:[%s515] sm:$0xff] %v516
                %v518 = vld [vmem:[%s514 + $0x8] sm:$0xff]
                %519 = vst [vmem:[%s515 + $0x8] sm:$0xff] %v518
                %v520 = vld [vmem:[%s514 + $0x10] sm:$0xff]
                %521 = vst [vmem:[%s515 + $0x20] sm:$0xff] %v520
                %v522 = vld [vmem:[%s514 + $0x18] sm:$0xff]
                %523 = vst [vmem:[%s515 + $0x28] sm:$0xff] %v522
              $region99: #{rfdn_forward.102} parent=93 // loop_footer
                %s513 = sadd.s32 1, %s509
              $region100: #{rfdn_forward.102} parent=93 // loop_footer_branch
                %508 = sbr.rel target = $region96
              $region101: #{rfdn_forward.102} parent=93 // loop_exit
                _
            $region94: #{rfdn_forward.102} parent=89 // pred_fallthru
              _
            // Predicated region
            $region102: #{rfdn_forward.102} parent=89 // pred_check
              _
            $region103: #{rfdn_forward.102} parent=89 // pred_check_branch
              %525 = sbr.rel target = $region105
            $region104: #{rfdn_forward.102} parent=89 // pred_region
              _
            $region105: #{rfdn_forward.102} parent=89 // pred_fallthru
              _
          $region90: #{rfdn_forward.102} parent=85 // pred_fallthru
            _
          %526 = vnop
        $region86: #{rfdn_forward.102} parent=73 // pred_fallthru
          _
      $region74: #{rfdn_forward.102} parent=5 // pred_fallthru
        _
      %p527 = scmp.le.s32.totalorder 2, %s10
      // Predicated region
      $region106: #{rfdn_forward.102} parent=5 // pred_check
        %p528 = pneg %p527
      $region107: #{rfdn_forward.102} parent=5 // pred_check_branch
        %530 = sbr.rel (%p528) target = $region109
      $region108: #{rfdn_forward.102} parent=5 // pred_region
        %s531 = ssub.s32 %s10, 2
        // Predicated region
        $region110: #{rfdn_forward.102} parent=108 // pred_check
          %p532 = pneg %p133
        $region111: #{rfdn_forward.102} parent=108 // pred_check_branch
          %534 = sbr.rel (%p532) target = $region113
        $region112: #{rfdn_forward.102} parent=108 // pred_region
          %s535 = sand.u32 %s118, 1
          %s536 = sand.u32 %s118, 1
          %s537 = smul.addr %s536, 32
          %s538 = scalar_lea.vmem [#allocation4], %s537
        $region113: #{rfdn_forward.102} parent=108 // pred_fallthru
          _
      $region109: #{rfdn_forward.102} parent=5 // pred_fallthru
        _
    $region6: #{rfdn_forward.102} parent=1 // loop_footer
      %s14 = sadd.s32 1, %s10
    $region7: #{rfdn_forward.102} parent=1 // loop_footer_branch
      %9 = sbr.rel target = $region3
    $region8: #{rfdn_forward.102} parent=1 // loop_exit
      _

// kernel: rfdn_forward.103
$region0: #{rfdn_forward.103}
  #allocation0 [shape = 'u32[]', space=smem, size = 0x4, offset = 0x4, fixed_abs, tag = 'smem constant byte address 0x4 - core index']
  #allocation1 [shape = 'u32[72,128]{1,0:T(1,128)}', space=vmem, size = 0x9000, scoped, tag = 'internal scratch']
  %s0 = inlined_call_operand.vmem [shape: f32[48,144], index: 0, kind: input, shape index: {}]
  %s1 = inlined_call_operand.vmem [shape: f32[144,512], index: 1, kind: input, shape index: {}]
  %s2 = inlined_call_operand.vmem [shape: f32[48,1], index: 2, kind: input, shape index: {}]
  %s3 = inlined_call_operand.vmem [shape: f32[48,512], index: 3, kind: output, shape index: {}]
  %s4 = sld [smem:[#allocation0]]
  $region87: #{rfdn_forward.103} parent=0
    _
  %s6 = ssub.s32 1, %s4
  %s7 = scalar_select 0, %s6, %s4
  $region1: #{rfdn_forward.103} parent=0
    #allocation2 [shape = 'u8[294912]{0}', space=vmem, size = 0x48000, scoped, tag = 'input window, operand 1']
    #allocation3 [shape = 'u8[98304]{0}', space=vmem, size = 0x18000, scoped, tag = 'output window, operand 0']
    loop: start=0, step=1, limit=4
    $region2: #{rfdn_forward.103} parent=1 // loop_pre_header
      _
    $region3: #{rfdn_forward.103} parent=1 // loop_header
      %s9 = sphi 0, %s13
      %p10 = scmp.ge.s32.totalorder %s9, 4
      %s17 = sphi 0, %s17
      %s19 = sphi 0, %s17
      %s20 = sphi 0, %s19
      %s34 = sphi 0, %s20
      %s40 = sphi 0, %s42
      %s43 = sphi 0, %s40
      %s44 = sphi 0, %s43
      %s60 = sphi 0, %s44
      %s64 = sphi 0, %s64
      %s66 = sphi 0, %s64
      %s67 = sphi 0, %s66
      %s81 = sphi 0, %s67
      %s87 = sphi 0, %s89
      %s90 = sphi 0, %s87
      %s91 = sphi 0, %s90
      %s107 = sphi 0, %s91
    $region4: #{rfdn_forward.103} parent=1 // loop_header_branch
      %12 = sbr.rel (%p10) target = $region8
    $region5: #{rfdn_forward.103} parent=1 // loop_body
      %s14 = ssub.s32 %s9, 1
      %s15 = ssub.s32 %s9, 2
      %s16 = sadd.s32 %s9, 1
      %s18 = sadd.s32 %s17, 1
      %p21 = scmp.eq.s32.totalorder %s9, 1
      %p22 = scmp.ne.s32.totalorder %s17, %s19
      %p23 = scmp.eq.s32.totalorder %s9, 0
      %p24 = por %p22, %p23
      %p25 = scmp.ne.s32.totalorder %s17, %s19
      %p26 = scmp.eq.s32.totalorder %s14, 1
      %p27 = por %p25, %p26
      %p28 = scmp.ne.s32.totalorder %s19, %s20
      %p29 = scmp.eq.s32.totalorder %s14, 0
      %p30 = por %p28, %p29
      %p31 = scmp.ne.s32.totalorder %s19, %s20
      %p32 = scmp.eq.s32.totalorder %s15, 1
      %p33 = por %p31, %p32
      %p35 = scmp.ne.s32.totalorder %s20, %s34
      %p36 = scmp.eq.s32.totalorder %s15, 0
      %p37 = por %p35, %p36
      %s38 = ssub.s32 %s9, %s16
      %p39 = scmp.eq.s32.totalorder %s38, 0
      %s41 = sadd.s32 %s40, 1
      %s42 = scalar_select %p39, %s40, %s41
      %p45 = pneg %p39
      %p46 = scmp.eq.s32.totalorder %s9, 1
      %p47 = por %p45, %p46
      %p48 = scmp.ne.s32.totalorder %s40, %s43
      %p49 = scmp.eq.s32.totalorder %s9, 0
      %p50 = por %p48, %p49
      %p51 = scmp.ne.s32.totalorder %s40, %s43
      %p52 = scmp.eq.s32.totalorder %s14, 1
      %p53 = por %p51, %p52
      %p54 = scmp.ne.s32.totalorder %s43, %s44
      %p55 = scmp.eq.s32.totalorder %s14, 0
      %p56 = por %p54, %p55
      %p57 = scmp.ne.s32.totalorder %s43, %s44
      %p58 = scmp.eq.s32.totalorder %s15, 1
      %p59 = por %p57, %p58
      %p61 = scmp.ne.s32.totalorder %s44, %s60
      %p62 = scmp.eq.s32.totalorder %s15, 0
      %p63 = por %p61, %p62
      %s65 = sadd.s32 %s64, 1
      %p68 = scmp.eq.s32.totalorder %s9, 1
      %p69 = scmp.ne.s32.totalorder %s64, %s66
      %p70 = scmp.eq.s32.totalorder %s9, 0
      %p71 = por %p69, %p70
      %p72 = scmp.ne.s32.totalorder %s64, %s66
      %p73 = scmp.eq.s32.totalorder %s14, 1
      %p74 = por %p72, %p73
      %p75 = scmp.ne.s32.totalorder %s66, %s67
      %p76 = scmp.eq.s32.totalorder %s14, 0
      %p77 = por %p75, %p76
      %p78 = scmp.ne.s32.totalorder %s66, %s67
      %p79 = scmp.eq.s32.totalorder %s15, 1
      %p80 = por %p78, %p79
      %p82 = scmp.ne.s32.totalorder %s67, %s81
      %p83 = scmp.eq.s32.totalorder %s15, 0
      %p84 = por %p82, %p83
      %s85 = ssub.s32 %s9, %s16
      %p86 = scmp.eq.s32.totalorder %s85, 0
      %s88 = sadd.s32 %s87, 1
      %s89 = scalar_select %p86, %s87, %s88
      %p92 = pneg %p86
      %p93 = scmp.eq.s32.totalorder %s9, 1
      %p94 = por %p92, %p93
      %p95 = scmp.ne.s32.totalorder %s87, %s90
      %p96 = scmp.eq.s32.totalorder %s9, 0
      %p97 = por %p95, %p96
      %p98 = scmp.ne.s32.totalorder %s87, %s90
      %p99 = scmp.eq.s32.totalorder %s14, 1
      %p100 = por %p98, %p99
      %p101 = scmp.ne.s32.totalorder %s90, %s91
      %p102 = scmp.eq.s32.totalorder %s14, 0
      %p103 = por %p101, %p102
      %p104 = scmp.ne.s32.totalorder %s90, %s91
      %p105 = scmp.eq.s32.totalorder %s15, 1
      %p106 = por %p104, %p105
      %p108 = scmp.ne.s32.totalorder %s91, %s107
      %p109 = scmp.eq.s32.totalorder %s15, 0
      %p110 = por %p108, %p109
      %p111 = scmp.le.s32.totalorder 1, %s9
      %p112 = scmp.lt.s32.totalorder %s9, 3
      %p113 = pnand %p111, %p112
      %p114 = pneg %p113
      // Predicated region
      $region9: #{rfdn_forward.103} parent=5 // pred_check
        _
      $region10: #{rfdn_forward.103} parent=5 // pred_check_branch
        %116 = sbr.rel (%p113) target = $region12
      $region11: #{rfdn_forward.103} parent=5 // pred_region
        %s117 = ssub.s32 %s9, 1
        // Predicated region
        $region13: #{rfdn_forward.103} parent=11 // pred_check
          %p118 = pneg %p30
        $region14: #{rfdn_forward.103} parent=11 // pred_check_branch
          %120 = sbr.rel (%p118) target = $region16
        $region15: #{rfdn_forward.103} parent=11 // pred_region
          _
        $region16: #{rfdn_forward.103} parent=11 // pred_fallthru
          _
        // Predicated region
        $region17: #{rfdn_forward.103} parent=11 // pred_check
          %p121 = pneg %p77
        $region18: #{rfdn_forward.103} parent=11 // pred_check_branch
          %123 = sbr.rel (%p121) target = $region20
        $region19: #{rfdn_forward.103} parent=11 // pred_region
          _
        $region20: #{rfdn_forward.103} parent=11 // pred_fallthru
          _
      $region12: #{rfdn_forward.103} parent=5 // pred_fallthru
        _
      %p124 = scmp.lt.s32.totalorder %s9, 2
      // Predicated region
      $region21: #{rfdn_forward.103} parent=5 // pred_check
        %p125 = pneg %p124
      $region22: #{rfdn_forward.103} parent=5 // pred_check_branch
        %127 = sbr.rel (%p125) target = $region24
      $region23: #{rfdn_forward.103} parent=5 // pred_region
        // Predicated region
        $region25: #{rfdn_forward.103} parent=23 // pred_check
          %p128 = pneg %p50
        $region26: #{rfdn_forward.103} parent=23 // pred_check_branch
          %130 = sbr.rel (%p128) target = $region28
        $region27: #{rfdn_forward.103} parent=23 // pred_region
          %s131 = sand.u32 %s40, 1
          %s132 = sand.u32 %s40, 1
          %s133 = smul.addr %s132, 288
          %s134 = scalar_lea.vmem [#allocation2], %s133
          %s135 = smul.u32 2, %s9
          %s136 = smul.addr %s135, 8
          %s137 = scalar_lea.vmem %s1, %s136
          // Predicated region
          $region29: #{rfdn_forward.103} parent=27 // pred_check
            _
          $region30: #{rfdn_forward.103} parent=27 // pred_check_branch
            %139 = sbr.rel (0) target = $region32
          $region31: #{rfdn_forward.103} parent=27 // pred_region
            // Predicated region
            $region33: #{rfdn_forward.103} parent=31 // pred_check
              _
            $region34: #{rfdn_forward.103} parent=31 // pred_check_branch
              %141 = sbr.rel (0) target = $region36
            $region35: #{rfdn_forward.103} parent=31 // pred_region
              loop: start=0, step=1, limit=1
              $region37: #{rfdn_forward.103} parent=35 // loop_pre_header
                _
              $region38: #{rfdn_forward.103} parent=35 // loop_header
                %s143 = sphi 0, %s147
                %p144 = scmp.ge.s32.totalorder %s143, 1
                %s148 = sphi %s137, %s137
                %s149 = sphi %s134, %s134
              $region39: #{rfdn_forward.103} parent=35 // loop_header_branch
                %146 = sbr.rel (%p144) target = $region43
              $region40: #{rfdn_forward.103} parent=35 // loop_body
                %v150 = vld [vmem:[%s148] sm:$0xff]
                %151 = vst [vmem:[%s149] sm:$0xff] %v150
                %v152 = vld [vmem:[%s148 + $0x8] sm:$0xff]
                %153 = vst [vmem:[%s149 + $0x8] sm:$0xff] %v152
                %v154 = vld [vmem:[%s148 + $0x20] sm:$0xff]
                %155 = vst [vmem:[%s149 + $0x10] sm:$0xff] %v154
                %v156 = vld [vmem:[%s148 + $0x28] sm:$0xff]
                %157 = vst [vmem:[%s149 + $0x18] sm:$0xff] %v156
                %v158 = vld [vmem:[%s148 + $0x40] sm:$0xff]
                %159 = vst [vmem:[%s149 + $0x20] sm:$0xff] %v158
                %v160 = vld [vmem:[%s148 + $0x48] sm:$0xff]
                %161 = vst [vmem:[%s149 + $0x28] sm:$0xff] %v160
                %v162 = vld [vmem:[%s148 + $0x60] sm:$0xff]
                %163 = vst [vmem:[%s149 + $0x30] sm:$0xff] %v162
                %v164 = vld [vmem:[%s148 + $0x68] sm:$0xff]
                %165 = vst [vmem:[%s149 + $0x38] sm:$0xff] %v164
                %v166 = vld [vmem:[%s148 + $0x80] sm:$0xff]
                %167 = vst [vmem:[%s149 + $0x40] sm:$0xff] %v166
                %v168 = vld [vmem:[%s148 + $0x88] sm:$0xff]
                %169 = vst [vmem:[%s149 + $0x48] sm:$0xff] %v168
                %v170 = vld [vmem:[%s148 + $0xa0] sm:$0xff]
                %171 = vst [vmem:[%s149 + $0x50] sm:$0xff] %v170
                %v172 = vld [vmem:[%s148 + $0xa8] sm:$0xff]
                %173 = vst [vmem:[%s149 + $0x58] sm:$0xff] %v172
                %v174 = vld [vmem:[%s148 + $0xc0] sm:$0xff]
                %175 = vst [vmem:[%s149 + $0x60] sm:$0xff] %v174
                %v176 = vld [vmem:[%s148 + $0xc8] sm:$0xff]
                %177 = vst [vmem:[%s149 + $0x68] sm:$0xff] %v176
                %v178 = vld [vmem:[%s148 + $0xe0] sm:$0xff]
                %179 = vst [vmem:[%s149 + $0x70] sm:$0xff] %v178
                %v180 = vld [vmem:[%s148 + $0xe8] sm:$0xff]
                %181 = vst [vmem:[%s149 + $0x78] sm:$0xff] %v180
                %v182 = vld [vmem:[%s148 + $0x100] sm:$0xff]
                %183 = vst [vmem:[%s149 + $0x80] sm:$0xff] %v182
                %v184 = vld [vmem:[%s148 + $0x108] sm:$0xff]
                %185 = vst [vmem:[%s149 + $0x88] sm:$0xff] %v184
                %v186 = vld [vmem:[%s148 + $0x120] sm:$0xff]
                %187 = vst [vmem:[%s149 + $0x90] sm:$0xff] %v186
                %v188 = vld [vmem:[%s148 + $0x128] sm:$0xff]
                %189 = vst [vmem:[%s149 + $0x98] sm:$0xff] %v188
                %v190 = vld [vmem:[%s148 + $0x140] sm:$0xff]
                %191 = vst [vmem:[%s149 + $0xa0] sm:$0xff] %v190
                %v192 = vld [vmem:[%s148 + $0x148] sm:$0xff]
                %193 = vst [vmem:[%s149 + $0xa8] sm:$0xff] %v192
                %v194 = vld [vmem:[%s148 + $0x160] sm:$0xff]
                %195 = vst [vmem:[%s149 + $0xb0] sm:$0xff] %v194
                %v196 = vld [vmem:[%s148 + $0x168] sm:$0xff]
                %197 = vst [vmem:[%s149 + $0xb8] sm:$0xff] %v196
                %v198 = vld [vmem:[%s148 + $0x180] sm:$0xff]
                %199 = vst [vmem:[%s149 + $0xc0] sm:$0xff] %v198
                %v200 = vld [vmem:[%s148 + $0x188] sm:$0xff]
                %201 = vst [vmem:[%s149 + $0xc8] sm:$0xff] %v200
                %v202 = vld [vmem:[%s148 + $0x1a0] sm:$0xff]
                %203 = vst [vmem:[%s149 + $0xd0] sm:$0xff] %v202
                %v204 = vld [vmem:[%s148 + $0x1a8] sm:$0xff]
                %205 = vst [vmem:[%s149 + $0xd8] sm:$0xff] %v204
                %v206 = vld [vmem:[%s148 + $0x1c0] sm:$0xff]
                %207 = vst [vmem:[%s149 + $0xe0] sm:$0xff] %v206
                %v208 = vld [vmem:[%s148 + $0x1c8] sm:$0xff]
                %209 = vst [vmem:[%s149 + $0xe8] sm:$0xff] %v208
                %v210 = vld [vmem:[%s148 + $0x1e0] sm:$0xff]
                %211 = vst [vmem:[%s149 + $0xf0] sm:$0xff] %v210
                %v212 = vld [vmem:[%s148 + $0x1e8] sm:$0xff]
                %213 = vst [vmem:[%s149 + $0xf8] sm:$0xff] %v212
                %v214 = vld [vmem:[%s148 + $0x200] sm:$0xff]
                %215 = vst [vmem:[%s149 + $0x100] sm:$0xff] %v214
                %v216 = vld [vmem:[%s148 + $0x208] sm:$0xff]
                %217 = vst [vmem:[%s149 + $0x108] sm:$0xff] %v216
                %v218 = vld [vmem:[%s148 + $0x220] sm:$0xff]
                %219 = vst [vmem:[%s149 + $0x110] sm:$0xff] %v218
                %v220 = vld [vmem:[%s148 + $0x228] sm:$0xff]
                %221 = vst [vmem:[%s149 + $0x118] sm:$0xff] %v220
              $region41: #{rfdn_forward.103} parent=35 // loop_footer
                %s147 = sadd.s32 1, %s143
              $region42: #{rfdn_forward.103} parent=35 // loop_footer_branch
                %142 = sbr.rel target = $region38
              $region43: #{rfdn_forward.103} parent=35 // loop_exit
                _
            $region36: #{rfdn_forward.103} parent=31 // pred_fallthru
              _
            // Predicated region
            $region44: #{rfdn_forward.103} parent=31 // pred_check
              _
            $region45: #{rfdn_forward.103} parent=31 // pred_check_branch
              %223 = sbr.rel target = $region47
            $region46: #{rfdn_forward.103} parent=31 // pred_region
              _
            $region47: #{rfdn_forward.103} parent=31 // pred_fallthru
              _
          $region32: #{rfdn_forward.103} parent=27 // pred_fallthru
            _
          %224 = vnop
        $region28: #{rfdn_forward.103} parent=23 // pred_fallthru
          _
      $region24: #{rfdn_forward.103} parent=5 // pred_fallthru
        _
      %p225 = scmp.le.s32.totalorder 1, %s9
      %p226 = scmp.lt.s32.totalorder %s9, 3
      %p227 = pnand %p225, %p226
      %p228 = pneg %p227
      // Predicated region
      $region48: #{rfdn_forward.103} parent=5 // pred_check
        _
      $region49: #{rfdn_forward.103} parent=5 // pred_check_branch
        %230 = sbr.rel (%p227) target = $region51
      $region50: #{rfdn_forward.103} parent=5 // pred_region
        %s231 = ssub.s32 %s9, 1
        %s232 = sand.u32 %s43, 1
        %s233 = sand.u32 %s43, 1
        %s234 = smul.addr %s233, 288
        %s235 = scalar_lea.vmem [#allocation2], %s234
        // Predicated region
        $region52: #{rfdn_forward.103} parent=50 // pred_check
          %p236 = pneg %p56
        $region53: #{rfdn_forward.103} parent=50 // pred_check_branch
          %238 = sbr.rel (%p236) target = $region55
        $region54: #{rfdn_forward.103} parent=50 // pred_region
          _
        $region55: #{rfdn_forward.103} parent=50 // pred_fallthru
          _
        %p239 = pneg %p30
        %p240 = pneg %p27
        %s241 = sand.u32 %s43, 1
        %s242 = sand.u32 %s43, 1
        %s243 = smul.addr %s242, 288
        %s244 = scalar_lea.vmem [#allocation2], %s243
        %p245 = pneg %p56
        %p246 = pneg %p53
        %p247 = pneg %p77
        %p248 = pneg %p74
        %p249 = pneg %p103
        %p250 = pneg %p100
        %s251 = sand.u32 %s90, 1
        %s252 = sand.u32 %s90, 1
        %s253 = smul.addr %s252, 96
        %s254 = scalar_lea.vmem [#allocation3], %s253
        %s255 = smul.u32 2, %s14
        %s256 = smul.u32 2, %s14
        %v257 = vld [vmem:[%s0] sm:$0xff]
        %v258 = vld [vmem:[%s0 + $0x8] sm:$0xff]
        %v259 = vld [vmem:[%s0 + $0x10] sm:$0xff]
        %v260 = vld [vmem:[%s0 + $0x18] sm:$0xff]
        %v261 = vld [vmem:[%s0 + $0x20] sm:$0xff]
        %v262 = vld [vmem:[%s0 + $0x28] sm:$0xff]
        %v263 = vld [vmem:[%s0 + $0x30] sm:$0xff]
        %v264 = vld [vmem:[%s0 + $0x38] sm:$0xff]
        %v265 = vld [vmem:[%s0 + $0x40] sm:$0xff]
        %v266 = vld [vmem:[%s0 + $0x48] sm:$0xff]
        %v267 = vld [vmem:[%s0 + $0x50] sm:$0xff]
        %v268 = vld [vmem:[%s0 + $0x58] sm:$0xff]
        %v269 = vld [vmem:[%s235] sm:$0xff]
        %v270 = vld [vmem:[%s235 + $0x8] sm:$0xff]
        %v271 = vld [vmem:[%s235 + $0x10] sm:$0xff]
        %v272 = vld [vmem:[%s235 + $0x18] sm:$0xff]
        %v273 = vld [vmem:[%s235 + $0x20] sm:$0xff]
        %v274 = vld [vmem:[%s235 + $0x28] sm:$0xff]
        %v275 = vld [vmem:[%s235 + $0x30] sm:$0xff]
        %v276 = vld [vmem:[%s235 + $0x38] sm:$0xff]
        %v277 = vld [vmem:[%s235 + $0x40] sm:$0xff]
        %v278 = vld [vmem:[%s235 + $0x48] sm:$0xff]
        %v279 = vld [vmem:[%s235 + $0x50] sm:$0xff]
        %v280 = vld [vmem:[%s235 + $0x58] sm:$0xff]
        %v281 = vld [vmem:[%s235 + $0x60] sm:$0xff]
        %v282 = vld [vmem:[%s235 + $0x68] sm:$0xff]
        %v283 = vld [vmem:[%s235 + $0x70] sm:$0xff]
        %v284 = vld [vmem:[%s235 + $0x78] sm:$0xff]
        %v285 = vld [vmem:[%s235 + $0x80] sm:$0xff]
        %v286 = vld [vmem:[%s235 + $0x88] sm:$0xff]
        %v287 = vld [vmem:[%s235 + $0x90] sm:$0xff]
        %v288 = vld [vmem:[%s235 + $0x98] sm:$0xff]
        %v289 = vld [vmem:[%s235 + $0xa0] sm:$0xff]
        %v290 = vld [vmem:[%s235 + $0xa8] sm:$0xff]
        %v291 = vld [vmem:[%s235 + $0xb0] sm:$0xff]
        %v292 = vld [vmem:[%s235 + $0xb8] sm:$0xff]
        %v293 = vld [vmem:[%s235 + $0xc0] sm:$0xff]
        %v294 = vld [vmem:[%s235 + $0xc8] sm:$0xff]
        %v295 = vld [vmem:[%s235 + $0xd0] sm:$0xff]
        %v296 = vld [vmem:[%s235 + $0xd8] sm:$0xff]
        %v297 = vld [vmem:[%s235 + $0xe0] sm:$0xff]
        %v298 = vld [vmem:[%s235 + $0xe8] sm:$0xff]
        %v299 = vld [vmem:[%s235 + $0xf0] sm:$0xff]
        %v300 = vld [vmem:[%s235 + $0xf8] sm:$0xff]
        %v301 = vld [vmem:[%s235 + $0x100] sm:$0xff]
        %v302 = vld [vmem:[%s235 + $0x108] sm:$0xff]
        %v303 = vld [vmem:[%s235 + $0x110] sm:$0xff]
        %v304 = vld [vmem:[%s235 + $0x118] sm:$0xff]
        %v305 = vld [vmem:[%s2] sm:$0xff]
        %v306 = vld [vmem:[%s2 + $0x8] sm:$0xff]
        %v307 = vld [vmem:[%s2 + $0x10] sm:$0xff]
        %v308 = vld [vmem:[%s2 + $0x18] sm:$0xff]
        %v309 = vld [vmem:[%s2 + $0x20] sm:$0xff]
        %v310 = vld [vmem:[%s2 + $0x28] sm:$0xff]
        %312 = vset.pattern.permute.xlu0 0
        %313 = vperm.xlu0 %312, %v305
        %v314 = vpop.permute.xlu0 %313
        %317 = vset.pattern.permute.xlu0 0
        %318 = vperm.xlu0 %317, %v306
        %v319 = vpop.permute.xlu0 %318
        %322 = vset.pattern.permute.xlu0 0
        %323 = vperm.xlu0 %322, %v307
        %v324 = vpop.permute.xlu0 %323
        %327 = vset.pattern.permute.xlu0 0
        %328 = vperm.xlu0 %327, %v308
        %v329 = vpop.permute.xlu0 %328
        %332 = vset.pattern.permute.xlu0 0
        %333 = vperm.xlu0 %332, %v309
        %v334 = vpop.permute.xlu0 %333
        %337 = vset.pattern.permute.xlu0 0
        %338 = vperm.xlu0 %337, %v310
        %v339 = vpop.permute.xlu0 %338
        %vm341 = vcmask 130048
        %v343 = vsel %vm341, %v258, 0
        %v346 = vsel %vm341, %v260, 0
        %v349 = vsel %vm341, %v262, 0
        %v352 = vsel %vm341, %v264, 0
        %v355 = vsel %vm341, %v266, 0
        %v358 = vsel %vm341, %v268, 0
        %360 = vmatpush.msra.mxu0 %v299
        %361 = vmatpush.msra.mxu0 %v297
        %362 = vmatpush.msra.mxu0 %v295
        %363 = vmatpush.msra.mxu0 %v293
        %364 = vmatpush.msra.mxu0 %v291
        %365 = vmatpush.msra.mxu0 %v289
        %366 = vmatpush.msra.mxu0 %v287
        %367 = vmatpush.msra.mxu0 %v285
        %368 = vmatpush.msra.mxu0 %v283
        %369 = vmatpush.msra.mxu0 %v281
        %370 = vmatpush.msra.mxu0 %v279
        %371 = vmatpush.msra.mxu0 %v277
        %372 = vmatpush.msra.mxu0 %v275
        %373 = vmatpush.msra.mxu0 %v273
        %374 = vmatpush.msra.mxu0 %v271
        %375 = vmatpush.msra.mxu0 %v269
        %376 = vmatmul.f32.gmra.mxu0 %v257
        %v377 = vpop.f32.mrf.mxu0
        %v378 = vadd.f32 %v314, %v377
        %379 = vmatmul.f32.gmra.mxu0 %v259
        %v380 = vpop.f32.mrf.mxu0
        %v381 = vadd.f32 %v319, %v380
        %382 = vmatmul.f32.gmra.mxu0 %v261
        %v383 = vpop.f32.mrf.mxu0
        %v384 = vadd.f32 %v324, %v383
        %385 = vmatmul.f32.gmra.mxu0 %v263
        %v386 = vpop.f32.mrf.mxu0
        %v387 = vadd.f32 %v329, %v386
        %388 = vmatmul.f32.gmra.mxu0 %v265
        %v389 = vpop.f32.mrf.mxu0
        %v390 = vadd.f32 %v334, %v389
        %391 = vmatmul.f32.gmra.mxu0 %v267
        %v392 = vpop.f32.mrf.mxu0
        %v393 = vadd.f32 %v339, %v392
        %394 = vdwg.mxu0
        %395 = vmatpush.msra.mxu0 0.0
        %396 = vmatpush.msra.mxu0 0.0
        %397 = vmatpush.msra.mxu0 0.0
        %398 = vmatpush.msra.mxu0 0.0
        %399 = vmatpush.msra.mxu0 0.0
        %400 = vmatpush.msra.mxu0 0.0
        %401 = vmatpush.msra.mxu0 0.0
        %402 = vmatpush.msra.mxu0 0.0
        %403 = vmatpush.msra.mxu0 0.0
        %404 = vmatpush.msra.mxu0 0.0
        %405 = vmatpush.msra.mxu0 0.0
        %406 = vmatpush.msra.mxu0 0.0
        %407 = vmatpush.msra.mxu0 0.0
        %408 = vmatpush.msra.mxu0 0.0
        %409 = vmatpush.msra.mxu0 %v303
        %410 = vmatpush.msra.mxu0 %v301
        %411 = vmatmul.f32.gmra.mxu0 %v343
        %v412 = vpop.f32.mrf.mxu0
        %v413 = vadd.f32 %v378, %v412
        %414 = vmatmul.f32.gmra.mxu0 %v346
        %v415 = vpop.f32.mrf.mxu0
        %v416 = vadd.f32 %v381, %v415
        %417 = vmatmul.f32.gmra.mxu0 %v349
        %v418 = vpop.f32.mrf.mxu0
        %v419 = vadd.f32 %v384, %v418
        %420 = vmatmul.f32.gmra.mxu0 %v352
        %v421 = vpop.f32.mrf.mxu0
        %v422 = vadd.f32 %v387, %v421
        %423 = vmatmul.f32.gmra.mxu0 %v355
        %v424 = vpop.f32.mrf.mxu0
        %v425 = vadd.f32 %v390, %v424
        %426 = vmatmul.f32.gmra.mxu0 %v358
        %v427 = vpop.f32.mrf.mxu0
        %v428 = vadd.f32 %v393, %v427
        %429 = vdwg.mxu0
        %430 = vmatpush.msra.mxu0 %v300
        %431 = vmatpush.msra.mxu0 %v298
        %432 = vmatpush.msra.mxu0 %v296
        %433 = vmatpush.msra.mxu0 %v294
        %434 = vmatpush.msra.mxu0 %v292
        %435 = vmatpush.msra.mxu0 %v290
        %436 = vmatpush.msra.mxu0 %v288
        %437 = vmatpush.msra.mxu0 %v286
        %438 = vmatpush.msra.mxu0 %v284
        %439 = vmatpush.msra.mxu0 %v282
        %440 = vmatpush.msra.mxu0 %v280
        %441 = vmatpush.msra.mxu0 %v278
        %442 = vmatpush.msra.mxu0 %v276
        %443 = vmatpush.msra.mxu0 %v274
        %444 = vmatpush.msra.mxu0 %v272
        %445 = vmatpush.msra.mxu0 %v270
        %446 = vmatmul.f32.gmra.mxu0 %v257
        %v447 = vpop.f32.mrf.mxu0
        %v448 = vadd.f32 %v314, %v447
        %449 = vmatmul.f32.gmra.mxu0 %v259
        %v450 = vpop.f32.mrf.mxu0
        %v451 = vadd.f32 %v319, %v450
        %452 = vmatmul.f32.gmra.mxu0 %v261
        %v453 = vpop.f32.mrf.mxu0
        %v454 = vadd.f32 %v324, %v453
        %455 = vmatmul.f32.gmra.mxu0 %v263
        %v456 = vpop.f32.mrf.mxu0
        %v457 = vadd.f32 %v329, %v456
        %458 = vmatmul.f32.gmra.mxu0 %v265
        %v459 = vpop.f32.mrf.mxu0
        %v460 = vadd.f32 %v334, %v459
        %461 = vmatmul.f32.gmra.mxu0 %v267
        %v462 = vpop.f32.mrf.mxu0
        %v463 = vadd.f32 %v339, %v462
        %464 = vdwg.mxu0
        %465 = vmatpush.msra.mxu0 0.0
        %466 = vmatpush.msra.mxu0 0.0
        %467 = vmatpush.msra.mxu0 0.0
        %468 = vmatpush.msra.mxu0 0.0
        %469 = vmatpush.msra.mxu0 0.0
        %470 = vmatpush.msra.mxu0 0.0
        %471 = vmatpush.msra.mxu0 0.0
        %472 = vmatpush.msra.mxu0 0.0
        %473 = vmatpush.msra.mxu0 0.0
        %474 = vmatpush.msra.mxu0 0.0
        %475 = vmatpush.msra.mxu0 0.0
        %476 = vmatpush.msra.mxu0 0.0
        %477 = vmatpush.msra.mxu0 0.0
        %478 = vmatpush.msra.mxu0 0.0
        %479 = vmatpush.msra.mxu0 %v304
        %480 = vmatpush.msra.mxu0 %v302
        %481 = vmatmul.f32.gmra.mxu0 %v343
        %v482 = vpop.f32.mrf.mxu0
        %v483 = vadd.f32 %v448, %v482
        %484 = vmatmul.f32.gmra.mxu0 %v346
        %v485 = vpop.f32.mrf.mxu0
        %v486 = vadd.f32 %v451, %v485
        %487 = vmatmul.f32.gmra.mxu0 %v349
        %v488 = vpop.f32.mrf.mxu0
        %v489 = vadd.f32 %v454, %v488
        %490 = vmatmul.f32.gmra.mxu0 %v352
        %v491 = vpop.f32.mrf.mxu0
        %v492 = vadd.f32 %v457, %v491
        %493 = vmatmul.f32.gmra.mxu0 %v355
        %v494 = vpop.f32.mrf.mxu0
        %v495 = vadd.f32 %v460, %v494
        %496 = vmatmul.f32.gmra.mxu0 %v358
        %v497 = vpop.f32.mrf.mxu0
        %v498 = vadd.f32 %v463, %v497
        %499 = vdwg.mxu0
        %500 = vst [vmem:[%s254] sm:$0xff] %v413
        %501 = vst [vmem:[%s254 + $0x8] sm:$0xff] %v483
        %502 = vst [vmem:[%s254 + $0x10] sm:$0xff] %v416
        %503 = vst [vmem:[%s254 + $0x18] sm:$0xff] %v486
        %504 = vst [vmem:[%s254 + $0x20] sm:$0xff] %v419
        %505 = vst [vmem:[%s254 + $0x28] sm:$0xff] %v489
        %506 = vst [vmem:[%s254 + $0x30] sm:$0xff] %v422
        %507 = vst [vmem:[%s254 + $0x38] sm:$0xff] %v492
        %508 = vst [vmem:[%s254 + $0x40] sm:$0xff] %v425
        %509 = vst [vmem:[%s254 + $0x48] sm:$0xff] %v495
        %510 = vst [vmem:[%s254 + $0x50] sm:$0xff] %v428
        %511 = vst [vmem:[%s254 + $0x58] sm:$0xff] %v498
        %s512 = sand.u32 %s90, 1
        %s513 = sand.u32 %s90, 1
        %s514 = smul.addr %s513, 96
        %s515 = scalar_lea.vmem [#allocation3], %s514
        // Predicated region
        $region56: #{rfdn_forward.103} parent=50 // pred_check
          %p516 = pneg %p100
        $region57: #{rfdn_forward.103} parent=50 // pred_check_branch
          %518 = sbr.rel (%p516) target = $region59
        $region58: #{rfdn_forward.103} parent=50 // pred_region
          %s519 = smul.u32 2, %s14
          %s520 = smul.addr %s519, 8
          %s521 = scalar_lea.vmem %s3, %s520
          // Predicated region
          $region60: #{rfdn_forward.103} parent=58 // pred_check
            _
          $region61: #{rfdn_forward.103} parent=58 // pred_check_branch
            %523 = sbr.rel (0) target = $region63
          $region62: #{rfdn_forward.103} parent=58 // pred_region
            // Predicated region
            $region64: #{rfdn_forward.103} parent=62 // pred_check
              _
            $region65: #{rfdn_forward.103} parent=62 // pred_check_branch
              %525 = sbr.rel (0) target = $region67
            $region66: #{rfdn_forward.103} parent=62 // pred_region
              loop: start=0, step=1, limit=1
              $region68: #{rfdn_forward.103} parent=66 // loop_pre_header
                _
              $region69: #{rfdn_forward.103} parent=66 // loop_header
                %s527 = sphi 0, %s531
                %p528 = scmp.ge.s32.totalorder %s527, 1
                %s532 = sphi %s515, %s515
                %s533 = sphi %s521, %s521
              $region70: #{rfdn_forward.103} parent=66 // loop_header_branch
                %530 = sbr.rel (%p528) target = $region74
              $region71: #{rfdn_forward.103} parent=66 // loop_body
                %v534 = vld [vmem:[%s532] sm:$0xff]
                %535 = vst [vmem:[%s533] sm:$0xff] %v534
                %v536 = vld [vmem:[%s532 + $0x8] sm:$0xff]
                %537 = vst [vmem:[%s533 + $0x8] sm:$0xff] %v536
                %v538 = vld [vmem:[%s532 + $0x10] sm:$0xff]
                %539 = vst [vmem:[%s533 + $0x20] sm:$0xff] %v538
                %v540 = vld [vmem:[%s532 + $0x18] sm:$0xff]
                %541 = vst [vmem:[%s533 + $0x28] sm:$0xff] %v540
                %v542 = vld [vmem:[%s532 + $0x20] sm:$0xff]
                %543 = vst [vmem:[%s533 + $0x40] sm:$0xff] %v542
                %v544 = vld [vmem:[%s532 + $0x28] sm:$0xff]
                %545 = vst [vmem:[%s533 + $0x48] sm:$0xff] %v544
                %v546 = vld [vmem:[%s532 + $0x30] sm:$0xff]
                %547 = vst [vmem:[%s533 + $0x60] sm:$0xff] %v546
                %v548 = vld [vmem:[%s532 + $0x38] sm:$0xff]
                %549 = vst [vmem:[%s533 + $0x68] sm:$0xff] %v548
                %v550 = vld [vmem:[%s532 + $0x40] sm:$0xff]
                %551 = vst [vmem:[%s533 + $0x80] sm:$0xff] %v550
                %v552 = vld [vmem:[%s532 + $0x48] sm:$0xff]
                %553 = vst [vmem:[%s533 + $0x88] sm:$0xff] %v552
                %v554 = vld [vmem:[%s532 + $0x50] sm:$0xff]
                %555 = vst [vmem:[%s533 + $0xa0] sm:$0xff] %v554
                %v556 = vld [vmem:[%s532 + $0x58] sm:$0xff]
                %557 = vst [vmem:[%s533 + $0xa8] sm:$0xff] %v556
              $region72: #{rfdn_forward.103} parent=66 // loop_footer
                %s531 = sadd.s32 1, %s527
              $region73: #{rfdn_forward.103} parent=66 // loop_footer_branch
                %526 = sbr.rel target = $region69
              $region74: #{rfdn_forward.103} parent=66 // loop_exit
                _
            $region67: #{rfdn_forward.103} parent=62 // pred_fallthru
              _
            // Predicated region
            $region75: #{rfdn_forward.103} parent=62 // pred_check
              _
            $region76: #{rfdn_forward.103} parent=62 // pred_check_branch
              %559 = sbr.rel target = $region78
            $region77: #{rfdn_forward.103} parent=62 // pred_region
              _
            $region78: #{rfdn_forward.103} parent=62 // pred_fallthru
              _
          $region63: #{rfdn_forward.103} parent=58 // pred_fallthru
            _
          %560 = vnop
        $region59: #{rfdn_forward.103} parent=50 // pred_fallthru
          _
      $region51: #{rfdn_forward.103} parent=5 // pred_fallthru
        _
      %p561 = scmp.le.s32.totalorder 2, %s9
      // Predicated region
      $region79: #{rfdn_forward.103} parent=5 // pred_check
        %p562 = pneg %p561
      $region80: #{rfdn_forward.103} parent=5 // pred_check_branch
        %564 = sbr.rel (%p562) target = $region82
      $region81: #{rfdn_forward.103} parent=5 // pred_region
        %s565 = ssub.s32 %s9, 2
        // Predicated region
        $region83: #{rfdn_forward.103} parent=81 // pred_check
          %p566 = pneg %p106
        $region84: #{rfdn_forward.103} parent=81 // pred_check_branch
          %568 = sbr.rel (%p566) target = $region86
        $region85: #{rfdn_forward.103} parent=81 // pred_region
          %s569 = sand.u32 %s91, 1
          %s570 = sand.u32 %s91, 1
          %s571 = smul.addr %s570, 96
          %s572 = scalar_lea.vmem [#allocation3], %s571
        $region86: #{rfdn_forward.103} parent=81 // pred_fallthru
          _
      $region82: #{rfdn_forward.103} parent=5 // pred_fallthru
        _
    $region6: #{rfdn_forward.103} parent=1 // loop_footer
      %s13 = sadd.s32 1, %s9
    $region7: #{rfdn_forward.103} parent=1 // loop_footer_branch
      %8 = sbr.rel target = $region3
    $region8: #{rfdn_forward.103} parent=1 // loop_exit
      _

</llo_original>
